<compile_context>
chip_gen: v7x
topology: tpu7x:2x2x1
jax: 0.10.0
libtpu: 0.0.40
codegen_flags: <defaults>
</compile_context>

<pallas_src>
import functools

import jax
import jax.numpy as jnp
import numpy as np
from jax.experimental import pallas as pl
from jax.experimental.pallas import tpu as pltpu

_EPS = 1e-5


def _vmem_limit_bytes():
    # ~1/2 of physical VMEM per generation (v5e/v6e: 128 MiB -> 64 MiB,
    # v7x: 64 MiB -> 32 MiB); safe 32 MiB fallback if the query fails.
    try:
        phys = pltpu.get_tpu_info().vmem_capacity_bytes
        return int(max(32 * 1024 * 1024, min(96 * 1024 * 1024, phys // 2)))
    except Exception:
        return 32 * 1024 * 1024


def _cparams():
    return pltpu.CompilerParams(
        dimension_semantics=("parallel",),
        vmem_limit_bytes=_vmem_limit_bytes(),
    )


def _pick_block_batch(n):
    # Batch several images per grid step to amortize per-step overhead.
    # TODO(synk): also cap by per-image VMEM footprint at realistic sizes.
    b = min(n, 8)
    while n % b:
        b -= 1
    return b


def _tap_masks(h2, w2):
    # (9, 1, S) 0/1 masks: validity of tap (dy, dx) at each flat output pixel
    # (implements the SAME zero padding without building a padded copy).
    h = np.arange(h2).reshape(h2, 1)
    w = np.arange(w2).reshape(1, w2)
    ms = []
    for dy in range(3):
        for dx in range(3):
            m = ((h + dy - 1 >= 0) & (h + dy - 1 < h2) &
                 (w + dx - 1 >= 0) & (w + dx - 1 < w2))
            ms.append(m.reshape(1, h2 * w2))
    return np.stack(ms, axis=0).astype(np.float32)  # (9, 1, S)


# ---------------------------------------------------------------------------
# in-kernel helpers
# ---------------------------------------------------------------------------
def _roll_lanes(a, delta):
    """rolled[:, s] = a[:, (s + delta) mod S]  (static delta, lane rotation)."""
    s = a.shape[-1]
    d = delta % s
    if d == 0:
        return a
    return jnp.concatenate([a[:, d:], a[:, :d]], axis=-1)


def _conv3x3_flat(a, w_all, m_all, cout, w2):
    """3x3 SAME conv of a flat channel-major activation.

    a:     (Cin, S) bf16, S = H2*W2 (lane-dense flat spatial)
    w_all: (9, Cout, Cin) bf16 tap-major weights
    m_all: (9, 1, S) bf16 border masks
    Returns (Cout, S) f32.  9 masked lane-rotations + small matmuls,
    accumulated in f32 -- no materialized im2col, no padded copy.
    """
    _, s = a.shape
    acc = jnp.zeros((cout, s), jnp.float32)
    for t in range(9):
        dy, dx = t // 3, t % 3
        delta = (dy - 1) * w2 + (dx - 1)
        tap = _roll_lanes(a, delta) * m_all[t]                 # (Cin, S) bf16
        acc = acc + jnp.dot(w_all[t], tap,
                            preferred_element_type=jnp.float32)
    return acc


# ---------------------------------------------------------------------------
# pass 1: maxpool(2) + conv1 + per-block channel stats
# ---------------------------------------------------------------------------
def _pool_conv1_kernel(x_ref, w_ref, m_ref, y_ref, psum_ref, psq_ref):
    B, cin, H, W = x_ref.shape
    _, cm, S = y_ref.shape
    H2, W2 = H // 2, W // 2

    w_all = w_ref[...]                                          # (9, Cm, Cin)
    m_all = m_ref[...]                                          # (9, 1, S)
    psum = jnp.zeros((cm, 1), jnp.float32)
    psq = jnp.zeros((cm, 1), jnp.float32)

    for b in range(B):                                          # static unroll
        x = x_ref[b]                                            # (Cin, H, W) f32
        # 2x2 max-pool via reshape + max (no strided indexing)
        xh = jnp.max(x.reshape(cin, H2, 2, W), axis=2)          # (Cin, H2, W)
        xp = jnp.max(xh.reshape(cin, H2, W2, 2), axis=3)        # (Cin, H2, W2)
        a = xp.reshape(cin, S).astype(jnp.bfloat16)             # cast once

        acc = _conv3x3_flat(a, w_all, m_all, cm, W2)            # (Cm, S) f32
        yb = acc.astype(jnp.bfloat16)
        y_ref[b] = yb

        # BN stats of the bf16-rounded values pass 2 will actually normalize
        yf = yb.astype(jnp.float32)
        psum = psum + jnp.sum(yf, axis=1, keepdims=True)
        psq = psq + jnp.sum(yf * yf, axis=1, keepdims=True)

    psum_ref[0] = psum
    psq_ref[0] = psq


def _pass1(x, w1, masks, B):
    N, cin, H, W = x.shape
    H2, W2 = H // 2, W // 2
    S = H2 * W2
    cm = w1.shape[1]
    nblk = N // B
    return pl.pallas_call(
        _pool_conv1_kernel,
        out_shape=(jax.ShapeDtypeStruct((N, cm, S), jnp.bfloat16),
                   jax.ShapeDtypeStruct((nblk, cm, 1), jnp.float32),
                   jax.ShapeDtypeStruct((nblk, cm, 1), jnp.float32)),
        grid=(nblk,),
        in_specs=[pl.BlockSpec((B, cin, H, W), lambda n: (n, 0, 0, 0)),
                  pl.BlockSpec((9, cm, cin), lambda n: (0, 0, 0)),
                  pl.BlockSpec((9, 1, S), lambda n: (0, 0, 0))],
        out_specs=(pl.BlockSpec((B, cm, S), lambda n: (n, 0, 0)),
                   pl.BlockSpec((1, cm, 1), lambda n: (n, 0, 0)),
                   pl.BlockSpec((1, cm, 1), lambda n: (n, 0, 0))),
        compiler_params=_cparams(),
    )(x, w1, masks)


# ---------------------------------------------------------------------------
# pass 2: (BN1 + ReLU on the input read) + conv2 + per-block channel stats
# ---------------------------------------------------------------------------
def _bnrelu_conv2_kernel(y_ref, sc_ref, sh_ref, w_ref, m_ref,
                         o_ref, psum_ref, psq_ref, *, W2):
    B, cm, S = y_ref.shape
    _, co, _ = o_ref.shape

    w_all = w_ref[...]                                          # (9, Co, Cm)
    m_all = m_ref[...]                                          # (9, 1, S)
    sc = sc_ref[...]                                            # (Cm, 1) f32
    sh = sh_ref[...]                                            # (Cm, 1) f32
    psum = jnp.zeros((co, 1), jnp.float32)
    psq = jnp.zeros((co, 1), jnp.float32)

    for b in range(B):
        y = y_ref[b].astype(jnp.float32)                        # (Cm, S)
        a = jnp.maximum(y * sc + sh, 0.0).astype(jnp.bfloat16)  # BN1+ReLU fused

        acc = _conv3x3_flat(a, w_all, m_all, co, W2)            # (Co, S) f32
        ob = acc.astype(jnp.bfloat16)
        o_ref[b] = ob

        of = ob.astype(jnp.float32)
        psum = psum + jnp.sum(of, axis=1, keepdims=True)
        psq = psq + jnp.sum(of * of, axis=1, keepdims=True)

    psum_ref[0] = psum
    psq_ref[0] = psq


def _pass2(y1, sc, sh, w2, masks, B, W2):
    N, cm, S = y1.shape
    co = w2.shape[1]
    nblk = N // B
    return pl.pallas_call(
        functools.partial(_bnrelu_conv2_kernel, W2=W2),
        out_shape=(jax.ShapeDtypeStruct((N, co, S), jnp.bfloat16),
                   jax.ShapeDtypeStruct((nblk, co, 1), jnp.float32),
                   jax.ShapeDtypeStruct((nblk, co, 1), jnp.float32)),
        grid=(nblk,),
        in_specs=[pl.BlockSpec((B, cm, S), lambda n: (n, 0, 0)),
                  pl.BlockSpec((cm, 1), lambda n: (0, 0)),
                  pl.BlockSpec((cm, 1), lambda n: (0, 0)),
                  pl.BlockSpec((9, co, cm), lambda n: (0, 0, 0)),
                  pl.BlockSpec((9, 1, S), lambda n: (0, 0, 0))],
        out_specs=(pl.BlockSpec((B, co, S), lambda n: (n, 0, 0)),
                   pl.BlockSpec((1, co, 1), lambda n: (n, 0, 0)),
                   pl.BlockSpec((1, co, 1), lambda n: (n, 0, 0))),
        compiler_params=_cparams(),
    )(y1, sc, sh, w2, masks)


# ---------------------------------------------------------------------------
# pass 3: final BN2 + ReLU
# ---------------------------------------------------------------------------
def _bnrelu_kernel(y_ref, sc_ref, sh_ref, o_ref):
    y = y_ref[...].astype(jnp.float32)                          # (B, C, S)
    o_ref[...] = jnp.maximum(y * sc_ref[...] + sh_ref[...], 0.0)


def _pass3(y2, sc, sh, B):
    N, co, S = y2.shape
    nblk = N // B
    return pl.pallas_call(
        _bnrelu_kernel,
        out_shape=jax.ShapeDtypeStruct((N, co, S), jnp.float32),
        grid=(nblk,),
        in_specs=[pl.BlockSpec((B, co, S), lambda n: (n, 0, 0)),
                  pl.BlockSpec((co, 1), lambda n: (0, 0)),
                  pl.BlockSpec((co, 1), lambda n: (0, 0))],
        out_specs=pl.BlockSpec((B, co, S), lambda n: (n, 0, 0)),
        compiler_params=_cparams(),
    )(y2, sc, sh)


# ---------------------------------------------------------------------------
# BN scale/shift from per-block partial sums (tiny (nblk, C, 1) reductions)
# ---------------------------------------------------------------------------
def _bn_scale_shift(psum, psq, count, gamma, beta, eps=_EPS):
    s = jnp.sum(psum, axis=0)                                   # (C, 1)
    sq = jnp.sum(psq, axis=0)                                   # (C, 1)
    mean = s / count
    # TODO(synk): one-pass E[x^2]-E[x]^2 can cancel for |mean| >> std; a
    # Welford / two-pass combine would be more robust.
    var = jnp.maximum(sq / count - mean * mean, 0.0)
    scale = gamma.reshape(-1, 1) / jnp.sqrt(var + eps)
    shift = beta.reshape(-1, 1) - mean * scale
    return scale, shift


# ---------------------------------------------------------------------------
# Encode forward (NCHW in / NCHW out, like the PyTorch module)
# ---------------------------------------------------------------------------
@jax.jit
def encode_forward(x_nchw, params):
    N, _, H, W = x_nchw.shape
    if H % 2 or W % 2:
        # TODO(synk): PyTorch MaxPool2d(2) floors odd sizes; not supported here.
        raise ValueError("encode_forward expects even H and W")
    H2, W2 = H // 2, W // 2
    S = H2 * W2
    co = params["w2"].shape[1]
    B = _pick_block_batch(N)
    masks = jnp.asarray(_tap_masks(H2, W2), dtype=jnp.bfloat16)
    count = float(N * S)

    # block 1: fused maxpool + conv1 (+ stats); conv bias cancels under BN
    y1, ps1, pq1 = _pass1(x_nchw, params["w1"], masks, B)
    sc1, sh1 = _bn_scale_shift(ps1, pq1, count, params["g1"], params["be1"])

    # block 2: fused BN1+ReLU (on load) + conv2 (+ stats)
    y2, ps2, pq2 = _pass2(y1, sc1, sh1, params["w2"], masks, B, W2)
    sc2, sh2 = _bn_scale_shift(ps2, pq2, count, params["g2"], params["be2"])

    # final BN2 + ReLU; free contiguous reshape to NCHW (no transpose)
    out = _pass3(y2, sc2, sh2, B)                               # (N, Co, S)
    return out.reshape(N, co, H2, W2)


# ---------------------------------------------------------------------------
# pure-JAX (f32) reference of the PyTorch module, bias included
# ---------------------------------------------------------------------------
def encode_reference(x_nchw, params, eps=_EPS):
    x = jax.lax.reduce_window(x_nchw, -jnp.inf, jax.lax.max,
                              (1, 1, 2, 2), (1, 1, 2, 2), "VALID")

    def block(h, w_taps, b, gamma, beta):
        _, co, ci = w_taps.shape
        w_hwio = jnp.transpose(w_taps.astype(jnp.float32),
                               (0, 2, 1)).reshape(3, 3, ci, co)
        y = jax.lax.conv_general_dilated(
            h, w_hwio, (1, 1), "SAME",
            dimension_numbers=("NCHW", "HWIO", "NCHW")) + b.reshape(1, -1, 1, 1)
        mean = y.mean(axis=(0, 2, 3), keepdims=True)
        var = y.var(axis=(0, 2, 3), keepdims=True)
        yhat = (y - mean) / jnp.sqrt(var + eps)
        return jax.nn.relu(yhat * gamma.reshape(1, -1, 1, 1)
                           + beta.reshape(1, -1, 1, 1))

    h = block(x, params["w1"], params["b1"], params["g1"], params["be1"])
    h = block(h, params["w2"], params["b2"], params["g2"], params["be2"])
    return h


# ---------------------------------------------------------------------------
def make_params(key, cin, cout):
    ks = jax.random.split(key, 6)
    mid = cout  # AddDoubleConv default: mid_channels = out_channels

    def conv_taps(k, ci, co):
        bound = 1.0 / np.sqrt(ci * 9)
        w = jax.random.uniform(k, (3, 3, ci, co), jnp.float32, -bound, bound)
        # tap-major (9, Cout, Cin); the bf16 values ARE the parameters.
        return jnp.transpose(w.reshape(9, ci, co), (0, 2, 1)).astype(jnp.bfloat16)

    w1 = conv_taps(ks[0], cin, mid)
    b1 = jax.random.uniform(ks[1], (mid,), jnp.float32, -0.1, 0.1)
    w2 = conv_taps(ks[2], mid, cout)
    b2 = jax.random.uniform(ks[3], (cout,), jnp.float32, -0.1, 0.1)
    g1 = 1.0 + 0.1 * jax.random.normal(ks[4], (mid,), jnp.float32)
    be1 = 0.1 * jax.random.normal(ks[5], (mid,), jnp.float32)
    g2 = 1.05 * jnp.ones((cout,), jnp.float32)
    be2 = -0.02 * jnp.ones((cout,), jnp.float32)
    return {"w1": w1, "b1": b1, "g1": g1, "be1": be1,
            "w2": w2, "b2": b2, "g2": g2, "be2": be2}


if __name__ == "__main__":
    N, Cin, Cout, H, W = 2, 4, 8, 16, 16
    key = jax.random.PRNGKey(0)
    kx, kp = jax.random.split(key)
    x = jax.random.normal(kx, (N, Cin, H, W), jnp.float32)      # NCHW, like PyTorch
    params = make_params(kp, Cin, Cout)

    out = jax.block_until_ready(encode_forward(x, params))
    ref = jax.block_until_ready(encode_reference(x, params))

    assert out.shape == (N, Cout, H // 2, W // 2), out.shape
    # bf16 activations / bf16 MXU vs f32 reference -> bf16-scale tolerance
    np.testing.assert_allclose(np.asarray(out), np.asarray(ref),
                               rtol=5e-2, atol=5e-2)

    print("KERNEL_OK")
</pallas_src>

<mosaic_0001>
module attributes {stable_mosaic.version = 11 : i64} {
  func.func @_pool_conv1_kernel(%arg0: i32, %arg1: memref<2x4x16x16xf32, #tpu.memory_space<vmem>>, %arg2: memref<9x8x4xbf16, #tpu.memory_space<vmem>>, %arg3: memref<9x1x64xbf16, #tpu.memory_space<vmem>>, %arg4: memref<2x8x64xbf16, #tpu.memory_space<vmem>>, %arg5: memref<1x8x1xf32, #tpu.memory_space<vmem>>, %arg6: memref<1x8x1xf32, #tpu.memory_space<vmem>>) attributes {dimension_semantics = [#tpu.dimension_semantics<parallel>], iteration_bounds = array<i64: 1>, scalar_prefetch = 0 : i64, scratch_operands = 0 : i64, tpu.core_type = #tpu.core_type<tc>, window_params = [{transform_indices = @transform_0, window_bounds = array<i64: 2, 4, 16, 16>}, {pipeline_mode = #tpu.pipeline_mode<synchronous>, transform_indices = @transform_1, window_bounds = array<i64: 9, 8, 4>}, {pipeline_mode = #tpu.pipeline_mode<synchronous>, transform_indices = @transform_2, window_bounds = array<i64: 9, 1, 64>}, {transform_indices = @transform_3, window_bounds = array<i64: 2, 8, 64>}, {transform_indices = @transform_4, window_bounds = array<i64: 1, 8, 1>}, {transform_indices = @transform_5, window_bounds = array<i64: 1, 8, 1>}]} {
    %c0 = arith.constant 0 : index
    %c0_0 = arith.constant 0 : index
    %c0_1 = arith.constant 0 : index
    %0 = vector.load %arg2[%c0, %c0_0, %c0_1] : memref<9x8x4xbf16, #tpu.memory_space<vmem>>, vector<9x8x4xbf16>
    %c0_2 = arith.constant 0 : index
    %c0_3 = arith.constant 0 : index
    %c0_4 = arith.constant 0 : index
    %1 = vector.load %arg3[%c0_2, %c0_3, %c0_4] : memref<9x1x64xbf16, #tpu.memory_space<vmem>>, vector<9x1x64xbf16>
    %cst = arith.constant 0.000000e+00 : f32
    %2 = vector.broadcast %cst : f32 to vector<8x1xf32>
    %cst_5 = arith.constant 0.000000e+00 : f32
    %3 = vector.broadcast %cst_5 : f32 to vector<8x1xf32>
    %c0_6 = arith.constant 0 : index
    %c0_7 = arith.constant 0 : index
    %c0_8 = arith.constant 0 : index
    %c0_9 = arith.constant 0 : index
    %4 = vector.load %arg1[%c0_6, %c0_7, %c0_8, %c0_9] : memref<2x4x16x16xf32, #tpu.memory_space<vmem>>, vector<1x4x16x16xf32>
    %5 = vector.shape_cast %4 : vector<1x4x16x16xf32> to vector<4x16x16xf32>
    %6 = vector.shape_cast %5 : vector<4x16x16xf32> to vector<4x8x2x16xf32>
    %cst_10 = arith.constant dense<0xFF800000> : vector<4x8x16xf32>
    %7 = vector.multi_reduction <maximumf>, %6, %cst_10 [2] : vector<4x8x2x16xf32> to vector<4x8x16xf32>
    %8 = vector.shape_cast %7 : vector<4x8x16xf32> to vector<4x8x8x2xf32>
    %cst_11 = arith.constant dense<0xFF800000> : vector<4x8x8xf32>
    %9 = vector.multi_reduction <maximumf>, %8, %cst_11 [3] : vector<4x8x8x2xf32> to vector<4x8x8xf32>
    %10 = vector.shape_cast %9 : vector<4x8x8xf32> to vector<4x64xf32>
    %11 = arith.truncf %10 : vector<4x64xf32> to vector<4x64xbf16>
    %cst_12 = arith.constant 0.000000e+00 : f32
    %12 = vector.broadcast %cst_12 : f32 to vector<8x64xf32>
    %13 = vector.extract_strided_slice %11 {offsets = [0, 55], sizes = [4, 9], strides = [1, 1]} : vector<4x64xbf16> to vector<4x9xbf16>
    %14 = vector.extract_strided_slice %11 {offsets = [0, 0], sizes = [4, 55], strides = [1, 1]} : vector<4x64xbf16> to vector<4x55xbf16>
    %15 = tpu.concatenate %13, %14 in 1 : vector<4x9xbf16>, vector<4x55xbf16> -> vector<4x64xbf16>
    %16 = vector.extract_strided_slice %1 {offsets = [0, 0, 0], sizes = [1, 1, 64], strides = [1, 1, 1]} : vector<9x1x64xbf16> to vector<1x1x64xbf16>
    %17 = vector.shape_cast %16 : vector<1x1x64xbf16> to vector<1x64xbf16>
    %18 = vector.broadcast %17 : vector<1x64xbf16> to vector<4x64xbf16>
    %19 = arith.mulf %15, %18 : vector<4x64xbf16>
    %20 = vector.extract_strided_slice %0 {offsets = [0, 0, 0], sizes = [1, 8, 4], strides = [1, 1, 1]} : vector<9x8x4xbf16> to vector<1x8x4xbf16>
    %21 = vector.shape_cast %20 : vector<1x8x4xbf16> to vector<8x4xbf16>
    %cst_13 = arith.constant dense<0.000000e+00> : vector<8x64xf32>
    %22 = tpu.matmul %21, %19, %cst_13 {dimension_numbers = #tpu.dot_dimension_numbers<[1], [0], [0], [1], [0, 0, 1, 1], [], []>} : vector<8x4xbf16>, vector<4x64xbf16>, vector<8x64xf32> -> vector<8x64xf32>
    %23 = arith.addf %12, %22 : vector<8x64xf32>
    %24 = vector.extract_strided_slice %11 {offsets = [0, 56], sizes = [4, 8], strides = [1, 1]} : vector<4x64xbf16> to vector<4x8xbf16>
    %25 = vector.extract_strided_slice %11 {offsets = [0, 0], sizes = [4, 56], strides = [1, 1]} : vector<4x64xbf16> to vector<4x56xbf16>
    %26 = tpu.concatenate %24, %25 in 1 : vector<4x8xbf16>, vector<4x56xbf16> -> vector<4x64xbf16>
    %27 = vector.extract_strided_slice %1 {offsets = [1, 0, 0], sizes = [1, 1, 64], strides = [1, 1, 1]} : vector<9x1x64xbf16> to vector<1x1x64xbf16>
    %28 = vector.shape_cast %27 : vector<1x1x64xbf16> to vector<1x64xbf16>
    %29 = vector.broadcast %28 : vector<1x64xbf16> to vector<4x64xbf16>
    %30 = arith.mulf %26, %29 : vector<4x64xbf16>
    %31 = vector.extract_strided_slice %0 {offsets = [1, 0, 0], sizes = [1, 8, 4], strides = [1, 1, 1]} : vector<9x8x4xbf16> to vector<1x8x4xbf16>
    %32 = vector.shape_cast %31 : vector<1x8x4xbf16> to vector<8x4xbf16>
    %cst_14 = arith.constant dense<0.000000e+00> : vector<8x64xf32>
    %33 = tpu.matmul %32, %30, %cst_14 {dimension_numbers = #tpu.dot_dimension_numbers<[1], [0], [0], [1], [0, 0, 1, 1], [], []>} : vector<8x4xbf16>, vector<4x64xbf16>, vector<8x64xf32> -> vector<8x64xf32>
    %34 = arith.addf %23, %33 : vector<8x64xf32>
    %35 = vector.extract_strided_slice %11 {offsets = [0, 57], sizes = [4, 7], strides = [1, 1]} : vector<4x64xbf16> to vector<4x7xbf16>
    %36 = vector.extract_strided_slice %11 {offsets = [0, 0], sizes = [4, 57], strides = [1, 1]} : vector<4x64xbf16> to vector<4x57xbf16>
    %37 = tpu.concatenate %35, %36 in 1 : vector<4x7xbf16>, vector<4x57xbf16> -> vector<4x64xbf16>
    %38 = vector.extract_strided_slice %1 {offsets = [2, 0, 0], sizes = [1, 1, 64], strides = [1, 1, 1]} : vector<9x1x64xbf16> to vector<1x1x64xbf16>
    %39 = vector.shape_cast %38 : vector<1x1x64xbf16> to vector<1x64xbf16>
    %40 = vector.broadcast %39 : vector<1x64xbf16> to vector<4x64xbf16>
    %41 = arith.mulf %37, %40 : vector<4x64xbf16>
    %42 = vector.extract_strided_slice %0 {offsets = [2, 0, 0], sizes = [1, 8, 4], strides = [1, 1, 1]} : vector<9x8x4xbf16> to vector<1x8x4xbf16>
    %43 = vector.shape_cast %42 : vector<1x8x4xbf16> to vector<8x4xbf16>
    %cst_15 = arith.constant dense<0.000000e+00> : vector<8x64xf32>
    %44 = tpu.matmul %43, %41, %cst_15 {dimension_numbers = #tpu.dot_dimension_numbers<[1], [0], [0], [1], [0, 0, 1, 1], [], []>} : vector<8x4xbf16>, vector<4x64xbf16>, vector<8x64xf32> -> vector<8x64xf32>
    %45 = arith.addf %34, %44 : vector<8x64xf32>
    %46 = vector.extract_strided_slice %11 {offsets = [0, 63], sizes = [4, 1], strides = [1, 1]} : vector<4x64xbf16> to vector<4x1xbf16>
    %47 = vector.extract_strided_slice %11 {offsets = [0, 0], sizes = [4, 63], strides = [1, 1]} : vector<4x64xbf16> to vector<4x63xbf16>
    %48 = tpu.concatenate %46, %47 in 1 : vector<4x1xbf16>, vector<4x63xbf16> -> vector<4x64xbf16>
    %49 = vector.extract_strided_slice %1 {offsets = [3, 0, 0], sizes = [1, 1, 64], strides = [1, 1, 1]} : vector<9x1x64xbf16> to vector<1x1x64xbf16>
    %50 = vector.shape_cast %49 : vector<1x1x64xbf16> to vector<1x64xbf16>
    %51 = vector.broadcast %50 : vector<1x64xbf16> to vector<4x64xbf16>
    %52 = arith.mulf %48, %51 : vector<4x64xbf16>
    %53 = vector.extract_strided_slice %0 {offsets = [3, 0, 0], sizes = [1, 8, 4], strides = [1, 1, 1]} : vector<9x8x4xbf16> to vector<1x8x4xbf16>
    %54 = vector.shape_cast %53 : vector<1x8x4xbf16> to vector<8x4xbf16>
    %cst_16 = arith.constant dense<0.000000e+00> : vector<8x64xf32>
    %55 = tpu.matmul %54, %52, %cst_16 {dimension_numbers = #tpu.dot_dimension_numbers<[1], [0], [0], [1], [0, 0, 1, 1], [], []>} : vector<8x4xbf16>, vector<4x64xbf16>, vector<8x64xf32> -> vector<8x64xf32>
    %56 = arith.addf %45, %55 : vector<8x64xf32>
    %57 = vector.extract_strided_slice %1 {offsets = [4, 0, 0], sizes = [1, 1, 64], strides = [1, 1, 1]} : vector<9x1x64xbf16> to vector<1x1x64xbf16>
    %58 = vector.shape_cast %57 : vector<1x1x64xbf16> to vector<1x64xbf16>
    %59 = vector.broadcast %58 : vector<1x64xbf16> to vector<4x64xbf16>
    %60 = arith.mulf %11, %59 : vector<4x64xbf16>
    %61 = vector.extract_strided_slice %0 {offsets = [4, 0, 0], sizes = [1, 8, 4], strides = [1, 1, 1]} : vector<9x8x4xbf16> to vector<1x8x4xbf16>
    %62 = vector.shape_cast %61 : vector<1x8x4xbf16> to vector<8x4xbf16>
    %cst_17 = arith.constant dense<0.000000e+00> : vector<8x64xf32>
    %63 = tpu.matmul %62, %60, %cst_17 {dimension_numbers = #tpu.dot_dimension_numbers<[1], [0], [0], [1], [0, 0, 1, 1], [], []>} : vector<8x4xbf16>, vector<4x64xbf16>, vector<8x64xf32> -> vector<8x64xf32>
    %64 = arith.addf %56, %63 : vector<8x64xf32>
    %65 = vector.extract_strided_slice %11 {offsets = [0, 1], sizes = [4, 63], strides = [1, 1]} : vector<4x64xbf16> to vector<4x63xbf16>
    %66 = vector.extract_strided_slice %11 {offsets = [0, 0], sizes = [4, 1], strides = [1, 1]} : vector<4x64xbf16> to vector<4x1xbf16>
    %67 = tpu.concatenate %65, %66 in 1 : vector<4x63xbf16>, vector<4x1xbf16> -> vector<4x64xbf16>
    %68 = vector.extract_strided_slice %1 {offsets = [5, 0, 0], sizes = [1, 1, 64], strides = [1, 1, 1]} : vector<9x1x64xbf16> to vector<1x1x64xbf16>
    %69 = vector.shape_cast %68 : vector<1x1x64xbf16> to vector<1x64xbf16>
    %70 = vector.broadcast %69 : vector<1x64xbf16> to vector<4x64xbf16>
    %71 = arith.mulf %67, %70 : vector<4x64xbf16>
    %72 = vector.extract_strided_slice %0 {offsets = [5, 0, 0], sizes = [1, 8, 4], strides = [1, 1, 1]} : vector<9x8x4xbf16> to vector<1x8x4xbf16>
    %73 = vector.shape_cast %72 : vector<1x8x4xbf16> to vector<8x4xbf16>
    %cst_18 = arith.constant dense<0.000000e+00> : vector<8x64xf32>
    %74 = tpu.matmul %73, %71, %cst_18 {dimension_numbers = #tpu.dot_dimension_numbers<[1], [0], [0], [1], [0, 0, 1, 1], [], []>} : vector<8x4xbf16>, vector<4x64xbf16>, vector<8x64xf32> -> vector<8x64xf32>
    %75 = arith.addf %64, %74 : vector<8x64xf32>
    %76 = vector.extract_strided_slice %11 {offsets = [0, 7], sizes = [4, 57], strides = [1, 1]} : vector<4x64xbf16> to vector<4x57xbf16>
    %77 = vector.extract_strided_slice %11 {offsets = [0, 0], sizes = [4, 7], strides = [1, 1]} : vector<4x64xbf16> to vector<4x7xbf16>
    %78 = tpu.concatenate %76, %77 in 1 : vector<4x57xbf16>, vector<4x7xbf16> -> vector<4x64xbf16>
    %79 = vector.extract_strided_slice %1 {offsets = [6, 0, 0], sizes = [1, 1, 64], strides = [1, 1, 1]} : vector<9x1x64xbf16> to vector<1x1x64xbf16>
    %80 = vector.shape_cast %79 : vector<1x1x64xbf16> to vector<1x64xbf16>
    %81 = vector.broadcast %80 : vector<1x64xbf16> to vector<4x64xbf16>
    %82 = arith.mulf %78, %81 : vector<4x64xbf16>
    %83 = vector.extract_strided_slice %0 {offsets = [6, 0, 0], sizes = [1, 8, 4], strides = [1, 1, 1]} : vector<9x8x4xbf16> to vector<1x8x4xbf16>
    %84 = vector.shape_cast %83 : vector<1x8x4xbf16> to vector<8x4xbf16>
    %cst_19 = arith.constant dense<0.000000e+00> : vector<8x64xf32>
    %85 = tpu.matmul %84, %82, %cst_19 {dimension_numbers = #tpu.dot_dimension_numbers<[1], [0], [0], [1], [0, 0, 1, 1], [], []>} : vector<8x4xbf16>, vector<4x64xbf16>, vector<8x64xf32> -> vector<8x64xf32>
    %86 = arith.addf %75, %85 : vector<8x64xf32>
    %87 = vector.extract_strided_slice %11 {offsets = [0, 8], sizes = [4, 56], strides = [1, 1]} : vector<4x64xbf16> to vector<4x56xbf16>
    %88 = vector.extract_strided_slice %11 {offsets = [0, 0], sizes = [4, 8], strides = [1, 1]} : vector<4x64xbf16> to vector<4x8xbf16>
    %89 = tpu.concatenate %87, %88 in 1 : vector<4x56xbf16>, vector<4x8xbf16> -> vector<4x64xbf16>
    %90 = vector.extract_strided_slice %1 {offsets = [7, 0, 0], sizes = [1, 1, 64], strides = [1, 1, 1]} : vector<9x1x64xbf16> to vector<1x1x64xbf16>
    %91 = vector.shape_cast %90 : vector<1x1x64xbf16> to vector<1x64xbf16>
    %92 = vector.broadcast %91 : vector<1x64xbf16> to vector<4x64xbf16>
    %93 = arith.mulf %89, %92 : vector<4x64xbf16>
    %94 = vector.extract_strided_slice %0 {offsets = [7, 0, 0], sizes = [1, 8, 4], strides = [1, 1, 1]} : vector<9x8x4xbf16> to vector<1x8x4xbf16>
    %95 = vector.shape_cast %94 : vector<1x8x4xbf16> to vector<8x4xbf16>
    %cst_20 = arith.constant dense<0.000000e+00> : vector<8x64xf32>
    %96 = tpu.matmul %95, %93, %cst_20 {dimension_numbers = #tpu.dot_dimension_numbers<[1], [0], [0], [1], [0, 0, 1, 1], [], []>} : vector<8x4xbf16>, vector<4x64xbf16>, vector<8x64xf32> -> vector<8x64xf32>
    %97 = arith.addf %86, %96 : vector<8x64xf32>
    %98 = vector.extract_strided_slice %11 {offsets = [0, 9], sizes = [4, 55], strides = [1, 1]} : vector<4x64xbf16> to vector<4x55xbf16>
    %99 = vector.extract_strided_slice %11 {offsets = [0, 0], sizes = [4, 9], strides = [1, 1]} : vector<4x64xbf16> to vector<4x9xbf16>
    %100 = tpu.concatenate %98, %99 in 1 : vector<4x55xbf16>, vector<4x9xbf16> -> vector<4x64xbf16>
    %101 = vector.extract_strided_slice %1 {offsets = [8, 0, 0], sizes = [1, 1, 64], strides = [1, 1, 1]} : vector<9x1x64xbf16> to vector<1x1x64xbf16>
    %102 = vector.shape_cast %101 : vector<1x1x64xbf16> to vector<1x64xbf16>
    %103 = vector.broadcast %102 : vector<1x64xbf16> to vector<4x64xbf16>
    %104 = arith.mulf %100, %103 : vector<4x64xbf16>
    %105 = vector.extract_strided_slice %0 {offsets = [8, 0, 0], sizes = [1, 8, 4], strides = [1, 1, 1]} : vector<9x8x4xbf16> to vector<1x8x4xbf16>
    %106 = vector.shape_cast %105 : vector<1x8x4xbf16> to vector<8x4xbf16>
    %cst_21 = arith.constant dense<0.000000e+00> : vector<8x64xf32>
    %107 = tpu.matmul %106, %104, %cst_21 {dimension_numbers = #tpu.dot_dimension_numbers<[1], [0], [0], [1], [0, 0, 1, 1], [], []>} : vector<8x4xbf16>, vector<4x64xbf16>, vector<8x64xf32> -> vector<8x64xf32>
    %108 = arith.addf %97, %107 : vector<8x64xf32>
    %109 = arith.truncf %108 : vector<8x64xf32> to vector<8x64xbf16>
    %c0_22 = arith.constant 0 : index
    %c0_23 = arith.constant 0 : index
    %c0_24 = arith.constant 0 : index
    %110 = vector.load %arg4[%c0_22, %c0_23, %c0_24] : memref<2x8x64xbf16, #tpu.memory_space<vmem>>, vector<1x8x64xbf16>
    %111 = vector.shape_cast %110 : vector<1x8x64xbf16> to vector<8x64xbf16>
    %112 = vector.shape_cast %109 : vector<8x64xbf16> to vector<1x8x64xbf16>
    tpu.vector_store %arg4[%c0_22, %c0_23, %c0_24], %112 {strides = array<i32>} : memref<2x8x64xbf16, #tpu.memory_space<vmem>>, vector<1x8x64xbf16>,
    %113 = arith.extf %109 : vector<8x64xbf16> to vector<8x64xf32>
    %cst_25 = arith.constant dense<0.000000e+00> : vector<8xf32>
    %114 = vector.multi_reduction <add>, %113, %cst_25 [1] : vector<8x64xf32> to vector<8xf32>
    %115 = vector.shape_cast %114 : vector<8xf32> to vector<8x1xf32>
    %116 = arith.addf %2, %115 : vector<8x1xf32>
    %117 = arith.mulf %113, %113 : vector<8x64xf32>
    %cst_26 = arith.constant dense<0.000000e+00> : vector<8xf32>
    %118 = vector.multi_reduction <add>, %117, %cst_26 [1] : vector<8x64xf32> to vector<8xf32>
    %119 = vector.shape_cast %118 : vector<8xf32> to vector<8x1xf32>
    %120 = arith.addf %3, %119 : vector<8x1xf32>
    %c1 = arith.constant 1 : index
    %c0_27 = arith.constant 0 : index
    %c0_28 = arith.constant 0 : index
    %c0_29 = arith.constant 0 : index
    %121 = vector.load %arg1[%c1, %c0_27, %c0_28, %c0_29] : memref<2x4x16x16xf32, #tpu.memory_space<vmem>>, vector<1x4x16x16xf32>
    %122 = vector.shape_cast %121 : vector<1x4x16x16xf32> to vector<4x16x16xf32>
    %123 = vector.shape_cast %122 : vector<4x16x16xf32> to vector<4x8x2x16xf32>
    %cst_30 = arith.constant dense<0xFF800000> : vector<4x8x16xf32>
    %124 = vector.multi_reduction <maximumf>, %123, %cst_30 [2] : vector<4x8x2x16xf32> to vector<4x8x16xf32>
    %125 = vector.shape_cast %124 : vector<4x8x16xf32> to vector<4x8x8x2xf32>
    %cst_31 = arith.constant dense<0xFF800000> : vector<4x8x8xf32>
    %126 = vector.multi_reduction <maximumf>, %125, %cst_31 [3] : vector<4x8x8x2xf32> to vector<4x8x8xf32>
    %127 = vector.shape_cast %126 : vector<4x8x8xf32> to vector<4x64xf32>
    %128 = arith.truncf %127 : vector<4x64xf32> to vector<4x64xbf16>
    %cst_32 = arith.constant 0.000000e+00 : f32
    %129 = vector.broadcast %cst_32 : f32 to vector<8x64xf32>
    %130 = vector.extract_strided_slice %128 {offsets = [0, 55], sizes = [4, 9], strides = [1, 1]} : vector<4x64xbf16> to vector<4x9xbf16>
    %131 = vector.extract_strided_slice %128 {offsets = [0, 0], sizes = [4, 55], strides = [1, 1]} : vector<4x64xbf16> to vector<4x55xbf16>
    %132 = tpu.concatenate %130, %131 in 1 : vector<4x9xbf16>, vector<4x55xbf16> -> vector<4x64xbf16>
    %133 = vector.extract_strided_slice %1 {offsets = [0, 0, 0], sizes = [1, 1, 64], strides = [1, 1, 1]} : vector<9x1x64xbf16> to vector<1x1x64xbf16>
    %134 = vector.shape_cast %133 : vector<1x1x64xbf16> to vector<1x64xbf16>
    %135 = vector.broadcast %134 : vector<1x64xbf16> to vector<4x64xbf16>
    %136 = arith.mulf %132, %135 : vector<4x64xbf16>
    %137 = vector.extract_strided_slice %0 {offsets = [0, 0, 0], sizes = [1, 8, 4], strides = [1, 1, 1]} : vector<9x8x4xbf16> to vector<1x8x4xbf16>
    %138 = vector.shape_cast %137 : vector<1x8x4xbf16> to vector<8x4xbf16>
    %cst_33 = arith.constant dense<0.000000e+00> : vector<8x64xf32>
    %139 = tpu.matmul %138, %136, %cst_33 {dimension_numbers = #tpu.dot_dimension_numbers<[1], [0], [0], [1], [0, 0, 1, 1], [], []>} : vector<8x4xbf16>, vector<4x64xbf16>, vector<8x64xf32> -> vector<8x64xf32>
    %140 = arith.addf %129, %139 : vector<8x64xf32>
    %141 = vector.extract_strided_slice %128 {offsets = [0, 56], sizes = [4, 8], strides = [1, 1]} : vector<4x64xbf16> to vector<4x8xbf16>
    %142 = vector.extract_strided_slice %128 {offsets = [0, 0], sizes = [4, 56], strides = [1, 1]} : vector<4x64xbf16> to vector<4x56xbf16>
    %143 = tpu.concatenate %141, %142 in 1 : vector<4x8xbf16>, vector<4x56xbf16> -> vector<4x64xbf16>
    %144 = vector.extract_strided_slice %1 {offsets = [1, 0, 0], sizes = [1, 1, 64], strides = [1, 1, 1]} : vector<9x1x64xbf16> to vector<1x1x64xbf16>
    %145 = vector.shape_cast %144 : vector<1x1x64xbf16> to vector<1x64xbf16>
    %146 = vector.broadcast %145 : vector<1x64xbf16> to vector<4x64xbf16>
    %147 = arith.mulf %143, %146 : vector<4x64xbf16>
    %148 = vector.extract_strided_slice %0 {offsets = [1, 0, 0], sizes = [1, 8, 4], strides = [1, 1, 1]} : vector<9x8x4xbf16> to vector<1x8x4xbf16>
    %149 = vector.shape_cast %148 : vector<1x8x4xbf16> to vector<8x4xbf16>
    %cst_34 = arith.constant dense<0.000000e+00> : vector<8x64xf32>
    %150 = tpu.matmul %149, %147, %cst_34 {dimension_numbers = #tpu.dot_dimension_numbers<[1], [0], [0], [1], [0, 0, 1, 1], [], []>} : vector<8x4xbf16>, vector<4x64xbf16>, vector<8x64xf32> -> vector<8x64xf32>
    %151 = arith.addf %140, %150 : vector<8x64xf32>
    %152 = vector.extract_strided_slice %128 {offsets = [0, 57], sizes = [4, 7], strides = [1, 1]} : vector<4x64xbf16> to vector<4x7xbf16>
    %153 = vector.extract_strided_slice %128 {offsets = [0, 0], sizes = [4, 57], strides = [1, 1]} : vector<4x64xbf16> to vector<4x57xbf16>
    %154 = tpu.concatenate %152, %153 in 1 : vector<4x7xbf16>, vector<4x57xbf16> -> vector<4x64xbf16>
    %155 = vector.extract_strided_slice %1 {offsets = [2, 0, 0], sizes = [1, 1, 64], strides = [1, 1, 1]} : vector<9x1x64xbf16> to vector<1x1x64xbf16>
    %156 = vector.shape_cast %155 : vector<1x1x64xbf16> to vector<1x64xbf16>
    %157 = vector.broadcast %156 : vector<1x64xbf16> to vector<4x64xbf16>
    %158 = arith.mulf %154, %157 : vector<4x64xbf16>
    %159 = vector.extract_strided_slice %0 {offsets = [2, 0, 0], sizes = [1, 8, 4], strides = [1, 1, 1]} : vector<9x8x4xbf16> to vector<1x8x4xbf16>
    %160 = vector.shape_cast %159 : vector<1x8x4xbf16> to vector<8x4xbf16>
    %cst_35 = arith.constant dense<0.000000e+00> : vector<8x64xf32>
    %161 = tpu.matmul %160, %158, %cst_35 {dimension_numbers = #tpu.dot_dimension_numbers<[1], [0], [0], [1], [0, 0, 1, 1], [], []>} : vector<8x4xbf16>, vector<4x64xbf16>, vector<8x64xf32> -> vector<8x64xf32>
    %162 = arith.addf %151, %161 : vector<8x64xf32>
    %163 = vector.extract_strided_slice %128 {offsets = [0, 63], sizes = [4, 1], strides = [1, 1]} : vector<4x64xbf16> to vector<4x1xbf16>
    %164 = vector.extract_strided_slice %128 {offsets = [0, 0], sizes = [4, 63], strides = [1, 1]} : vector<4x64xbf16> to vector<4x63xbf16>
    %165 = tpu.concatenate %163, %164 in 1 : vector<4x1xbf16>, vector<4x63xbf16> -> vector<4x64xbf16>
    %166 = vector.extract_strided_slice %1 {offsets = [3, 0, 0], sizes = [1, 1, 64], strides = [1, 1, 1]} : vector<9x1x64xbf16> to vector<1x1x64xbf16>
    %167 = vector.shape_cast %166 : vector<1x1x64xbf16> to vector<1x64xbf16>
    %168 = vector.broadcast %167 : vector<1x64xbf16> to vector<4x64xbf16>
    %169 = arith.mulf %165, %168 : vector<4x64xbf16>
    %170 = vector.extract_strided_slice %0 {offsets = [3, 0, 0], sizes = [1, 8, 4], strides = [1, 1, 1]} : vector<9x8x4xbf16> to vector<1x8x4xbf16>
    %171 = vector.shape_cast %170 : vector<1x8x4xbf16> to vector<8x4xbf16>
    %cst_36 = arith.constant dense<0.000000e+00> : vector<8x64xf32>
    %172 = tpu.matmul %171, %169, %cst_36 {dimension_numbers = #tpu.dot_dimension_numbers<[1], [0], [0], [1], [0, 0, 1, 1], [], []>} : vector<8x4xbf16>, vector<4x64xbf16>, vector<8x64xf32> -> vector<8x64xf32>
    %173 = arith.addf %162, %172 : vector<8x64xf32>
    %174 = vector.extract_strided_slice %1 {offsets = [4, 0, 0], sizes = [1, 1, 64], strides = [1, 1, 1]} : vector<9x1x64xbf16> to vector<1x1x64xbf16>
    %175 = vector.shape_cast %174 : vector<1x1x64xbf16> to vector<1x64xbf16>
    %176 = vector.broadcast %175 : vector<1x64xbf16> to vector<4x64xbf16>
    %177 = arith.mulf %128, %176 : vector<4x64xbf16>
    %178 = vector.extract_strided_slice %0 {offsets = [4, 0, 0], sizes = [1, 8, 4], strides = [1, 1, 1]} : vector<9x8x4xbf16> to vector<1x8x4xbf16>
    %179 = vector.shape_cast %178 : vector<1x8x4xbf16> to vector<8x4xbf16>
    %cst_37 = arith.constant dense<0.000000e+00> : vector<8x64xf32>
    %180 = tpu.matmul %179, %177, %cst_37 {dimension_numbers = #tpu.dot_dimension_numbers<[1], [0], [0], [1], [0, 0, 1, 1], [], []>} : vector<8x4xbf16>, vector<4x64xbf16>, vector<8x64xf32> -> vector<8x64xf32>
    %181 = arith.addf %173, %180 : vector<8x64xf32>
    %182 = vector.extract_strided_slice %128 {offsets = [0, 1], sizes = [4, 63], strides = [1, 1]} : vector<4x64xbf16> to vector<4x63xbf16>
    %183 = vector.extract_strided_slice %128 {offsets = [0, 0], sizes = [4, 1], strides = [1, 1]} : vector<4x64xbf16> to vector<4x1xbf16>
    %184 = tpu.concatenate %182, %183 in 1 : vector<4x63xbf16>, vector<4x1xbf16> -> vector<4x64xbf16>
    %185 = vector.extract_strided_slice %1 {offsets = [5, 0, 0], sizes = [1, 1, 64], strides = [1, 1, 1]} : vector<9x1x64xbf16> to vector<1x1x64xbf16>
    %186 = vector.shape_cast %185 : vector<1x1x64xbf16> to vector<1x64xbf16>
    %187 = vector.broadcast %186 : vector<1x64xbf16> to vector<4x64xbf16>
    %188 = arith.mulf %184, %187 : vector<4x64xbf16>
    %189 = vector.extract_strided_slice %0 {offsets = [5, 0, 0], sizes = [1, 8, 4], strides = [1, 1, 1]} : vector<9x8x4xbf16> to vector<1x8x4xbf16>
    %190 = vector.shape_cast %189 : vector<1x8x4xbf16> to vector<8x4xbf16>
    %cst_38 = arith.constant dense<0.000000e+00> : vector<8x64xf32>
    %191 = tpu.matmul %190, %188, %cst_38 {dimension_numbers = #tpu.dot_dimension_numbers<[1], [0], [0], [1], [0, 0, 1, 1], [], []>} : vector<8x4xbf16>, vector<4x64xbf16>, vector<8x64xf32> -> vector<8x64xf32>
    %192 = arith.addf %181, %191 : vector<8x64xf32>
    %193 = vector.extract_strided_slice %128 {offsets = [0, 7], sizes = [4, 57], strides = [1, 1]} : vector<4x64xbf16> to vector<4x57xbf16>
    %194 = vector.extract_strided_slice %128 {offsets = [0, 0], sizes = [4, 7], strides = [1, 1]} : vector<4x64xbf16> to vector<4x7xbf16>
    %195 = tpu.concatenate %193, %194 in 1 : vector<4x57xbf16>, vector<4x7xbf16> -> vector<4x64xbf16>
    %196 = vector.extract_strided_slice %1 {offsets = [6, 0, 0], sizes = [1, 1, 64], strides = [1, 1, 1]} : vector<9x1x64xbf16> to vector<1x1x64xbf16>
    %197 = vector.shape_cast %196 : vector<1x1x64xbf16> to vector<1x64xbf16>
    %198 = vector.broadcast %197 : vector<1x64xbf16> to vector<4x64xbf16>
    %199 = arith.mulf %195, %198 : vector<4x64xbf16>
    %200 = vector.extract_strided_slice %0 {offsets = [6, 0, 0], sizes = [1, 8, 4], strides = [1, 1, 1]} : vector<9x8x4xbf16> to vector<1x8x4xbf16>
    %201 = vector.shape_cast %200 : vector<1x8x4xbf16> to vector<8x4xbf16>
    %cst_39 = arith.constant dense<0.000000e+00> : vector<8x64xf32>
    %202 = tpu.matmul %201, %199, %cst_39 {dimension_numbers = #tpu.dot_dimension_numbers<[1], [0], [0], [1], [0, 0, 1, 1], [], []>} : vector<8x4xbf16>, vector<4x64xbf16>, vector<8x64xf32> -> vector<8x64xf32>
    %203 = arith.addf %192, %202 : vector<8x64xf32>
    %204 = vector.extract_strided_slice %128 {offsets = [0, 8], sizes = [4, 56], strides = [1, 1]} : vector<4x64xbf16> to vector<4x56xbf16>
    %205 = vector.extract_strided_slice %128 {offsets = [0, 0], sizes = [4, 8], strides = [1, 1]} : vector<4x64xbf16> to vector<4x8xbf16>
    %206 = tpu.concatenate %204, %205 in 1 : vector<4x56xbf16>, vector<4x8xbf16> -> vector<4x64xbf16>
    %207 = vector.extract_strided_slice %1 {offsets = [7, 0, 0], sizes = [1, 1, 64], strides = [1, 1, 1]} : vector<9x1x64xbf16> to vector<1x1x64xbf16>
    %208 = vector.shape_cast %207 : vector<1x1x64xbf16> to vector<1x64xbf16>
    %209 = vector.broadcast %208 : vector<1x64xbf16> to vector<4x64xbf16>
    %210 = arith.mulf %206, %209 : vector<4x64xbf16>
    %211 = vector.extract_strided_slice %0 {offsets = [7, 0, 0], sizes = [1, 8, 4], strides = [1, 1, 1]} : vector<9x8x4xbf16> to vector<1x8x4xbf16>
    %212 = vector.shape_cast %211 : vector<1x8x4xbf16> to vector<8x4xbf16>
    %cst_40 = arith.constant dense<0.000000e+00> : vector<8x64xf32>
    %213 = tpu.matmul %212, %210, %cst_40 {dimension_numbers = #tpu.dot_dimension_numbers<[1], [0], [0], [1], [0, 0, 1, 1], [], []>} : vector<8x4xbf16>, vector<4x64xbf16>, vector<8x64xf32> -> vector<8x64xf32>
    %214 = arith.addf %203, %213 : vector<8x64xf32>
    %215 = vector.extract_strided_slice %128 {offsets = [0, 9], sizes = [4, 55], strides = [1, 1]} : vector<4x64xbf16> to vector<4x55xbf16>
    %216 = vector.extract_strided_slice %128 {offsets = [0, 0], sizes = [4, 9], strides = [1, 1]} : vector<4x64xbf16> to vector<4x9xbf16>
    %217 = tpu.concatenate %215, %216 in 1 : vector<4x55xbf16>, vector<4x9xbf16> -> vector<4x64xbf16>
    %218 = vector.extract_strided_slice %1 {offsets = [8, 0, 0], sizes = [1, 1, 64], strides = [1, 1, 1]} : vector<9x1x64xbf16> to vector<1x1x64xbf16>
    %219 = vector.shape_cast %218 : vector<1x1x64xbf16> to vector<1x64xbf16>
    %220 = vector.broadcast %219 : vector<1x64xbf16> to vector<4x64xbf16>
    %221 = arith.mulf %217, %220 : vector<4x64xbf16>
    %222 = vector.extract_strided_slice %0 {offsets = [8, 0, 0], sizes = [1, 8, 4], strides = [1, 1, 1]} : vector<9x8x4xbf16> to vector<1x8x4xbf16>
    %223 = vector.shape_cast %222 : vector<1x8x4xbf16> to vector<8x4xbf16>
    %cst_41 = arith.constant dense<0.000000e+00> : vector<8x64xf32>
    %224 = tpu.matmul %223, %221, %cst_41 {dimension_numbers = #tpu.dot_dimension_numbers<[1], [0], [0], [1], [0, 0, 1, 1], [], []>} : vector<8x4xbf16>, vector<4x64xbf16>, vector<8x64xf32> -> vector<8x64xf32>
    %225 = arith.addf %214, %224 : vector<8x64xf32>
    %226 = arith.truncf %225 : vector<8x64xf32> to vector<8x64xbf16>
    %c1_42 = arith.constant 1 : index
    %c0_43 = arith.constant 0 : index
    %c0_44 = arith.constant 0 : index
    %227 = vector.load %arg4[%c1_42, %c0_43, %c0_44] : memref<2x8x64xbf16, #tpu.memory_space<vmem>>, vector<1x8x64xbf16>
    %228 = vector.shape_cast %227 : vector<1x8x64xbf16> to vector<8x64xbf16>
    %229 = vector.shape_cast %226 : vector<8x64xbf16> to vector<1x8x64xbf16>
    tpu.vector_store %arg4[%c1_42, %c0_43, %c0_44], %229 {strides = array<i32>} : memref<2x8x64xbf16, #tpu.memory_space<vmem>>, vector<1x8x64xbf16>,
    %230 = arith.extf %226 : vector<8x64xbf16> to vector<8x64xf32>
    %cst_45 = arith.constant dense<0.000000e+00> : vector<8xf32>
    %231 = vector.multi_reduction <add>, %230, %cst_45 [1] : vector<8x64xf32> to vector<8xf32>
    %232 = vector.shape_cast %231 : vector<8xf32> to vector<8x1xf32>
    %233 = arith.addf %116, %232 : vector<8x1xf32>
    %234 = arith.mulf %230, %230 : vector<8x64xf32>
    %cst_46 = arith.constant dense<0.000000e+00> : vector<8xf32>
    %235 = vector.multi_reduction <add>, %234, %cst_46 [1] : vector<8x64xf32> to vector<8xf32>
    %236 = vector.shape_cast %235 : vector<8xf32> to vector<8x1xf32>
    %237 = arith.addf %120, %236 : vector<8x1xf32>
    %c0_47 = arith.constant 0 : index
    %c0_48 = arith.constant 0 : index
    %c0_49 = arith.constant 0 : index
    %238 = vector.load %arg5[%c0_47, %c0_48, %c0_49] : memref<1x8x1xf32, #tpu.memory_space<vmem>>, vector<1x8x1xf32>
    %239 = vector.shape_cast %238 : vector<1x8x1xf32> to vector<8x1xf32>
    %240 = vector.shape_cast %233 : vector<8x1xf32> to vector<1x8x1xf32>
    tpu.vector_store %arg5[%c0_47, %c0_48, %c0_49], %240 {strides = array<i32>} : memref<1x8x1xf32, #tpu.memory_space<vmem>>, vector<1x8x1xf32>,
    %c0_50 = arith.constant 0 : index
    %c0_51 = arith.constant 0 : index
    %c0_52 = arith.constant 0 : index
    %241 = vector.load %arg6[%c0_50, %c0_51, %c0_52] : memref<1x8x1xf32, #tpu.memory_space<vmem>>, vector<1x8x1xf32>
    %242 = vector.shape_cast %241 : vector<1x8x1xf32> to vector<8x1xf32>
    %243 = vector.shape_cast %237 : vector<8x1xf32> to vector<1x8x1xf32>
    tpu.vector_store %arg6[%c0_50, %c0_51, %c0_52], %243 {strides = array<i32>} : memref<1x8x1xf32, #tpu.memory_space<vmem>>, vector<1x8x1xf32>,
    return
  }
  func.func @transform_0(%arg0: i32) -> (i32, i32, i32, i32) {
    %c0_i32 = arith.constant 0 : i32
    %c0_i32_0 = arith.constant 0 : i32
    %c0_i32_1 = arith.constant 0 : i32
    %c0_i32_2 = arith.constant 0 : i32
    return %arg0, %c0_i32, %c0_i32_0, %c0_i32_1 : i32, i32, i32, i32
  }
  func.func @transform_1(%arg0: i32) -> (i32, i32, i32) {
    %c0_i32 = arith.constant 0 : i32
    %c0_i32_0 = arith.constant 0 : i32
    %c0_i32_1 = arith.constant 0 : i32
    %c0_i32_2 = arith.constant 0 : i32
    return %c0_i32, %c0_i32_0, %c0_i32_1 : i32, i32, i32
  }
  func.func @transform_2(%arg0: i32) -> (i32, i32, i32) {
    %c0_i32 = arith.constant 0 : i32
    %c0_i32_0 = arith.constant 0 : i32
    %c0_i32_1 = arith.constant 0 : i32
    %c0_i32_2 = arith.constant 0 : i32
    return %c0_i32, %c0_i32_0, %c0_i32_1 : i32, i32, i32
  }
  func.func @transform_3(%arg0: i32) -> (i32, i32, i32) {
    %c0_i32 = arith.constant 0 : i32
    %c0_i32_0 = arith.constant 0 : i32
    %c0_i32_1 = arith.constant 0 : i32
    return %arg0, %c0_i32, %c0_i32_0 : i32, i32, i32
  }
  func.func @transform_4(%arg0: i32) -> (i32, i32, i32) {
    %c0_i32 = arith.constant 0 : i32
    %c0_i32_0 = arith.constant 0 : i32
    %c0_i32_1 = arith.constant 0 : i32
    return %arg0, %c0_i32, %c0_i32_0 : i32, i32, i32
  }
  func.func @transform_5(%arg0: i32) -> (i32, i32, i32) {
    %c0_i32 = arith.constant 0 : i32
    %c0_i32_0 = arith.constant 0 : i32
    %c0_i32_1 = arith.constant 0 : i32
    return %arg0, %c0_i32, %c0_i32_0 : i32, i32, i32
  }
}

module attributes {stable_mosaic.version = 11 : i64} {
  func.func @_bnrelu_conv2_kernel(%arg0: i32, %arg1: memref<2x8x64xbf16, #tpu.memory_space<vmem>>, %arg2: memref<8x1xf32, #tpu.memory_space<vmem>>, %arg3: memref<8x1xf32, #tpu.memory_space<vmem>>, %arg4: memref<9x8x8xbf16, #tpu.memory_space<vmem>>, %arg5: memref<9x1x64xbf16, #tpu.memory_space<vmem>>, %arg6: memref<2x8x64xbf16, #tpu.memory_space<vmem>>, %arg7: memref<1x8x1xf32, #tpu.memory_space<vmem>>, %arg8: memref<1x8x1xf32, #tpu.memory_space<vmem>>) attributes {dimension_semantics = [#tpu.dimension_semantics<parallel>], iteration_bounds = array<i64: 1>, scalar_prefetch = 0 : i64, scratch_operands = 0 : i64, tpu.core_type = #tpu.core_type<tc>, window_params = [{transform_indices = @transform_0, window_bounds = array<i64: 2, 8, 64>}, {pipeline_mode = #tpu.pipeline_mode<synchronous>, transform_indices = @transform_1, window_bounds = array<i64: 8, 1>}, {pipeline_mode = #tpu.pipeline_mode<synchronous>, transform_indices = @transform_2, window_bounds = array<i64: 8, 1>}, {pipeline_mode = #tpu.pipeline_mode<synchronous>, transform_indices = @transform_3, window_bounds = array<i64: 9, 8, 8>}, {pipeline_mode = #tpu.pipeline_mode<synchronous>, transform_indices = @transform_4, window_bounds = array<i64: 9, 1, 64>}, {transform_indices = @transform_5, window_bounds = array<i64: 2, 8, 64>}, {transform_indices = @transform_6, window_bounds = array<i64: 1, 8, 1>}, {transform_indices = @transform_7, window_bounds = array<i64: 1, 8, 1>}]} {
    %c0 = arith.constant 0 : index
    %c0_0 = arith.constant 0 : index
    %c0_1 = arith.constant 0 : index
    %0 = vector.load %arg4[%c0, %c0_0, %c0_1] : memref<9x8x8xbf16, #tpu.memory_space<vmem>>, vector<9x8x8xbf16>
    %c0_2 = arith.constant 0 : index
    %c0_3 = arith.constant 0 : index
    %c0_4 = arith.constant 0 : index
    %1 = vector.load %arg5[%c0_2, %c0_3, %c0_4] : memref<9x1x64xbf16, #tpu.memory_space<vmem>>, vector<9x1x64xbf16>
    %c0_5 = arith.constant 0 : index
    %c0_6 = arith.constant 0 : index
    %2 = vector.load %arg2[%c0_5, %c0_6] : memref<8x1xf32, #tpu.memory_space<vmem>>, vector<8x1xf32>
    %c0_7 = arith.constant 0 : index
    %c0_8 = arith.constant 0 : index
    %3 = vector.load %arg3[%c0_7, %c0_8] : memref<8x1xf32, #tpu.memory_space<vmem>>, vector<8x1xf32>
    %cst = arith.constant 0.000000e+00 : f32
    %4 = vector.broadcast %cst : f32 to vector<8x1xf32>
    %cst_9 = arith.constant 0.000000e+00 : f32
    %5 = vector.broadcast %cst_9 : f32 to vector<8x1xf32>
    %c0_10 = arith.constant 0 : index
    %c0_11 = arith.constant 0 : index
    %c0_12 = arith.constant 0 : index
    %6 = vector.load %arg1[%c0_10, %c0_11, %c0_12] : memref<2x8x64xbf16, #tpu.memory_space<vmem>>, vector<1x8x64xbf16>
    %7 = vector.shape_cast %6 : vector<1x8x64xbf16> to vector<8x64xbf16>
    %8 = arith.extf %7 : vector<8x64xbf16> to vector<8x64xf32>
    %9 = vector.broadcast %2 : vector<8x1xf32> to vector<8x64xf32>
    %10 = arith.mulf %8, %9 : vector<8x64xf32>
    %11 = vector.broadcast %3 : vector<8x1xf32> to vector<8x64xf32>
    %12 = arith.addf %10, %11 : vector<8x64xf32>
    %cst_13 = arith.constant 0.000000e+00 : f32
    %13 = vector.broadcast %cst_13 : f32 to vector<8x64xf32>
    %14 = arith.maximumf %12, %13 : vector<8x64xf32>
    %15 = arith.truncf %14 : vector<8x64xf32> to vector<8x64xbf16>
    %cst_14 = arith.constant 0.000000e+00 : f32
    %16 = vector.broadcast %cst_14 : f32 to vector<8x64xf32>
    %17 = vector.extract_strided_slice %15 {offsets = [0, 55], sizes = [8, 9], strides = [1, 1]} : vector<8x64xbf16> to vector<8x9xbf16>
    %18 = vector.extract_strided_slice %15 {offsets = [0, 0], sizes = [8, 55], strides = [1, 1]} : vector<8x64xbf16> to vector<8x55xbf16>
    %19 = tpu.concatenate %17, %18 in 1 : vector<8x9xbf16>, vector<8x55xbf16> -> vector<8x64xbf16>
    %20 = vector.extract_strided_slice %1 {offsets = [0, 0, 0], sizes = [1, 1, 64], strides = [1, 1, 1]} : vector<9x1x64xbf16> to vector<1x1x64xbf16>
    %21 = vector.shape_cast %20 : vector<1x1x64xbf16> to vector<1x64xbf16>
    %22 = vector.broadcast %21 : vector<1x64xbf16> to vector<8x64xbf16>
    %23 = arith.mulf %19, %22 : vector<8x64xbf16>
    %24 = vector.extract_strided_slice %0 {offsets = [0, 0, 0], sizes = [1, 8, 8], strides = [1, 1, 1]} : vector<9x8x8xbf16> to vector<1x8x8xbf16>
    %25 = vector.shape_cast %24 : vector<1x8x8xbf16> to vector<8x8xbf16>
    %cst_15 = arith.constant dense<0.000000e+00> : vector<8x64xf32>
    %26 = tpu.matmul %25, %23, %cst_15 {dimension_numbers = #tpu.dot_dimension_numbers<[1], [0], [0], [1], [0, 0, 1, 1], [], []>} : vector<8x8xbf16>, vector<8x64xbf16>, vector<8x64xf32> -> vector<8x64xf32>
    %27 = arith.addf %16, %26 : vector<8x64xf32>
    %28 = vector.extract_strided_slice %15 {offsets = [0, 56], sizes = [8, 8], strides = [1, 1]} : vector<8x64xbf16> to vector<8x8xbf16>
    %29 = vector.extract_strided_slice %15 {offsets = [0, 0], sizes = [8, 56], strides = [1, 1]} : vector<8x64xbf16> to vector<8x56xbf16>
    %30 = tpu.concatenate %28, %29 in 1 : vector<8x8xbf16>, vector<8x56xbf16> -> vector<8x64xbf16>
    %31 = vector.extract_strided_slice %1 {offsets = [1, 0, 0], sizes = [1, 1, 64], strides = [1, 1, 1]} : vector<9x1x64xbf16> to vector<1x1x64xbf16>
    %32 = vector.shape_cast %31 : vector<1x1x64xbf16> to vector<1x64xbf16>
    %33 = vector.broadcast %32 : vector<1x64xbf16> to vector<8x64xbf16>
    %34 = arith.mulf %30, %33 : vector<8x64xbf16>
    %35 = vector.extract_strided_slice %0 {offsets = [1, 0, 0], sizes = [1, 8, 8], strides = [1, 1, 1]} : vector<9x8x8xbf16> to vector<1x8x8xbf16>
    %36 = vector.shape_cast %35 : vector<1x8x8xbf16> to vector<8x8xbf16>
    %cst_16 = arith.constant dense<0.000000e+00> : vector<8x64xf32>
    %37 = tpu.matmul %36, %34, %cst_16 {dimension_numbers = #tpu.dot_dimension_numbers<[1], [0], [0], [1], [0, 0, 1, 1], [], []>} : vector<8x8xbf16>, vector<8x64xbf16>, vector<8x64xf32> -> vector<8x64xf32>
    %38 = arith.addf %27, %37 : vector<8x64xf32>
    %39 = vector.extract_strided_slice %15 {offsets = [0, 57], sizes = [8, 7], strides = [1, 1]} : vector<8x64xbf16> to vector<8x7xbf16>
    %40 = vector.extract_strided_slice %15 {offsets = [0, 0], sizes = [8, 57], strides = [1, 1]} : vector<8x64xbf16> to vector<8x57xbf16>
    %41 = tpu.concatenate %39, %40 in 1 : vector<8x7xbf16>, vector<8x57xbf16> -> vector<8x64xbf16>
    %42 = vector.extract_strided_slice %1 {offsets = [2, 0, 0], sizes = [1, 1, 64], strides = [1, 1, 1]} : vector<9x1x64xbf16> to vector<1x1x64xbf16>
    %43 = vector.shape_cast %42 : vector<1x1x64xbf16> to vector<1x64xbf16>
    %44 = vector.broadcast %43 : vector<1x64xbf16> to vector<8x64xbf16>
    %45 = arith.mulf %41, %44 : vector<8x64xbf16>
    %46 = vector.extract_strided_slice %0 {offsets = [2, 0, 0], sizes = [1, 8, 8], strides = [1, 1, 1]} : vector<9x8x8xbf16> to vector<1x8x8xbf16>
    %47 = vector.shape_cast %46 : vector<1x8x8xbf16> to vector<8x8xbf16>
    %cst_17 = arith.constant dense<0.000000e+00> : vector<8x64xf32>
    %48 = tpu.matmul %47, %45, %cst_17 {dimension_numbers = #tpu.dot_dimension_numbers<[1], [0], [0], [1], [0, 0, 1, 1], [], []>} : vector<8x8xbf16>, vector<8x64xbf16>, vector<8x64xf32> -> vector<8x64xf32>
    %49 = arith.addf %38, %48 : vector<8x64xf32>
    %50 = vector.extract_strided_slice %15 {offsets = [0, 63], sizes = [8, 1], strides = [1, 1]} : vector<8x64xbf16> to vector<8x1xbf16>
    %51 = vector.extract_strided_slice %15 {offsets = [0, 0], sizes = [8, 63], strides = [1, 1]} : vector<8x64xbf16> to vector<8x63xbf16>
    %52 = tpu.concatenate %50, %51 in 1 : vector<8x1xbf16>, vector<8x63xbf16> -> vector<8x64xbf16>
    %53 = vector.extract_strided_slice %1 {offsets = [3, 0, 0], sizes = [1, 1, 64], strides = [1, 1, 1]} : vector<9x1x64xbf16> to vector<1x1x64xbf16>
    %54 = vector.shape_cast %53 : vector<1x1x64xbf16> to vector<1x64xbf16>
    %55 = vector.broadcast %54 : vector<1x64xbf16> to vector<8x64xbf16>
    %56 = arith.mulf %52, %55 : vector<8x64xbf16>
    %57 = vector.extract_strided_slice %0 {offsets = [3, 0, 0], sizes = [1, 8, 8], strides = [1, 1, 1]} : vector<9x8x8xbf16> to vector<1x8x8xbf16>
    %58 = vector.shape_cast %57 : vector<1x8x8xbf16> to vector<8x8xbf16>
    %cst_18 = arith.constant dense<0.000000e+00> : vector<8x64xf32>
    %59 = tpu.matmul %58, %56, %cst_18 {dimension_numbers = #tpu.dot_dimension_numbers<[1], [0], [0], [1], [0, 0, 1, 1], [], []>} : vector<8x8xbf16>, vector<8x64xbf16>, vector<8x64xf32> -> vector<8x64xf32>
    %60 = arith.addf %49, %59 : vector<8x64xf32>
    %61 = vector.extract_strided_slice %1 {offsets = [4, 0, 0], sizes = [1, 1, 64], strides = [1, 1, 1]} : vector<9x1x64xbf16> to vector<1x1x64xbf16>
    %62 = vector.shape_cast %61 : vector<1x1x64xbf16> to vector<1x64xbf16>
    %63 = vector.broadcast %62 : vector<1x64xbf16> to vector<8x64xbf16>
    %64 = arith.mulf %15, %63 : vector<8x64xbf16>
    %65 = vector.extract_strided_slice %0 {offsets = [4, 0, 0], sizes = [1, 8, 8], strides = [1, 1, 1]} : vector<9x8x8xbf16> to vector<1x8x8xbf16>
    %66 = vector.shape_cast %65 : vector<1x8x8xbf16> to vector<8x8xbf16>
    %cst_19 = arith.constant dense<0.000000e+00> : vector<8x64xf32>
    %67 = tpu.matmul %66, %64, %cst_19 {dimension_numbers = #tpu.dot_dimension_numbers<[1], [0], [0], [1], [0, 0, 1, 1], [], []>} : vector<8x8xbf16>, vector<8x64xbf16>, vector<8x64xf32> -> vector<8x64xf32>
    %68 = arith.addf %60, %67 : vector<8x64xf32>
    %69 = vector.extract_strided_slice %15 {offsets = [0, 1], sizes = [8, 63], strides = [1, 1]} : vector<8x64xbf16> to vector<8x63xbf16>
    %70 = vector.extract_strided_slice %15 {offsets = [0, 0], sizes = [8, 1], strides = [1, 1]} : vector<8x64xbf16> to vector<8x1xbf16>
    %71 = tpu.concatenate %69, %70 in 1 : vector<8x63xbf16>, vector<8x1xbf16> -> vector<8x64xbf16>
    %72 = vector.extract_strided_slice %1 {offsets = [5, 0, 0], sizes = [1, 1, 64], strides = [1, 1, 1]} : vector<9x1x64xbf16> to vector<1x1x64xbf16>
    %73 = vector.shape_cast %72 : vector<1x1x64xbf16> to vector<1x64xbf16>
    %74 = vector.broadcast %73 : vector<1x64xbf16> to vector<8x64xbf16>
    %75 = arith.mulf %71, %74 : vector<8x64xbf16>
    %76 = vector.extract_strided_slice %0 {offsets = [5, 0, 0], sizes = [1, 8, 8], strides = [1, 1, 1]} : vector<9x8x8xbf16> to vector<1x8x8xbf16>
    %77 = vector.shape_cast %76 : vector<1x8x8xbf16> to vector<8x8xbf16>
    %cst_20 = arith.constant dense<0.000000e+00> : vector<8x64xf32>
    %78 = tpu.matmul %77, %75, %cst_20 {dimension_numbers = #tpu.dot_dimension_numbers<[1], [0], [0], [1], [0, 0, 1, 1], [], []>} : vector<8x8xbf16>, vector<8x64xbf16>, vector<8x64xf32> -> vector<8x64xf32>
    %79 = arith.addf %68, %78 : vector<8x64xf32>
    %80 = vector.extract_strided_slice %15 {offsets = [0, 7], sizes = [8, 57], strides = [1, 1]} : vector<8x64xbf16> to vector<8x57xbf16>
    %81 = vector.extract_strided_slice %15 {offsets = [0, 0], sizes = [8, 7], strides = [1, 1]} : vector<8x64xbf16> to vector<8x7xbf16>
    %82 = tpu.concatenate %80, %81 in 1 : vector<8x57xbf16>, vector<8x7xbf16> -> vector<8x64xbf16>
    %83 = vector.extract_strided_slice %1 {offsets = [6, 0, 0], sizes = [1, 1, 64], strides = [1, 1, 1]} : vector<9x1x64xbf16> to vector<1x1x64xbf16>
    %84 = vector.shape_cast %83 : vector<1x1x64xbf16> to vector<1x64xbf16>
    %85 = vector.broadcast %84 : vector<1x64xbf16> to vector<8x64xbf16>
    %86 = arith.mulf %82, %85 : vector<8x64xbf16>
    %87 = vector.extract_strided_slice %0 {offsets = [6, 0, 0], sizes = [1, 8, 8], strides = [1, 1, 1]} : vector<9x8x8xbf16> to vector<1x8x8xbf16>
    %88 = vector.shape_cast %87 : vector<1x8x8xbf16> to vector<8x8xbf16>
    %cst_21 = arith.constant dense<0.000000e+00> : vector<8x64xf32>
    %89 = tpu.matmul %88, %86, %cst_21 {dimension_numbers = #tpu.dot_dimension_numbers<[1], [0], [0], [1], [0, 0, 1, 1], [], []>} : vector<8x8xbf16>, vector<8x64xbf16>, vector<8x64xf32> -> vector<8x64xf32>
    %90 = arith.addf %79, %89 : vector<8x64xf32>
    %91 = vector.extract_strided_slice %15 {offsets = [0, 8], sizes = [8, 56], strides = [1, 1]} : vector<8x64xbf16> to vector<8x56xbf16>
    %92 = vector.extract_strided_slice %15 {offsets = [0, 0], sizes = [8, 8], strides = [1, 1]} : vector<8x64xbf16> to vector<8x8xbf16>
    %93 = tpu.concatenate %91, %92 in 1 : vector<8x56xbf16>, vector<8x8xbf16> -> vector<8x64xbf16>
    %94 = vector.extract_strided_slice %1 {offsets = [7, 0, 0], sizes = [1, 1, 64], strides = [1, 1, 1]} : vector<9x1x64xbf16> to vector<1x1x64xbf16>
    %95 = vector.shape_cast %94 : vector<1x1x64xbf16> to vector<1x64xbf16>
    %96 = vector.broadcast %95 : vector<1x64xbf16> to vector<8x64xbf16>
    %97 = arith.mulf %93, %96 : vector<8x64xbf16>
    %98 = vector.extract_strided_slice %0 {offsets = [7, 0, 0], sizes = [1, 8, 8], strides = [1, 1, 1]} : vector<9x8x8xbf16> to vector<1x8x8xbf16>
    %99 = vector.shape_cast %98 : vector<1x8x8xbf16> to vector<8x8xbf16>
    %cst_22 = arith.constant dense<0.000000e+00> : vector<8x64xf32>
    %100 = tpu.matmul %99, %97, %cst_22 {dimension_numbers = #tpu.dot_dimension_numbers<[1], [0], [0], [1], [0, 0, 1, 1], [], []>} : vector<8x8xbf16>, vector<8x64xbf16>, vector<8x64xf32> -> vector<8x64xf32>
    %101 = arith.addf %90, %100 : vector<8x64xf32>
    %102 = vector.extract_strided_slice %15 {offsets = [0, 9], sizes = [8, 55], strides = [1, 1]} : vector<8x64xbf16> to vector<8x55xbf16>
    %103 = vector.extract_strided_slice %15 {offsets = [0, 0], sizes = [8, 9], strides = [1, 1]} : vector<8x64xbf16> to vector<8x9xbf16>
    %104 = tpu.concatenate %102, %103 in 1 : vector<8x55xbf16>, vector<8x9xbf16> -> vector<8x64xbf16>
    %105 = vector.extract_strided_slice %1 {offsets = [8, 0, 0], sizes = [1, 1, 64], strides = [1, 1, 1]} : vector<9x1x64xbf16> to vector<1x1x64xbf16>
    %106 = vector.shape_cast %105 : vector<1x1x64xbf16> to vector<1x64xbf16>
    %107 = vector.broadcast %106 : vector<1x64xbf16> to vector<8x64xbf16>
    %108 = arith.mulf %104, %107 : vector<8x64xbf16>
    %109 = vector.extract_strided_slice %0 {offsets = [8, 0, 0], sizes = [1, 8, 8], strides = [1, 1, 1]} : vector<9x8x8xbf16> to vector<1x8x8xbf16>
    %110 = vector.shape_cast %109 : vector<1x8x8xbf16> to vector<8x8xbf16>
    %cst_23 = arith.constant dense<0.000000e+00> : vector<8x64xf32>
    %111 = tpu.matmul %110, %108, %cst_23 {dimension_numbers = #tpu.dot_dimension_numbers<[1], [0], [0], [1], [0, 0, 1, 1], [], []>} : vector<8x8xbf16>, vector<8x64xbf16>, vector<8x64xf32> -> vector<8x64xf32>
    %112 = arith.addf %101, %111 : vector<8x64xf32>
    %113 = arith.truncf %112 : vector<8x64xf32> to vector<8x64xbf16>
    %c0_24 = arith.constant 0 : index
    %c0_25 = arith.constant 0 : index
    %c0_26 = arith.constant 0 : index
    %114 = vector.load %arg6[%c0_24, %c0_25, %c0_26] : memref<2x8x64xbf16, #tpu.memory_space<vmem>>, vector<1x8x64xbf16>
    %115 = vector.shape_cast %114 : vector<1x8x64xbf16> to vector<8x64xbf16>
    %116 = vector.shape_cast %113 : vector<8x64xbf16> to vector<1x8x64xbf16>
    tpu.vector_store %arg6[%c0_24, %c0_25, %c0_26], %116 {strides = array<i32>} : memref<2x8x64xbf16, #tpu.memory_space<vmem>>, vector<1x8x64xbf16>,
    %117 = arith.extf %113 : vector<8x64xbf16> to vector<8x64xf32>
    %cst_27 = arith.constant dense<0.000000e+00> : vector<8xf32>
    %118 = vector.multi_reduction <add>, %117, %cst_27 [1] : vector<8x64xf32> to vector<8xf32>
    %119 = vector.shape_cast %118 : vector<8xf32> to vector<8x1xf32>
    %120 = arith.addf %4, %119 : vector<8x1xf32>
    %121 = arith.mulf %117, %117 : vector<8x64xf32>
    %cst_28 = arith.constant dense<0.000000e+00> : vector<8xf32>
    %122 = vector.multi_reduction <add>, %121, %cst_28 [1] : vector<8x64xf32> to vector<8xf32>
    %123 = vector.shape_cast %122 : vector<8xf32> to vector<8x1xf32>
    %124 = arith.addf %5, %123 : vector<8x1xf32>
    %c1 = arith.constant 1 : index
    %c0_29 = arith.constant 0 : index
    %c0_30 = arith.constant 0 : index
    %125 = vector.load %arg1[%c1, %c0_29, %c0_30] : memref<2x8x64xbf16, #tpu.memory_space<vmem>>, vector<1x8x64xbf16>
    %126 = vector.shape_cast %125 : vector<1x8x64xbf16> to vector<8x64xbf16>
    %127 = arith.extf %126 : vector<8x64xbf16> to vector<8x64xf32>
    %128 = vector.broadcast %2 : vector<8x1xf32> to vector<8x64xf32>
    %129 = arith.mulf %127, %128 : vector<8x64xf32>
    %130 = vector.broadcast %3 : vector<8x1xf32> to vector<8x64xf32>
    %131 = arith.addf %129, %130 : vector<8x64xf32>
    %cst_31 = arith.constant 0.000000e+00 : f32
    %132 = vector.broadcast %cst_31 : f32 to vector<8x64xf32>
    %133 = arith.maximumf %131, %132 : vector<8x64xf32>
    %134 = arith.truncf %133 : vector<8x64xf32> to vector<8x64xbf16>
    %cst_32 = arith.constant 0.000000e+00 : f32
    %135 = vector.broadcast %cst_32 : f32 to vector<8x64xf32>
    %136 = vector.extract_strided_slice %134 {offsets = [0, 55], sizes = [8, 9], strides = [1, 1]} : vector<8x64xbf16> to vector<8x9xbf16>
    %137 = vector.extract_strided_slice %134 {offsets = [0, 0], sizes = [8, 55], strides = [1, 1]} : vector<8x64xbf16> to vector<8x55xbf16>
    %138 = tpu.concatenate %136, %137 in 1 : vector<8x9xbf16>, vector<8x55xbf16> -> vector<8x64xbf16>
    %139 = vector.extract_strided_slice %1 {offsets = [0, 0, 0], sizes = [1, 1, 64], strides = [1, 1, 1]} : vector<9x1x64xbf16> to vector<1x1x64xbf16>
    %140 = vector.shape_cast %139 : vector<1x1x64xbf16> to vector<1x64xbf16>
    %141 = vector.broadcast %140 : vector<1x64xbf16> to vector<8x64xbf16>
    %142 = arith.mulf %138, %141 : vector<8x64xbf16>
    %143 = vector.extract_strided_slice %0 {offsets = [0, 0, 0], sizes = [1, 8, 8], strides = [1, 1, 1]} : vector<9x8x8xbf16> to vector<1x8x8xbf16>
    %144 = vector.shape_cast %143 : vector<1x8x8xbf16> to vector<8x8xbf16>
    %cst_33 = arith.constant dense<0.000000e+00> : vector<8x64xf32>
    %145 = tpu.matmul %144, %142, %cst_33 {dimension_numbers = #tpu.dot_dimension_numbers<[1], [0], [0], [1], [0, 0, 1, 1], [], []>} : vector<8x8xbf16>, vector<8x64xbf16>, vector<8x64xf32> -> vector<8x64xf32>
    %146 = arith.addf %135, %145 : vector<8x64xf32>
    %147 = vector.extract_strided_slice %134 {offsets = [0, 56], sizes = [8, 8], strides = [1, 1]} : vector<8x64xbf16> to vector<8x8xbf16>
    %148 = vector.extract_strided_slice %134 {offsets = [0, 0], sizes = [8, 56], strides = [1, 1]} : vector<8x64xbf16> to vector<8x56xbf16>
    %149 = tpu.concatenate %147, %148 in 1 : vector<8x8xbf16>, vector<8x56xbf16> -> vector<8x64xbf16>
    %150 = vector.extract_strided_slice %1 {offsets = [1, 0, 0], sizes = [1, 1, 64], strides = [1, 1, 1]} : vector<9x1x64xbf16> to vector<1x1x64xbf16>
    %151 = vector.shape_cast %150 : vector<1x1x64xbf16> to vector<1x64xbf16>
    %152 = vector.broadcast %151 : vector<1x64xbf16> to vector<8x64xbf16>
    %153 = arith.mulf %149, %152 : vector<8x64xbf16>
    %154 = vector.extract_strided_slice %0 {offsets = [1, 0, 0], sizes = [1, 8, 8], strides = [1, 1, 1]} : vector<9x8x8xbf16> to vector<1x8x8xbf16>
    %155 = vector.shape_cast %154 : vector<1x8x8xbf16> to vector<8x8xbf16>
    %cst_34 = arith.constant dense<0.000000e+00> : vector<8x64xf32>
    %156 = tpu.matmul %155, %153, %cst_34 {dimension_numbers = #tpu.dot_dimension_numbers<[1], [0], [0], [1], [0, 0, 1, 1], [], []>} : vector<8x8xbf16>, vector<8x64xbf16>, vector<8x64xf32> -> vector<8x64xf32>
    %157 = arith.addf %146, %156 : vector<8x64xf32>
    %158 = vector.extract_strided_slice %134 {offsets = [0, 57], sizes = [8, 7], strides = [1, 1]} : vector<8x64xbf16> to vector<8x7xbf16>
    %159 = vector.extract_strided_slice %134 {offsets = [0, 0], sizes = [8, 57], strides = [1, 1]} : vector<8x64xbf16> to vector<8x57xbf16>
    %160 = tpu.concatenate %158, %159 in 1 : vector<8x7xbf16>, vector<8x57xbf16> -> vector<8x64xbf16>
    %161 = vector.extract_strided_slice %1 {offsets = [2, 0, 0], sizes = [1, 1, 64], strides = [1, 1, 1]} : vector<9x1x64xbf16> to vector<1x1x64xbf16>
    %162 = vector.shape_cast %161 : vector<1x1x64xbf16> to vector<1x64xbf16>
    %163 = vector.broadcast %162 : vector<1x64xbf16> to vector<8x64xbf16>
    %164 = arith.mulf %160, %163 : vector<8x64xbf16>
    %165 = vector.extract_strided_slice %0 {offsets = [2, 0, 0], sizes = [1, 8, 8], strides = [1, 1, 1]} : vector<9x8x8xbf16> to vector<1x8x8xbf16>
    %166 = vector.shape_cast %165 : vector<1x8x8xbf16> to vector<8x8xbf16>
    %cst_35 = arith.constant dense<0.000000e+00> : vector<8x64xf32>
    %167 = tpu.matmul %166, %164, %cst_35 {dimension_numbers = #tpu.dot_dimension_numbers<[1], [0], [0], [1], [0, 0, 1, 1], [], []>} : vector<8x8xbf16>, vector<8x64xbf16>, vector<8x64xf32> -> vector<8x64xf32>
    %168 = arith.addf %157, %167 : vector<8x64xf32>
    %169 = vector.extract_strided_slice %134 {offsets = [0, 63], sizes = [8, 1], strides = [1, 1]} : vector<8x64xbf16> to vector<8x1xbf16>
    %170 = vector.extract_strided_slice %134 {offsets = [0, 0], sizes = [8, 63], strides = [1, 1]} : vector<8x64xbf16> to vector<8x63xbf16>
    %171 = tpu.concatenate %169, %170 in 1 : vector<8x1xbf16>, vector<8x63xbf16> -> vector<8x64xbf16>
    %172 = vector.extract_strided_slice %1 {offsets = [3, 0, 0], sizes = [1, 1, 64], strides = [1, 1, 1]} : vector<9x1x64xbf16> to vector<1x1x64xbf16>
    %173 = vector.shape_cast %172 : vector<1x1x64xbf16> to vector<1x64xbf16>
    %174 = vector.broadcast %173 : vector<1x64xbf16> to vector<8x64xbf16>
    %175 = arith.mulf %171, %174 : vector<8x64xbf16>
    %176 = vector.extract_strided_slice %0 {offsets = [3, 0, 0], sizes = [1, 8, 8], strides = [1, 1, 1]} : vector<9x8x8xbf16> to vector<1x8x8xbf16>
    %177 = vector.shape_cast %176 : vector<1x8x8xbf16> to vector<8x8xbf16>
    %cst_36 = arith.constant dense<0.000000e+00> : vector<8x64xf32>
    %178 = tpu.matmul %177, %175, %cst_36 {dimension_numbers = #tpu.dot_dimension_numbers<[1], [0], [0], [1], [0, 0, 1, 1], [], []>} : vector<8x8xbf16>, vector<8x64xbf16>, vector<8x64xf32> -> vector<8x64xf32>
    %179 = arith.addf %168, %178 : vector<8x64xf32>
    %180 = vector.extract_strided_slice %1 {offsets = [4, 0, 0], sizes = [1, 1, 64], strides = [1, 1, 1]} : vector<9x1x64xbf16> to vector<1x1x64xbf16>
    %181 = vector.shape_cast %180 : vector<1x1x64xbf16> to vector<1x64xbf16>
    %182 = vector.broadcast %181 : vector<1x64xbf16> to vector<8x64xbf16>
    %183 = arith.mulf %134, %182 : vector<8x64xbf16>
    %184 = vector.extract_strided_slice %0 {offsets = [4, 0, 0], sizes = [1, 8, 8], strides = [1, 1, 1]} : vector<9x8x8xbf16> to vector<1x8x8xbf16>
    %185 = vector.shape_cast %184 : vector<1x8x8xbf16> to vector<8x8xbf16>
    %cst_37 = arith.constant dense<0.000000e+00> : vector<8x64xf32>
    %186 = tpu.matmul %185, %183, %cst_37 {dimension_numbers = #tpu.dot_dimension_numbers<[1], [0], [0], [1], [0, 0, 1, 1], [], []>} : vector<8x8xbf16>, vector<8x64xbf16>, vector<8x64xf32> -> vector<8x64xf32>
    %187 = arith.addf %179, %186 : vector<8x64xf32>
    %188 = vector.extract_strided_slice %134 {offsets = [0, 1], sizes = [8, 63], strides = [1, 1]} : vector<8x64xbf16> to vector<8x63xbf16>
    %189 = vector.extract_strided_slice %134 {offsets = [0, 0], sizes = [8, 1], strides = [1, 1]} : vector<8x64xbf16> to vector<8x1xbf16>
    %190 = tpu.concatenate %188, %189 in 1 : vector<8x63xbf16>, vector<8x1xbf16> -> vector<8x64xbf16>
    %191 = vector.extract_strided_slice %1 {offsets = [5, 0, 0], sizes = [1, 1, 64], strides = [1, 1, 1]} : vector<9x1x64xbf16> to vector<1x1x64xbf16>
    %192 = vector.shape_cast %191 : vector<1x1x64xbf16> to vector<1x64xbf16>
    %193 = vector.broadcast %192 : vector<1x64xbf16> to vector<8x64xbf16>
    %194 = arith.mulf %190, %193 : vector<8x64xbf16>
    %195 = vector.extract_strided_slice %0 {offsets = [5, 0, 0], sizes = [1, 8, 8], strides = [1, 1, 1]} : vector<9x8x8xbf16> to vector<1x8x8xbf16>
    %196 = vector.shape_cast %195 : vector<1x8x8xbf16> to vector<8x8xbf16>
    %cst_38 = arith.constant dense<0.000000e+00> : vector<8x64xf32>
    %197 = tpu.matmul %196, %194, %cst_38 {dimension_numbers = #tpu.dot_dimension_numbers<[1], [0], [0], [1], [0, 0, 1, 1], [], []>} : vector<8x8xbf16>, vector<8x64xbf16>, vector<8x64xf32> -> vector<8x64xf32>
    %198 = arith.addf %187, %197 : vector<8x64xf32>
    %199 = vector.extract_strided_slice %134 {offsets = [0, 7], sizes = [8, 57], strides = [1, 1]} : vector<8x64xbf16> to vector<8x57xbf16>
    %200 = vector.extract_strided_slice %134 {offsets = [0, 0], sizes = [8, 7], strides = [1, 1]} : vector<8x64xbf16> to vector<8x7xbf16>
    %201 = tpu.concatenate %199, %200 in 1 : vector<8x57xbf16>, vector<8x7xbf16> -> vector<8x64xbf16>
    %202 = vector.extract_strided_slice %1 {offsets = [6, 0, 0], sizes = [1, 1, 64], strides = [1, 1, 1]} : vector<9x1x64xbf16> to vector<1x1x64xbf16>
    %203 = vector.shape_cast %202 : vector<1x1x64xbf16> to vector<1x64xbf16>
    %204 = vector.broadcast %203 : vector<1x64xbf16> to vector<8x64xbf16>
    %205 = arith.mulf %201, %204 : vector<8x64xbf16>
    %206 = vector.extract_strided_slice %0 {offsets = [6, 0, 0], sizes = [1, 8, 8], strides = [1, 1, 1]} : vector<9x8x8xbf16> to vector<1x8x8xbf16>
    %207 = vector.shape_cast %206 : vector<1x8x8xbf16> to vector<8x8xbf16>
    %cst_39 = arith.constant dense<0.000000e+00> : vector<8x64xf32>
    %208 = tpu.matmul %207, %205, %cst_39 {dimension_numbers = #tpu.dot_dimension_numbers<[1], [0], [0], [1], [0, 0, 1, 1], [], []>} : vector<8x8xbf16>, vector<8x64xbf16>, vector<8x64xf32> -> vector<8x64xf32>
    %209 = arith.addf %198, %208 : vector<8x64xf32>
    %210 = vector.extract_strided_slice %134 {offsets = [0, 8], sizes = [8, 56], strides = [1, 1]} : vector<8x64xbf16> to vector<8x56xbf16>
    %211 = vector.extract_strided_slice %134 {offsets = [0, 0], sizes = [8, 8], strides = [1, 1]} : vector<8x64xbf16> to vector<8x8xbf16>
    %212 = tpu.concatenate %210, %211 in 1 : vector<8x56xbf16>, vector<8x8xbf16> -> vector<8x64xbf16>
    %213 = vector.extract_strided_slice %1 {offsets = [7, 0, 0], sizes = [1, 1, 64], strides = [1, 1, 1]} : vector<9x1x64xbf16> to vector<1x1x64xbf16>
    %214 = vector.shape_cast %213 : vector<1x1x64xbf16> to vector<1x64xbf16>
    %215 = vector.broadcast %214 : vector<1x64xbf16> to vector<8x64xbf16>
    %216 = arith.mulf %212, %215 : vector<8x64xbf16>
    %217 = vector.extract_strided_slice %0 {offsets = [7, 0, 0], sizes = [1, 8, 8], strides = [1, 1, 1]} : vector<9x8x8xbf16> to vector<1x8x8xbf16>
    %218 = vector.shape_cast %217 : vector<1x8x8xbf16> to vector<8x8xbf16>
    %cst_40 = arith.constant dense<0.000000e+00> : vector<8x64xf32>
    %219 = tpu.matmul %218, %216, %cst_40 {dimension_numbers = #tpu.dot_dimension_numbers<[1], [0], [0], [1], [0, 0, 1, 1], [], []>} : vector<8x8xbf16>, vector<8x64xbf16>, vector<8x64xf32> -> vector<8x64xf32>
    %220 = arith.addf %209, %219 : vector<8x64xf32>
    %221 = vector.extract_strided_slice %134 {offsets = [0, 9], sizes = [8, 55], strides = [1, 1]} : vector<8x64xbf16> to vector<8x55xbf16>
    %222 = vector.extract_strided_slice %134 {offsets = [0, 0], sizes = [8, 9], strides = [1, 1]} : vector<8x64xbf16> to vector<8x9xbf16>
    %223 = tpu.concatenate %221, %222 in 1 : vector<8x55xbf16>, vector<8x9xbf16> -> vector<8x64xbf16>
    %224 = vector.extract_strided_slice %1 {offsets = [8, 0, 0], sizes = [1, 1, 64], strides = [1, 1, 1]} : vector<9x1x64xbf16> to vector<1x1x64xbf16>
    %225 = vector.shape_cast %224 : vector<1x1x64xbf16> to vector<1x64xbf16>
    %226 = vector.broadcast %225 : vector<1x64xbf16> to vector<8x64xbf16>
    %227 = arith.mulf %223, %226 : vector<8x64xbf16>
    %228 = vector.extract_strided_slice %0 {offsets = [8, 0, 0], sizes = [1, 8, 8], strides = [1, 1, 1]} : vector<9x8x8xbf16> to vector<1x8x8xbf16>
    %229 = vector.shape_cast %228 : vector<1x8x8xbf16> to vector<8x8xbf16>
    %cst_41 = arith.constant dense<0.000000e+00> : vector<8x64xf32>
    %230 = tpu.matmul %229, %227, %cst_41 {dimension_numbers = #tpu.dot_dimension_numbers<[1], [0], [0], [1], [0, 0, 1, 1], [], []>} : vector<8x8xbf16>, vector<8x64xbf16>, vector<8x64xf32> -> vector<8x64xf32>
    %231 = arith.addf %220, %230 : vector<8x64xf32>
    %232 = arith.truncf %231 : vector<8x64xf32> to vector<8x64xbf16>
    %c1_42 = arith.constant 1 : index
    %c0_43 = arith.constant 0 : index
    %c0_44 = arith.constant 0 : index
    %233 = vector.load %arg6[%c1_42, %c0_43, %c0_44] : memref<2x8x64xbf16, #tpu.memory_space<vmem>>, vector<1x8x64xbf16>
    %234 = vector.shape_cast %233 : vector<1x8x64xbf16> to vector<8x64xbf16>
    %235 = vector.shape_cast %232 : vector<8x64xbf16> to vector<1x8x64xbf16>
    tpu.vector_store %arg6[%c1_42, %c0_43, %c0_44], %235 {strides = array<i32>} : memref<2x8x64xbf16, #tpu.memory_space<vmem>>, vector<1x8x64xbf16>,
    %236 = arith.extf %232 : vector<8x64xbf16> to vector<8x64xf32>
    %cst_45 = arith.constant dense<0.000000e+00> : vector<8xf32>
    %237 = vector.multi_reduction <add>, %236, %cst_45 [1] : vector<8x64xf32> to vector<8xf32>
    %238 = vector.shape_cast %237 : vector<8xf32> to vector<8x1xf32>
    %239 = arith.addf %120, %238 : vector<8x1xf32>
    %240 = arith.mulf %236, %236 : vector<8x64xf32>
    %cst_46 = arith.constant dense<0.000000e+00> : vector<8xf32>
    %241 = vector.multi_reduction <add>, %240, %cst_46 [1] : vector<8x64xf32> to vector<8xf32>
    %242 = vector.shape_cast %241 : vector<8xf32> to vector<8x1xf32>
    %243 = arith.addf %124, %242 : vector<8x1xf32>
    %c0_47 = arith.constant 0 : index
    %c0_48 = arith.constant 0 : index
    %c0_49 = arith.constant 0 : index
    %244 = vector.load %arg7[%c0_47, %c0_48, %c0_49] : memref<1x8x1xf32, #tpu.memory_space<vmem>>, vector<1x8x1xf32>
    %245 = vector.shape_cast %244 : vector<1x8x1xf32> to vector<8x1xf32>
    %246 = vector.shape_cast %239 : vector<8x1xf32> to vector<1x8x1xf32>
    tpu.vector_store %arg7[%c0_47, %c0_48, %c0_49], %246 {strides = array<i32>} : memref<1x8x1xf32, #tpu.memory_space<vmem>>, vector<1x8x1xf32>,
    %c0_50 = arith.constant 0 : index
    %c0_51 = arith.constant 0 : index
    %c0_52 = arith.constant 0 : index
    %247 = vector.load %arg8[%c0_50, %c0_51, %c0_52] : memref<1x8x1xf32, #tpu.memory_space<vmem>>, vector<1x8x1xf32>
    %248 = vector.shape_cast %247 : vector<1x8x1xf32> to vector<8x1xf32>
    %249 = vector.shape_cast %243 : vector<8x1xf32> to vector<1x8x1xf32>
    tpu.vector_store %arg8[%c0_50, %c0_51, %c0_52], %249 {strides = array<i32>} : memref<1x8x1xf32, #tpu.memory_space<vmem>>, vector<1x8x1xf32>,
    return
  }
  func.func @transform_0(%arg0: i32) -> (i32, i32, i32) {
    %c0_i32 = arith.constant 0 : i32
    %c0_i32_0 = arith.constant 0 : i32
    %c0_i32_1 = arith.constant 0 : i32
    return %arg0, %c0_i32, %c0_i32_0 : i32, i32, i32
  }
  func.func @transform_1(%arg0: i32) -> (i32, i32) {
    %c0_i32 = arith.constant 0 : i32
    %c0_i32_0 = arith.constant 0 : i32
    %c0_i32_1 = arith.constant 0 : i32
    return %c0_i32, %c0_i32_0 : i32, i32
  }
  func.func @transform_2(%arg0: i32) -> (i32, i32) {
    %c0_i32 = arith.constant 0 : i32
    %c0_i32_0 = arith.constant 0 : i32
    %c0_i32_1 = arith.constant 0 : i32
    return %c0_i32, %c0_i32_0 : i32, i32
  }
  func.func @transform_3(%arg0: i32) -> (i32, i32, i32) {
    %c0_i32 = arith.constant 0 : i32
    %c0_i32_0 = arith.constant 0 : i32
    %c0_i32_1 = arith.constant 0 : i32
    %c0_i32_2 = arith.constant 0 : i32
    return %c0_i32, %c0_i32_0, %c0_i32_1 : i32, i32, i32
  }
  func.func @transform_4(%arg0: i32) -> (i32, i32, i32) {
    %c0_i32 = arith.constant 0 : i32
    %c0_i32_0 = arith.constant 0 : i32
    %c0_i32_1 = arith.constant 0 : i32
    %c0_i32_2 = arith.constant 0 : i32
    return %c0_i32, %c0_i32_0, %c0_i32_1 : i32, i32, i32
  }
  func.func @transform_5(%arg0: i32) -> (i32, i32, i32) {
    %c0_i32 = arith.constant 0 : i32
    %c0_i32_0 = arith.constant 0 : i32
    %c0_i32_1 = arith.constant 0 : i32
    return %arg0, %c0_i32, %c0_i32_0 : i32, i32, i32
  }
  func.func @transform_6(%arg0: i32) -> (i32, i32, i32) {
    %c0_i32 = arith.constant 0 : i32
    %c0_i32_0 = arith.constant 0 : i32
    %c0_i32_1 = arith.constant 0 : i32
    return %arg0, %c0_i32, %c0_i32_0 : i32, i32, i32
  }
  func.func @transform_7(%arg0: i32) -> (i32, i32, i32) {
    %c0_i32 = arith.constant 0 : i32
    %c0_i32_0 = arith.constant 0 : i32
    %c0_i32_1 = arith.constant 0 : i32
    return %arg0, %c0_i32, %c0_i32_0 : i32, i32, i32
  }
}

module attributes {stable_mosaic.version = 11 : i64} {
  func.func @_bnrelu_kernel(%arg0: i32, %arg1: memref<2x8x64xbf16, #tpu.memory_space<vmem>>, %arg2: memref<8x1xf32, #tpu.memory_space<vmem>>, %arg3: memref<8x1xf32, #tpu.memory_space<vmem>>, %arg4: memref<2x8x64xf32, #tpu.memory_space<vmem>>) attributes {dimension_semantics = [#tpu.dimension_semantics<parallel>], iteration_bounds = array<i64: 1>, scalar_prefetch = 0 : i64, scratch_operands = 0 : i64, tpu.core_type = #tpu.core_type<tc>, window_params = [{transform_indices = @transform_0, window_bounds = array<i64: 2, 8, 64>}, {pipeline_mode = #tpu.pipeline_mode<synchronous>, transform_indices = @transform_1, window_bounds = array<i64: 8, 1>}, {pipeline_mode = #tpu.pipeline_mode<synchronous>, transform_indices = @transform_2, window_bounds = array<i64: 8, 1>}, {transform_indices = @transform_3, window_bounds = array<i64: 2, 8, 64>}]} {
    %c0 = arith.constant 0 : index
    %c0_0 = arith.constant 0 : index
    %c0_1 = arith.constant 0 : index
    %0 = vector.load %arg1[%c0, %c0_0, %c0_1] : memref<2x8x64xbf16, #tpu.memory_space<vmem>>, vector<2x8x64xbf16>
    %1 = arith.extf %0 : vector<2x8x64xbf16> to vector<2x8x64xf32>
    %c0_2 = arith.constant 0 : index
    %c0_3 = arith.constant 0 : index
    %2 = vector.load %arg2[%c0_2, %c0_3] : memref<8x1xf32, #tpu.memory_space<vmem>>, vector<8x1xf32>
    %3 = vector.shape_cast %2 : vector<8x1xf32> to vector<1x8x1xf32>
    %4 = vector.broadcast %3 : vector<1x8x1xf32> to vector<2x8x64xf32>
    %5 = arith.mulf %1, %4 : vector<2x8x64xf32>
    %c0_4 = arith.constant 0 : index
    %c0_5 = arith.constant 0 : index
    %6 = vector.load %arg3[%c0_4, %c0_5] : memref<8x1xf32, #tpu.memory_space<vmem>>, vector<8x1xf32>
    %7 = vector.shape_cast %6 : vector<8x1xf32> to vector<1x8x1xf32>
    %8 = vector.broadcast %7 : vector<1x8x1xf32> to vector<2x8x64xf32>
    %9 = arith.addf %5, %8 : vector<2x8x64xf32>
    %cst = arith.constant 0.000000e+00 : f32
    %10 = vector.broadcast %cst : f32 to vector<2x8x64xf32>
    %11 = arith.maximumf %9, %10 : vector<2x8x64xf32>
    %c0_6 = arith.constant 0 : index
    %c0_7 = arith.constant 0 : index
    %c0_8 = arith.constant 0 : index
    %12 = vector.load %arg4[%c0_6, %c0_7, %c0_8] : memref<2x8x64xf32, #tpu.memory_space<vmem>>, vector<2x8x64xf32>
    tpu.vector_store %arg4[%c0_6, %c0_7, %c0_8], %11 {strides = array<i32>} : memref<2x8x64xf32, #tpu.memory_space<vmem>>, vector<2x8x64xf32>,
    return
  }
  func.func @transform_0(%arg0: i32) -> (i32, i32, i32) {
    %c0_i32 = arith.constant 0 : i32
    %c0_i32_0 = arith.constant 0 : i32
    %c0_i32_1 = arith.constant 0 : i32
    return %arg0, %c0_i32, %c0_i32_0 : i32, i32, i32
  }
  func.func @transform_1(%arg0: i32) -> (i32, i32) {
    %c0_i32 = arith.constant 0 : i32
    %c0_i32_0 = arith.constant 0 : i32
    %c0_i32_1 = arith.constant 0 : i32
    return %c0_i32, %c0_i32_0 : i32, i32
  }
  func.func @transform_2(%arg0: i32) -> (i32, i32) {
    %c0_i32 = arith.constant 0 : i32
    %c0_i32_0 = arith.constant 0 : i32
    %c0_i32_1 = arith.constant 0 : i32
    return %c0_i32, %c0_i32_0 : i32, i32
  }
  func.func @transform_3(%arg0: i32) -> (i32, i32, i32) {
    %c0_i32 = arith.constant 0 : i32
    %c0_i32_0 = arith.constant 0 : i32
    %c0_i32_1 = arith.constant 0 : i32
    return %arg0, %c0_i32, %c0_i32_0 : i32, i32, i32
  }
}

</mosaic_0001>

<llo_original>
// kernel: encode_forward.5
$region0: #{encode_forward.5}
  #allocation0 [shape = 'u32[]', space=smem, size = 0x4, offset = 0x4, fixed_abs, tag = 'smem constant byte address 0x4 - core index']
  #allocation1 [shape = 'u32[144,128]{1,0:T(1,128)}', space=vmem, size = 0x12000, scoped, tag = 'internal scratch']
  %s0 = inlined_call_operand.vmem [shape: bf16[2,8,64], index: 0, kind: input, shape index: {}]
  %s1 = inlined_call_operand.vmem [shape: f32[8,1], index: 1, kind: input, shape index: {}]
  %s2 = inlined_call_operand.vmem [shape: f32[8,1], index: 2, kind: input, shape index: {}]
  %s3 = inlined_call_operand.vmem [shape: f32[2,8,64], index: 3, kind: output, shape index: {}]
  %s4 = sld [smem:[#allocation0]]
  $region22: #{encode_forward.5} parent=0
    _
  %s6 = ssub.s32 1, %s4
  %s7 = scalar_select 0, %s6, %s4
  // Predicated region
  $region2: #{encode_forward.5} parent=0 // pred_check
    _
  $region3: #{encode_forward.5} parent=0 // pred_check_branch
    %9 = sbr.rel (0) target = $region5
  $region4: #{encode_forward.5} parent=0 // pred_region
    _
  $region5: #{encode_forward.5} parent=0 // pred_fallthru
    _
  // Predicated region
  $region6: #{encode_forward.5} parent=0 // pred_check
    _
  $region7: #{encode_forward.5} parent=0 // pred_check_branch
    %11 = sbr.rel (0) target = $region9
  $region8: #{encode_forward.5} parent=0 // pred_region
    _
  $region9: #{encode_forward.5} parent=0 // pred_fallthru
    _
  // Predicated region
  $region10: #{encode_forward.5} parent=0 // pred_check
    _
  $region11: #{encode_forward.5} parent=0 // pred_check_branch
    %13 = sbr.rel (0) target = $region13
  $region12: #{encode_forward.5} parent=0 // pred_region
    _
  $region13: #{encode_forward.5} parent=0 // pred_fallthru
    _
  %v14 = vld [vmem:[%s0] sm:$0xf]
  %v15 = vld [vmem:[%s0 + $0x4] sm:$0xf]
  %v16 = vunpack.c.l.bf16 %v14
  %v17 = vunpack.c.l.bf16 %v15
  %v18 = vld [vmem:[%s1] sm:$0xff]
  %20 = vset.pattern.permute.xlu0 0
  %21 = vperm.xlu0 %20, %v18
  %v22 = vpop.permute.xlu0 %21
  %v24 = vmul.f32 %v16, %v22
  %v25 = vmul.f32 %v17, %v22
  %v26 = vld [vmem:[%s2] sm:$0xff]
  %28 = vset.pattern.permute.xlu0 0
  %29 = vperm.xlu0 %28, %v26
  %v30 = vpop.permute.xlu0 %29
  %v32 = vadd.f32 %v24, %v30
  %v33 = vadd.f32 %v25, %v30
  %v34 = vmax.f32 %v32, 0.0
  %v35 = vmax.f32 %v33, 0.0
  %vm36 = vcmask 523264
  %37 = vst.msk [vmem:[%s3] sm:$0xff] %vm36, %v34
  %38 = vst.msk [vmem:[%s3 + $0x8] sm:$0xff] %vm36, %v35
  // Predicated region
  $region14: #{encode_forward.5} parent=0 // pred_check
    _
  $region15: #{encode_forward.5} parent=0 // pred_check_branch
    %40 = sbr.rel (0) target = $region17
  $region16: #{encode_forward.5} parent=0 // pred_region
    _
  $region17: #{encode_forward.5} parent=0 // pred_fallthru
    _
  // Predicated region
  $region18: #{encode_forward.5} parent=0 // pred_check
    _
  $region19: #{encode_forward.5} parent=0 // pred_check_branch
    %42 = sbr.rel (0) target = $region21
  $region20: #{encode_forward.5} parent=0 // pred_region
    _
  $region21: #{encode_forward.5} parent=0 // pred_fallthru
    _

// kernel: encode_forward.4
$region0: #{encode_forward.4}
  #allocation0 [shape = 'u32[]', space=smem, size = 0x4, offset = 0x4, fixed_abs, tag = 'smem constant byte address 0x4 - core index']
  #allocation1 [shape = 'u32[144,128]{1,0:T(1,128)}', space=vmem, size = 0x12000, scoped, tag = 'internal scratch']
  %s0 = inlined_call_operand.vmem [shape: bf16[2,8,64], index: 0, kind: input, shape index: {}]
  %s1 = inlined_call_operand.vmem [shape: f32[8,1], index: 1, kind: input, shape index: {}]
  %s2 = inlined_call_operand.vmem [shape: f32[8,1], index: 2, kind: input, shape index: {}]
  %s3 = inlined_call_operand.vmem [shape: bf16[9,8,8], index: 3, kind: input, shape index: {}]
  %s4 = inlined_call_operand.vmem [shape: bf16[9,1,64], index: 4, kind: input, shape index: {}]
  %s5 = inlined_call_operand.vmem [shape: bf16[2,8,64], index: 5, kind: output, shape index: {0}]
  %s6 = inlined_call_operand.vmem [shape: f32[1,8,1], index: 6, kind: output, shape index: {1}]
  %s7 = inlined_call_operand.vmem [shape: f32[1,8,1], index: 7, kind: output, shape index: {2}]
  %8 = xla_tuple %s5, %s6, %s7
  %s9 = sld [smem:[#allocation0]]
  $region46: #{encode_forward.4} parent=0
    _
  %s11 = ssub.s32 1, %s9
  %s12 = scalar_select 0, %s11, %s9
  // Predicated region
  $region2: #{encode_forward.4} parent=0 // pred_check
    _
  $region3: #{encode_forward.4} parent=0 // pred_check_branch
    %14 = sbr.rel (0) target = $region5
  $region4: #{encode_forward.4} parent=0 // pred_region
    _
  $region5: #{encode_forward.4} parent=0 // pred_fallthru
    _
  // Predicated region
  $region6: #{encode_forward.4} parent=0 // pred_check
    _
  $region7: #{encode_forward.4} parent=0 // pred_check_branch
    %16 = sbr.rel (0) target = $region9
  $region8: #{encode_forward.4} parent=0 // pred_region
    _
  $region9: #{encode_forward.4} parent=0 // pred_fallthru
    _
  // Predicated region
  $region10: #{encode_forward.4} parent=0 // pred_check
    _
  $region11: #{encode_forward.4} parent=0 // pred_check_branch
    %18 = sbr.rel (0) target = $region13
  $region12: #{encode_forward.4} parent=0 // pred_region
    _
  $region13: #{encode_forward.4} parent=0 // pred_fallthru
    _
  // Predicated region
  $region14: #{encode_forward.4} parent=0 // pred_check
    _
  $region15: #{encode_forward.4} parent=0 // pred_check_branch
    %20 = sbr.rel (0) target = $region17
  $region16: #{encode_forward.4} parent=0 // pred_region
    _
  $region17: #{encode_forward.4} parent=0 // pred_fallthru
    _
  // Predicated region
  $region18: #{encode_forward.4} parent=0 // pred_check
    _
  $region19: #{encode_forward.4} parent=0 // pred_check_branch
    %22 = sbr.rel (0) target = $region21
  $region20: #{encode_forward.4} parent=0 // pred_region
    _
  $region21: #{encode_forward.4} parent=0 // pred_fallthru
    _
  %v24 = vld [vmem:[%s3] sm:$0xf]
  %v25 = vld [vmem:[%s3 + $0x4] sm:$0xf]
  %v26 = vld [vmem:[%s3 + $0x8] sm:$0xf]
  %v27 = vld [vmem:[%s3 + $0xc] sm:$0xf]
  %v28 = vld [vmem:[%s3 + $0x10] sm:$0xf]
  %v29 = vld [vmem:[%s3 + $0x14] sm:$0xf]
  %v30 = vld [vmem:[%s3 + $0x18] sm:$0xf]
  %v31 = vld [vmem:[%s3 + $0x1c] sm:$0xf]
  %v32 = vld [vmem:[%s3 + $0x20] sm:$0xf]
  %v33 = vld [vmem:[%s4] sm:$0x1]
  %v34 = vld [vmem:[%s4 + $0x1] sm:$0x1]
  %v35 = vld [vmem:[%s4 + $0x2] sm:$0x1]
  %v36 = vld [vmem:[%s4 + $0x3] sm:$0x1]
  %v37 = vld [vmem:[%s4 + $0x4] sm:$0x1]
  %v38 = vld [vmem:[%s4 + $0x5] sm:$0x1]
  %v39 = vld [vmem:[%s4 + $0x6] sm:$0x1]
  %v40 = vld [vmem:[%s4 + $0x7] sm:$0x1]
  %v41 = vld [vmem:[%s4 + $0x8] sm:$0x1]
  %v42 = vld [vmem:[%s1] sm:$0xff]
  %v43 = vld [vmem:[%s2] sm:$0xff]
  %v44 = vld [vmem:[%s0] sm:$0xf]
  %v45 = vunpack.c.l.bf16 %v44
  %47 = vset.pattern.permute.xlu0 0
  %48 = vperm.xlu0 %47, %v42
  %v49 = vpop.permute.xlu0 %48
  %v51 = vmul.f32 %v45, %v49
  %53 = vset.pattern.permute.xlu0 0
  %54 = vperm.xlu0 %53, %v43
  %v55 = vpop.permute.xlu0 %54
  %v57 = vadd.f32 %v51, %v55
  %v58 = vmax.f32 %v57, 0.0
  %v59 = vpack.c.bf16 %v58, %v58
  %61 = vrot.lane.b32.xlu0 %v59, 73
  %v62 = vpop.permute.xlu0 %61
  %63 = vrot.lane.b32.xlu0 %v59, 9
  %v64 = vpop.permute.xlu0 %63
  %vm65 = vcmask 72704
  %v68 = vsel %vm65, %v62, %v64
  %v71 = vpack.i.b16 %v33, %v33
  %v73 = vlaneseq
  %v74 = vshrl.u32 %v73, 7
  %v75 = vsub.s32 0, %v74
  %v76 = vrot.slane %v71, %v75
  %v77 = vmul.bf16 %v68, %v76
  %78 = vrot.lane.b32.xlu0 %v59, 72
  %v79 = vpop.permute.xlu0 %78
  %80 = vrot.lane.b32.xlu0 %v59, 8
  %v81 = vpop.permute.xlu0 %80
  %vm82 = vcmask 64512
  %v85 = vsel %vm82, %v79, %v81
  %v88 = vpack.i.b16 %v34, %v34
  %v90 = vlaneseq
  %v91 = vshrl.u32 %v90, 7
  %v92 = vsub.s32 0, %v91
  %v93 = vrot.slane %v88, %v92
  %v94 = vmul.bf16 %v85, %v93
  %v96 = vsel %vm82, %v25, 0
  %vm98 = vcmask 1043456
  %v100 = vsel %vm98, %v94, 0
  %102 = vmatprep.subr.bf16.mxu0 0
  %103 = vmatpush1.bf16.msra.mxu0 %v100
  %104 = vmatprep.subr.bf16.mxu0 0
  %105 = vmatpush1.bf16.msra.mxu0 0
  %106 = vmatprep.subr.bf16.mxu0 0
  %107 = vmatpush1.bf16.msra.mxu0 0
  %108 = vmatprep.subr.bf16.mxu0 0
  %109 = vmatpush1.bf16.msra.mxu0 0
  %110 = vmatprep.subr.bf16.mxu0 0
  %111 = vmatpush1.bf16.msra.mxu0 0
  %112 = vmatprep.subr.bf16.mxu0 0
  %113 = vmatpush1.bf16.msra.mxu0 0
  %114 = vmatprep.subr.bf16.mxu0 0
  %115 = vmatpush1.bf16.msra.mxu0 0
  %116 = vmatprep.subr.bf16.mxu0 0
  %117 = vmatpush1.bf16.msra.mxu0 0
  %118 = vmatprep.subr.bf16.mxu0 0
  %119 = vmatpush1.bf16.msra.mxu0 0
  %120 = vmatprep.subr.bf16.mxu0 0
  %121 = vmatpush1.bf16.msra.mxu0 0
  %122 = vmatprep.subr.bf16.mxu0 0
  %123 = vmatpush1.bf16.msra.mxu0 0
  %124 = vmatprep.subr.bf16.mxu0 0
  %125 = vmatpush1.bf16.msra.mxu0 0
  %126 = vmatprep.subr.bf16.mxu0 0
  %127 = vmatpush1.bf16.msra.mxu0 0
  %128 = vmatprep.subr.bf16.mxu0 0
  %129 = vmatpush1.bf16.msra.mxu0 0
  %130 = vmatprep.subr.bf16.mxu0 0
  %131 = vmatpush1.bf16.msra.mxu0 0
  %132 = vmatprep.subr.bf16.mxu0 0
  %133 = vmatpush1.bf16.msra.mxu0 0
  %134 = vmatprep.mubr.bf16.mxu0 0
  %135 = vmatmul.mubr.bf16.gmra.mrb[0].mxu0 %v96
  %v136 = vpop.f32.mrb[0].mxu0
  %v137 = vadd.f32 0.0, %v136
  %v138 = vpop.f32.mrb[0].mxu0
  %v139 = vpop.f32.mrb[0].mxu0
  %v140 = vpop.f32.mrb[0].mxu0
  %141 = vdwg.mxu0
  %v143 = vsel %vm82, %v24, 0
  %v146 = vsel %vm98, %v77, 0
  %148 = vmatprep.subr.bf16.mxu0 0
  %149 = vmatpush1.bf16.msra.mxu0 %v146
  %150 = vmatprep.subr.bf16.mxu0 0
  %151 = vmatpush1.bf16.msra.mxu0 0
  %152 = vmatprep.subr.bf16.mxu0 0
  %153 = vmatpush1.bf16.msra.mxu0 0
  %154 = vmatprep.subr.bf16.mxu0 0
  %155 = vmatpush1.bf16.msra.mxu0 0
  %156 = vmatprep.subr.bf16.mxu0 0
  %157 = vmatpush1.bf16.msra.mxu0 0
  %158 = vmatprep.subr.bf16.mxu0 0
  %159 = vmatpush1.bf16.msra.mxu0 0
  %160 = vmatprep.subr.bf16.mxu0 0
  %161 = vmatpush1.bf16.msra.mxu0 0
  %162 = vmatprep.subr.bf16.mxu0 0
  %163 = vmatpush1.bf16.msra.mxu0 0
  %164 = vmatprep.subr.bf16.mxu0 0
  %165 = vmatpush1.bf16.msra.mxu0 0
  %166 = vmatprep.subr.bf16.mxu0 0
  %167 = vmatpush1.bf16.msra.mxu0 0
  %168 = vmatprep.subr.bf16.mxu0 0
  %169 = vmatpush1.bf16.msra.mxu0 0
  %170 = vmatprep.subr.bf16.mxu0 0
  %171 = vmatpush1.bf16.msra.mxu0 0
  %172 = vmatprep.subr.bf16.mxu0 0
  %173 = vmatpush1.bf16.msra.mxu0 0
  %174 = vmatprep.subr.bf16.mxu0 0
  %175 = vmatpush1.bf16.msra.mxu0 0
  %176 = vmatprep.subr.bf16.mxu0 0
  %177 = vmatpush1.bf16.msra.mxu0 0
  %178 = vmatprep.subr.bf16.mxu0 0
  %179 = vmatpush1.bf16.msra.mxu0 0
  %180 = vmatprep.mubr.bf16.mxu0 0
  %181 = vmatmul.mubr.bf16.gmra.mrb[0].mxu0 %v143
  %v182 = vpop.f32.mrb[0].mxu0
  %v183 = vadd.f32 %v137, %v182
  %v184 = vpop.f32.mrb[0].mxu0
  %v185 = vpop.f32.mrb[0].mxu0
  %v186 = vpop.f32.mrb[0].mxu0
  %187 = vdwg.mxu0
  %188 = vrot.lane.b32.xlu0 %v59, 71
  %v189 = vpop.permute.xlu0 %188
  %190 = vrot.lane.b32.xlu0 %v59, 7
  %v191 = vpop.permute.xlu0 %190
  %vm192 = vcmask 56320
  %v195 = vsel %vm192, %v189, %v191
  %v198 = vpack.i.b16 %v35, %v35
  %v200 = vlaneseq
  %v201 = vshrl.u32 %v200, 7
  %v202 = vsub.s32 0, %v201
  %v203 = vrot.slane %v198, %v202
  %v204 = vmul.bf16 %v195, %v203
  %v206 = vsel %vm82, %v26, 0
  %v209 = vsel %vm98, %v204, 0
  %211 = vmatprep.subr.bf16.mxu0 0
  %212 = vmatpush1.bf16.msra.mxu0 %v209
  %213 = vmatprep.subr.bf16.mxu0 0
  %214 = vmatpush1.bf16.msra.mxu0 0
  %215 = vmatprep.subr.bf16.mxu0 0
  %216 = vmatpush1.bf16.msra.mxu0 0
  %217 = vmatprep.subr.bf16.mxu0 0
  %218 = vmatpush1.bf16.msra.mxu0 0
  %219 = vmatprep.subr.bf16.mxu0 0
  %220 = vmatpush1.bf16.msra.mxu0 0
  %221 = vmatprep.subr.bf16.mxu0 0
  %222 = vmatpush1.bf16.msra.mxu0 0
  %223 = vmatprep.subr.bf16.mxu0 0
  %224 = vmatpush1.bf16.msra.mxu0 0
  %225 = vmatprep.subr.bf16.mxu0 0
  %226 = vmatpush1.bf16.msra.mxu0 0
  %227 = vmatprep.subr.bf16.mxu0 0
  %228 = vmatpush1.bf16.msra.mxu0 0
  %229 = vmatprep.subr.bf16.mxu0 0
  %230 = vmatpush1.bf16.msra.mxu0 0
  %231 = vmatprep.subr.bf16.mxu0 0
  %232 = vmatpush1.bf16.msra.mxu0 0
  %233 = vmatprep.subr.bf16.mxu0 0
  %234 = vmatpush1.bf16.msra.mxu0 0
  %235 = vmatprep.subr.bf16.mxu0 0
  %236 = vmatpush1.bf16.msra.mxu0 0
  %237 = vmatprep.subr.bf16.mxu0 0
  %238 = vmatpush1.bf16.msra.mxu0 0
  %239 = vmatprep.subr.bf16.mxu0 0
  %240 = vmatpush1.bf16.msra.mxu0 0
  %241 = vmatprep.subr.bf16.mxu0 0
  %242 = vmatpush1.bf16.msra.mxu0 0
  %243 = vmatprep.mubr.bf16.mxu0 0
  %244 = vmatmul.mubr.bf16.gmra.mrb[0].mxu0 %v206
  %v245 = vpop.f32.mrb[0].mxu0
  %v246 = vadd.f32 0.0, %v245
  %v247 = vpop.f32.mrb[0].mxu0
  %v248 = vpop.f32.mrb[0].mxu0
  %v249 = vpop.f32.mrb[0].mxu0
  %250 = vdwg.mxu0
  %v251 = vadd.f32 %v183, %v246
  %252 = vrot.lane.b32.xlu0 %v59, 65
  %v253 = vpop.permute.xlu0 %252
  %254 = vrot.lane.b32.xlu0 %v59, 1
  %v255 = vpop.permute.xlu0 %254
  %vm256 = vcmask 7168
  %v259 = vsel %vm256, %v253, %v255
  %v262 = vpack.i.b16 %v36, %v36
  %v264 = vlaneseq
  %v265 = vshrl.u32 %v264, 7
  %v266 = vsub.s32 0, %v265
  %v267 = vrot.slane %v262, %v266
  %v268 = vmul.bf16 %v259, %v267
  %v270 = vsel %vm82, %v27, 0
  %v273 = vsel %vm98, %v268, 0
  %275 = vmatprep.subr.bf16.mxu0 0
  %276 = vmatpush1.bf16.msra.mxu0 %v273
  %277 = vmatprep.subr.bf16.mxu0 0
  %278 = vmatpush1.bf16.msra.mxu0 0
  %279 = vmatprep.subr.bf16.mxu0 0
  %280 = vmatpush1.bf16.msra.mxu0 0
  %281 = vmatprep.subr.bf16.mxu0 0
  %282 = vmatpush1.bf16.msra.mxu0 0
  %283 = vmatprep.subr.bf16.mxu0 0
  %284 = vmatpush1.bf16.msra.mxu0 0
  %285 = vmatprep.subr.bf16.mxu0 0
  %286 = vmatpush1.bf16.msra.mxu0 0
  %287 = vmatprep.subr.bf16.mxu0 0
  %288 = vmatpush1.bf16.msra.mxu0 0
  %289 = vmatprep.subr.bf16.mxu0 0
  %290 = vmatpush1.bf16.msra.mxu0 0
  %291 = vmatprep.subr.bf16.mxu0 0
  %292 = vmatpush1.bf16.msra.mxu0 0
  %293 = vmatprep.subr.bf16.mxu0 0
  %294 = vmatpush1.bf16.msra.mxu0 0
  %295 = vmatprep.subr.bf16.mxu0 0
  %296 = vmatpush1.bf16.msra.mxu0 0
  %297 = vmatprep.subr.bf16.mxu0 0
  %298 = vmatpush1.bf16.msra.mxu0 0
  %299 = vmatprep.subr.bf16.mxu0 0
  %300 = vmatpush1.bf16.msra.mxu0 0
  %301 = vmatprep.subr.bf16.mxu0 0
  %302 = vmatpush1.bf16.msra.mxu0 0
  %303 = vmatprep.subr.bf16.mxu0 0
  %304 = vmatpush1.bf16.msra.mxu0 0
  %305 = vmatprep.subr.bf16.mxu0 0
  %306 = vmatpush1.bf16.msra.mxu0 0
  %307 = vmatprep.mubr.bf16.mxu0 0
  %308 = vmatmul.mubr.bf16.gmra.mrb[0].mxu0 %v270
  %v309 = vpop.f32.mrb[0].mxu0
  %v310 = vadd.f32 0.0, %v309
  %v311 = vpop.f32.mrb[0].mxu0
  %v312 = vpop.f32.mrb[0].mxu0
  %v313 = vpop.f32.mrb[0].mxu0
  %314 = vdwg.mxu0
  %v315 = vadd.f32 %v251, %v310
  %v317 = vpack.i.b16 %v37, %v37
  %v319 = vlaneseq
  %v320 = vshrl.u32 %v319, 7
  %v321 = vsub.s32 0, %v320
  %v322 = vrot.slane %v317, %v321
  %v323 = vmul.bf16 %v59, %v322
  %v325 = vsel %vm82, %v28, 0
  %v328 = vsel %vm98, %v323, 0
  %330 = vmatprep.subr.bf16.mxu0 0
  %331 = vmatpush1.bf16.msra.mxu0 %v328
  %332 = vmatprep.subr.bf16.mxu0 0
  %333 = vmatpush1.bf16.msra.mxu0 0
  %334 = vmatprep.subr.bf16.mxu0 0
  %335 = vmatpush1.bf16.msra.mxu0 0
  %336 = vmatprep.subr.bf16.mxu0 0
  %337 = vmatpush1.bf16.msra.mxu0 0
  %338 = vmatprep.subr.bf16.mxu0 0
  %339 = vmatpush1.bf16.msra.mxu0 0
  %340 = vmatprep.subr.bf16.mxu0 0
  %341 = vmatpush1.bf16.msra.mxu0 0
  %342 = vmatprep.subr.bf16.mxu0 0
  %343 = vmatpush1.bf16.msra.mxu0 0
  %344 = vmatprep.subr.bf16.mxu0 0
  %345 = vmatpush1.bf16.msra.mxu0 0
  %346 = vmatprep.subr.bf16.mxu0 0
  %347 = vmatpush1.bf16.msra.mxu0 0
  %348 = vmatprep.subr.bf16.mxu0 0
  %349 = vmatpush1.bf16.msra.mxu0 0
  %350 = vmatprep.subr.bf16.mxu0 0
  %351 = vmatpush1.bf16.msra.mxu0 0
  %352 = vmatprep.subr.bf16.mxu0 0
  %353 = vmatpush1.bf16.msra.mxu0 0
  %354 = vmatprep.subr.bf16.mxu0 0
  %355 = vmatpush1.bf16.msra.mxu0 0
  %356 = vmatprep.subr.bf16.mxu0 0
  %357 = vmatpush1.bf16.msra.mxu0 0
  %358 = vmatprep.subr.bf16.mxu0 0
  %359 = vmatpush1.bf16.msra.mxu0 0
  %360 = vmatprep.subr.bf16.mxu0 0
  %361 = vmatpush1.bf16.msra.mxu0 0
  %362 = vmatprep.mubr.bf16.mxu0 0
  %363 = vmatmul.mubr.bf16.gmra.mrb[0].mxu0 %v325
  %v364 = vpop.f32.mrb[0].mxu0
  %v365 = vadd.f32 0.0, %v364
  %v366 = vpop.f32.mrb[0].mxu0
  %v367 = vpop.f32.mrb[0].mxu0
  %v368 = vpop.f32.mrb[0].mxu0
  %369 = vdwg.mxu0
  %v370 = vadd.f32 %v315, %v365
  %371 = vrot.lane.b32.xlu0 %v59, 127
  %v372 = vpop.permute.xlu0 %371
  %373 = vrot.lane.b32.xlu0 %v59, 63
  %v374 = vpop.permute.xlu0 %373
  %vm375 = vcmask 515072
  %v378 = vsel %vm375, %v372, %v374
  %v381 = vpack.i.b16 %v38, %v38
  %v383 = vlaneseq
  %v384 = vshrl.u32 %v383, 7
  %v385 = vsub.s32 0, %v384
  %v386 = vrot.slane %v381, %v385
  %v387 = vmul.bf16 %v378, %v386
  %v389 = vsel %vm82, %v29, 0
  %v392 = vsel %vm98, %v387, 0
  %394 = vmatprep.subr.bf16.mxu0 0
  %395 = vmatpush1.bf16.msra.mxu0 %v392
  %396 = vmatprep.subr.bf16.mxu0 0
  %397 = vmatpush1.bf16.msra.mxu0 0
  %398 = vmatprep.subr.bf16.mxu0 0
  %399 = vmatpush1.bf16.msra.mxu0 0
  %400 = vmatprep.subr.bf16.mxu0 0
  %401 = vmatpush1.bf16.msra.mxu0 0
  %402 = vmatprep.subr.bf16.mxu0 0
  %403 = vmatpush1.bf16.msra.mxu0 0
  %404 = vmatprep.subr.bf16.mxu0 0
  %405 = vmatpush1.bf16.msra.mxu0 0
  %406 = vmatprep.subr.bf16.mxu0 0
  %407 = vmatpush1.bf16.msra.mxu0 0
  %408 = vmatprep.subr.bf16.mxu0 0
  %409 = vmatpush1.bf16.msra.mxu0 0
  %410 = vmatprep.subr.bf16.mxu0 0
  %411 = vmatpush1.bf16.msra.mxu0 0
  %412 = vmatprep.subr.bf16.mxu0 0
  %413 = vmatpush1.bf16.msra.mxu0 0
  %414 = vmatprep.subr.bf16.mxu0 0
  %415 = vmatpush1.bf16.msra.mxu0 0
  %416 = vmatprep.subr.bf16.mxu0 0
  %417 = vmatpush1.bf16.msra.mxu0 0
  %418 = vmatprep.subr.bf16.mxu0 0
  %419 = vmatpush1.bf16.msra.mxu0 0
  %420 = vmatprep.subr.bf16.mxu0 0
  %421 = vmatpush1.bf16.msra.mxu0 0
  %422 = vmatprep.subr.bf16.mxu0 0
  %423 = vmatpush1.bf16.msra.mxu0 0
  %424 = vmatprep.subr.bf16.mxu0 0
  %425 = vmatpush1.bf16.msra.mxu0 0
  %426 = vmatprep.mubr.bf16.mxu0 0
  %427 = vmatmul.mubr.bf16.gmra.mrb[0].mxu0 %v389
  %v428 = vpop.f32.mrb[0].mxu0
  %v429 = vadd.f32 0.0, %v428
  %v430 = vpop.f32.mrb[0].mxu0
  %v431 = vpop.f32.mrb[0].mxu0
  %v432 = vpop.f32.mrb[0].mxu0
  %433 = vdwg.mxu0
  %v434 = vadd.f32 %v370, %v429
  %435 = vrot.lane.b32.xlu0 %v59, 121
  %v436 = vpop.permute.xlu0 %435
  %437 = vrot.lane.b32.xlu0 %v59, 57
  %v438 = vpop.permute.xlu0 %437
  %vm439 = vcmask 465920
  %v442 = vsel %vm439, %v436, %v438
  %v445 = vpack.i.b16 %v39, %v39
  %v447 = vlaneseq
  %v448 = vshrl.u32 %v447, 7
  %v449 = vsub.s32 0, %v448
  %v450 = vrot.slane %v445, %v449
  %v451 = vmul.bf16 %v442, %v450
  %v453 = vsel %vm82, %v30, 0
  %v456 = vsel %vm98, %v451, 0
  %458 = vmatprep.subr.bf16.mxu0 0
  %459 = vmatpush1.bf16.msra.mxu0 %v456
  %460 = vmatprep.subr.bf16.mxu0 0
  %461 = vmatpush1.bf16.msra.mxu0 0
  %462 = vmatprep.subr.bf16.mxu0 0
  %463 = vmatpush1.bf16.msra.mxu0 0
  %464 = vmatprep.subr.bf16.mxu0 0
  %465 = vmatpush1.bf16.msra.mxu0 0
  %466 = vmatprep.subr.bf16.mxu0 0
  %467 = vmatpush1.bf16.msra.mxu0 0
  %468 = vmatprep.subr.bf16.mxu0 0
  %469 = vmatpush1.bf16.msra.mxu0 0
  %470 = vmatprep.subr.bf16.mxu0 0
  %471 = vmatpush1.bf16.msra.mxu0 0
  %472 = vmatprep.subr.bf16.mxu0 0
  %473 = vmatpush1.bf16.msra.mxu0 0
  %474 = vmatprep.subr.bf16.mxu0 0
  %475 = vmatpush1.bf16.msra.mxu0 0
  %476 = vmatprep.subr.bf16.mxu0 0
  %477 = vmatpush1.bf16.msra.mxu0 0
  %478 = vmatprep.subr.bf16.mxu0 0
  %479 = vmatpush1.bf16.msra.mxu0 0
  %480 = vmatprep.subr.bf16.mxu0 0
  %481 = vmatpush1.bf16.msra.mxu0 0
  %482 = vmatprep.subr.bf16.mxu0 0
  %483 = vmatpush1.bf16.msra.mxu0 0
  %484 = vmatprep.subr.bf16.mxu0 0
  %485 = vmatpush1.bf16.msra.mxu0 0
  %486 = vmatprep.subr.bf16.mxu0 0
  %487 = vmatpush1.bf16.msra.mxu0 0
  %488 = vmatprep.subr.bf16.mxu0 0
  %489 = vmatpush1.bf16.msra.mxu0 0
  %490 = vmatprep.mubr.bf16.mxu0 0
  %491 = vmatmul.mubr.bf16.gmra.mrb[0].mxu0 %v453
  %v492 = vpop.f32.mrb[0].mxu0
  %v493 = vadd.f32 0.0, %v492
  %v494 = vpop.f32.mrb[0].mxu0
  %v495 = vpop.f32.mrb[0].mxu0
  %v496 = vpop.f32.mrb[0].mxu0
  %497 = vdwg.mxu0
  %v498 = vadd.f32 %v434, %v493
  %499 = vrot.lane.b32.xlu0 %v59, 120
  %v500 = vpop.permute.xlu0 %499
  %501 = vrot.lane.b32.xlu0 %v59, 56
  %v502 = vpop.permute.xlu0 %501
  %vm503 = vcmask 457728
  %v506 = vsel %vm503, %v500, %v502
  %v509 = vpack.i.b16 %v40, %v40
  %v511 = vlaneseq
  %v512 = vshrl.u32 %v511, 7
  %v513 = vsub.s32 0, %v512
  %v514 = vrot.slane %v509, %v513
  %v515 = vmul.bf16 %v506, %v514
  %v517 = vsel %vm82, %v31, 0
  %v520 = vsel %vm98, %v515, 0
  %522 = vmatprep.subr.bf16.mxu0 0
  %523 = vmatpush1.bf16.msra.mxu0 %v520
  %524 = vmatprep.subr.bf16.mxu0 0
  %525 = vmatpush1.bf16.msra.mxu0 0
  %526 = vmatprep.subr.bf16.mxu0 0
  %527 = vmatpush1.bf16.msra.mxu0 0
  %528 = vmatprep.subr.bf16.mxu0 0
  %529 = vmatpush1.bf16.msra.mxu0 0
  %530 = vmatprep.subr.bf16.mxu0 0
  %531 = vmatpush1.bf16.msra.mxu0 0
  %532 = vmatprep.subr.bf16.mxu0 0
  %533 = vmatpush1.bf16.msra.mxu0 0
  %534 = vmatprep.subr.bf16.mxu0 0
  %535 = vmatpush1.bf16.msra.mxu0 0
  %536 = vmatprep.subr.bf16.mxu0 0
  %537 = vmatpush1.bf16.msra.mxu0 0
  %538 = vmatprep.subr.bf16.mxu0 0
  %539 = vmatpush1.bf16.msra.mxu0 0
  %540 = vmatprep.subr.bf16.mxu0 0
  %541 = vmatpush1.bf16.msra.mxu0 0
  %542 = vmatprep.subr.bf16.mxu0 0
  %543 = vmatpush1.bf16.msra.mxu0 0
  %544 = vmatprep.subr.bf16.mxu0 0
  %545 = vmatpush1.bf16.msra.mxu0 0
  %546 = vmatprep.subr.bf16.mxu0 0
  %547 = vmatpush1.bf16.msra.mxu0 0
  %548 = vmatprep.subr.bf16.mxu0 0
  %549 = vmatpush1.bf16.msra.mxu0 0
  %550 = vmatprep.subr.bf16.mxu0 0
  %551 = vmatpush1.bf16.msra.mxu0 0
  %552 = vmatprep.subr.bf16.mxu0 0
  %553 = vmatpush1.bf16.msra.mxu0 0
  %554 = vmatprep.mubr.bf16.mxu0 0
  %555 = vmatmul.mubr.bf16.gmra.mrb[0].mxu0 %v517
  %v556 = vpop.f32.mrb[0].mxu0
  %v557 = vadd.f32 0.0, %v556
  %v558 = vpop.f32.mrb[0].mxu0
  %v559 = vpop.f32.mrb[0].mxu0
  %v560 = vpop.f32.mrb[0].mxu0
  %561 = vdwg.mxu0
  %v562 = vadd.f32 %v498, %v557
  %563 = vrot.lane.b32.xlu0 %v59, 119
  %v564 = vpop.permute.xlu0 %563
  %565 = vrot.lane.b32.xlu0 %v59, 55
  %v566 = vpop.permute.xlu0 %565
  %vm567 = vcmask 449536
  %v570 = vsel %vm567, %v564, %v566
  %v573 = vpack.i.b16 %v41, %v41
  %v575 = vlaneseq
  %v576 = vshrl.u32 %v575, 7
  %v577 = vsub.s32 0, %v576
  %v578 = vrot.slane %v573, %v577
  %v579 = vmul.bf16 %v570, %v578
  %v581 = vsel %vm82, %v32, 0
  %v584 = vsel %vm98, %v579, 0
  %586 = vmatprep.subr.bf16.mxu0 0
  %587 = vmatpush1.bf16.msra.mxu0 %v584
  %588 = vmatprep.subr.bf16.mxu0 0
  %589 = vmatpush1.bf16.msra.mxu0 0
  %590 = vmatprep.subr.bf16.mxu0 0
  %591 = vmatpush1.bf16.msra.mxu0 0
  %592 = vmatprep.subr.bf16.mxu0 0
  %593 = vmatpush1.bf16.msra.mxu0 0
  %594 = vmatprep.subr.bf16.mxu0 0
  %595 = vmatpush1.bf16.msra.mxu0 0
  %596 = vmatprep.subr.bf16.mxu0 0
  %597 = vmatpush1.bf16.msra.mxu0 0
  %598 = vmatprep.subr.bf16.mxu0 0
  %599 = vmatpush1.bf16.msra.mxu0 0
  %600 = vmatprep.subr.bf16.mxu0 0
  %601 = vmatpush1.bf16.msra.mxu0 0
  %602 = vmatprep.subr.bf16.mxu0 0
  %603 = vmatpush1.bf16.msra.mxu0 0
  %604 = vmatprep.subr.bf16.mxu0 0
  %605 = vmatpush1.bf16.msra.mxu0 0
  %606 = vmatprep.subr.bf16.mxu0 0
  %607 = vmatpush1.bf16.msra.mxu0 0
  %608 = vmatprep.subr.bf16.mxu0 0
  %609 = vmatpush1.bf16.msra.mxu0 0
  %610 = vmatprep.subr.bf16.mxu0 0
  %611 = vmatpush1.bf16.msra.mxu0 0
  %612 = vmatprep.subr.bf16.mxu0 0
  %613 = vmatpush1.bf16.msra.mxu0 0
  %614 = vmatprep.subr.bf16.mxu0 0
  %615 = vmatpush1.bf16.msra.mxu0 0
  %616 = vmatprep.subr.bf16.mxu0 0
  %617 = vmatpush1.bf16.msra.mxu0 0
  %618 = vmatprep.mubr.bf16.mxu0 0
  %619 = vmatmul.mubr.bf16.gmra.mrb[0].mxu0 %v581
  %v620 = vpop.f32.mrb[0].mxu0
  %v621 = vadd.f32 0.0, %v620
  %v622 = vpop.f32.mrb[0].mxu0
  %v623 = vpop.f32.mrb[0].mxu0
  %v624 = vpop.f32.mrb[0].mxu0
  %625 = vdwg.mxu0
  %v626 = vadd.f32 %v562, %v621
  %v627 = vpack.c.bf16 %v626, %v626
  %vm628 = vcmask 519168
  %629 = vst.msk [vmem:[%s5] sm:$0xf] %vm628, %v627
  %v630 = vunpack.c.l.bf16 %v627
  %vm631 = vcmask 523264
  %v632 = vsel %vm631, %v630, 0.0
  %633 = vadd.xlane.f32.xlu0 %v632
  %v634 = vpop.xlane.xlu0 %633
  %v635 = vadd.f32 %v634, 0.0
  %v636 = vmul.f32 %v630, %v630
  %v637 = vsel %vm631, %v636, 0.0
  %638 = vadd.xlane.f32.xlu0 %v637
  %v639 = vpop.xlane.xlu0 %638
  %v640 = vadd.f32 %v639, 0.0
  %s641 = scalar_lea.vmem %s0, 4
  %v642 = vld [vmem:[%s641] sm:$0xf]
  %v643 = vunpack.c.l.bf16 %v642
  %v644 = vmul.f32 %v643, %v49
  %v645 = vadd.f32 %v644, %v55
  %v646 = vmax.f32 %v645, 0.0
  %v647 = vpack.c.bf16 %v646, %v646
  %649 = vrot.lane.b32.xlu0 %v647, 73
  %v650 = vpop.permute.xlu0 %649
  %651 = vrot.lane.b32.xlu0 %v647, 9
  %v652 = vpop.permute.xlu0 %651
  %v655 = vsel %vm65, %v650, %v652
  %v657 = vmul.bf16 %v655, %v76
  %658 = vrot.lane.b32.xlu0 %v647, 72
  %v659 = vpop.permute.xlu0 %658
  %660 = vrot.lane.b32.xlu0 %v647, 8
  %v661 = vpop.permute.xlu0 %660
  %v664 = vsel %vm82, %v659, %v661
  %v666 = vmul.bf16 %v664, %v93
  %v668 = vsel %vm98, %v666, 0
  %670 = vmatprep.subr.bf16.mxu0 0
  %671 = vmatpush1.bf16.msra.mxu0 %v668
  %672 = vmatprep.subr.bf16.mxu0 0
  %673 = vmatpush1.bf16.msra.mxu0 0
  %674 = vmatprep.subr.bf16.mxu0 0
  %675 = vmatpush1.bf16.msra.mxu0 0
  %676 = vmatprep.subr.bf16.mxu0 0
  %677 = vmatpush1.bf16.msra.mxu0 0
  %678 = vmatprep.subr.bf16.mxu0 0
  %679 = vmatpush1.bf16.msra.mxu0 0
  %680 = vmatprep.subr.bf16.mxu0 0
  %681 = vmatpush1.bf16.msra.mxu0 0
  %682 = vmatprep.subr.bf16.mxu0 0
  %683 = vmatpush1.bf16.msra.mxu0 0
  %684 = vmatprep.subr.bf16.mxu0 0
  %685 = vmatpush1.bf16.msra.mxu0 0
  %686 = vmatprep.subr.bf16.mxu0 0
  %687 = vmatpush1.bf16.msra.mxu0 0
  %688 = vmatprep.subr.bf16.mxu0 0
  %689 = vmatpush1.bf16.msra.mxu0 0
  %690 = vmatprep.subr.bf16.mxu0 0
  %691 = vmatpush1.bf16.msra.mxu0 0
  %692 = vmatprep.subr.bf16.mxu0 0
  %693 = vmatpush1.bf16.msra.mxu0 0
  %694 = vmatprep.subr.bf16.mxu0 0
  %695 = vmatpush1.bf16.msra.mxu0 0
  %696 = vmatprep.subr.bf16.mxu0 0
  %697 = vmatpush1.bf16.msra.mxu0 0
  %698 = vmatprep.subr.bf16.mxu0 0
  %699 = vmatpush1.bf16.msra.mxu0 0
  %700 = vmatprep.subr.bf16.mxu0 0
  %701 = vmatpush1.bf16.msra.mxu0 0
  %702 = vmatprep.mubr.bf16.mxu0 0
  %703 = vmatmul.mubr.bf16.gmra.mrb[0].mxu0 %v96
  %v704 = vpop.f32.mrb[0].mxu0
  %v705 = vadd.f32 0.0, %v704
  %v706 = vpop.f32.mrb[0].mxu0
  %v707 = vpop.f32.mrb[0].mxu0
  %v708 = vpop.f32.mrb[0].mxu0
  %709 = vdwg.mxu0
  %v711 = vsel %vm98, %v657, 0
  %713 = vmatprep.subr.bf16.mxu0 0
  %714 = vmatpush1.bf16.msra.mxu0 %v711
  %715 = vmatprep.subr.bf16.mxu0 0
  %716 = vmatpush1.bf16.msra.mxu0 0
  %717 = vmatprep.subr.bf16.mxu0 0
  %718 = vmatpush1.bf16.msra.mxu0 0
  %719 = vmatprep.subr.bf16.mxu0 0
  %720 = vmatpush1.bf16.msra.mxu0 0
  %721 = vmatprep.subr.bf16.mxu0 0
  %722 = vmatpush1.bf16.msra.mxu0 0
  %723 = vmatprep.subr.bf16.mxu0 0
  %724 = vmatpush1.bf16.msra.mxu0 0
  %725 = vmatprep.subr.bf16.mxu0 0
  %726 = vmatpush1.bf16.msra.mxu0 0
  %727 = vmatprep.subr.bf16.mxu0 0
  %728 = vmatpush1.bf16.msra.mxu0 0
  %729 = vmatprep.subr.bf16.mxu0 0
  %730 = vmatpush1.bf16.msra.mxu0 0
  %731 = vmatprep.subr.bf16.mxu0 0
  %732 = vmatpush1.bf16.msra.mxu0 0
  %733 = vmatprep.subr.bf16.mxu0 0
  %734 = vmatpush1.bf16.msra.mxu0 0
  %735 = vmatprep.subr.bf16.mxu0 0
  %736 = vmatpush1.bf16.msra.mxu0 0
  %737 = vmatprep.subr.bf16.mxu0 0
  %738 = vmatpush1.bf16.msra.mxu0 0
  %739 = vmatprep.subr.bf16.mxu0 0
  %740 = vmatpush1.bf16.msra.mxu0 0
  %741 = vmatprep.subr.bf16.mxu0 0
  %742 = vmatpush1.bf16.msra.mxu0 0
  %743 = vmatprep.subr.bf16.mxu0 0
  %744 = vmatpush1.bf16.msra.mxu0 0
  %745 = vmatprep.mubr.bf16.mxu0 0
  %746 = vmatmul.mubr.bf16.gmra.mrb[0].mxu0 %v143
  %v747 = vpop.f32.mrb[0].mxu0
  %v748 = vadd.f32 %v705, %v747
  %v749 = vpop.f32.mrb[0].mxu0
  %v750 = vpop.f32.mrb[0].mxu0
  %v751 = vpop.f32.mrb[0].mxu0
  %752 = vdwg.mxu0
  %753 = vrot.lane.b32.xlu0 %v647, 71
  %v754 = vpop.permute.xlu0 %753
  %755 = vrot.lane.b32.xlu0 %v647, 7
  %v756 = vpop.permute.xlu0 %755
  %v759 = vsel %vm192, %v754, %v756
  %v761 = vmul.bf16 %v759, %v203
  %v763 = vsel %vm98, %v761, 0
  %765 = vmatprep.subr.bf16.mxu0 0
  %766 = vmatpush1.bf16.msra.mxu0 %v763
  %767 = vmatprep.subr.bf16.mxu0 0
  %768 = vmatpush1.bf16.msra.mxu0 0
  %769 = vmatprep.subr.bf16.mxu0 0
  %770 = vmatpush1.bf16.msra.mxu0 0
  %771 = vmatprep.subr.bf16.mxu0 0
  %772 = vmatpush1.bf16.msra.mxu0 0
  %773 = vmatprep.subr.bf16.mxu0 0
  %774 = vmatpush1.bf16.msra.mxu0 0
  %775 = vmatprep.subr.bf16.mxu0 0
  %776 = vmatpush1.bf16.msra.mxu0 0
  %777 = vmatprep.subr.bf16.mxu0 0
  %778 = vmatpush1.bf16.msra.mxu0 0
  %779 = vmatprep.subr.bf16.mxu0 0
  %780 = vmatpush1.bf16.msra.mxu0 0
  %781 = vmatprep.subr.bf16.mxu0 0
  %782 = vmatpush1.bf16.msra.mxu0 0
  %783 = vmatprep.subr.bf16.mxu0 0
  %784 = vmatpush1.bf16.msra.mxu0 0
  %785 = vmatprep.subr.bf16.mxu0 0
  %786 = vmatpush1.bf16.msra.mxu0 0
  %787 = vmatprep.subr.bf16.mxu0 0
  %788 = vmatpush1.bf16.msra.mxu0 0
  %789 = vmatprep.subr.bf16.mxu0 0
  %790 = vmatpush1.bf16.msra.mxu0 0
  %791 = vmatprep.subr.bf16.mxu0 0
  %792 = vmatpush1.bf16.msra.mxu0 0
  %793 = vmatprep.subr.bf16.mxu0 0
  %794 = vmatpush1.bf16.msra.mxu0 0
  %795 = vmatprep.subr.bf16.mxu0 0
  %796 = vmatpush1.bf16.msra.mxu0 0
  %797 = vmatprep.mubr.bf16.mxu0 0
  %798 = vmatmul.mubr.bf16.gmra.mrb[0].mxu0 %v206
  %v799 = vpop.f32.mrb[0].mxu0
  %v800 = vadd.f32 0.0, %v799
  %v801 = vpop.f32.mrb[0].mxu0
  %v802 = vpop.f32.mrb[0].mxu0
  %v803 = vpop.f32.mrb[0].mxu0
  %804 = vdwg.mxu0
  %v805 = vadd.f32 %v748, %v800
  %806 = vrot.lane.b32.xlu0 %v647, 65
  %v807 = vpop.permute.xlu0 %806
  %808 = vrot.lane.b32.xlu0 %v647, 1
  %v809 = vpop.permute.xlu0 %808
  %v812 = vsel %vm256, %v807, %v809
  %v814 = vmul.bf16 %v812, %v267
  %v816 = vsel %vm98, %v814, 0
  %818 = vmatprep.subr.bf16.mxu0 0
  %819 = vmatpush1.bf16.msra.mxu0 %v816
  %820 = vmatprep.subr.bf16.mxu0 0
  %821 = vmatpush1.bf16.msra.mxu0 0
  %822 = vmatprep.subr.bf16.mxu0 0
  %823 = vmatpush1.bf16.msra.mxu0 0
  %824 = vmatprep.subr.bf16.mxu0 0
  %825 = vmatpush1.bf16.msra.mxu0 0
  %826 = vmatprep.subr.bf16.mxu0 0
  %827 = vmatpush1.bf16.msra.mxu0 0
  %828 = vmatprep.subr.bf16.mxu0 0
  %829 = vmatpush1.bf16.msra.mxu0 0
  %830 = vmatprep.subr.bf16.mxu0 0
  %831 = vmatpush1.bf16.msra.mxu0 0
  %832 = vmatprep.subr.bf16.mxu0 0
  %833 = vmatpush1.bf16.msra.mxu0 0
  %834 = vmatprep.subr.bf16.mxu0 0
  %835 = vmatpush1.bf16.msra.mxu0 0
  %836 = vmatprep.subr.bf16.mxu0 0
  %837 = vmatpush1.bf16.msra.mxu0 0
  %838 = vmatprep.subr.bf16.mxu0 0
  %839 = vmatpush1.bf16.msra.mxu0 0
  %840 = vmatprep.subr.bf16.mxu0 0
  %841 = vmatpush1.bf16.msra.mxu0 0
  %842 = vmatprep.subr.bf16.mxu0 0
  %843 = vmatpush1.bf16.msra.mxu0 0
  %844 = vmatprep.subr.bf16.mxu0 0
  %845 = vmatpush1.bf16.msra.mxu0 0
  %846 = vmatprep.subr.bf16.mxu0 0
  %847 = vmatpush1.bf16.msra.mxu0 0
  %848 = vmatprep.subr.bf16.mxu0 0
  %849 = vmatpush1.bf16.msra.mxu0 0
  %850 = vmatprep.mubr.bf16.mxu0 0
  %851 = vmatmul.mubr.bf16.gmra.mrb[0].mxu0 %v270
  %v852 = vpop.f32.mrb[0].mxu0
  %v853 = vadd.f32 0.0, %v852
  %v854 = vpop.f32.mrb[0].mxu0
  %v855 = vpop.f32.mrb[0].mxu0
  %v856 = vpop.f32.mrb[0].mxu0
  %857 = vdwg.mxu0
  %v858 = vadd.f32 %v805, %v853
  %v859 = vmul.bf16 %v647, %v322
  %v861 = vsel %vm98, %v859, 0
  %863 = vmatprep.subr.bf16.mxu0 0
  %864 = vmatpush1.bf16.msra.mxu0 %v861
  %865 = vmatprep.subr.bf16.mxu0 0
  %866 = vmatpush1.bf16.msra.mxu0 0
  %867 = vmatprep.subr.bf16.mxu0 0
  %868 = vmatpush1.bf16.msra.mxu0 0
  %869 = vmatprep.subr.bf16.mxu0 0
  %870 = vmatpush1.bf16.msra.mxu0 0
  %871 = vmatprep.subr.bf16.mxu0 0
  %872 = vmatpush1.bf16.msra.mxu0 0
  %873 = vmatprep.subr.bf16.mxu0 0
  %874 = vmatpush1.bf16.msra.mxu0 0
  %875 = vmatprep.subr.bf16.mxu0 0
  %876 = vmatpush1.bf16.msra.mxu0 0
  %877 = vmatprep.subr.bf16.mxu0 0
  %878 = vmatpush1.bf16.msra.mxu0 0
  %879 = vmatprep.subr.bf16.mxu0 0
  %880 = vmatpush1.bf16.msra.mxu0 0
  %881 = vmatprep.subr.bf16.mxu0 0
  %882 = vmatpush1.bf16.msra.mxu0 0
  %883 = vmatprep.subr.bf16.mxu0 0
  %884 = vmatpush1.bf16.msra.mxu0 0
  %885 = vmatprep.subr.bf16.mxu0 0
  %886 = vmatpush1.bf16.msra.mxu0 0
  %887 = vmatprep.subr.bf16.mxu0 0
  %888 = vmatpush1.bf16.msra.mxu0 0
  %889 = vmatprep.subr.bf16.mxu0 0
  %890 = vmatpush1.bf16.msra.mxu0 0
  %891 = vmatprep.subr.bf16.mxu0 0
  %892 = vmatpush1.bf16.msra.mxu0 0
  %893 = vmatprep.subr.bf16.mxu0 0
  %894 = vmatpush1.bf16.msra.mxu0 0
  %895 = vmatprep.mubr.bf16.mxu0 0
  %896 = vmatmul.mubr.bf16.gmra.mrb[0].mxu0 %v325
  %v897 = vpop.f32.mrb[0].mxu0
  %v898 = vadd.f32 0.0, %v897
  %v899 = vpop.f32.mrb[0].mxu0
  %v900 = vpop.f32.mrb[0].mxu0
  %v901 = vpop.f32.mrb[0].mxu0
  %902 = vdwg.mxu0
  %v903 = vadd.f32 %v858, %v898
  %904 = vrot.lane.b32.xlu0 %v647, 127
  %v905 = vpop.permute.xlu0 %904
  %906 = vrot.lane.b32.xlu0 %v647, 63
  %v907 = vpop.permute.xlu0 %906
  %v910 = vsel %vm375, %v905, %v907
  %v912 = vmul.bf16 %v910, %v386
  %v914 = vsel %vm98, %v912, 0
  %916 = vmatprep.subr.bf16.mxu0 0
  %917 = vmatpush1.bf16.msra.mxu0 %v914
  %918 = vmatprep.subr.bf16.mxu0 0
  %919 = vmatpush1.bf16.msra.mxu0 0
  %920 = vmatprep.subr.bf16.mxu0 0
  %921 = vmatpush1.bf16.msra.mxu0 0
  %922 = vmatprep.subr.bf16.mxu0 0
  %923 = vmatpush1.bf16.msra.mxu0 0
  %924 = vmatprep.subr.bf16.mxu0 0
  %925 = vmatpush1.bf16.msra.mxu0 0
  %926 = vmatprep.subr.bf16.mxu0 0
  %927 = vmatpush1.bf16.msra.mxu0 0
  %928 = vmatprep.subr.bf16.mxu0 0
  %929 = vmatpush1.bf16.msra.mxu0 0
  %930 = vmatprep.subr.bf16.mxu0 0
  %931 = vmatpush1.bf16.msra.mxu0 0
  %932 = vmatprep.subr.bf16.mxu0 0
  %933 = vmatpush1.bf16.msra.mxu0 0
  %934 = vmatprep.subr.bf16.mxu0 0
  %935 = vmatpush1.bf16.msra.mxu0 0
  %936 = vmatprep.subr.bf16.mxu0 0
  %937 = vmatpush1.bf16.msra.mxu0 0
  %938 = vmatprep.subr.bf16.mxu0 0
  %939 = vmatpush1.bf16.msra.mxu0 0
  %940 = vmatprep.subr.bf16.mxu0 0
  %941 = vmatpush1.bf16.msra.mxu0 0
  %942 = vmatprep.subr.bf16.mxu0 0
  %943 = vmatpush1.bf16.msra.mxu0 0
  %944 = vmatprep.subr.bf16.mxu0 0
  %945 = vmatpush1.bf16.msra.mxu0 0
  %946 = vmatprep.subr.bf16.mxu0 0
  %947 = vmatpush1.bf16.msra.mxu0 0
  %948 = vmatprep.mubr.bf16.mxu0 0
  %949 = vmatmul.mubr.bf16.gmra.mrb[0].mxu0 %v389
  %v950 = vpop.f32.mrb[0].mxu0
  %v951 = vadd.f32 0.0, %v950
  %v952 = vpop.f32.mrb[0].mxu0
  %v953 = vpop.f32.mrb[0].mxu0
  %v954 = vpop.f32.mrb[0].mxu0
  %955 = vdwg.mxu0
  %v956 = vadd.f32 %v903, %v951
  %957 = vrot.lane.b32.xlu0 %v647, 121
  %v958 = vpop.permute.xlu0 %957
  %959 = vrot.lane.b32.xlu0 %v647, 57
  %v960 = vpop.permute.xlu0 %959
  %v963 = vsel %vm439, %v958, %v960
  %v965 = vmul.bf16 %v963, %v450
  %v967 = vsel %vm98, %v965, 0
  %969 = vmatprep.subr.bf16.mxu0 0
  %970 = vmatpush1.bf16.msra.mxu0 %v967
  %971 = vmatprep.subr.bf16.mxu0 0
  %972 = vmatpush1.bf16.msra.mxu0 0
  %973 = vmatprep.subr.bf16.mxu0 0
  %974 = vmatpush1.bf16.msra.mxu0 0
  %975 = vmatprep.subr.bf16.mxu0 0
  %976 = vmatpush1.bf16.msra.mxu0 0
  %977 = vmatprep.subr.bf16.mxu0 0
  %978 = vmatpush1.bf16.msra.mxu0 0
  %979 = vmatprep.subr.bf16.mxu0 0
  %980 = vmatpush1.bf16.msra.mxu0 0
  %981 = vmatprep.subr.bf16.mxu0 0
  %982 = vmatpush1.bf16.msra.mxu0 0
  %983 = vmatprep.subr.bf16.mxu0 0
  %984 = vmatpush1.bf16.msra.mxu0 0
  %985 = vmatprep.subr.bf16.mxu0 0
  %986 = vmatpush1.bf16.msra.mxu0 0
  %987 = vmatprep.subr.bf16.mxu0 0
  %988 = vmatpush1.bf16.msra.mxu0 0
  %989 = vmatprep.subr.bf16.mxu0 0
  %990 = vmatpush1.bf16.msra.mxu0 0
  %991 = vmatprep.subr.bf16.mxu0 0
  %992 = vmatpush1.bf16.msra.mxu0 0
  %993 = vmatprep.subr.bf16.mxu0 0
  %994 = vmatpush1.bf16.msra.mxu0 0
  %995 = vmatprep.subr.bf16.mxu0 0
  %996 = vmatpush1.bf16.msra.mxu0 0
  %997 = vmatprep.subr.bf16.mxu0 0
  %998 = vmatpush1.bf16.msra.mxu0 0
  %999 = vmatprep.subr.bf16.mxu0 0
  %1000 = vmatpush1.bf16.msra.mxu0 0
  %1001 = vmatprep.mubr.bf16.mxu0 0
  %1002 = vmatmul.mubr.bf16.gmra.mrb[0].mxu0 %v453
  %v1003 = vpop.f32.mrb[0].mxu0
  %v1004 = vadd.f32 0.0, %v1003
  %v1005 = vpop.f32.mrb[0].mxu0
  %v1006 = vpop.f32.mrb[0].mxu0
  %v1007 = vpop.f32.mrb[0].mxu0
  %1008 = vdwg.mxu0
  %v1009 = vadd.f32 %v956, %v1004
  %1010 = vrot.lane.b32.xlu0 %v647, 120
  %v1011 = vpop.permute.xlu0 %1010
  %1012 = vrot.lane.b32.xlu0 %v647, 56
  %v1013 = vpop.permute.xlu0 %1012
  %v1016 = vsel %vm503, %v1011, %v1013
  %v1018 = vmul.bf16 %v1016, %v514
  %v1020 = vsel %vm98, %v1018, 0
  %1022 = vmatprep.subr.bf16.mxu0 0
  %1023 = vmatpush1.bf16.msra.mxu0 %v1020
  %1024 = vmatprep.subr.bf16.mxu0 0
  %1025 = vmatpush1.bf16.msra.mxu0 0
  %1026 = vmatprep.subr.bf16.mxu0 0
  %1027 = vmatpush1.bf16.msra.mxu0 0
  %1028 = vmatprep.subr.bf16.mxu0 0
  %1029 = vmatpush1.bf16.msra.mxu0 0
  %1030 = vmatprep.subr.bf16.mxu0 0
  %1031 = vmatpush1.bf16.msra.mxu0 0
  %1032 = vmatprep.subr.bf16.mxu0 0
  %1033 = vmatpush1.bf16.msra.mxu0 0
  %1034 = vmatprep.subr.bf16.mxu0 0
  %1035 = vmatpush1.bf16.msra.mxu0 0
  %1036 = vmatprep.subr.bf16.mxu0 0
  %1037 = vmatpush1.bf16.msra.mxu0 0
  %1038 = vmatprep.subr.bf16.mxu0 0
  %1039 = vmatpush1.bf16.msra.mxu0 0
  %1040 = vmatprep.subr.bf16.mxu0 0
  %1041 = vmatpush1.bf16.msra.mxu0 0
  %1042 = vmatprep.subr.bf16.mxu0 0
  %1043 = vmatpush1.bf16.msra.mxu0 0
  %1044 = vmatprep.subr.bf16.mxu0 0
  %1045 = vmatpush1.bf16.msra.mxu0 0
  %1046 = vmatprep.subr.bf16.mxu0 0
  %1047 = vmatpush1.bf16.msra.mxu0 0
  %1048 = vmatprep.subr.bf16.mxu0 0
  %1049 = vmatpush1.bf16.msra.mxu0 0
  %1050 = vmatprep.subr.bf16.mxu0 0
  %1051 = vmatpush1.bf16.msra.mxu0 0
  %1052 = vmatprep.subr.bf16.mxu0 0
  %1053 = vmatpush1.bf16.msra.mxu0 0
  %1054 = vmatprep.mubr.bf16.mxu0 0
  %1055 = vmatmul.mubr.bf16.gmra.mrb[0].mxu0 %v517
  %v1056 = vpop.f32.mrb[0].mxu0
  %v1057 = vadd.f32 0.0, %v1056
  %v1058 = vpop.f32.mrb[0].mxu0
  %v1059 = vpop.f32.mrb[0].mxu0
  %v1060 = vpop.f32.mrb[0].mxu0
  %1061 = vdwg.mxu0
  %v1062 = vadd.f32 %v1009, %v1057
  %1063 = vrot.lane.b32.xlu0 %v647, 119
  %v1064 = vpop.permute.xlu0 %1063
  %1065 = vrot.lane.b32.xlu0 %v647, 55
  %v1066 = vpop.permute.xlu0 %1065
  %v1069 = vsel %vm567, %v1064, %v1066
  %v1071 = vmul.bf16 %v1069, %v578
  %v1073 = vsel %vm98, %v1071, 0
  %1075 = vmatprep.subr.bf16.mxu0 0
  %1076 = vmatpush1.bf16.msra.mxu0 %v1073
  %1077 = vmatprep.subr.bf16.mxu0 0
  %1078 = vmatpush1.bf16.msra.mxu0 0
  %1079 = vmatprep.subr.bf16.mxu0 0
  %1080 = vmatpush1.bf16.msra.mxu0 0
  %1081 = vmatprep.subr.bf16.mxu0 0
  %1082 = vmatpush1.bf16.msra.mxu0 0
  %1083 = vmatprep.subr.bf16.mxu0 0
  %1084 = vmatpush1.bf16.msra.mxu0 0
  %1085 = vmatprep.subr.bf16.mxu0 0
  %1086 = vmatpush1.bf16.msra.mxu0 0
  %1087 = vmatprep.subr.bf16.mxu0 0
  %1088 = vmatpush1.bf16.msra.mxu0 0
  %1089 = vmatprep.subr.bf16.mxu0 0
  %1090 = vmatpush1.bf16.msra.mxu0 0
  %1091 = vmatprep.subr.bf16.mxu0 0
  %1092 = vmatpush1.bf16.msra.mxu0 0
  %1093 = vmatprep.subr.bf16.mxu0 0
  %1094 = vmatpush1.bf16.msra.mxu0 0
  %1095 = vmatprep.subr.bf16.mxu0 0
  %1096 = vmatpush1.bf16.msra.mxu0 0
  %1097 = vmatprep.subr.bf16.mxu0 0
  %1098 = vmatpush1.bf16.msra.mxu0 0
  %1099 = vmatprep.subr.bf16.mxu0 0
  %1100 = vmatpush1.bf16.msra.mxu0 0
  %1101 = vmatprep.subr.bf16.mxu0 0
  %1102 = vmatpush1.bf16.msra.mxu0 0
  %1103 = vmatprep.subr.bf16.mxu0 0
  %1104 = vmatpush1.bf16.msra.mxu0 0
  %1105 = vmatprep.subr.bf16.mxu0 0
  %1106 = vmatpush1.bf16.msra.mxu0 0
  %1107 = vmatprep.mubr.bf16.mxu0 0
  %1108 = vmatmul.mubr.bf16.gmra.mrb[0].mxu0 %v581
  %v1109 = vpop.f32.mrb[0].mxu0
  %v1110 = vadd.f32 0.0, %v1109
  %v1111 = vpop.f32.mrb[0].mxu0
  %v1112 = vpop.f32.mrb[0].mxu0
  %v1113 = vpop.f32.mrb[0].mxu0
  %1114 = vdwg.mxu0
  %v1115 = vadd.f32 %v1062, %v1110
  %v1116 = vpack.c.bf16 %v1115, %v1115
  %s1117 = scalar_lea.vmem %s5, 4
  %1118 = vst.msk [vmem:[%s1117] sm:$0xf] %vm628, %v1116
  %v1119 = vunpack.c.l.bf16 %v1116
  %v1120 = vsel %vm631, %v1119, 0.0
  %1121 = vadd.xlane.f32.xlu0 %v1120
  %v1122 = vpop.xlane.xlu0 %1121
  %v1123 = vadd.f32 %v635, %v1122
  %v1124 = vmul.f32 %v1119, %v1119
  %v1125 = vsel %vm631, %v1124, 0.0
  %1126 = vadd.xlane.f32.xlu0 %v1125
  %v1127 = vpop.xlane.xlu0 %1126
  %v1128 = vadd.f32 %v640, %v1127
  %1129 = vst.msk [vmem:[%s6] sm:$0xff] %vm256, %v1123
  %1130 = vst.msk [vmem:[%s7] sm:$0xff] %vm256, %v1128
  // Predicated region
  $region22: #{encode_forward.4} parent=0 // pred_check
    _
  $region23: #{encode_forward.4} parent=0 // pred_check_branch
    %1132 = sbr.rel (0) target = $region25
  $region24: #{encode_forward.4} parent=0 // pred_region
    _
  $region25: #{encode_forward.4} parent=0 // pred_fallthru
    _
  // Predicated region
  $region26: #{encode_forward.4} parent=0 // pred_check
    _
  $region27: #{encode_forward.4} parent=0 // pred_check_branch
    %1134 = sbr.rel (0) target = $region29
  $region28: #{encode_forward.4} parent=0 // pred_region
    _
  $region29: #{encode_forward.4} parent=0 // pred_fallthru
    _
  // Predicated region
  $region30: #{encode_forward.4} parent=0 // pred_check
    _
  $region31: #{encode_forward.4} parent=0 // pred_check_branch
    %1136 = sbr.rel (0) target = $region33
  $region32: #{encode_forward.4} parent=0 // pred_region
    _
  $region33: #{encode_forward.4} parent=0 // pred_fallthru
    _
  // Predicated region
  $region34: #{encode_forward.4} parent=0 // pred_check
    _
  $region35: #{encode_forward.4} parent=0 // pred_check_branch
    %1138 = sbr.rel (0) target = $region37
  $region36: #{encode_forward.4} parent=0 // pred_region
    _
  $region37: #{encode_forward.4} parent=0 // pred_fallthru
    _
  // Predicated region
  $region38: #{encode_forward.4} parent=0 // pred_check
    _
  $region39: #{encode_forward.4} parent=0 // pred_check_branch
    %1140 = sbr.rel (0) target = $region41
  $region40: #{encode_forward.4} parent=0 // pred_region
    _
  $region41: #{encode_forward.4} parent=0 // pred_fallthru
    _
  // Predicated region
  $region42: #{encode_forward.4} parent=0 // pred_check
    _
  $region43: #{encode_forward.4} parent=0 // pred_check_branch
    %1142 = sbr.rel (0) target = $region45
  $region44: #{encode_forward.4} parent=0 // pred_region
    _
  $region45: #{encode_forward.4} parent=0 // pred_fallthru
    _

// kernel: encode_forward.3
$region0: #{encode_forward.3}
  #allocation0 [shape = 'u32[]', space=smem, size = 0x4, offset = 0x4, fixed_abs, tag = 'smem constant byte address 0x4 - core index']
  #allocation1 [shape = 'u32[144,128]{1,0:T(1,128)}', space=vmem, size = 0x12000, scoped, tag = 'internal scratch']
  %s0 = inlined_call_operand.hbm [shape: f32[2,4,16,16], index: 0, kind: input, shape index: {}]
  %s1 = inlined_call_operand.vmem [shape: bf16[9,8,4], index: 1, kind: input, shape index: {}]
  %s2 = inlined_call_operand.vmem [shape: bf16[9,1,64], index: 2, kind: input, shape index: {}]
  %s3 = inlined_call_operand.vmem [shape: bf16[2,8,64], index: 3, kind: output, shape index: {0}]
  %s4 = inlined_call_operand.vmem [shape: f32[1,8,1], index: 4, kind: output, shape index: {1}]
  %s5 = inlined_call_operand.vmem [shape: f32[1,8,1], index: 5, kind: output, shape index: {2}]
  %6 = xla_tuple %s3, %s4, %s5
  %s7 = sld [smem:[#allocation0]]
  $region42: #{encode_forward.3} parent=0
    _
  %s9 = ssub.s32 1, %s7
  %s10 = scalar_select 0, %s9, %s7
  $region1: #{encode_forward.3} parent=0
    #allocation2 [shape = 'u8[65536]{0}', space=vmem, size = 0x10000, scoped, tag = 'input window, operand 0, single buffered']
    #allocation3 [shape = 's32[1]{0}', space=sflag, size = 0x4, scoped, tag = 'scoped memory for encode_forward.3']
    %11 = vsyncpa [#allocation3], 0
    // Predicated region
    $region2: #{encode_forward.3} parent=1 // pred_check
      _
    $region3: #{encode_forward.3} parent=1 // pred_check_branch
      %13 = sbr.rel (0) target = $region5
    $region4: #{encode_forward.3} parent=1 // pred_region
      %s15 = ssub.s32 2048, 2048
      %16 = vsyncadd [#allocation3], %s15
      %s17 = sshll.u32 [#allocation2], 4
      %s18 = int_to_ptr.vmem [resolvable:$true] %s17
      %23 = dma.hbm_to_vmem [thread:$0]  %s0, 2048, %s18, [#allocation3], 128, 128, 8
    $region5: #{encode_forward.3} parent=1 // pred_fallthru
      _
    // Predicated region
    $region6: #{encode_forward.3} parent=1 // pred_check
      _
    $region7: #{encode_forward.3} parent=1 // pred_check_branch
      %25 = sbr.rel (0) target = $region9
    $region8: #{encode_forward.3} parent=1 // pred_region
      _
    $region9: #{encode_forward.3} parent=1 // pred_fallthru
      _
    // Predicated region
    $region10: #{encode_forward.3} parent=1 // pred_check
      _
    $region11: #{encode_forward.3} parent=1 // pred_check_branch
      %27 = sbr.rel (0) target = $region13
    $region12: #{encode_forward.3} parent=1 // pred_region
      _
    $region13: #{encode_forward.3} parent=1 // pred_fallthru
      _
    // Predicated region
    $region14: #{encode_forward.3} parent=1 // pred_check
      _
    $region15: #{encode_forward.3} parent=1 // pred_check_branch
      %29 = sbr.rel (0) target = $region17
    $region16: #{encode_forward.3} parent=1 // pred_region
      %30 = dma.done [#allocation3], 2048
    $region17: #{encode_forward.3} parent=1 // pred_fallthru
      _
    %v32 = vld [vmem:[%s1] sm:$0xf]
    %v33 = vld [vmem:[%s1 + $0x4] sm:$0xf]
    %v34 = vld [vmem:[%s1 + $0x8] sm:$0xf]
    %v35 = vld [vmem:[%s1 + $0xc] sm:$0xf]
    %v36 = vld [vmem:[%s1 + $0x10] sm:$0xf]
    %v37 = vld [vmem:[%s1 + $0x14] sm:$0xf]
    %v38 = vld [vmem:[%s1 + $0x18] sm:$0xf]
    %v39 = vld [vmem:[%s1 + $0x1c] sm:$0xf]
    %v40 = vld [vmem:[%s1 + $0x20] sm:$0xf]
    %v41 = vld [vmem:[%s2] sm:$0x1]
    %v42 = vld [vmem:[%s2 + $0x1] sm:$0x1]
    %v43 = vld [vmem:[%s2 + $0x2] sm:$0x1]
    %v44 = vld [vmem:[%s2 + $0x3] sm:$0x1]
    %v45 = vld [vmem:[%s2 + $0x4] sm:$0x1]
    %v46 = vld [vmem:[%s2 + $0x5] sm:$0x1]
    %v47 = vld [vmem:[%s2 + $0x6] sm:$0x1]
    %v48 = vld [vmem:[%s2 + $0x7] sm:$0x1]
    %v49 = vld [vmem:[%s2 + $0x8] sm:$0x1]
    %v50 = vld [vmem:[#allocation2] sm:$0xff]
    %v51 = vld [vmem:[#allocation2 + $0x8] sm:$0xff]
    %v52 = vld [vmem:[#allocation2 + $0x10] sm:$0xff]
    %v53 = vld [vmem:[#allocation2 + $0x18] sm:$0xff]
    %v54 = vld [vmem:[#allocation2 + $0x20] sm:$0xff]
    %v55 = vld [vmem:[#allocation2 + $0x28] sm:$0xff]
    %v56 = vld [vmem:[#allocation2 + $0x30] sm:$0xff]
    %v57 = vld [vmem:[#allocation2 + $0x38] sm:$0xff]
    %v66 = vcombine.high %v50, %v50
    %v68 = vunpack.c.l.s4 1983009808
    %v69 = vunpack.c.0.s8 %v68
    %v70 = vlaneseq
    %v71 = vshrl.u32 %v70, 7
    %v72 = vsub.s32 %v69, %v71
    %v73 = vrot.slane %v50, %v72
    %v75 = vunpack.c.l.s4 1983009808
    %v76 = vunpack.c.0.s8 %v75
    %v77 = vlaneseq
    %v78 = vshrl.u32 %v77, 7
    %v79 = vsub.s32 %v76, %v78
    %v80 = vrot.slane %v66, %v79
    %v81 = vcombine.high %v73, %v73
    %v82 = vcombine.high %v80, %v80
    %v83 = vcombine.high %v51, %v51
    %v85 = vunpack.c.l.s4 1983009808
    %v86 = vunpack.c.0.s8 %v85
    %v87 = vlaneseq
    %v88 = vshrl.u32 %v87, 7
    %v89 = vsub.s32 %v86, %v88
    %v90 = vrot.slane %v51, %v89
    %v92 = vunpack.c.l.s4 1983009808
    %v93 = vunpack.c.0.s8 %v92
    %v94 = vlaneseq
    %v95 = vshrl.u32 %v94, 7
    %v96 = vsub.s32 %v93, %v95
    %v97 = vrot.slane %v83, %v96
    %v98 = vcombine.high %v90, %v90
    %v99 = vcombine.high %v97, %v97
    %v100 = vcombine.high %v52, %v52
    %v102 = vunpack.c.l.s4 1983009808
    %v103 = vunpack.c.0.s8 %v102
    %v104 = vlaneseq
    %v105 = vshrl.u32 %v104, 7
    %v106 = vsub.s32 %v103, %v105
    %v107 = vrot.slane %v52, %v106
    %v109 = vunpack.c.l.s4 1983009808
    %v110 = vunpack.c.0.s8 %v109
    %v111 = vlaneseq
    %v112 = vshrl.u32 %v111, 7
    %v113 = vsub.s32 %v110, %v112
    %v114 = vrot.slane %v100, %v113
    %v115 = vcombine.high %v107, %v107
    %v116 = vcombine.high %v114, %v114
    %v117 = vcombine.high %v53, %v53
    %v119 = vunpack.c.l.s4 1983009808
    %v120 = vunpack.c.0.s8 %v119
    %v121 = vlaneseq
    %v122 = vshrl.u32 %v121, 7
    %v123 = vsub.s32 %v120, %v122
    %v124 = vrot.slane %v53, %v123
    %v126 = vunpack.c.l.s4 1983009808
    %v127 = vunpack.c.0.s8 %v126
    %v128 = vlaneseq
    %v129 = vshrl.u32 %v128, 7
    %v130 = vsub.s32 %v127, %v129
    %v131 = vrot.slane %v117, %v130
    %v132 = vcombine.high %v124, %v124
    %v133 = vcombine.high %v131, %v131
    %v134 = vcombine.high %v54, %v54
    %v136 = vunpack.c.l.s4 1983009808
    %v137 = vunpack.c.0.s8 %v136
    %v138 = vlaneseq
    %v139 = vshrl.u32 %v138, 7
    %v140 = vsub.s32 %v137, %v139
    %v141 = vrot.slane %v54, %v140
    %v143 = vunpack.c.l.s4 1983009808
    %v144 = vunpack.c.0.s8 %v143
    %v145 = vlaneseq
    %v146 = vshrl.u32 %v145, 7
    %v147 = vsub.s32 %v144, %v146
    %v148 = vrot.slane %v134, %v147
    %v149 = vcombine.high %v141, %v141
    %v150 = vcombine.high %v148, %v148
    %v151 = vcombine.high %v55, %v55
    %v153 = vunpack.c.l.s4 1983009808
    %v154 = vunpack.c.0.s8 %v153
    %v155 = vlaneseq
    %v156 = vshrl.u32 %v155, 7
    %v157 = vsub.s32 %v154, %v156
    %v158 = vrot.slane %v55, %v157
    %v160 = vunpack.c.l.s4 1983009808
    %v161 = vunpack.c.0.s8 %v160
    %v162 = vlaneseq
    %v163 = vshrl.u32 %v162, 7
    %v164 = vsub.s32 %v161, %v163
    %v165 = vrot.slane %v151, %v164
    %v166 = vcombine.high %v158, %v158
    %v167 = vcombine.high %v165, %v165
    %v168 = vcombine.high %v56, %v56
    %v170 = vunpack.c.l.s4 1983009808
    %v171 = vunpack.c.0.s8 %v170
    %v172 = vlaneseq
    %v173 = vshrl.u32 %v172, 7
    %v174 = vsub.s32 %v171, %v173
    %v175 = vrot.slane %v56, %v174
    %v177 = vunpack.c.l.s4 1983009808
    %v178 = vunpack.c.0.s8 %v177
    %v179 = vlaneseq
    %v180 = vshrl.u32 %v179, 7
    %v181 = vsub.s32 %v178, %v180
    %v182 = vrot.slane %v168, %v181
    %v183 = vcombine.high %v175, %v175
    %v184 = vcombine.high %v182, %v182
    %v185 = vcombine.high %v57, %v57
    %v187 = vunpack.c.l.s4 1983009808
    %v188 = vunpack.c.0.s8 %v187
    %v189 = vlaneseq
    %v190 = vshrl.u32 %v189, 7
    %v191 = vsub.s32 %v188, %v190
    %v192 = vrot.slane %v57, %v191
    %v194 = vunpack.c.l.s4 1983009808
    %v195 = vunpack.c.0.s8 %v194
    %v196 = vlaneseq
    %v197 = vshrl.u32 %v196, 7
    %v198 = vsub.s32 %v195, %v197
    %v199 = vrot.slane %v185, %v198
    %v200 = vcombine.high %v192, %v192
    %v201 = vcombine.high %v199, %v199
    %vm234 = vcmask 123904
    %v235 = vsel %vm234, %v73, -inf
    %v236 = vrot.slane %v235, 4
    %v237 = vmax.f32 %v235, %v236
    %v238 = vrot.slane %v237, 2
    %v239 = vmax.f32 %v237, %v238
    %v240 = vrot.slane %v239, 1
    %v241 = vmax.f32 %v239, %v240
    %v242 = vsel %vm234, %v81, -inf
    %v243 = vrot.slane %v242, 4
    %v244 = vmax.f32 %v242, %v243
    %v245 = vrot.slane %v244, 2
    %v246 = vmax.f32 %v244, %v245
    %v247 = vrot.slane %v246, 1
    %v248 = vmax.f32 %v246, %v247
    %v249 = vsel %vm234, %v80, -inf
    %v250 = vrot.slane %v249, 4
    %v251 = vmax.f32 %v249, %v250
    %v252 = vrot.slane %v251, 2
    %v253 = vmax.f32 %v251, %v252
    %v254 = vrot.slane %v253, 1
    %v255 = vmax.f32 %v253, %v254
    %v256 = vsel %vm234, %v82, -inf
    %v257 = vrot.slane %v256, 4
    %v258 = vmax.f32 %v256, %v257
    %v259 = vrot.slane %v258, 2
    %v260 = vmax.f32 %v258, %v259
    %v261 = vrot.slane %v260, 1
    %v262 = vmax.f32 %v260, %v261
    %v263 = vsel %vm234, %v90, -inf
    %v264 = vrot.slane %v263, 4
    %v265 = vmax.f32 %v263, %v264
    %v266 = vrot.slane %v265, 2
    %v267 = vmax.f32 %v265, %v266
    %v268 = vrot.slane %v267, 1
    %v269 = vmax.f32 %v267, %v268
    %v270 = vsel %vm234, %v98, -inf
    %v271 = vrot.slane %v270, 4
    %v272 = vmax.f32 %v270, %v271
    %v273 = vrot.slane %v272, 2
    %v274 = vmax.f32 %v272, %v273
    %v275 = vrot.slane %v274, 1
    %v276 = vmax.f32 %v274, %v275
    %v277 = vsel %vm234, %v97, -inf
    %v278 = vrot.slane %v277, 4
    %v279 = vmax.f32 %v277, %v278
    %v280 = vrot.slane %v279, 2
    %v281 = vmax.f32 %v279, %v280
    %v282 = vrot.slane %v281, 1
    %v283 = vmax.f32 %v281, %v282
    %v284 = vsel %vm234, %v99, -inf
    %v285 = vrot.slane %v284, 4
    %v286 = vmax.f32 %v284, %v285
    %v287 = vrot.slane %v286, 2
    %v288 = vmax.f32 %v286, %v287
    %v289 = vrot.slane %v288, 1
    %v290 = vmax.f32 %v288, %v289
    %v291 = vsel %vm234, %v107, -inf
    %v292 = vrot.slane %v291, 4
    %v293 = vmax.f32 %v291, %v292
    %v294 = vrot.slane %v293, 2
    %v295 = vmax.f32 %v293, %v294
    %v296 = vrot.slane %v295, 1
    %v297 = vmax.f32 %v295, %v296
    %v298 = vsel %vm234, %v115, -inf
    %v299 = vrot.slane %v298, 4
    %v300 = vmax.f32 %v298, %v299
    %v301 = vrot.slane %v300, 2
    %v302 = vmax.f32 %v300, %v301
    %v303 = vrot.slane %v302, 1
    %v304 = vmax.f32 %v302, %v303
    %v305 = vsel %vm234, %v114, -inf
    %v306 = vrot.slane %v305, 4
    %v307 = vmax.f32 %v305, %v306
    %v308 = vrot.slane %v307, 2
    %v309 = vmax.f32 %v307, %v308
    %v310 = vrot.slane %v309, 1
    %v311 = vmax.f32 %v309, %v310
    %v312 = vsel %vm234, %v116, -inf
    %v313 = vrot.slane %v312, 4
    %v314 = vmax.f32 %v312, %v313
    %v315 = vrot.slane %v314, 2
    %v316 = vmax.f32 %v314, %v315
    %v317 = vrot.slane %v316, 1
    %v318 = vmax.f32 %v316, %v317
    %v319 = vsel %vm234, %v124, -inf
    %v320 = vrot.slane %v319, 4
    %v321 = vmax.f32 %v319, %v320
    %v322 = vrot.slane %v321, 2
    %v323 = vmax.f32 %v321, %v322
    %v324 = vrot.slane %v323, 1
    %v325 = vmax.f32 %v323, %v324
    %v326 = vsel %vm234, %v132, -inf
    %v327 = vrot.slane %v326, 4
    %v328 = vmax.f32 %v326, %v327
    %v329 = vrot.slane %v328, 2
    %v330 = vmax.f32 %v328, %v329
    %v331 = vrot.slane %v330, 1
    %v332 = vmax.f32 %v330, %v331
    %v333 = vsel %vm234, %v131, -inf
    %v334 = vrot.slane %v333, 4
    %v335 = vmax.f32 %v333, %v334
    %v336 = vrot.slane %v335, 2
    %v337 = vmax.f32 %v335, %v336
    %v338 = vrot.slane %v337, 1
    %v339 = vmax.f32 %v337, %v338
    %v340 = vsel %vm234, %v133, -inf
    %v341 = vrot.slane %v340, 4
    %v342 = vmax.f32 %v340, %v341
    %v343 = vrot.slane %v342, 2
    %v344 = vmax.f32 %v342, %v343
    %v345 = vrot.slane %v344, 1
    %v346 = vmax.f32 %v344, %v345
    %v347 = vsel %vm234, %v141, -inf
    %v348 = vrot.slane %v347, 4
    %v349 = vmax.f32 %v347, %v348
    %v350 = vrot.slane %v349, 2
    %v351 = vmax.f32 %v349, %v350
    %v352 = vrot.slane %v351, 1
    %v353 = vmax.f32 %v351, %v352
    %v354 = vsel %vm234, %v149, -inf
    %v355 = vrot.slane %v354, 4
    %v356 = vmax.f32 %v354, %v355
    %v357 = vrot.slane %v356, 2
    %v358 = vmax.f32 %v356, %v357
    %v359 = vrot.slane %v358, 1
    %v360 = vmax.f32 %v358, %v359
    %v361 = vsel %vm234, %v148, -inf
    %v362 = vrot.slane %v361, 4
    %v363 = vmax.f32 %v361, %v362
    %v364 = vrot.slane %v363, 2
    %v365 = vmax.f32 %v363, %v364
    %v366 = vrot.slane %v365, 1
    %v367 = vmax.f32 %v365, %v366
    %v368 = vsel %vm234, %v150, -inf
    %v369 = vrot.slane %v368, 4
    %v370 = vmax.f32 %v368, %v369
    %v371 = vrot.slane %v370, 2
    %v372 = vmax.f32 %v370, %v371
    %v373 = vrot.slane %v372, 1
    %v374 = vmax.f32 %v372, %v373
    %v375 = vsel %vm234, %v158, -inf
    %v376 = vrot.slane %v375, 4
    %v377 = vmax.f32 %v375, %v376
    %v378 = vrot.slane %v377, 2
    %v379 = vmax.f32 %v377, %v378
    %v380 = vrot.slane %v379, 1
    %v381 = vmax.f32 %v379, %v380
    %v382 = vsel %vm234, %v166, -inf
    %v383 = vrot.slane %v382, 4
    %v384 = vmax.f32 %v382, %v383
    %v385 = vrot.slane %v384, 2
    %v386 = vmax.f32 %v384, %v385
    %v387 = vrot.slane %v386, 1
    %v388 = vmax.f32 %v386, %v387
    %v389 = vsel %vm234, %v165, -inf
    %v390 = vrot.slane %v389, 4
    %v391 = vmax.f32 %v389, %v390
    %v392 = vrot.slane %v391, 2
    %v393 = vmax.f32 %v391, %v392
    %v394 = vrot.slane %v393, 1
    %v395 = vmax.f32 %v393, %v394
    %v396 = vsel %vm234, %v167, -inf
    %v397 = vrot.slane %v396, 4
    %v398 = vmax.f32 %v396, %v397
    %v399 = vrot.slane %v398, 2
    %v400 = vmax.f32 %v398, %v399
    %v401 = vrot.slane %v400, 1
    %v402 = vmax.f32 %v400, %v401
    %v403 = vsel %vm234, %v175, -inf
    %v404 = vrot.slane %v403, 4
    %v405 = vmax.f32 %v403, %v404
    %v406 = vrot.slane %v405, 2
    %v407 = vmax.f32 %v405, %v406
    %v408 = vrot.slane %v407, 1
    %v409 = vmax.f32 %v407, %v408
    %v410 = vsel %vm234, %v183, -inf
    %v411 = vrot.slane %v410, 4
    %v412 = vmax.f32 %v410, %v411
    %v413 = vrot.slane %v412, 2
    %v414 = vmax.f32 %v412, %v413
    %v415 = vrot.slane %v414, 1
    %v416 = vmax.f32 %v414, %v415
    %v417 = vsel %vm234, %v182, -inf
    %v418 = vrot.slane %v417, 4
    %v419 = vmax.f32 %v417, %v418
    %v420 = vrot.slane %v419, 2
    %v421 = vmax.f32 %v419, %v420
    %v422 = vrot.slane %v421, 1
    %v423 = vmax.f32 %v421, %v422
    %v424 = vsel %vm234, %v184, -inf
    %v425 = vrot.slane %v424, 4
    %v426 = vmax.f32 %v424, %v425
    %v427 = vrot.slane %v426, 2
    %v428 = vmax.f32 %v426, %v427
    %v429 = vrot.slane %v428, 1
    %v430 = vmax.f32 %v428, %v429
    %v431 = vsel %vm234, %v192, -inf
    %v432 = vrot.slane %v431, 4
    %v433 = vmax.f32 %v431, %v432
    %v434 = vrot.slane %v433, 2
    %v435 = vmax.f32 %v433, %v434
    %v436 = vrot.slane %v435, 1
    %v437 = vmax.f32 %v435, %v436
    %v438 = vsel %vm234, %v200, -inf
    %v439 = vrot.slane %v438, 4
    %v440 = vmax.f32 %v438, %v439
    %v441 = vrot.slane %v440, 2
    %v442 = vmax.f32 %v440, %v441
    %v443 = vrot.slane %v442, 1
    %v444 = vmax.f32 %v442, %v443
    %v445 = vsel %vm234, %v199, -inf
    %v446 = vrot.slane %v445, 4
    %v447 = vmax.f32 %v445, %v446
    %v448 = vrot.slane %v447, 2
    %v449 = vmax.f32 %v447, %v448
    %v450 = vrot.slane %v449, 1
    %v451 = vmax.f32 %v449, %v450
    %v452 = vsel %vm234, %v201, -inf
    %v453 = vrot.slane %v452, 4
    %v454 = vmax.f32 %v452, %v453
    %v455 = vrot.slane %v454, 2
    %v456 = vmax.f32 %v454, %v455
    %v457 = vrot.slane %v456, 1
    %v458 = vmax.f32 %v456, %v457
    %491 = vrot.lane.b32.xlu0 %v241, 126
    %v492 = vpop.permute.xlu0 %491
    %493 = vrot.lane.b32.xlu0 %v248, 126
    %v494 = vpop.permute.xlu0 %493
    %495 = vrot.lane.b32.xlu0 %v255, 126
    %v496 = vpop.permute.xlu0 %495
    %497 = vrot.lane.b32.xlu0 %v262, 126
    %v498 = vpop.permute.xlu0 %497
    %499 = vrot.lane.b32.xlu0 %v269, 126
    %v500 = vpop.permute.xlu0 %499
    %501 = vrot.lane.b32.xlu0 %v276, 126
    %v502 = vpop.permute.xlu0 %501
    %503 = vrot.lane.b32.xlu0 %v283, 126
    %v504 = vpop.permute.xlu0 %503
    %505 = vrot.lane.b32.xlu0 %v290, 126
    %v506 = vpop.permute.xlu0 %505
    %507 = vrot.lane.b32.xlu0 %v297, 126
    %v508 = vpop.permute.xlu0 %507
    %509 = vrot.lane.b32.xlu0 %v304, 126
    %v510 = vpop.permute.xlu0 %509
    %511 = vrot.lane.b32.xlu0 %v311, 126
    %v512 = vpop.permute.xlu0 %511
    %513 = vrot.lane.b32.xlu0 %v318, 126
    %v514 = vpop.permute.xlu0 %513
    %515 = vrot.lane.b32.xlu0 %v325, 126
    %v516 = vpop.permute.xlu0 %515
    %517 = vrot.lane.b32.xlu0 %v332, 126
    %v518 = vpop.permute.xlu0 %517
    %519 = vrot.lane.b32.xlu0 %v339, 126
    %v520 = vpop.permute.xlu0 %519
    %521 = vrot.lane.b32.xlu0 %v346, 126
    %v522 = vpop.permute.xlu0 %521
    %523 = vrot.lane.b32.xlu0 %v353, 126
    %v524 = vpop.permute.xlu0 %523
    %525 = vrot.lane.b32.xlu0 %v360, 126
    %v526 = vpop.permute.xlu0 %525
    %527 = vrot.lane.b32.xlu0 %v367, 126
    %v528 = vpop.permute.xlu0 %527
    %529 = vrot.lane.b32.xlu0 %v374, 126
    %v530 = vpop.permute.xlu0 %529
    %531 = vrot.lane.b32.xlu0 %v381, 126
    %v532 = vpop.permute.xlu0 %531
    %533 = vrot.lane.b32.xlu0 %v388, 126
    %v534 = vpop.permute.xlu0 %533
    %535 = vrot.lane.b32.xlu0 %v395, 126
    %v536 = vpop.permute.xlu0 %535
    %537 = vrot.lane.b32.xlu0 %v402, 126
    %v538 = vpop.permute.xlu0 %537
    %539 = vrot.lane.b32.xlu0 %v409, 126
    %v540 = vpop.permute.xlu0 %539
    %541 = vrot.lane.b32.xlu0 %v416, 126
    %v542 = vpop.permute.xlu0 %541
    %543 = vrot.lane.b32.xlu0 %v423, 126
    %v544 = vpop.permute.xlu0 %543
    %545 = vrot.lane.b32.xlu0 %v430, 126
    %v546 = vpop.permute.xlu0 %545
    %547 = vrot.lane.b32.xlu0 %v437, 126
    %v548 = vpop.permute.xlu0 %547
    %549 = vrot.lane.b32.xlu0 %v444, 126
    %v550 = vpop.permute.xlu0 %549
    %551 = vrot.lane.b32.xlu0 %v451, 126
    %v552 = vpop.permute.xlu0 %551
    %553 = vrot.lane.b32.xlu0 %v458, 126
    %v554 = vpop.permute.xlu0 %553
    %555 = vrot.lane.b32.xlu0 %v241, 124
    %v556 = vpop.permute.xlu0 %555
    %557 = vrot.lane.b32.xlu0 %v248, 124
    %v558 = vpop.permute.xlu0 %557
    %559 = vrot.lane.b32.xlu0 %v255, 124
    %v560 = vpop.permute.xlu0 %559
    %561 = vrot.lane.b32.xlu0 %v262, 124
    %v562 = vpop.permute.xlu0 %561
    %563 = vrot.lane.b32.xlu0 %v269, 124
    %v564 = vpop.permute.xlu0 %563
    %565 = vrot.lane.b32.xlu0 %v276, 124
    %v566 = vpop.permute.xlu0 %565
    %567 = vrot.lane.b32.xlu0 %v283, 124
    %v568 = vpop.permute.xlu0 %567
    %569 = vrot.lane.b32.xlu0 %v290, 124
    %v570 = vpop.permute.xlu0 %569
    %571 = vrot.lane.b32.xlu0 %v297, 124
    %v572 = vpop.permute.xlu0 %571
    %573 = vrot.lane.b32.xlu0 %v304, 124
    %v574 = vpop.permute.xlu0 %573
    %575 = vrot.lane.b32.xlu0 %v311, 124
    %v576 = vpop.permute.xlu0 %575
    %577 = vrot.lane.b32.xlu0 %v318, 124
    %v578 = vpop.permute.xlu0 %577
    %579 = vrot.lane.b32.xlu0 %v325, 124
    %v580 = vpop.permute.xlu0 %579
    %581 = vrot.lane.b32.xlu0 %v332, 124
    %v582 = vpop.permute.xlu0 %581
    %583 = vrot.lane.b32.xlu0 %v339, 124
    %v584 = vpop.permute.xlu0 %583
    %585 = vrot.lane.b32.xlu0 %v346, 124
    %v586 = vpop.permute.xlu0 %585
    %587 = vrot.lane.b32.xlu0 %v353, 124
    %v588 = vpop.permute.xlu0 %587
    %589 = vrot.lane.b32.xlu0 %v360, 124
    %v590 = vpop.permute.xlu0 %589
    %591 = vrot.lane.b32.xlu0 %v367, 124
    %v592 = vpop.permute.xlu0 %591
    %593 = vrot.lane.b32.xlu0 %v374, 124
    %v594 = vpop.permute.xlu0 %593
    %595 = vrot.lane.b32.xlu0 %v381, 124
    %v596 = vpop.permute.xlu0 %595
    %597 = vrot.lane.b32.xlu0 %v388, 124
    %v598 = vpop.permute.xlu0 %597
    %599 = vrot.lane.b32.xlu0 %v395, 124
    %v600 = vpop.permute.xlu0 %599
    %601 = vrot.lane.b32.xlu0 %v402, 124
    %v602 = vpop.permute.xlu0 %601
    %603 = vrot.lane.b32.xlu0 %v409, 124
    %v604 = vpop.permute.xlu0 %603
    %605 = vrot.lane.b32.xlu0 %v416, 124
    %v606 = vpop.permute.xlu0 %605
    %607 = vrot.lane.b32.xlu0 %v423, 124
    %v608 = vpop.permute.xlu0 %607
    %609 = vrot.lane.b32.xlu0 %v430, 124
    %v610 = vpop.permute.xlu0 %609
    %611 = vrot.lane.b32.xlu0 %v437, 124
    %v612 = vpop.permute.xlu0 %611
    %613 = vrot.lane.b32.xlu0 %v444, 124
    %v614 = vpop.permute.xlu0 %613
    %615 = vrot.lane.b32.xlu0 %v451, 124
    %v616 = vpop.permute.xlu0 %615
    %617 = vrot.lane.b32.xlu0 %v458, 124
    %v618 = vpop.permute.xlu0 %617
    %619 = vrot.lane.b32.xlu0 %v241, 122
    %v620 = vpop.permute.xlu0 %619
    %621 = vrot.lane.b32.xlu0 %v248, 122
    %v622 = vpop.permute.xlu0 %621
    %623 = vrot.lane.b32.xlu0 %v255, 122
    %v624 = vpop.permute.xlu0 %623
    %625 = vrot.lane.b32.xlu0 %v262, 122
    %v626 = vpop.permute.xlu0 %625
    %627 = vrot.lane.b32.xlu0 %v269, 122
    %v628 = vpop.permute.xlu0 %627
    %629 = vrot.lane.b32.xlu0 %v276, 122
    %v630 = vpop.permute.xlu0 %629
    %631 = vrot.lane.b32.xlu0 %v283, 122
    %v632 = vpop.permute.xlu0 %631
    %633 = vrot.lane.b32.xlu0 %v290, 122
    %v634 = vpop.permute.xlu0 %633
    %635 = vrot.lane.b32.xlu0 %v297, 122
    %v636 = vpop.permute.xlu0 %635
    %637 = vrot.lane.b32.xlu0 %v304, 122
    %v638 = vpop.permute.xlu0 %637
    %639 = vrot.lane.b32.xlu0 %v311, 122
    %v640 = vpop.permute.xlu0 %639
    %641 = vrot.lane.b32.xlu0 %v318, 122
    %v642 = vpop.permute.xlu0 %641
    %643 = vrot.lane.b32.xlu0 %v325, 122
    %v644 = vpop.permute.xlu0 %643
    %645 = vrot.lane.b32.xlu0 %v332, 122
    %v646 = vpop.permute.xlu0 %645
    %647 = vrot.lane.b32.xlu0 %v339, 122
    %v648 = vpop.permute.xlu0 %647
    %649 = vrot.lane.b32.xlu0 %v346, 122
    %v650 = vpop.permute.xlu0 %649
    %651 = vrot.lane.b32.xlu0 %v353, 122
    %v652 = vpop.permute.xlu0 %651
    %653 = vrot.lane.b32.xlu0 %v360, 122
    %v654 = vpop.permute.xlu0 %653
    %655 = vrot.lane.b32.xlu0 %v367, 122
    %v656 = vpop.permute.xlu0 %655
    %657 = vrot.lane.b32.xlu0 %v374, 122
    %v658 = vpop.permute.xlu0 %657
    %659 = vrot.lane.b32.xlu0 %v381, 122
    %v660 = vpop.permute.xlu0 %659
    %661 = vrot.lane.b32.xlu0 %v388, 122
    %v662 = vpop.permute.xlu0 %661
    %663 = vrot.lane.b32.xlu0 %v395, 122
    %v664 = vpop.permute.xlu0 %663
    %665 = vrot.lane.b32.xlu0 %v402, 122
    %v666 = vpop.permute.xlu0 %665
    %667 = vrot.lane.b32.xlu0 %v409, 122
    %v668 = vpop.permute.xlu0 %667
    %669 = vrot.lane.b32.xlu0 %v416, 122
    %v670 = vpop.permute.xlu0 %669
    %671 = vrot.lane.b32.xlu0 %v423, 122
    %v672 = vpop.permute.xlu0 %671
    %673 = vrot.lane.b32.xlu0 %v430, 122
    %v674 = vpop.permute.xlu0 %673
    %675 = vrot.lane.b32.xlu0 %v437, 122
    %v676 = vpop.permute.xlu0 %675
    %677 = vrot.lane.b32.xlu0 %v444, 122
    %v678 = vpop.permute.xlu0 %677
    %679 = vrot.lane.b32.xlu0 %v451, 122
    %v680 = vpop.permute.xlu0 %679
    %681 = vrot.lane.b32.xlu0 %v458, 122
    %v682 = vpop.permute.xlu0 %681
    %683 = vrot.lane.b32.xlu0 %v241, 120
    %v684 = vpop.permute.xlu0 %683
    %685 = vrot.lane.b32.xlu0 %v248, 120
    %v686 = vpop.permute.xlu0 %685
    %687 = vrot.lane.b32.xlu0 %v255, 120
    %v688 = vpop.permute.xlu0 %687
    %689 = vrot.lane.b32.xlu0 %v262, 120
    %v690 = vpop.permute.xlu0 %689
    %691 = vrot.lane.b32.xlu0 %v269, 120
    %v692 = vpop.permute.xlu0 %691
    %693 = vrot.lane.b32.xlu0 %v276, 120
    %v694 = vpop.permute.xlu0 %693
    %695 = vrot.lane.b32.xlu0 %v283, 120
    %v696 = vpop.permute.xlu0 %695
    %697 = vrot.lane.b32.xlu0 %v290, 120
    %v698 = vpop.permute.xlu0 %697
    %699 = vrot.lane.b32.xlu0 %v297, 120
    %v700 = vpop.permute.xlu0 %699
    %701 = vrot.lane.b32.xlu0 %v304, 120
    %v702 = vpop.permute.xlu0 %701
    %703 = vrot.lane.b32.xlu0 %v311, 120
    %v704 = vpop.permute.xlu0 %703
    %705 = vrot.lane.b32.xlu0 %v318, 120
    %v706 = vpop.permute.xlu0 %705
    %707 = vrot.lane.b32.xlu0 %v325, 120
    %v708 = vpop.permute.xlu0 %707
    %709 = vrot.lane.b32.xlu0 %v332, 120
    %v710 = vpop.permute.xlu0 %709
    %711 = vrot.lane.b32.xlu0 %v339, 120
    %v712 = vpop.permute.xlu0 %711
    %713 = vrot.lane.b32.xlu0 %v346, 120
    %v714 = vpop.permute.xlu0 %713
    %715 = vrot.lane.b32.xlu0 %v353, 120
    %v716 = vpop.permute.xlu0 %715
    %717 = vrot.lane.b32.xlu0 %v360, 120
    %v718 = vpop.permute.xlu0 %717
    %719 = vrot.lane.b32.xlu0 %v367, 120
    %v720 = vpop.permute.xlu0 %719
    %721 = vrot.lane.b32.xlu0 %v374, 120
    %v722 = vpop.permute.xlu0 %721
    %723 = vrot.lane.b32.xlu0 %v381, 120
    %v724 = vpop.permute.xlu0 %723
    %725 = vrot.lane.b32.xlu0 %v388, 120
    %v726 = vpop.permute.xlu0 %725
    %727 = vrot.lane.b32.xlu0 %v395, 120
    %v728 = vpop.permute.xlu0 %727
    %729 = vrot.lane.b32.xlu0 %v402, 120
    %v730 = vpop.permute.xlu0 %729
    %731 = vrot.lane.b32.xlu0 %v409, 120
    %v732 = vpop.permute.xlu0 %731
    %733 = vrot.lane.b32.xlu0 %v416, 120
    %v734 = vpop.permute.xlu0 %733
    %735 = vrot.lane.b32.xlu0 %v423, 120
    %v736 = vpop.permute.xlu0 %735
    %737 = vrot.lane.b32.xlu0 %v430, 120
    %v738 = vpop.permute.xlu0 %737
    %739 = vrot.lane.b32.xlu0 %v437, 120
    %v740 = vpop.permute.xlu0 %739
    %741 = vrot.lane.b32.xlu0 %v444, 120
    %v742 = vpop.permute.xlu0 %741
    %743 = vrot.lane.b32.xlu0 %v451, 120
    %v744 = vpop.permute.xlu0 %743
    %745 = vrot.lane.b32.xlu0 %v458, 120
    %v746 = vpop.permute.xlu0 %745
    %747 = vrot.lane.b32.xlu0 %v241, 118
    %v748 = vpop.permute.xlu0 %747
    %749 = vrot.lane.b32.xlu0 %v248, 118
    %v750 = vpop.permute.xlu0 %749
    %751 = vrot.lane.b32.xlu0 %v255, 118
    %v752 = vpop.permute.xlu0 %751
    %753 = vrot.lane.b32.xlu0 %v262, 118
    %v754 = vpop.permute.xlu0 %753
    %755 = vrot.lane.b32.xlu0 %v269, 118
    %v756 = vpop.permute.xlu0 %755
    %757 = vrot.lane.b32.xlu0 %v276, 118
    %v758 = vpop.permute.xlu0 %757
    %759 = vrot.lane.b32.xlu0 %v283, 118
    %v760 = vpop.permute.xlu0 %759
    %761 = vrot.lane.b32.xlu0 %v290, 118
    %v762 = vpop.permute.xlu0 %761
    %763 = vrot.lane.b32.xlu0 %v297, 118
    %v764 = vpop.permute.xlu0 %763
    %765 = vrot.lane.b32.xlu0 %v304, 118
    %v766 = vpop.permute.xlu0 %765
    %767 = vrot.lane.b32.xlu0 %v311, 118
    %v768 = vpop.permute.xlu0 %767
    %769 = vrot.lane.b32.xlu0 %v318, 118
    %v770 = vpop.permute.xlu0 %769
    %771 = vrot.lane.b32.xlu0 %v325, 118
    %v772 = vpop.permute.xlu0 %771
    %773 = vrot.lane.b32.xlu0 %v332, 118
    %v774 = vpop.permute.xlu0 %773
    %775 = vrot.lane.b32.xlu0 %v339, 118
    %v776 = vpop.permute.xlu0 %775
    %777 = vrot.lane.b32.xlu0 %v346, 118
    %v778 = vpop.permute.xlu0 %777
    %779 = vrot.lane.b32.xlu0 %v353, 118
    %v780 = vpop.permute.xlu0 %779
    %781 = vrot.lane.b32.xlu0 %v360, 118
    %v782 = vpop.permute.xlu0 %781
    %783 = vrot.lane.b32.xlu0 %v367, 118
    %v784 = vpop.permute.xlu0 %783
    %785 = vrot.lane.b32.xlu0 %v374, 118
    %v786 = vpop.permute.xlu0 %785
    %787 = vrot.lane.b32.xlu0 %v381, 118
    %v788 = vpop.permute.xlu0 %787
    %789 = vrot.lane.b32.xlu0 %v388, 118
    %v790 = vpop.permute.xlu0 %789
    %791 = vrot.lane.b32.xlu0 %v395, 118
    %v792 = vpop.permute.xlu0 %791
    %793 = vrot.lane.b32.xlu0 %v402, 118
    %v794 = vpop.permute.xlu0 %793
    %795 = vrot.lane.b32.xlu0 %v409, 118
    %v796 = vpop.permute.xlu0 %795
    %797 = vrot.lane.b32.xlu0 %v416, 118
    %v798 = vpop.permute.xlu0 %797
    %799 = vrot.lane.b32.xlu0 %v423, 118
    %v800 = vpop.permute.xlu0 %799
    %801 = vrot.lane.b32.xlu0 %v430, 118
    %v802 = vpop.permute.xlu0 %801
    %803 = vrot.lane.b32.xlu0 %v437, 118
    %v804 = vpop.permute.xlu0 %803
    %805 = vrot.lane.b32.xlu0 %v444, 118
    %v806 = vpop.permute.xlu0 %805
    %807 = vrot.lane.b32.xlu0 %v451, 118
    %v808 = vpop.permute.xlu0 %807
    %809 = vrot.lane.b32.xlu0 %v458, 118
    %v810 = vpop.permute.xlu0 %809
    %811 = vrot.lane.b32.xlu0 %v241, 116
    %v812 = vpop.permute.xlu0 %811
    %813 = vrot.lane.b32.xlu0 %v248, 116
    %v814 = vpop.permute.xlu0 %813
    %815 = vrot.lane.b32.xlu0 %v255, 116
    %v816 = vpop.permute.xlu0 %815
    %817 = vrot.lane.b32.xlu0 %v262, 116
    %v818 = vpop.permute.xlu0 %817
    %819 = vrot.lane.b32.xlu0 %v269, 116
    %v820 = vpop.permute.xlu0 %819
    %821 = vrot.lane.b32.xlu0 %v276, 116
    %v822 = vpop.permute.xlu0 %821
    %823 = vrot.lane.b32.xlu0 %v283, 116
    %v824 = vpop.permute.xlu0 %823
    %825 = vrot.lane.b32.xlu0 %v290, 116
    %v826 = vpop.permute.xlu0 %825
    %827 = vrot.lane.b32.xlu0 %v297, 116
    %v828 = vpop.permute.xlu0 %827
    %829 = vrot.lane.b32.xlu0 %v304, 116
    %v830 = vpop.permute.xlu0 %829
    %831 = vrot.lane.b32.xlu0 %v311, 116
    %v832 = vpop.permute.xlu0 %831
    %833 = vrot.lane.b32.xlu0 %v318, 116
    %v834 = vpop.permute.xlu0 %833
    %835 = vrot.lane.b32.xlu0 %v325, 116
    %v836 = vpop.permute.xlu0 %835
    %837 = vrot.lane.b32.xlu0 %v332, 116
    %v838 = vpop.permute.xlu0 %837
    %839 = vrot.lane.b32.xlu0 %v339, 116
    %v840 = vpop.permute.xlu0 %839
    %841 = vrot.lane.b32.xlu0 %v346, 116
    %v842 = vpop.permute.xlu0 %841
    %843 = vrot.lane.b32.xlu0 %v353, 116
    %v844 = vpop.permute.xlu0 %843
    %845 = vrot.lane.b32.xlu0 %v360, 116
    %v846 = vpop.permute.xlu0 %845
    %847 = vrot.lane.b32.xlu0 %v367, 116
    %v848 = vpop.permute.xlu0 %847
    %849 = vrot.lane.b32.xlu0 %v374, 116
    %v850 = vpop.permute.xlu0 %849
    %851 = vrot.lane.b32.xlu0 %v381, 116
    %v852 = vpop.permute.xlu0 %851
    %853 = vrot.lane.b32.xlu0 %v388, 116
    %v854 = vpop.permute.xlu0 %853
    %855 = vrot.lane.b32.xlu0 %v395, 116
    %v856 = vpop.permute.xlu0 %855
    %857 = vrot.lane.b32.xlu0 %v402, 116
    %v858 = vpop.permute.xlu0 %857
    %859 = vrot.lane.b32.xlu0 %v409, 116
    %v860 = vpop.permute.xlu0 %859
    %861 = vrot.lane.b32.xlu0 %v416, 116
    %v862 = vpop.permute.xlu0 %861
    %863 = vrot.lane.b32.xlu0 %v423, 116
    %v864 = vpop.permute.xlu0 %863
    %865 = vrot.lane.b32.xlu0 %v430, 116
    %v866 = vpop.permute.xlu0 %865
    %867 = vrot.lane.b32.xlu0 %v437, 116
    %v868 = vpop.permute.xlu0 %867
    %869 = vrot.lane.b32.xlu0 %v444, 116
    %v870 = vpop.permute.xlu0 %869
    %871 = vrot.lane.b32.xlu0 %v451, 116
    %v872 = vpop.permute.xlu0 %871
    %873 = vrot.lane.b32.xlu0 %v458, 116
    %v874 = vpop.permute.xlu0 %873
    %875 = vrot.lane.b32.xlu0 %v241, 114
    %v876 = vpop.permute.xlu0 %875
    %877 = vrot.lane.b32.xlu0 %v248, 114
    %v878 = vpop.permute.xlu0 %877
    %879 = vrot.lane.b32.xlu0 %v255, 114
    %v880 = vpop.permute.xlu0 %879
    %881 = vrot.lane.b32.xlu0 %v262, 114
    %v882 = vpop.permute.xlu0 %881
    %883 = vrot.lane.b32.xlu0 %v269, 114
    %v884 = vpop.permute.xlu0 %883
    %885 = vrot.lane.b32.xlu0 %v276, 114
    %v886 = vpop.permute.xlu0 %885
    %887 = vrot.lane.b32.xlu0 %v283, 114
    %v888 = vpop.permute.xlu0 %887
    %889 = vrot.lane.b32.xlu0 %v290, 114
    %v890 = vpop.permute.xlu0 %889
    %891 = vrot.lane.b32.xlu0 %v297, 114
    %v892 = vpop.permute.xlu0 %891
    %893 = vrot.lane.b32.xlu0 %v304, 114
    %v894 = vpop.permute.xlu0 %893
    %895 = vrot.lane.b32.xlu0 %v311, 114
    %v896 = vpop.permute.xlu0 %895
    %897 = vrot.lane.b32.xlu0 %v318, 114
    %v898 = vpop.permute.xlu0 %897
    %899 = vrot.lane.b32.xlu0 %v325, 114
    %v900 = vpop.permute.xlu0 %899
    %901 = vrot.lane.b32.xlu0 %v332, 114
    %v902 = vpop.permute.xlu0 %901
    %903 = vrot.lane.b32.xlu0 %v339, 114
    %v904 = vpop.permute.xlu0 %903
    %905 = vrot.lane.b32.xlu0 %v346, 114
    %v906 = vpop.permute.xlu0 %905
    %907 = vrot.lane.b32.xlu0 %v353, 114
    %v908 = vpop.permute.xlu0 %907
    %909 = vrot.lane.b32.xlu0 %v360, 114
    %v910 = vpop.permute.xlu0 %909
    %911 = vrot.lane.b32.xlu0 %v367, 114
    %v912 = vpop.permute.xlu0 %911
    %913 = vrot.lane.b32.xlu0 %v374, 114
    %v914 = vpop.permute.xlu0 %913
    %915 = vrot.lane.b32.xlu0 %v381, 114
    %v916 = vpop.permute.xlu0 %915
    %917 = vrot.lane.b32.xlu0 %v388, 114
    %v918 = vpop.permute.xlu0 %917
    %919 = vrot.lane.b32.xlu0 %v395, 114
    %v920 = vpop.permute.xlu0 %919
    %921 = vrot.lane.b32.xlu0 %v402, 114
    %v922 = vpop.permute.xlu0 %921
    %923 = vrot.lane.b32.xlu0 %v409, 114
    %v924 = vpop.permute.xlu0 %923
    %925 = vrot.lane.b32.xlu0 %v416, 114
    %v926 = vpop.permute.xlu0 %925
    %927 = vrot.lane.b32.xlu0 %v423, 114
    %v928 = vpop.permute.xlu0 %927
    %929 = vrot.lane.b32.xlu0 %v430, 114
    %v930 = vpop.permute.xlu0 %929
    %931 = vrot.lane.b32.xlu0 %v437, 114
    %v932 = vpop.permute.xlu0 %931
    %933 = vrot.lane.b32.xlu0 %v444, 114
    %v934 = vpop.permute.xlu0 %933
    %935 = vrot.lane.b32.xlu0 %v451, 114
    %v936 = vpop.permute.xlu0 %935
    %937 = vrot.lane.b32.xlu0 %v458, 114
    %v938 = vpop.permute.xlu0 %937
    %v939 = vrot.slane %v248, 7
    %vm940 = vcmask 1041409
    %v941 = vsel %vm940, %v939, %v241
    %v942 = vrot.slane %v255, 6
    %vm943 = vcmask 1042434
    %v944 = vsel %vm943, %v942, %v941
    %v945 = vrot.slane %v262, 5
    %vm946 = vcmask 1043459
    %v947 = vsel %vm946, %v945, %v944
    %v948 = vrot.slane %v269, 4
    %vm949 = vcmask 1044484
    %v950 = vsel %vm949, %v948, %v947
    %v951 = vrot.slane %v276, 3
    %vm952 = vcmask 1045509
    %v953 = vsel %vm952, %v951, %v950
    %v954 = vrot.slane %v283, 2
    %vm955 = vcmask 1046534
    %v956 = vsel %vm955, %v954, %v953
    %v957 = vrot.slane %v290, 1
    %vm958 = vcmask 1047559
    %v959 = vsel %vm958, %v957, %v956
    %v960 = vrot.slane %v494, 7
    %v961 = vsel %vm940, %v960, %v492
    %v962 = vrot.slane %v496, 6
    %v963 = vsel %vm943, %v962, %v961
    %v964 = vrot.slane %v498, 5
    %v965 = vsel %vm946, %v964, %v963
    %v966 = vrot.slane %v500, 4
    %v967 = vsel %vm949, %v966, %v965
    %v968 = vrot.slane %v502, 3
    %v969 = vsel %vm952, %v968, %v967
    %v970 = vrot.slane %v504, 2
    %v971 = vsel %vm955, %v970, %v969
    %v972 = vrot.slane %v506, 1
    %v973 = vsel %vm958, %v972, %v971
    %v974 = vrot.slane %v558, 7
    %v975 = vsel %vm940, %v974, %v556
    %v976 = vrot.slane %v560, 6
    %v977 = vsel %vm943, %v976, %v975
    %v978 = vrot.slane %v562, 5
    %v979 = vsel %vm946, %v978, %v977
    %v980 = vrot.slane %v564, 4
    %v981 = vsel %vm949, %v980, %v979
    %v982 = vrot.slane %v566, 3
    %v983 = vsel %vm952, %v982, %v981
    %v984 = vrot.slane %v568, 2
    %v985 = vsel %vm955, %v984, %v983
    %v986 = vrot.slane %v570, 1
    %v987 = vsel %vm958, %v986, %v985
    %v988 = vrot.slane %v622, 7
    %v989 = vsel %vm940, %v988, %v620
    %v990 = vrot.slane %v624, 6
    %v991 = vsel %vm943, %v990, %v989
    %v992 = vrot.slane %v626, 5
    %v993 = vsel %vm946, %v992, %v991
    %v994 = vrot.slane %v628, 4
    %v995 = vsel %vm949, %v994, %v993
    %v996 = vrot.slane %v630, 3
    %v997 = vsel %vm952, %v996, %v995
    %v998 = vrot.slane %v632, 2
    %v999 = vsel %vm955, %v998, %v997
    %v1000 = vrot.slane %v634, 1
    %v1001 = vsel %vm958, %v1000, %v999
    %v1002 = vrot.slane %v686, 7
    %v1003 = vsel %vm940, %v1002, %v684
    %v1004 = vrot.slane %v688, 6
    %v1005 = vsel %vm943, %v1004, %v1003
    %v1006 = vrot.slane %v690, 5
    %v1007 = vsel %vm946, %v1006, %v1005
    %v1008 = vrot.slane %v692, 4
    %v1009 = vsel %vm949, %v1008, %v1007
    %v1010 = vrot.slane %v694, 3
    %v1011 = vsel %vm952, %v1010, %v1009
    %v1012 = vrot.slane %v696, 2
    %v1013 = vsel %vm955, %v1012, %v1011
    %v1014 = vrot.slane %v698, 1
    %v1015 = vsel %vm958, %v1014, %v1013
    %v1016 = vrot.slane %v750, 7
    %v1017 = vsel %vm940, %v1016, %v748
    %v1018 = vrot.slane %v752, 6
    %v1019 = vsel %vm943, %v1018, %v1017
    %v1020 = vrot.slane %v754, 5
    %v1021 = vsel %vm946, %v1020, %v1019
    %v1022 = vrot.slane %v756, 4
    %v1023 = vsel %vm949, %v1022, %v1021
    %v1024 = vrot.slane %v758, 3
    %v1025 = vsel %vm952, %v1024, %v1023
    %v1026 = vrot.slane %v760, 2
    %v1027 = vsel %vm955, %v1026, %v1025
    %v1028 = vrot.slane %v762, 1
    %v1029 = vsel %vm958, %v1028, %v1027
    %v1030 = vrot.slane %v814, 7
    %v1031 = vsel %vm940, %v1030, %v812
    %v1032 = vrot.slane %v816, 6
    %v1033 = vsel %vm943, %v1032, %v1031
    %v1034 = vrot.slane %v818, 5
    %v1035 = vsel %vm946, %v1034, %v1033
    %v1036 = vrot.slane %v820, 4
    %v1037 = vsel %vm949, %v1036, %v1035
    %v1038 = vrot.slane %v822, 3
    %v1039 = vsel %vm952, %v1038, %v1037
    %v1040 = vrot.slane %v824, 2
    %v1041 = vsel %vm955, %v1040, %v1039
    %v1042 = vrot.slane %v826, 1
    %v1043 = vsel %vm958, %v1042, %v1041
    %v1044 = vrot.slane %v878, 7
    %v1045 = vsel %vm940, %v1044, %v876
    %v1046 = vrot.slane %v880, 6
    %v1047 = vsel %vm943, %v1046, %v1045
    %v1048 = vrot.slane %v882, 5
    %v1049 = vsel %vm946, %v1048, %v1047
    %v1050 = vrot.slane %v884, 4
    %v1051 = vsel %vm949, %v1050, %v1049
    %v1052 = vrot.slane %v886, 3
    %v1053 = vsel %vm952, %v1052, %v1051
    %v1054 = vrot.slane %v888, 2
    %v1055 = vsel %vm955, %v1054, %v1053
    %v1056 = vrot.slane %v890, 1
    %v1057 = vsel %vm958, %v1056, %v1055
    %v1058 = vrot.slane %v304, 7
    %v1059 = vsel %vm940, %v1058, %v297
    %v1060 = vrot.slane %v311, 6
    %v1061 = vsel %vm943, %v1060, %v1059
    %v1062 = vrot.slane %v318, 5
    %v1063 = vsel %vm946, %v1062, %v1061
    %v1064 = vrot.slane %v325, 4
    %v1065 = vsel %vm949, %v1064, %v1063
    %v1066 = vrot.slane %v332, 3
    %v1067 = vsel %vm952, %v1066, %v1065
    %v1068 = vrot.slane %v339, 2
    %v1069 = vsel %vm955, %v1068, %v1067
    %v1070 = vrot.slane %v346, 1
    %v1071 = vsel %vm958, %v1070, %v1069
    %v1072 = vrot.slane %v510, 7
    %v1073 = vsel %vm940, %v1072, %v508
    %v1074 = vrot.slane %v512, 6
    %v1075 = vsel %vm943, %v1074, %v1073
    %v1076 = vrot.slane %v514, 5
    %v1077 = vsel %vm946, %v1076, %v1075
    %v1078 = vrot.slane %v516, 4
    %v1079 = vsel %vm949, %v1078, %v1077
    %v1080 = vrot.slane %v518, 3
    %v1081 = vsel %vm952, %v1080, %v1079
    %v1082 = vrot.slane %v520, 2
    %v1083 = vsel %vm955, %v1082, %v1081
    %v1084 = vrot.slane %v522, 1
    %v1085 = vsel %vm958, %v1084, %v1083
    %v1086 = vrot.slane %v574, 7
    %v1087 = vsel %vm940, %v1086, %v572
    %v1088 = vrot.slane %v576, 6
    %v1089 = vsel %vm943, %v1088, %v1087
    %v1090 = vrot.slane %v578, 5
    %v1091 = vsel %vm946, %v1090, %v1089
    %v1092 = vrot.slane %v580, 4
    %v1093 = vsel %vm949, %v1092, %v1091
    %v1094 = vrot.slane %v582, 3
    %v1095 = vsel %vm952, %v1094, %v1093
    %v1096 = vrot.slane %v584, 2
    %v1097 = vsel %vm955, %v1096, %v1095
    %v1098 = vrot.slane %v586, 1
    %v1099 = vsel %vm958, %v1098, %v1097
    %v1100 = vrot.slane %v638, 7
    %v1101 = vsel %vm940, %v1100, %v636
    %v1102 = vrot.slane %v640, 6
    %v1103 = vsel %vm943, %v1102, %v1101
    %v1104 = vrot.slane %v642, 5
    %v1105 = vsel %vm946, %v1104, %v1103
    %v1106 = vrot.slane %v644, 4
    %v1107 = vsel %vm949, %v1106, %v1105
    %v1108 = vrot.slane %v646, 3
    %v1109 = vsel %vm952, %v1108, %v1107
    %v1110 = vrot.slane %v648, 2
    %v1111 = vsel %vm955, %v1110, %v1109
    %v1112 = vrot.slane %v650, 1
    %v1113 = vsel %vm958, %v1112, %v1111
    %v1114 = vrot.slane %v702, 7
    %v1115 = vsel %vm940, %v1114, %v700
    %v1116 = vrot.slane %v704, 6
    %v1117 = vsel %vm943, %v1116, %v1115
    %v1118 = vrot.slane %v706, 5
    %v1119 = vsel %vm946, %v1118, %v1117
    %v1120 = vrot.slane %v708, 4
    %v1121 = vsel %vm949, %v1120, %v1119
    %v1122 = vrot.slane %v710, 3
    %v1123 = vsel %vm952, %v1122, %v1121
    %v1124 = vrot.slane %v712, 2
    %v1125 = vsel %vm955, %v1124, %v1123
    %v1126 = vrot.slane %v714, 1
    %v1127 = vsel %vm958, %v1126, %v1125
    %v1128 = vrot.slane %v766, 7
    %v1129 = vsel %vm940, %v1128, %v764
    %v1130 = vrot.slane %v768, 6
    %v1131 = vsel %vm943, %v1130, %v1129
    %v1132 = vrot.slane %v770, 5
    %v1133 = vsel %vm946, %v1132, %v1131
    %v1134 = vrot.slane %v772, 4
    %v1135 = vsel %vm949, %v1134, %v1133
    %v1136 = vrot.slane %v774, 3
    %v1137 = vsel %vm952, %v1136, %v1135
    %v1138 = vrot.slane %v776, 2
    %v1139 = vsel %vm955, %v1138, %v1137
    %v1140 = vrot.slane %v778, 1
    %v1141 = vsel %vm958, %v1140, %v1139
    %v1142 = vrot.slane %v830, 7
    %v1143 = vsel %vm940, %v1142, %v828
    %v1144 = vrot.slane %v832, 6
    %v1145 = vsel %vm943, %v1144, %v1143
    %v1146 = vrot.slane %v834, 5
    %v1147 = vsel %vm946, %v1146, %v1145
    %v1148 = vrot.slane %v836, 4
    %v1149 = vsel %vm949, %v1148, %v1147
    %v1150 = vrot.slane %v838, 3
    %v1151 = vsel %vm952, %v1150, %v1149
    %v1152 = vrot.slane %v840, 2
    %v1153 = vsel %vm955, %v1152, %v1151
    %v1154 = vrot.slane %v842, 1
    %v1155 = vsel %vm958, %v1154, %v1153
    %v1156 = vrot.slane %v894, 7
    %v1157 = vsel %vm940, %v1156, %v892
    %v1158 = vrot.slane %v896, 6
    %v1159 = vsel %vm943, %v1158, %v1157
    %v1160 = vrot.slane %v898, 5
    %v1161 = vsel %vm946, %v1160, %v1159
    %v1162 = vrot.slane %v900, 4
    %v1163 = vsel %vm949, %v1162, %v1161
    %v1164 = vrot.slane %v902, 3
    %v1165 = vsel %vm952, %v1164, %v1163
    %v1166 = vrot.slane %v904, 2
    %v1167 = vsel %vm955, %v1166, %v1165
    %v1168 = vrot.slane %v906, 1
    %v1169 = vsel %vm958, %v1168, %v1167
    %v1170 = vrot.slane %v360, 7
    %v1171 = vsel %vm940, %v1170, %v353
    %v1172 = vrot.slane %v367, 6
    %v1173 = vsel %vm943, %v1172, %v1171
    %v1174 = vrot.slane %v374, 5
    %v1175 = vsel %vm946, %v1174, %v1173
    %v1176 = vrot.slane %v381, 4
    %v1177 = vsel %vm949, %v1176, %v1175
    %v1178 = vrot.slane %v388, 3
    %v1179 = vsel %vm952, %v1178, %v1177
    %v1180 = vrot.slane %v395, 2
    %v1181 = vsel %vm955, %v1180, %v1179
    %v1182 = vrot.slane %v402, 1
    %v1183 = vsel %vm958, %v1182, %v1181
    %v1184 = vrot.slane %v526, 7
    %v1185 = vsel %vm940, %v1184, %v524
    %v1186 = vrot.slane %v528, 6
    %v1187 = vsel %vm943, %v1186, %v1185
    %v1188 = vrot.slane %v530, 5
    %v1189 = vsel %vm946, %v1188, %v1187
    %v1190 = vrot.slane %v532, 4
    %v1191 = vsel %vm949, %v1190, %v1189
    %v1192 = vrot.slane %v534, 3
    %v1193 = vsel %vm952, %v1192, %v1191
    %v1194 = vrot.slane %v536, 2
    %v1195 = vsel %vm955, %v1194, %v1193
    %v1196 = vrot.slane %v538, 1
    %v1197 = vsel %vm958, %v1196, %v1195
    %v1198 = vrot.slane %v590, 7
    %v1199 = vsel %vm940, %v1198, %v588
    %v1200 = vrot.slane %v592, 6
    %v1201 = vsel %vm943, %v1200, %v1199
    %v1202 = vrot.slane %v594, 5
    %v1203 = vsel %vm946, %v1202, %v1201
    %v1204 = vrot.slane %v596, 4
    %v1205 = vsel %vm949, %v1204, %v1203
    %v1206 = vrot.slane %v598, 3
    %v1207 = vsel %vm952, %v1206, %v1205
    %v1208 = vrot.slane %v600, 2
    %v1209 = vsel %vm955, %v1208, %v1207
    %v1210 = vrot.slane %v602, 1
    %v1211 = vsel %vm958, %v1210, %v1209
    %v1212 = vrot.slane %v654, 7
    %v1213 = vsel %vm940, %v1212, %v652
    %v1214 = vrot.slane %v656, 6
    %v1215 = vsel %vm943, %v1214, %v1213
    %v1216 = vrot.slane %v658, 5
    %v1217 = vsel %vm946, %v1216, %v1215
    %v1218 = vrot.slane %v660, 4
    %v1219 = vsel %vm949, %v1218, %v1217
    %v1220 = vrot.slane %v662, 3
    %v1221 = vsel %vm952, %v1220, %v1219
    %v1222 = vrot.slane %v664, 2
    %v1223 = vsel %vm955, %v1222, %v1221
    %v1224 = vrot.slane %v666, 1
    %v1225 = vsel %vm958, %v1224, %v1223
    %v1226 = vrot.slane %v718, 7
    %v1227 = vsel %vm940, %v1226, %v716
    %v1228 = vrot.slane %v720, 6
    %v1229 = vsel %vm943, %v1228, %v1227
    %v1230 = vrot.slane %v722, 5
    %v1231 = vsel %vm946, %v1230, %v1229
    %v1232 = vrot.slane %v724, 4
    %v1233 = vsel %vm949, %v1232, %v1231
    %v1234 = vrot.slane %v726, 3
    %v1235 = vsel %vm952, %v1234, %v1233
    %v1236 = vrot.slane %v728, 2
    %v1237 = vsel %vm955, %v1236, %v1235
    %v1238 = vrot.slane %v730, 1
    %v1239 = vsel %vm958, %v1238, %v1237
    %v1240 = vrot.slane %v782, 7
    %v1241 = vsel %vm940, %v1240, %v780
    %v1242 = vrot.slane %v784, 6
    %v1243 = vsel %vm943, %v1242, %v1241
    %v1244 = vrot.slane %v786, 5
    %v1245 = vsel %vm946, %v1244, %v1243
    %v1246 = vrot.slane %v788, 4
    %v1247 = vsel %vm949, %v1246, %v1245
    %v1248 = vrot.slane %v790, 3
    %v1249 = vsel %vm952, %v1248, %v1247
    %v1250 = vrot.slane %v792, 2
    %v1251 = vsel %vm955, %v1250, %v1249
    %v1252 = vrot.slane %v794, 1
    %v1253 = vsel %vm958, %v1252, %v1251
    %v1254 = vrot.slane %v846, 7
    %v1255 = vsel %vm940, %v1254, %v844
    %v1256 = vrot.slane %v848, 6
    %v1257 = vsel %vm943, %v1256, %v1255
    %v1258 = vrot.slane %v850, 5
    %v1259 = vsel %vm946, %v1258, %v1257
    %v1260 = vrot.slane %v852, 4
    %v1261 = vsel %vm949, %v1260, %v1259
    %v1262 = vrot.slane %v854, 3
    %v1263 = vsel %vm952, %v1262, %v1261
    %v1264 = vrot.slane %v856, 2
    %v1265 = vsel %vm955, %v1264, %v1263
    %v1266 = vrot.slane %v858, 1
    %v1267 = vsel %vm958, %v1266, %v1265
    %v1268 = vrot.slane %v910, 7
    %v1269 = vsel %vm940, %v1268, %v908
    %v1270 = vrot.slane %v912, 6
    %v1271 = vsel %vm943, %v1270, %v1269
    %v1272 = vrot.slane %v914, 5
    %v1273 = vsel %vm946, %v1272, %v1271
    %v1274 = vrot.slane %v916, 4
    %v1275 = vsel %vm949, %v1274, %v1273
    %v1276 = vrot.slane %v918, 3
    %v1277 = vsel %vm952, %v1276, %v1275
    %v1278 = vrot.slane %v920, 2
    %v1279 = vsel %vm955, %v1278, %v1277
    %v1280 = vrot.slane %v922, 1
    %v1281 = vsel %vm958, %v1280, %v1279
    %v1282 = vrot.slane %v416, 7
    %v1283 = vsel %vm940, %v1282, %v409
    %v1284 = vrot.slane %v423, 6
    %v1285 = vsel %vm943, %v1284, %v1283
    %v1286 = vrot.slane %v430, 5
    %v1287 = vsel %vm946, %v1286, %v1285
    %v1288 = vrot.slane %v437, 4
    %v1289 = vsel %vm949, %v1288, %v1287
    %v1290 = vrot.slane %v444, 3
    %v1291 = vsel %vm952, %v1290, %v1289
    %v1292 = vrot.slane %v451, 2
    %v1293 = vsel %vm955, %v1292, %v1291
    %v1294 = vrot.slane %v458, 1
    %v1295 = vsel %vm958, %v1294, %v1293
    %v1296 = vrot.slane %v542, 7
    %v1297 = vsel %vm940, %v1296, %v540
    %v1298 = vrot.slane %v544, 6
    %v1299 = vsel %vm943, %v1298, %v1297
    %v1300 = vrot.slane %v546, 5
    %v1301 = vsel %vm946, %v1300, %v1299
    %v1302 = vrot.slane %v548, 4
    %v1303 = vsel %vm949, %v1302, %v1301
    %v1304 = vrot.slane %v550, 3
    %v1305 = vsel %vm952, %v1304, %v1303
    %v1306 = vrot.slane %v552, 2
    %v1307 = vsel %vm955, %v1306, %v1305
    %v1308 = vrot.slane %v554, 1
    %v1309 = vsel %vm958, %v1308, %v1307
    %v1310 = vrot.slane %v606, 7
    %v1311 = vsel %vm940, %v1310, %v604
    %v1312 = vrot.slane %v608, 6
    %v1313 = vsel %vm943, %v1312, %v1311
    %v1314 = vrot.slane %v610, 5
    %v1315 = vsel %vm946, %v1314, %v1313
    %v1316 = vrot.slane %v612, 4
    %v1317 = vsel %vm949, %v1316, %v1315
    %v1318 = vrot.slane %v614, 3
    %v1319 = vsel %vm952, %v1318, %v1317
    %v1320 = vrot.slane %v616, 2
    %v1321 = vsel %vm955, %v1320, %v1319
    %v1322 = vrot.slane %v618, 1
    %v1323 = vsel %vm958, %v1322, %v1321
    %v1324 = vrot.slane %v670, 7
    %v1325 = vsel %vm940, %v1324, %v668
    %v1326 = vrot.slane %v672, 6
    %v1327 = vsel %vm943, %v1326, %v1325
    %v1328 = vrot.slane %v674, 5
    %v1329 = vsel %vm946, %v1328, %v1327
    %v1330 = vrot.slane %v676, 4
    %v1331 = vsel %vm949, %v1330, %v1329
    %v1332 = vrot.slane %v678, 3
    %v1333 = vsel %vm952, %v1332, %v1331
    %v1334 = vrot.slane %v680, 2
    %v1335 = vsel %vm955, %v1334, %v1333
    %v1336 = vrot.slane %v682, 1
    %v1337 = vsel %vm958, %v1336, %v1335
    %v1338 = vrot.slane %v734, 7
    %v1339 = vsel %vm940, %v1338, %v732
    %v1340 = vrot.slane %v736, 6
    %v1341 = vsel %vm943, %v1340, %v1339
    %v1342 = vrot.slane %v738, 5
    %v1343 = vsel %vm946, %v1342, %v1341
    %v1344 = vrot.slane %v740, 4
    %v1345 = vsel %vm949, %v1344, %v1343
    %v1346 = vrot.slane %v742, 3
    %v1347 = vsel %vm952, %v1346, %v1345
    %v1348 = vrot.slane %v744, 2
    %v1349 = vsel %vm955, %v1348, %v1347
    %v1350 = vrot.slane %v746, 1
    %v1351 = vsel %vm958, %v1350, %v1349
    %v1352 = vrot.slane %v798, 7
    %v1353 = vsel %vm940, %v1352, %v796
    %v1354 = vrot.slane %v800, 6
    %v1355 = vsel %vm943, %v1354, %v1353
    %v1356 = vrot.slane %v802, 5
    %v1357 = vsel %vm946, %v1356, %v1355
    %v1358 = vrot.slane %v804, 4
    %v1359 = vsel %vm949, %v1358, %v1357
    %v1360 = vrot.slane %v806, 3
    %v1361 = vsel %vm952, %v1360, %v1359
    %v1362 = vrot.slane %v808, 2
    %v1363 = vsel %vm955, %v1362, %v1361
    %v1364 = vrot.slane %v810, 1
    %v1365 = vsel %vm958, %v1364, %v1363
    %v1366 = vrot.slane %v862, 7
    %v1367 = vsel %vm940, %v1366, %v860
    %v1368 = vrot.slane %v864, 6
    %v1369 = vsel %vm943, %v1368, %v1367
    %v1370 = vrot.slane %v866, 5
    %v1371 = vsel %vm946, %v1370, %v1369
    %v1372 = vrot.slane %v868, 4
    %v1373 = vsel %vm949, %v1372, %v1371
    %v1374 = vrot.slane %v870, 3
    %v1375 = vsel %vm952, %v1374, %v1373
    %v1376 = vrot.slane %v872, 2
    %v1377 = vsel %vm955, %v1376, %v1375
    %v1378 = vrot.slane %v874, 1
    %v1379 = vsel %vm958, %v1378, %v1377
    %v1380 = vrot.slane %v926, 7
    %v1381 = vsel %vm940, %v1380, %v924
    %v1382 = vrot.slane %v928, 6
    %v1383 = vsel %vm943, %v1382, %v1381
    %v1384 = vrot.slane %v930, 5
    %v1385 = vsel %vm946, %v1384, %v1383
    %v1386 = vrot.slane %v932, 4
    %v1387 = vsel %vm949, %v1386, %v1385
    %v1388 = vrot.slane %v934, 3
    %v1389 = vsel %vm952, %v1388, %v1387
    %v1390 = vrot.slane %v936, 2
    %v1391 = vsel %vm955, %v1390, %v1389
    %v1392 = vrot.slane %v938, 1
    %v1393 = vsel %vm958, %v1392, %v1391
    %v1426 = vcombine.low %v959, %v987
    %v1427 = vcombine.high %v959, %v987
    %v1429 = vunpack.c.l.s4 1983009808
    %v1430 = vunpack.c.0.s8 %v1429
    %v1431 = vlaneseq
    %v1432 = vshrl.u32 %v1431, 7
    %v1433 = vsub.s32 %v1430, %v1432
    %v1434 = vrot.slane %v1426, %v1433
    %v1436 = vunpack.c.l.s4 1983009808
    %v1437 = vunpack.c.0.s8 %v1436
    %v1438 = vlaneseq
    %v1439 = vshrl.u32 %v1438, 7
    %v1440 = vsub.s32 %v1437, %v1439
    %v1441 = vrot.slane %v1427, %v1440
    %v1442 = vcombine.low %v973, %v1001
    %v1443 = vcombine.high %v973, %v1001
    %v1445 = vunpack.c.l.s4 1983009808
    %v1446 = vunpack.c.0.s8 %v1445
    %v1447 = vlaneseq
    %v1448 = vshrl.u32 %v1447, 7
    %v1449 = vsub.s32 %v1446, %v1448
    %v1450 = vrot.slane %v1442, %v1449
    %v1452 = vunpack.c.l.s4 1983009808
    %v1453 = vunpack.c.0.s8 %v1452
    %v1454 = vlaneseq
    %v1455 = vshrl.u32 %v1454, 7
    %v1456 = vsub.s32 %v1453, %v1455
    %v1457 = vrot.slane %v1443, %v1456
    %v1458 = vcombine.low %v1015, %v1043
    %v1459 = vcombine.high %v1015, %v1043
    %v1461 = vunpack.c.l.s4 1983009808
    %v1462 = vunpack.c.0.s8 %v1461
    %v1463 = vlaneseq
    %v1464 = vshrl.u32 %v1463, 7
    %v1465 = vsub.s32 %v1462, %v1464
    %v1466 = vrot.slane %v1458, %v1465
    %v1468 = vunpack.c.l.s4 1983009808
    %v1469 = vunpack.c.0.s8 %v1468
    %v1470 = vlaneseq
    %v1471 = vshrl.u32 %v1470, 7
    %v1472 = vsub.s32 %v1469, %v1471
    %v1473 = vrot.slane %v1459, %v1472
    %v1474 = vcombine.low %v1029, %v1057
    %v1475 = vcombine.high %v1029, %v1057
    %v1477 = vunpack.c.l.s4 1983009808
    %v1478 = vunpack.c.0.s8 %v1477
    %v1479 = vlaneseq
    %v1480 = vshrl.u32 %v1479, 7
    %v1481 = vsub.s32 %v1478, %v1480
    %v1482 = vrot.slane %v1474, %v1481
    %v1484 = vunpack.c.l.s4 1983009808
    %v1485 = vunpack.c.0.s8 %v1484
    %v1486 = vlaneseq
    %v1487 = vshrl.u32 %v1486, 7
    %v1488 = vsub.s32 %v1485, %v1487
    %v1489 = vrot.slane %v1475, %v1488
    %v1490 = vcombine.low %v1434, %v1450
    %v1491 = vcombine.high %v1434, %v1450
    %v1493 = vunpack.c.l.s4 1934713408
    %v1494 = vunpack.c.0.s8 %v1493
    %v1495 = vlaneseq
    %v1496 = vshrl.u32 %v1495, 7
    %v1497 = vsub.s32 %v1494, %v1496
    %v1498 = vrot.slane %v1490, %v1497
    %v1500 = vunpack.c.l.s4 1934713408
    %v1501 = vunpack.c.0.s8 %v1500
    %v1502 = vlaneseq
    %v1503 = vshrl.u32 %v1502, 7
    %v1504 = vsub.s32 %v1501, %v1503
    %v1505 = vrot.slane %v1491, %v1504
    %v1506 = vcombine.low %v1441, %v1457
    %v1507 = vcombine.high %v1441, %v1457
    %v1509 = vunpack.c.l.s4 1934713408
    %v1510 = vunpack.c.0.s8 %v1509
    %v1511 = vlaneseq
    %v1512 = vshrl.u32 %v1511, 7
    %v1513 = vsub.s32 %v1510, %v1512
    %v1514 = vrot.slane %v1506, %v1513
    %v1516 = vunpack.c.l.s4 1934713408
    %v1517 = vunpack.c.0.s8 %v1516
    %v1518 = vlaneseq
    %v1519 = vshrl.u32 %v1518, 7
    %v1520 = vsub.s32 %v1517, %v1519
    %v1521 = vrot.slane %v1507, %v1520
    %v1522 = vcombine.low %v1466, %v1482
    %v1523 = vcombine.high %v1466, %v1482
    %v1525 = vunpack.c.l.s4 1934713408
    %v1526 = vunpack.c.0.s8 %v1525
    %v1527 = vlaneseq
    %v1528 = vshrl.u32 %v1527, 7
    %v1529 = vsub.s32 %v1526, %v1528
    %v1530 = vrot.slane %v1522, %v1529
    %v1532 = vunpack.c.l.s4 1934713408
    %v1533 = vunpack.c.0.s8 %v1532
    %v1534 = vlaneseq
    %v1535 = vshrl.u32 %v1534, 7
    %v1536 = vsub.s32 %v1533, %v1535
    %v1537 = vrot.slane %v1523, %v1536
    %v1538 = vcombine.low %v1473, %v1489
    %v1539 = vcombine.high %v1473, %v1489
    %v1541 = vunpack.c.l.s4 1934713408
    %v1542 = vunpack.c.0.s8 %v1541
    %v1543 = vlaneseq
    %v1544 = vshrl.u32 %v1543, 7
    %v1545 = vsub.s32 %v1542, %v1544
    %v1546 = vrot.slane %v1538, %v1545
    %v1548 = vunpack.c.l.s4 1934713408
    %v1549 = vunpack.c.0.s8 %v1548
    %v1550 = vlaneseq
    %v1551 = vshrl.u32 %v1550, 7
    %v1552 = vsub.s32 %v1549, %v1551
    %v1553 = vrot.slane %v1539, %v1552
    %v1554 = vcombine.low %v1498, %v1530
    %v1555 = vcombine.high %v1498, %v1530
    %v1556 = vcombine.low %v1505, %v1537
    %v1557 = vcombine.high %v1505, %v1537
    %v1558 = vcombine.low %v1514, %v1546
    %v1559 = vcombine.high %v1514, %v1546
    %v1560 = vcombine.low %v1521, %v1553
    %v1561 = vcombine.high %v1521, %v1553
    %v1562 = vcombine.low %v1071, %v1099
    %v1563 = vcombine.high %v1071, %v1099
    %v1565 = vunpack.c.l.s4 1983009808
    %v1566 = vunpack.c.0.s8 %v1565
    %v1567 = vlaneseq
    %v1568 = vshrl.u32 %v1567, 7
    %v1569 = vsub.s32 %v1566, %v1568
    %v1570 = vrot.slane %v1562, %v1569
    %v1572 = vunpack.c.l.s4 1983009808
    %v1573 = vunpack.c.0.s8 %v1572
    %v1574 = vlaneseq
    %v1575 = vshrl.u32 %v1574, 7
    %v1576 = vsub.s32 %v1573, %v1575
    %v1577 = vrot.slane %v1563, %v1576
    %v1578 = vcombine.low %v1085, %v1113
    %v1579 = vcombine.high %v1085, %v1113
    %v1581 = vunpack.c.l.s4 1983009808
    %v1582 = vunpack.c.0.s8 %v1581
    %v1583 = vlaneseq
    %v1584 = vshrl.u32 %v1583, 7
    %v1585 = vsub.s32 %v1582, %v1584
    %v1586 = vrot.slane %v1578, %v1585
    %v1588 = vunpack.c.l.s4 1983009808
    %v1589 = vunpack.c.0.s8 %v1588
    %v1590 = vlaneseq
    %v1591 = vshrl.u32 %v1590, 7
    %v1592 = vsub.s32 %v1589, %v1591
    %v1593 = vrot.slane %v1579, %v1592
    %v1594 = vcombine.low %v1127, %v1155
    %v1595 = vcombine.high %v1127, %v1155
    %v1597 = vunpack.c.l.s4 1983009808
    %v1598 = vunpack.c.0.s8 %v1597
    %v1599 = vlaneseq
    %v1600 = vshrl.u32 %v1599, 7
    %v1601 = vsub.s32 %v1598, %v1600
    %v1602 = vrot.slane %v1594, %v1601
    %v1604 = vunpack.c.l.s4 1983009808
    %v1605 = vunpack.c.0.s8 %v1604
    %v1606 = vlaneseq
    %v1607 = vshrl.u32 %v1606, 7
    %v1608 = vsub.s32 %v1605, %v1607
    %v1609 = vrot.slane %v1595, %v1608
    %v1610 = vcombine.low %v1141, %v1169
    %v1611 = vcombine.high %v1141, %v1169
    %v1613 = vunpack.c.l.s4 1983009808
    %v1614 = vunpack.c.0.s8 %v1613
    %v1615 = vlaneseq
    %v1616 = vshrl.u32 %v1615, 7
    %v1617 = vsub.s32 %v1614, %v1616
    %v1618 = vrot.slane %v1610, %v1617
    %v1620 = vunpack.c.l.s4 1983009808
    %v1621 = vunpack.c.0.s8 %v1620
    %v1622 = vlaneseq
    %v1623 = vshrl.u32 %v1622, 7
    %v1624 = vsub.s32 %v1621, %v1623
    %v1625 = vrot.slane %v1611, %v1624
    %v1626 = vcombine.low %v1570, %v1586
    %v1627 = vcombine.high %v1570, %v1586
    %v1629 = vunpack.c.l.s4 1934713408
    %v1630 = vunpack.c.0.s8 %v1629
    %v1631 = vlaneseq
    %v1632 = vshrl.u32 %v1631, 7
    %v1633 = vsub.s32 %v1630, %v1632
    %v1634 = vrot.slane %v1626, %v1633
    %v1636 = vunpack.c.l.s4 1934713408
    %v1637 = vunpack.c.0.s8 %v1636
    %v1638 = vlaneseq
    %v1639 = vshrl.u32 %v1638, 7
    %v1640 = vsub.s32 %v1637, %v1639
    %v1641 = vrot.slane %v1627, %v1640
    %v1642 = vcombine.low %v1577, %v1593
    %v1643 = vcombine.high %v1577, %v1593
    %v1645 = vunpack.c.l.s4 1934713408
    %v1646 = vunpack.c.0.s8 %v1645
    %v1647 = vlaneseq
    %v1648 = vshrl.u32 %v1647, 7
    %v1649 = vsub.s32 %v1646, %v1648
    %v1650 = vrot.slane %v1642, %v1649
    %v1652 = vunpack.c.l.s4 1934713408
    %v1653 = vunpack.c.0.s8 %v1652
    %v1654 = vlaneseq
    %v1655 = vshrl.u32 %v1654, 7
    %v1656 = vsub.s32 %v1653, %v1655
    %v1657 = vrot.slane %v1643, %v1656
    %v1658 = vcombine.low %v1602, %v1618
    %v1659 = vcombine.high %v1602, %v1618
    %v1661 = vunpack.c.l.s4 1934713408
    %v1662 = vunpack.c.0.s8 %v1661
    %v1663 = vlaneseq
    %v1664 = vshrl.u32 %v1663, 7
    %v1665 = vsub.s32 %v1662, %v1664
    %v1666 = vrot.slane %v1658, %v1665
    %v1668 = vunpack.c.l.s4 1934713408
    %v1669 = vunpack.c.0.s8 %v1668
    %v1670 = vlaneseq
    %v1671 = vshrl.u32 %v1670, 7
    %v1672 = vsub.s32 %v1669, %v1671
    %v1673 = vrot.slane %v1659, %v1672
    %v1674 = vcombine.low %v1609, %v1625
    %v1675 = vcombine.high %v1609, %v1625
    %v1677 = vunpack.c.l.s4 1934713408
    %v1678 = vunpack.c.0.s8 %v1677
    %v1679 = vlaneseq
    %v1680 = vshrl.u32 %v1679, 7
    %v1681 = vsub.s32 %v1678, %v1680
    %v1682 = vrot.slane %v1674, %v1681
    %v1684 = vunpack.c.l.s4 1934713408
    %v1685 = vunpack.c.0.s8 %v1684
    %v1686 = vlaneseq
    %v1687 = vshrl.u32 %v1686, 7
    %v1688 = vsub.s32 %v1685, %v1687
    %v1689 = vrot.slane %v1675, %v1688
    %v1690 = vcombine.low %v1634, %v1666
    %v1691 = vcombine.high %v1634, %v1666
    %v1692 = vcombine.low %v1641, %v1673
    %v1693 = vcombine.high %v1641, %v1673
    %v1694 = vcombine.low %v1650, %v1682
    %v1695 = vcombine.high %v1650, %v1682
    %v1696 = vcombine.low %v1657, %v1689
    %v1697 = vcombine.high %v1657, %v1689
    %v1698 = vcombine.low %v1183, %v1211
    %v1699 = vcombine.high %v1183, %v1211
    %v1701 = vunpack.c.l.s4 1983009808
    %v1702 = vunpack.c.0.s8 %v1701
    %v1703 = vlaneseq
    %v1704 = vshrl.u32 %v1703, 7
    %v1705 = vsub.s32 %v1702, %v1704
    %v1706 = vrot.slane %v1698, %v1705
    %v1708 = vunpack.c.l.s4 1983009808
    %v1709 = vunpack.c.0.s8 %v1708
    %v1710 = vlaneseq
    %v1711 = vshrl.u32 %v1710, 7
    %v1712 = vsub.s32 %v1709, %v1711
    %v1713 = vrot.slane %v1699, %v1712
    %v1714 = vcombine.low %v1197, %v1225
    %v1715 = vcombine.high %v1197, %v1225
    %v1717 = vunpack.c.l.s4 1983009808
    %v1718 = vunpack.c.0.s8 %v1717
    %v1719 = vlaneseq
    %v1720 = vshrl.u32 %v1719, 7
    %v1721 = vsub.s32 %v1718, %v1720
    %v1722 = vrot.slane %v1714, %v1721
    %v1724 = vunpack.c.l.s4 1983009808
    %v1725 = vunpack.c.0.s8 %v1724
    %v1726 = vlaneseq
    %v1727 = vshrl.u32 %v1726, 7
    %v1728 = vsub.s32 %v1725, %v1727
    %v1729 = vrot.slane %v1715, %v1728
    %v1730 = vcombine.low %v1239, %v1267
    %v1731 = vcombine.high %v1239, %v1267
    %v1733 = vunpack.c.l.s4 1983009808
    %v1734 = vunpack.c.0.s8 %v1733
    %v1735 = vlaneseq
    %v1736 = vshrl.u32 %v1735, 7
    %v1737 = vsub.s32 %v1734, %v1736
    %v1738 = vrot.slane %v1730, %v1737
    %v1740 = vunpack.c.l.s4 1983009808
    %v1741 = vunpack.c.0.s8 %v1740
    %v1742 = vlaneseq
    %v1743 = vshrl.u32 %v1742, 7
    %v1744 = vsub.s32 %v1741, %v1743
    %v1745 = vrot.slane %v1731, %v1744
    %v1746 = vcombine.low %v1253, %v1281
    %v1747 = vcombine.high %v1253, %v1281
    %v1749 = vunpack.c.l.s4 1983009808
    %v1750 = vunpack.c.0.s8 %v1749
    %v1751 = vlaneseq
    %v1752 = vshrl.u32 %v1751, 7
    %v1753 = vsub.s32 %v1750, %v1752
    %v1754 = vrot.slane %v1746, %v1753
    %v1756 = vunpack.c.l.s4 1983009808
    %v1757 = vunpack.c.0.s8 %v1756
    %v1758 = vlaneseq
    %v1759 = vshrl.u32 %v1758, 7
    %v1760 = vsub.s32 %v1757, %v1759
    %v1761 = vrot.slane %v1747, %v1760
    %v1762 = vcombine.low %v1706, %v1722
    %v1763 = vcombine.high %v1706, %v1722
    %v1765 = vunpack.c.l.s4 1934713408
    %v1766 = vunpack.c.0.s8 %v1765
    %v1767 = vlaneseq
    %v1768 = vshrl.u32 %v1767, 7
    %v1769 = vsub.s32 %v1766, %v1768
    %v1770 = vrot.slane %v1762, %v1769
    %v1772 = vunpack.c.l.s4 1934713408
    %v1773 = vunpack.c.0.s8 %v1772
    %v1774 = vlaneseq
    %v1775 = vshrl.u32 %v1774, 7
    %v1776 = vsub.s32 %v1773, %v1775
    %v1777 = vrot.slane %v1763, %v1776
    %v1778 = vcombine.low %v1713, %v1729
    %v1779 = vcombine.high %v1713, %v1729
    %v1781 = vunpack.c.l.s4 1934713408
    %v1782 = vunpack.c.0.s8 %v1781
    %v1783 = vlaneseq
    %v1784 = vshrl.u32 %v1783, 7
    %v1785 = vsub.s32 %v1782, %v1784
    %v1786 = vrot.slane %v1778, %v1785
    %v1788 = vunpack.c.l.s4 1934713408
    %v1789 = vunpack.c.0.s8 %v1788
    %v1790 = vlaneseq
    %v1791 = vshrl.u32 %v1790, 7
    %v1792 = vsub.s32 %v1789, %v1791
    %v1793 = vrot.slane %v1779, %v1792
    %v1794 = vcombine.low %v1738, %v1754
    %v1795 = vcombine.high %v1738, %v1754
    %v1797 = vunpack.c.l.s4 1934713408
    %v1798 = vunpack.c.0.s8 %v1797
    %v1799 = vlaneseq
    %v1800 = vshrl.u32 %v1799, 7
    %v1801 = vsub.s32 %v1798, %v1800
    %v1802 = vrot.slane %v1794, %v1801
    %v1804 = vunpack.c.l.s4 1934713408
    %v1805 = vunpack.c.0.s8 %v1804
    %v1806 = vlaneseq
    %v1807 = vshrl.u32 %v1806, 7
    %v1808 = vsub.s32 %v1805, %v1807
    %v1809 = vrot.slane %v1795, %v1808
    %v1810 = vcombine.low %v1745, %v1761
    %v1811 = vcombine.high %v1745, %v1761
    %v1813 = vunpack.c.l.s4 1934713408
    %v1814 = vunpack.c.0.s8 %v1813
    %v1815 = vlaneseq
    %v1816 = vshrl.u32 %v1815, 7
    %v1817 = vsub.s32 %v1814, %v1816
    %v1818 = vrot.slane %v1810, %v1817
    %v1820 = vunpack.c.l.s4 1934713408
    %v1821 = vunpack.c.0.s8 %v1820
    %v1822 = vlaneseq
    %v1823 = vshrl.u32 %v1822, 7
    %v1824 = vsub.s32 %v1821, %v1823
    %v1825 = vrot.slane %v1811, %v1824
    %v1826 = vcombine.low %v1770, %v1802
    %v1827 = vcombine.high %v1770, %v1802
    %v1828 = vcombine.low %v1777, %v1809
    %v1829 = vcombine.high %v1777, %v1809
    %v1830 = vcombine.low %v1786, %v1818
    %v1831 = vcombine.high %v1786, %v1818
    %v1832 = vcombine.low %v1793, %v1825
    %v1833 = vcombine.high %v1793, %v1825
    %v1834 = vcombine.low %v1295, %v1323
    %v1835 = vcombine.high %v1295, %v1323
    %v1837 = vunpack.c.l.s4 1983009808
    %v1838 = vunpack.c.0.s8 %v1837
    %v1839 = vlaneseq
    %v1840 = vshrl.u32 %v1839, 7
    %v1841 = vsub.s32 %v1838, %v1840
    %v1842 = vrot.slane %v1834, %v1841
    %v1844 = vunpack.c.l.s4 1983009808
    %v1845 = vunpack.c.0.s8 %v1844
    %v1846 = vlaneseq
    %v1847 = vshrl.u32 %v1846, 7
    %v1848 = vsub.s32 %v1845, %v1847
    %v1849 = vrot.slane %v1835, %v1848
    %v1850 = vcombine.low %v1309, %v1337
    %v1851 = vcombine.high %v1309, %v1337
    %v1853 = vunpack.c.l.s4 1983009808
    %v1854 = vunpack.c.0.s8 %v1853
    %v1855 = vlaneseq
    %v1856 = vshrl.u32 %v1855, 7
    %v1857 = vsub.s32 %v1854, %v1856
    %v1858 = vrot.slane %v1850, %v1857
    %v1860 = vunpack.c.l.s4 1983009808
    %v1861 = vunpack.c.0.s8 %v1860
    %v1862 = vlaneseq
    %v1863 = vshrl.u32 %v1862, 7
    %v1864 = vsub.s32 %v1861, %v1863
    %v1865 = vrot.slane %v1851, %v1864
    %v1866 = vcombine.low %v1351, %v1379
    %v1867 = vcombine.high %v1351, %v1379
    %v1869 = vunpack.c.l.s4 1983009808
    %v1870 = vunpack.c.0.s8 %v1869
    %v1871 = vlaneseq
    %v1872 = vshrl.u32 %v1871, 7
    %v1873 = vsub.s32 %v1870, %v1872
    %v1874 = vrot.slane %v1866, %v1873
    %v1876 = vunpack.c.l.s4 1983009808
    %v1877 = vunpack.c.0.s8 %v1876
    %v1878 = vlaneseq
    %v1879 = vshrl.u32 %v1878, 7
    %v1880 = vsub.s32 %v1877, %v1879
    %v1881 = vrot.slane %v1867, %v1880
    %v1882 = vcombine.low %v1365, %v1393
    %v1883 = vcombine.high %v1365, %v1393
    %v1885 = vunpack.c.l.s4 1983009808
    %v1886 = vunpack.c.0.s8 %v1885
    %v1887 = vlaneseq
    %v1888 = vshrl.u32 %v1887, 7
    %v1889 = vsub.s32 %v1886, %v1888
    %v1890 = vrot.slane %v1882, %v1889
    %v1892 = vunpack.c.l.s4 1983009808
    %v1893 = vunpack.c.0.s8 %v1892
    %v1894 = vlaneseq
    %v1895 = vshrl.u32 %v1894, 7
    %v1896 = vsub.s32 %v1893, %v1895
    %v1897 = vrot.slane %v1883, %v1896
    %v1898 = vcombine.low %v1842, %v1858
    %v1899 = vcombine.high %v1842, %v1858
    %v1901 = vunpack.c.l.s4 1934713408
    %v1902 = vunpack.c.0.s8 %v1901
    %v1903 = vlaneseq
    %v1904 = vshrl.u32 %v1903, 7
    %v1905 = vsub.s32 %v1902, %v1904
    %v1906 = vrot.slane %v1898, %v1905
    %v1908 = vunpack.c.l.s4 1934713408
    %v1909 = vunpack.c.0.s8 %v1908
    %v1910 = vlaneseq
    %v1911 = vshrl.u32 %v1910, 7
    %v1912 = vsub.s32 %v1909, %v1911
    %v1913 = vrot.slane %v1899, %v1912
    %v1914 = vcombine.low %v1849, %v1865
    %v1915 = vcombine.high %v1849, %v1865
    %v1917 = vunpack.c.l.s4 1934713408
    %v1918 = vunpack.c.0.s8 %v1917
    %v1919 = vlaneseq
    %v1920 = vshrl.u32 %v1919, 7
    %v1921 = vsub.s32 %v1918, %v1920
    %v1922 = vrot.slane %v1914, %v1921
    %v1924 = vunpack.c.l.s4 1934713408
    %v1925 = vunpack.c.0.s8 %v1924
    %v1926 = vlaneseq
    %v1927 = vshrl.u32 %v1926, 7
    %v1928 = vsub.s32 %v1925, %v1927
    %v1929 = vrot.slane %v1915, %v1928
    %v1930 = vcombine.low %v1874, %v1890
    %v1931 = vcombine.high %v1874, %v1890
    %v1933 = vunpack.c.l.s4 1934713408
    %v1934 = vunpack.c.0.s8 %v1933
    %v1935 = vlaneseq
    %v1936 = vshrl.u32 %v1935, 7
    %v1937 = vsub.s32 %v1934, %v1936
    %v1938 = vrot.slane %v1930, %v1937
    %v1940 = vunpack.c.l.s4 1934713408
    %v1941 = vunpack.c.0.s8 %v1940
    %v1942 = vlaneseq
    %v1943 = vshrl.u32 %v1942, 7
    %v1944 = vsub.s32 %v1941, %v1943
    %v1945 = vrot.slane %v1931, %v1944
    %v1946 = vcombine.low %v1881, %v1897
    %v1947 = vcombine.high %v1881, %v1897
    %v1949 = vunpack.c.l.s4 1934713408
    %v1950 = vunpack.c.0.s8 %v1949
    %v1951 = vlaneseq
    %v1952 = vshrl.u32 %v1951, 7
    %v1953 = vsub.s32 %v1950, %v1952
    %v1954 = vrot.slane %v1946, %v1953
    %v1956 = vunpack.c.l.s4 1934713408
    %v1957 = vunpack.c.0.s8 %v1956
    %v1958 = vlaneseq
    %v1959 = vshrl.u32 %v1958, 7
    %v1960 = vsub.s32 %v1957, %v1959
    %v1961 = vrot.slane %v1947, %v1960
    %v1962 = vcombine.low %v1906, %v1938
    %v1963 = vcombine.high %v1906, %v1938
    %v1964 = vcombine.low %v1913, %v1945
    %v1965 = vcombine.high %v1913, %v1945
    %v1966 = vcombine.low %v1922, %v1954
    %v1967 = vcombine.high %v1922, %v1954
    %v1968 = vcombine.low %v1929, %v1961
    %v1969 = vcombine.high %v1929, %v1961
    %vm1970 = vcmask 15360
    %v1971 = vsel %vm1970, %v1554, -inf
    %1972 = vmax.xlane.f32.xlu0 %v1971
    %v1973 = vpop.xlane.xlu0 %1972
    %v1974 = vsel %vm1970, %v1555, -inf
    %1975 = vmax.xlane.f32.xlu0 %v1974
    %v1976 = vpop.xlane.xlu0 %1975
    %v1977 = vsel %vm1970, %v1556, -inf
    %1978 = vmax.xlane.f32.xlu0 %v1977
    %v1979 = vpop.xlane.xlu0 %1978
    %v1980 = vsel %vm1970, %v1557, -inf
    %1981 = vmax.xlane.f32.xlu0 %v1980
    %v1982 = vpop.xlane.xlu0 %1981
    %v1983 = vsel %vm1970, %v1558, -inf
    %1984 = vmax.xlane.f32.xlu0 %v1983
    %v1985 = vpop.xlane.xlu0 %1984
    %v1986 = vsel %vm1970, %v1559, -inf
    %1987 = vmax.xlane.f32.xlu0 %v1986
    %v1988 = vpop.xlane.xlu0 %1987
    %v1989 = vsel %vm1970, %v1560, -inf
    %1990 = vmax.xlane.f32.xlu0 %v1989
    %v1991 = vpop.xlane.xlu0 %1990
    %v1992 = vsel %vm1970, %v1561, -inf
    %1993 = vmax.xlane.f32.xlu0 %v1992
    %v1994 = vpop.xlane.xlu0 %1993
    %v1995 = vsel %vm1970, %v1690, -inf
    %1996 = vmax.xlane.f32.xlu0 %v1995
    %v1997 = vpop.xlane.xlu0 %1996
    %v1998 = vsel %vm1970, %v1691, -inf
    %1999 = vmax.xlane.f32.xlu0 %v1998
    %v2000 = vpop.xlane.xlu0 %1999
    %v2001 = vsel %vm1970, %v1692, -inf
    %2002 = vmax.xlane.f32.xlu0 %v2001
    %v2003 = vpop.xlane.xlu0 %2002
    %v2004 = vsel %vm1970, %v1693, -inf
    %2005 = vmax.xlane.f32.xlu0 %v2004
    %v2006 = vpop.xlane.xlu0 %2005
    %v2007 = vsel %vm1970, %v1694, -inf
    %2008 = vmax.xlane.f32.xlu0 %v2007
    %v2009 = vpop.xlane.xlu0 %2008
    %v2010 = vsel %vm1970, %v1695, -inf
    %2011 = vmax.xlane.f32.xlu0 %v2010
    %v2012 = vpop.xlane.xlu0 %2011
    %v2013 = vsel %vm1970, %v1696, -inf
    %2014 = vmax.xlane.f32.xlu0 %v2013
    %v2015 = vpop.xlane.xlu0 %2014
    %v2016 = vsel %vm1970, %v1697, -inf
    %2017 = vmax.xlane.f32.xlu0 %v2016
    %v2018 = vpop.xlane.xlu0 %2017
    %v2019 = vsel %vm1970, %v1826, -inf
    %2020 = vmax.xlane.f32.xlu0 %v2019
    %v2021 = vpop.xlane.xlu0 %2020
    %v2022 = vsel %vm1970, %v1827, -inf
    %2023 = vmax.xlane.f32.xlu0 %v2022
    %v2024 = vpop.xlane.xlu0 %2023
    %v2025 = vsel %vm1970, %v1828, -inf
    %2026 = vmax.xlane.f32.xlu0 %v2025
    %v2027 = vpop.xlane.xlu0 %2026
    %v2028 = vsel %vm1970, %v1829, -inf
    %2029 = vmax.xlane.f32.xlu0 %v2028
    %v2030 = vpop.xlane.xlu0 %2029
    %v2031 = vsel %vm1970, %v1830, -inf
    %2032 = vmax.xlane.f32.xlu0 %v2031
    %v2033 = vpop.xlane.xlu0 %2032
    %v2034 = vsel %vm1970, %v1831, -inf
    %2035 = vmax.xlane.f32.xlu0 %v2034
    %v2036 = vpop.xlane.xlu0 %2035
    %v2037 = vsel %vm1970, %v1832, -inf
    %2038 = vmax.xlane.f32.xlu0 %v2037
    %v2039 = vpop.xlane.xlu0 %2038
    %v2040 = vsel %vm1970, %v1833, -inf
    %2041 = vmax.xlane.f32.xlu0 %v2040
    %v2042 = vpop.xlane.xlu0 %2041
    %v2043 = vsel %vm1970, %v1962, -inf
    %2044 = vmax.xlane.f32.xlu0 %v2043
    %v2045 = vpop.xlane.xlu0 %2044
    %v2046 = vsel %vm1970, %v1963, -inf
    %2047 = vmax.xlane.f32.xlu0 %v2046
    %v2048 = vpop.xlane.xlu0 %2047
    %v2049 = vsel %vm1970, %v1964, -inf
    %2050 = vmax.xlane.f32.xlu0 %v2049
    %v2051 = vpop.xlane.xlu0 %2050
    %v2052 = vsel %vm1970, %v1965, -inf
    %2053 = vmax.xlane.f32.xlu0 %v2052
    %v2054 = vpop.xlane.xlu0 %2053
    %v2055 = vsel %vm1970, %v1966, -inf
    %2056 = vmax.xlane.f32.xlu0 %v2055
    %v2057 = vpop.xlane.xlu0 %2056
    %v2058 = vsel %vm1970, %v1967, -inf
    %2059 = vmax.xlane.f32.xlu0 %v2058
    %v2060 = vpop.xlane.xlu0 %2059
    %v2061 = vsel %vm1970, %v1968, -inf
    %2062 = vmax.xlane.f32.xlu0 %v2061
    %v2063 = vpop.xlane.xlu0 %2062
    %v2064 = vsel %vm1970, %v1969, -inf
    %2065 = vmax.xlane.f32.xlu0 %v2064
    %v2066 = vpop.xlane.xlu0 %2065
    %v2099 = vlaneseq
    %v2100 = vand.u32 %v2099, 127
    %v2101 = vlaneseq
    %v2102 = vshrl.u32 %v2101, 7
    %v2103 = vsub.s32 %v2100, %v2102
    %v2104 = vrot.slane %v1973, %v2103
    %v2105 = vlaneseq
    %v2106 = vshrl.u32 %v2105, 7
    %v2107 = vsub.s32 %v2100, %v2106
    %v2108 = vrot.slane %v1976, %v2107
    %v2109 = vlaneseq
    %v2110 = vshrl.u32 %v2109, 7
    %v2111 = vsub.s32 %v2100, %v2110
    %v2112 = vrot.slane %v1979, %v2111
    %v2113 = vlaneseq
    %v2114 = vshrl.u32 %v2113, 7
    %v2115 = vsub.s32 %v2100, %v2114
    %v2116 = vrot.slane %v1982, %v2115
    %v2117 = vlaneseq
    %v2118 = vshrl.u32 %v2117, 7
    %v2119 = vsub.s32 %v2100, %v2118
    %v2120 = vrot.slane %v1985, %v2119
    %v2121 = vlaneseq
    %v2122 = vshrl.u32 %v2121, 7
    %v2123 = vsub.s32 %v2100, %v2122
    %v2124 = vrot.slane %v1988, %v2123
    %v2125 = vlaneseq
    %v2126 = vshrl.u32 %v2125, 7
    %v2127 = vsub.s32 %v2100, %v2126
    %v2128 = vrot.slane %v1991, %v2127
    %v2129 = vlaneseq
    %v2130 = vshrl.u32 %v2129, 7
    %v2131 = vsub.s32 %v2100, %v2130
    %v2132 = vrot.slane %v1994, %v2131
    %v2133 = vlaneseq
    %v2134 = vshrl.u32 %v2133, 7
    %v2135 = vsub.s32 %v2100, %v2134
    %v2136 = vrot.slane %v1997, %v2135
    %v2137 = vlaneseq
    %v2138 = vshrl.u32 %v2137, 7
    %v2139 = vsub.s32 %v2100, %v2138
    %v2140 = vrot.slane %v2000, %v2139
    %v2141 = vlaneseq
    %v2142 = vshrl.u32 %v2141, 7
    %v2143 = vsub.s32 %v2100, %v2142
    %v2144 = vrot.slane %v2003, %v2143
    %v2145 = vlaneseq
    %v2146 = vshrl.u32 %v2145, 7
    %v2147 = vsub.s32 %v2100, %v2146
    %v2148 = vrot.slane %v2006, %v2147
    %v2149 = vlaneseq
    %v2150 = vshrl.u32 %v2149, 7
    %v2151 = vsub.s32 %v2100, %v2150
    %v2152 = vrot.slane %v2009, %v2151
    %v2153 = vlaneseq
    %v2154 = vshrl.u32 %v2153, 7
    %v2155 = vsub.s32 %v2100, %v2154
    %v2156 = vrot.slane %v2012, %v2155
    %v2157 = vlaneseq
    %v2158 = vshrl.u32 %v2157, 7
    %v2159 = vsub.s32 %v2100, %v2158
    %v2160 = vrot.slane %v2015, %v2159
    %v2161 = vlaneseq
    %v2162 = vshrl.u32 %v2161, 7
    %v2163 = vsub.s32 %v2100, %v2162
    %v2164 = vrot.slane %v2018, %v2163
    %v2165 = vlaneseq
    %v2166 = vshrl.u32 %v2165, 7
    %v2167 = vsub.s32 %v2100, %v2166
    %v2168 = vrot.slane %v2021, %v2167
    %v2169 = vlaneseq
    %v2170 = vshrl.u32 %v2169, 7
    %v2171 = vsub.s32 %v2100, %v2170
    %v2172 = vrot.slane %v2024, %v2171
    %v2173 = vlaneseq
    %v2174 = vshrl.u32 %v2173, 7
    %v2175 = vsub.s32 %v2100, %v2174
    %v2176 = vrot.slane %v2027, %v2175
    %v2177 = vlaneseq
    %v2178 = vshrl.u32 %v2177, 7
    %v2179 = vsub.s32 %v2100, %v2178
    %v2180 = vrot.slane %v2030, %v2179
    %v2181 = vlaneseq
    %v2182 = vshrl.u32 %v2181, 7
    %v2183 = vsub.s32 %v2100, %v2182
    %v2184 = vrot.slane %v2033, %v2183
    %v2185 = vlaneseq
    %v2186 = vshrl.u32 %v2185, 7
    %v2187 = vsub.s32 %v2100, %v2186
    %v2188 = vrot.slane %v2036, %v2187
    %v2189 = vlaneseq
    %v2190 = vshrl.u32 %v2189, 7
    %v2191 = vsub.s32 %v2100, %v2190
    %v2192 = vrot.slane %v2039, %v2191
    %v2193 = vlaneseq
    %v2194 = vshrl.u32 %v2193, 7
    %v2195 = vsub.s32 %v2100, %v2194
    %v2196 = vrot.slane %v2042, %v2195
    %v2197 = vlaneseq
    %v2198 = vshrl.u32 %v2197, 7
    %v2199 = vsub.s32 %v2100, %v2198
    %v2200 = vrot.slane %v2045, %v2199
    %v2201 = vlaneseq
    %v2202 = vshrl.u32 %v2201, 7
    %v2203 = vsub.s32 %v2100, %v2202
    %v2204 = vrot.slane %v2048, %v2203
    %v2205 = vlaneseq
    %v2206 = vshrl.u32 %v2205, 7
    %v2207 = vsub.s32 %v2100, %v2206
    %v2208 = vrot.slane %v2051, %v2207
    %v2209 = vlaneseq
    %v2210 = vshrl.u32 %v2209, 7
    %v2211 = vsub.s32 %v2100, %v2210
    %v2212 = vrot.slane %v2054, %v2211
    %v2213 = vlaneseq
    %v2214 = vshrl.u32 %v2213, 7
    %v2215 = vsub.s32 %v2100, %v2214
    %v2216 = vrot.slane %v2057, %v2215
    %v2217 = vlaneseq
    %v2218 = vshrl.u32 %v2217, 7
    %v2219 = vsub.s32 %v2100, %v2218
    %v2220 = vrot.slane %v2060, %v2219
    %v2221 = vlaneseq
    %v2222 = vshrl.u32 %v2221, 7
    %v2223 = vsub.s32 %v2100, %v2222
    %v2224 = vrot.slane %v2063, %v2223
    %v2225 = vlaneseq
    %v2226 = vshrl.u32 %v2225, 7
    %v2227 = vsub.s32 %v2100, %v2226
    %v2228 = vrot.slane %v2066, %v2227
    %v2229 = vsel %vm940, %v2108, %v2104
    %v2230 = vsel %vm943, %v2112, %v2229
    %v2231 = vsel %vm946, %v2116, %v2230
    %v2232 = vsel %vm949, %v2120, %v2231
    %v2233 = vsel %vm952, %v2124, %v2232
    %v2234 = vsel %vm955, %v2128, %v2233
    %v2235 = vsel %vm958, %v2132, %v2234
    %v2236 = vsel %vm940, %v2140, %v2136
    %v2237 = vsel %vm943, %v2144, %v2236
    %v2238 = vsel %vm946, %v2148, %v2237
    %v2239 = vsel %vm949, %v2152, %v2238
    %v2240 = vsel %vm952, %v2156, %v2239
    %v2241 = vsel %vm955, %v2160, %v2240
    %v2242 = vsel %vm958, %v2164, %v2241
    %v2243 = vsel %vm940, %v2172, %v2168
    %v2244 = vsel %vm943, %v2176, %v2243
    %v2245 = vsel %vm946, %v2180, %v2244
    %v2246 = vsel %vm949, %v2184, %v2245
    %v2247 = vsel %vm952, %v2188, %v2246
    %v2248 = vsel %vm955, %v2192, %v2247
    %v2249 = vsel %vm958, %v2196, %v2248
    %v2250 = vsel %vm940, %v2204, %v2200
    %v2251 = vsel %vm943, %v2208, %v2250
    %v2252 = vsel %vm946, %v2212, %v2251
    %v2253 = vsel %vm949, %v2216, %v2252
    %v2254 = vsel %vm952, %v2220, %v2253
    %v2255 = vsel %vm955, %v2224, %v2254
    %v2256 = vsel %vm958, %v2228, %v2255
    %v2261 = vcombine.low %v2235, %v2249
    %v2262 = vcombine.high %v2235, %v2249
    %v2264 = vunpack.c.l.s4 1983009808
    %v2265 = vunpack.c.0.s8 %v2264
    %v2266 = vlaneseq
    %v2267 = vshrl.u32 %v2266, 7
    %v2268 = vsub.s32 %v2265, %v2267
    %v2269 = vrot.slane %v2261, %v2268
    %v2271 = vunpack.c.l.s4 1983009808
    %v2272 = vunpack.c.0.s8 %v2271
    %v2273 = vlaneseq
    %v2274 = vshrl.u32 %v2273, 7
    %v2275 = vsub.s32 %v2272, %v2274
    %v2276 = vrot.slane %v2262, %v2275
    %v2277 = vcombine.low %v2242, %v2256
    %v2278 = vcombine.high %v2242, %v2256
    %v2280 = vunpack.c.l.s4 1983009808
    %v2281 = vunpack.c.0.s8 %v2280
    %v2282 = vlaneseq
    %v2283 = vshrl.u32 %v2282, 7
    %v2284 = vsub.s32 %v2281, %v2283
    %v2285 = vrot.slane %v2277, %v2284
    %v2287 = vunpack.c.l.s4 1983009808
    %v2288 = vunpack.c.0.s8 %v2287
    %v2289 = vlaneseq
    %v2290 = vshrl.u32 %v2289, 7
    %v2291 = vsub.s32 %v2288, %v2290
    %v2292 = vrot.slane %v2278, %v2291
    %v2293 = vcombine.low %v2269, %v2285
    %v2294 = vcombine.high %v2269, %v2285
    %v2296 = vunpack.c.l.s4 1934713408
    %v2297 = vunpack.c.0.s8 %v2296
    %v2298 = vlaneseq
    %v2299 = vshrl.u32 %v2298, 7
    %v2300 = vsub.s32 %v2297, %v2299
    %v2301 = vrot.slane %v2293, %v2300
    %v2303 = vunpack.c.l.s4 1934713408
    %v2304 = vunpack.c.0.s8 %v2303
    %v2305 = vlaneseq
    %v2306 = vshrl.u32 %v2305, 7
    %v2307 = vsub.s32 %v2304, %v2306
    %v2308 = vrot.slane %v2294, %v2307
    %v2309 = vcombine.low %v2276, %v2292
    %v2310 = vcombine.high %v2276, %v2292
    %v2312 = vunpack.c.l.s4 1934713408
    %v2313 = vunpack.c.0.s8 %v2312
    %v2314 = vlaneseq
    %v2315 = vshrl.u32 %v2314, 7
    %v2316 = vsub.s32 %v2313, %v2315
    %v2317 = vrot.slane %v2309, %v2316
    %v2319 = vunpack.c.l.s4 1934713408
    %v2320 = vunpack.c.0.s8 %v2319
    %v2321 = vlaneseq
    %v2322 = vshrl.u32 %v2321, 7
    %v2323 = vsub.s32 %v2320, %v2322
    %v2324 = vrot.slane %v2310, %v2323
    %v2325 = vcombine.high %v2301, 0.0
    %v2326 = vcombine.high %v2308, 0.0
    %v2327 = vcombine.high %v2317, 0.0
    %v2328 = vcombine.high %v2324, 0.0
    %2330 = vrot.lane.b32.xlu0 %v2325, 8
    %v2331 = vpop.permute.xlu0 %2330
    %2334 = vrot.lane.b32.xlu0 %v2308, 16
    %v2335 = vpop.permute.xlu0 %2334
    %2338 = vrot.lane.b32.xlu0 %v2326, 24
    %v2339 = vpop.permute.xlu0 %2338
    %2342 = vrot.lane.b32.xlu0 %v2317, 32
    %v2343 = vpop.permute.xlu0 %2342
    %2346 = vrot.lane.b32.xlu0 %v2327, 40
    %v2347 = vpop.permute.xlu0 %2346
    %2350 = vrot.lane.b32.xlu0 %v2324, 48
    %v2351 = vpop.permute.xlu0 %2350
    %2354 = vrot.lane.b32.xlu0 %v2328, 56
    %v2355 = vpop.permute.xlu0 %2354
    %vm2357 = vcmask 64512
    %v2358 = vsel %vm2357, %v2301, %v2331
    %vm2359 = vcmask 130048
    %v2360 = vsel %vm2359, %v2358, %v2335
    %vm2361 = vcmask 195584
    %v2362 = vsel %vm2361, %v2360, %v2339
    %vm2363 = vcmask 261120
    %v2364 = vsel %vm2363, %v2362, %v2343
    %vm2365 = vcmask 326656
    %v2366 = vsel %vm2365, %v2364, %v2347
    %vm2367 = vcmask 392192
    %v2368 = vsel %vm2367, %v2366, %v2351
    %vm2369 = vcmask 457728
    %v2370 = vsel %vm2369, %v2368, %v2355
    %v2371 = vpack.c.bf16 %v2370, %v2370
    %2373 = vrot.lane.b32.xlu0 %v2371, 73
    %v2374 = vpop.permute.xlu0 %2373
    %2375 = vrot.lane.b32.xlu0 %v2371, 9
    %v2376 = vpop.permute.xlu0 %2375
    %vm2377 = vcmask 72704
    %v2380 = vsel %vm2377, %v2374, %v2376
    %v2383 = vpack.i.b16 %v41, %v41
    %v2385 = vlaneseq
    %v2386 = vshrl.u32 %v2385, 7
    %v2387 = vsub.s32 0, %v2386
    %v2388 = vrot.slane %v2383, %v2387
    %v2389 = vmul.bf16 %v2380, %v2388
    %2390 = vrot.lane.b32.xlu0 %v2371, 72
    %v2391 = vpop.permute.xlu0 %2390
    %2392 = vrot.lane.b32.xlu0 %v2371, 8
    %v2393 = vpop.permute.xlu0 %2392
    %v2396 = vsel %vm2357, %v2391, %v2393
    %v2399 = vpack.i.b16 %v42, %v42
    %v2401 = vlaneseq
    %v2402 = vshrl.u32 %v2401, 7
    %v2403 = vsub.s32 0, %v2402
    %v2404 = vrot.slane %v2399, %v2403
    %v2405 = vmul.bf16 %v2396, %v2404
    %vm2406 = vcmask 31744
    %v2408 = vsel %vm2406, %v33, 0
    %vm2410 = vcmask 1041408
    %v2412 = vsel %vm2410, %v2405, 0
    %2414 = vmatprep.subr.bf16.mxu0 0
    %2415 = vmatpush1.bf16.msra.mxu0 %v2412
    %2416 = vmatprep.subr.bf16.mxu0 0
    %2417 = vmatpush1.bf16.msra.mxu0 0
    %2418 = vmatprep.subr.bf16.mxu0 0
    %2419 = vmatpush1.bf16.msra.mxu0 0
    %2420 = vmatprep.subr.bf16.mxu0 0
    %2421 = vmatpush1.bf16.msra.mxu0 0
    %2422 = vmatprep.subr.bf16.mxu0 0
    %2423 = vmatpush1.bf16.msra.mxu0 0
    %2424 = vmatprep.subr.bf16.mxu0 0
    %2425 = vmatpush1.bf16.msra.mxu0 0
    %2426 = vmatprep.subr.bf16.mxu0 0
    %2427 = vmatpush1.bf16.msra.mxu0 0
    %2428 = vmatprep.subr.bf16.mxu0 0
    %2429 = vmatpush1.bf16.msra.mxu0 0
    %2430 = vmatprep.subr.bf16.mxu0 0
    %2431 = vmatpush1.bf16.msra.mxu0 0
    %2432 = vmatprep.subr.bf16.mxu0 0
    %2433 = vmatpush1.bf16.msra.mxu0 0
    %2434 = vmatprep.subr.bf16.mxu0 0
    %2435 = vmatpush1.bf16.msra.mxu0 0
    %2436 = vmatprep.subr.bf16.mxu0 0
    %2437 = vmatpush1.bf16.msra.mxu0 0
    %2438 = vmatprep.subr.bf16.mxu0 0
    %2439 = vmatpush1.bf16.msra.mxu0 0
    %2440 = vmatprep.subr.bf16.mxu0 0
    %2441 = vmatpush1.bf16.msra.mxu0 0
    %2442 = vmatprep.subr.bf16.mxu0 0
    %2443 = vmatpush1.bf16.msra.mxu0 0
    %2444 = vmatprep.subr.bf16.mxu0 0
    %2445 = vmatpush1.bf16.msra.mxu0 0
    %2446 = vmatprep.mubr.bf16.mxu0 0
    %2447 = vmatmul.mubr.bf16.gmra.mrb[0].mxu0 %v2408
    %v2448 = vpop.f32.mrb[0].mxu0
    %v2449 = vadd.f32 0.0, %v2448
    %v2450 = vpop.f32.mrb[0].mxu0
    %v2451 = vpop.f32.mrb[0].mxu0
    %v2452 = vpop.f32.mrb[0].mxu0
    %2453 = vdwg.mxu0
    %v2455 = vsel %vm2406, %v32, 0
    %v2458 = vsel %vm2410, %v2389, 0
    %2460 = vmatprep.subr.bf16.mxu0 0
    %2461 = vmatpush1.bf16.msra.mxu0 %v2458
    %2462 = vmatprep.subr.bf16.mxu0 0
    %2463 = vmatpush1.bf16.msra.mxu0 0
    %2464 = vmatprep.subr.bf16.mxu0 0
    %2465 = vmatpush1.bf16.msra.mxu0 0
    %2466 = vmatprep.subr.bf16.mxu0 0
    %2467 = vmatpush1.bf16.msra.mxu0 0
    %2468 = vmatprep.subr.bf16.mxu0 0
    %2469 = vmatpush1.bf16.msra.mxu0 0
    %2470 = vmatprep.subr.bf16.mxu0 0
    %2471 = vmatpush1.bf16.msra.mxu0 0
    %2472 = vmatprep.subr.bf16.mxu0 0
    %2473 = vmatpush1.bf16.msra.mxu0 0
    %2474 = vmatprep.subr.bf16.mxu0 0
    %2475 = vmatpush1.bf16.msra.mxu0 0
    %2476 = vmatprep.subr.bf16.mxu0 0
    %2477 = vmatpush1.bf16.msra.mxu0 0
    %2478 = vmatprep.subr.bf16.mxu0 0
    %2479 = vmatpush1.bf16.msra.mxu0 0
    %2480 = vmatprep.subr.bf16.mxu0 0
    %2481 = vmatpush1.bf16.msra.mxu0 0
    %2482 = vmatprep.subr.bf16.mxu0 0
    %2483 = vmatpush1.bf16.msra.mxu0 0
    %2484 = vmatprep.subr.bf16.mxu0 0
    %2485 = vmatpush1.bf16.msra.mxu0 0
    %2486 = vmatprep.subr.bf16.mxu0 0
    %2487 = vmatpush1.bf16.msra.mxu0 0
    %2488 = vmatprep.subr.bf16.mxu0 0
    %2489 = vmatpush1.bf16.msra.mxu0 0
    %2490 = vmatprep.subr.bf16.mxu0 0
    %2491 = vmatpush1.bf16.msra.mxu0 0
    %2492 = vmatprep.mubr.bf16.mxu0 0
    %2493 = vmatmul.mubr.bf16.gmra.mrb[0].mxu0 %v2455
    %v2494 = vpop.f32.mrb[0].mxu0
    %v2495 = vadd.f32 %v2449, %v2494
    %v2496 = vpop.f32.mrb[0].mxu0
    %v2497 = vpop.f32.mrb[0].mxu0
    %v2498 = vpop.f32.mrb[0].mxu0
    %2499 = vdwg.mxu0
    %2500 = vrot.lane.b32.xlu0 %v2371, 71
    %v2501 = vpop.permute.xlu0 %2500
    %2502 = vrot.lane.b32.xlu0 %v2371, 7
    %v2503 = vpop.permute.xlu0 %2502
    %vm2504 = vcmask 56320
    %v2507 = vsel %vm2504, %v2501, %v2503
    %v2510 = vpack.i.b16 %v43, %v43
    %v2512 = vlaneseq
    %v2513 = vshrl.u32 %v2512, 7
    %v2514 = vsub.s32 0, %v2513
    %v2515 = vrot.slane %v2510, %v2514
    %v2516 = vmul.bf16 %v2507, %v2515
    %v2518 = vsel %vm2406, %v34, 0
    %v2521 = vsel %vm2410, %v2516, 0
    %2523 = vmatprep.subr.bf16.mxu0 0
    %2524 = vmatpush1.bf16.msra.mxu0 %v2521
    %2525 = vmatprep.subr.bf16.mxu0 0
    %2526 = vmatpush1.bf16.msra.mxu0 0
    %2527 = vmatprep.subr.bf16.mxu0 0
    %2528 = vmatpush1.bf16.msra.mxu0 0
    %2529 = vmatprep.subr.bf16.mxu0 0
    %2530 = vmatpush1.bf16.msra.mxu0 0
    %2531 = vmatprep.subr.bf16.mxu0 0
    %2532 = vmatpush1.bf16.msra.mxu0 0
    %2533 = vmatprep.subr.bf16.mxu0 0
    %2534 = vmatpush1.bf16.msra.mxu0 0
    %2535 = vmatprep.subr.bf16.mxu0 0
    %2536 = vmatpush1.bf16.msra.mxu0 0
    %2537 = vmatprep.subr.bf16.mxu0 0
    %2538 = vmatpush1.bf16.msra.mxu0 0
    %2539 = vmatprep.subr.bf16.mxu0 0
    %2540 = vmatpush1.bf16.msra.mxu0 0
    %2541 = vmatprep.subr.bf16.mxu0 0
    %2542 = vmatpush1.bf16.msra.mxu0 0
    %2543 = vmatprep.subr.bf16.mxu0 0
    %2544 = vmatpush1.bf16.msra.mxu0 0
    %2545 = vmatprep.subr.bf16.mxu0 0
    %2546 = vmatpush1.bf16.msra.mxu0 0
    %2547 = vmatprep.subr.bf16.mxu0 0
    %2548 = vmatpush1.bf16.msra.mxu0 0
    %2549 = vmatprep.subr.bf16.mxu0 0
    %2550 = vmatpush1.bf16.msra.mxu0 0
    %2551 = vmatprep.subr.bf16.mxu0 0
    %2552 = vmatpush1.bf16.msra.mxu0 0
    %2553 = vmatprep.subr.bf16.mxu0 0
    %2554 = vmatpush1.bf16.msra.mxu0 0
    %2555 = vmatprep.mubr.bf16.mxu0 0
    %2556 = vmatmul.mubr.bf16.gmra.mrb[0].mxu0 %v2518
    %v2557 = vpop.f32.mrb[0].mxu0
    %v2558 = vadd.f32 0.0, %v2557
    %v2559 = vpop.f32.mrb[0].mxu0
    %v2560 = vpop.f32.mrb[0].mxu0
    %v2561 = vpop.f32.mrb[0].mxu0
    %2562 = vdwg.mxu0
    %v2563 = vadd.f32 %v2495, %v2558
    %2564 = vrot.lane.b32.xlu0 %v2371, 65
    %v2565 = vpop.permute.xlu0 %2564
    %2566 = vrot.lane.b32.xlu0 %v2371, 1
    %v2567 = vpop.permute.xlu0 %2566
    %vm2568 = vcmask 7168
    %v2571 = vsel %vm2568, %v2565, %v2567
    %v2574 = vpack.i.b16 %v44, %v44
    %v2576 = vlaneseq
    %v2577 = vshrl.u32 %v2576, 7
    %v2578 = vsub.s32 0, %v2577
    %v2579 = vrot.slane %v2574, %v2578
    %v2580 = vmul.bf16 %v2571, %v2579
    %v2582 = vsel %vm2406, %v35, 0
    %v2585 = vsel %vm2410, %v2580, 0
    %2587 = vmatprep.subr.bf16.mxu0 0
    %2588 = vmatpush1.bf16.msra.mxu0 %v2585
    %2589 = vmatprep.subr.bf16.mxu0 0
    %2590 = vmatpush1.bf16.msra.mxu0 0
    %2591 = vmatprep.subr.bf16.mxu0 0
    %2592 = vmatpush1.bf16.msra.mxu0 0
    %2593 = vmatprep.subr.bf16.mxu0 0
    %2594 = vmatpush1.bf16.msra.mxu0 0
    %2595 = vmatprep.subr.bf16.mxu0 0
    %2596 = vmatpush1.bf16.msra.mxu0 0
    %2597 = vmatprep.subr.bf16.mxu0 0
    %2598 = vmatpush1.bf16.msra.mxu0 0
    %2599 = vmatprep.subr.bf16.mxu0 0
    %2600 = vmatpush1.bf16.msra.mxu0 0
    %2601 = vmatprep.subr.bf16.mxu0 0
    %2602 = vmatpush1.bf16.msra.mxu0 0
    %2603 = vmatprep.subr.bf16.mxu0 0
    %2604 = vmatpush1.bf16.msra.mxu0 0
    %2605 = vmatprep.subr.bf16.mxu0 0
    %2606 = vmatpush1.bf16.msra.mxu0 0
    %2607 = vmatprep.subr.bf16.mxu0 0
    %2608 = vmatpush1.bf16.msra.mxu0 0
    %2609 = vmatprep.subr.bf16.mxu0 0
    %2610 = vmatpush1.bf16.msra.mxu0 0
    %2611 = vmatprep.subr.bf16.mxu0 0
    %2612 = vmatpush1.bf16.msra.mxu0 0
    %2613 = vmatprep.subr.bf16.mxu0 0
    %2614 = vmatpush1.bf16.msra.mxu0 0
    %2615 = vmatprep.subr.bf16.mxu0 0
    %2616 = vmatpush1.bf16.msra.mxu0 0
    %2617 = vmatprep.subr.bf16.mxu0 0
    %2618 = vmatpush1.bf16.msra.mxu0 0
    %2619 = vmatprep.mubr.bf16.mxu0 0
    %2620 = vmatmul.mubr.bf16.gmra.mrb[0].mxu0 %v2582
    %v2621 = vpop.f32.mrb[0].mxu0
    %v2622 = vadd.f32 0.0, %v2621
    %v2623 = vpop.f32.mrb[0].mxu0
    %v2624 = vpop.f32.mrb[0].mxu0
    %v2625 = vpop.f32.mrb[0].mxu0
    %2626 = vdwg.mxu0
    %v2627 = vadd.f32 %v2563, %v2622
    %v2629 = vpack.i.b16 %v45, %v45
    %v2631 = vlaneseq
    %v2632 = vshrl.u32 %v2631, 7
    %v2633 = vsub.s32 0, %v2632
    %v2634 = vrot.slane %v2629, %v2633
    %v2635 = vmul.bf16 %v2371, %v2634
    %v2637 = vsel %vm2406, %v36, 0
    %v2640 = vsel %vm2410, %v2635, 0
    %2642 = vmatprep.subr.bf16.mxu0 0
    %2643 = vmatpush1.bf16.msra.mxu0 %v2640
    %2644 = vmatprep.subr.bf16.mxu0 0
    %2645 = vmatpush1.bf16.msra.mxu0 0
    %2646 = vmatprep.subr.bf16.mxu0 0
    %2647 = vmatpush1.bf16.msra.mxu0 0
    %2648 = vmatprep.subr.bf16.mxu0 0
    %2649 = vmatpush1.bf16.msra.mxu0 0
    %2650 = vmatprep.subr.bf16.mxu0 0
    %2651 = vmatpush1.bf16.msra.mxu0 0
    %2652 = vmatprep.subr.bf16.mxu0 0
    %2653 = vmatpush1.bf16.msra.mxu0 0
    %2654 = vmatprep.subr.bf16.mxu0 0
    %2655 = vmatpush1.bf16.msra.mxu0 0
    %2656 = vmatprep.subr.bf16.mxu0 0
    %2657 = vmatpush1.bf16.msra.mxu0 0
    %2658 = vmatprep.subr.bf16.mxu0 0
    %2659 = vmatpush1.bf16.msra.mxu0 0
    %2660 = vmatprep.subr.bf16.mxu0 0
    %2661 = vmatpush1.bf16.msra.mxu0 0
    %2662 = vmatprep.subr.bf16.mxu0 0
    %2663 = vmatpush1.bf16.msra.mxu0 0
    %2664 = vmatprep.subr.bf16.mxu0 0
    %2665 = vmatpush1.bf16.msra.mxu0 0
    %2666 = vmatprep.subr.bf16.mxu0 0
    %2667 = vmatpush1.bf16.msra.mxu0 0
    %2668 = vmatprep.subr.bf16.mxu0 0
    %2669 = vmatpush1.bf16.msra.mxu0 0
    %2670 = vmatprep.subr.bf16.mxu0 0
    %2671 = vmatpush1.bf16.msra.mxu0 0
    %2672 = vmatprep.subr.bf16.mxu0 0
    %2673 = vmatpush1.bf16.msra.mxu0 0
    %2674 = vmatprep.mubr.bf16.mxu0 0
    %2675 = vmatmul.mubr.bf16.gmra.mrb[0].mxu0 %v2637
    %v2676 = vpop.f32.mrb[0].mxu0
    %v2677 = vadd.f32 0.0, %v2676
    %v2678 = vpop.f32.mrb[0].mxu0
    %v2679 = vpop.f32.mrb[0].mxu0
    %v2680 = vpop.f32.mrb[0].mxu0
    %2681 = vdwg.mxu0
    %v2682 = vadd.f32 %v2627, %v2677
    %2683 = vrot.lane.b32.xlu0 %v2371, 127
    %v2684 = vpop.permute.xlu0 %2683
    %2685 = vrot.lane.b32.xlu0 %v2371, 63
    %v2686 = vpop.permute.xlu0 %2685
    %vm2687 = vcmask 515072
    %v2690 = vsel %vm2687, %v2684, %v2686
    %v2693 = vpack.i.b16 %v46, %v46
    %v2695 = vlaneseq
    %v2696 = vshrl.u32 %v2695, 7
    %v2697 = vsub.s32 0, %v2696
    %v2698 = vrot.slane %v2693, %v2697
    %v2699 = vmul.bf16 %v2690, %v2698
    %v2701 = vsel %vm2406, %v37, 0
    %v2704 = vsel %vm2410, %v2699, 0
    %2706 = vmatprep.subr.bf16.mxu0 0
    %2707 = vmatpush1.bf16.msra.mxu0 %v2704
    %2708 = vmatprep.subr.bf16.mxu0 0
    %2709 = vmatpush1.bf16.msra.mxu0 0
    %2710 = vmatprep.subr.bf16.mxu0 0
    %2711 = vmatpush1.bf16.msra.mxu0 0
    %2712 = vmatprep.subr.bf16.mxu0 0
    %2713 = vmatpush1.bf16.msra.mxu0 0
    %2714 = vmatprep.subr.bf16.mxu0 0
    %2715 = vmatpush1.bf16.msra.mxu0 0
    %2716 = vmatprep.subr.bf16.mxu0 0
    %2717 = vmatpush1.bf16.msra.mxu0 0
    %2718 = vmatprep.subr.bf16.mxu0 0
    %2719 = vmatpush1.bf16.msra.mxu0 0
    %2720 = vmatprep.subr.bf16.mxu0 0
    %2721 = vmatpush1.bf16.msra.mxu0 0
    %2722 = vmatprep.subr.bf16.mxu0 0
    %2723 = vmatpush1.bf16.msra.mxu0 0
    %2724 = vmatprep.subr.bf16.mxu0 0
    %2725 = vmatpush1.bf16.msra.mxu0 0
    %2726 = vmatprep.subr.bf16.mxu0 0
    %2727 = vmatpush1.bf16.msra.mxu0 0
    %2728 = vmatprep.subr.bf16.mxu0 0
    %2729 = vmatpush1.bf16.msra.mxu0 0
    %2730 = vmatprep.subr.bf16.mxu0 0
    %2731 = vmatpush1.bf16.msra.mxu0 0
    %2732 = vmatprep.subr.bf16.mxu0 0
    %2733 = vmatpush1.bf16.msra.mxu0 0
    %2734 = vmatprep.subr.bf16.mxu0 0
    %2735 = vmatpush1.bf16.msra.mxu0 0
    %2736 = vmatprep.subr.bf16.mxu0 0
    %2737 = vmatpush1.bf16.msra.mxu0 0
    %2738 = vmatprep.mubr.bf16.mxu0 0
    %2739 = vmatmul.mubr.bf16.gmra.mrb[0].mxu0 %v2701
    %v2740 = vpop.f32.mrb[0].mxu0
    %v2741 = vadd.f32 0.0, %v2740
    %v2742 = vpop.f32.mrb[0].mxu0
    %v2743 = vpop.f32.mrb[0].mxu0
    %v2744 = vpop.f32.mrb[0].mxu0
    %2745 = vdwg.mxu0
    %v2746 = vadd.f32 %v2682, %v2741
    %2747 = vrot.lane.b32.xlu0 %v2371, 121
    %v2748 = vpop.permute.xlu0 %2747
    %2749 = vrot.lane.b32.xlu0 %v2371, 57
    %v2750 = vpop.permute.xlu0 %2749
    %vm2751 = vcmask 465920
    %v2754 = vsel %vm2751, %v2748, %v2750
    %v2757 = vpack.i.b16 %v47, %v47
    %v2759 = vlaneseq
    %v2760 = vshrl.u32 %v2759, 7
    %v2761 = vsub.s32 0, %v2760
    %v2762 = vrot.slane %v2757, %v2761
    %v2763 = vmul.bf16 %v2754, %v2762
    %v2765 = vsel %vm2406, %v38, 0
    %v2768 = vsel %vm2410, %v2763, 0
    %2770 = vmatprep.subr.bf16.mxu0 0
    %2771 = vmatpush1.bf16.msra.mxu0 %v2768
    %2772 = vmatprep.subr.bf16.mxu0 0
    %2773 = vmatpush1.bf16.msra.mxu0 0
    %2774 = vmatprep.subr.bf16.mxu0 0
    %2775 = vmatpush1.bf16.msra.mxu0 0
    %2776 = vmatprep.subr.bf16.mxu0 0
    %2777 = vmatpush1.bf16.msra.mxu0 0
    %2778 = vmatprep.subr.bf16.mxu0 0
    %2779 = vmatpush1.bf16.msra.mxu0 0
    %2780 = vmatprep.subr.bf16.mxu0 0
    %2781 = vmatpush1.bf16.msra.mxu0 0
    %2782 = vmatprep.subr.bf16.mxu0 0
    %2783 = vmatpush1.bf16.msra.mxu0 0
    %2784 = vmatprep.subr.bf16.mxu0 0
    %2785 = vmatpush1.bf16.msra.mxu0 0
    %2786 = vmatprep.subr.bf16.mxu0 0
    %2787 = vmatpush1.bf16.msra.mxu0 0
    %2788 = vmatprep.subr.bf16.mxu0 0
    %2789 = vmatpush1.bf16.msra.mxu0 0
    %2790 = vmatprep.subr.bf16.mxu0 0
    %2791 = vmatpush1.bf16.msra.mxu0 0
    %2792 = vmatprep.subr.bf16.mxu0 0
    %2793 = vmatpush1.bf16.msra.mxu0 0
    %2794 = vmatprep.subr.bf16.mxu0 0
    %2795 = vmatpush1.bf16.msra.mxu0 0
    %2796 = vmatprep.subr.bf16.mxu0 0
    %2797 = vmatpush1.bf16.msra.mxu0 0
    %2798 = vmatprep.subr.bf16.mxu0 0
    %2799 = vmatpush1.bf16.msra.mxu0 0
    %2800 = vmatprep.subr.bf16.mxu0 0
    %2801 = vmatpush1.bf16.msra.mxu0 0
    %2802 = vmatprep.mubr.bf16.mxu0 0
    %2803 = vmatmul.mubr.bf16.gmra.mrb[0].mxu0 %v2765
    %v2804 = vpop.f32.mrb[0].mxu0
    %v2805 = vadd.f32 0.0, %v2804
    %v2806 = vpop.f32.mrb[0].mxu0
    %v2807 = vpop.f32.mrb[0].mxu0
    %v2808 = vpop.f32.mrb[0].mxu0
    %2809 = vdwg.mxu0
    %v2810 = vadd.f32 %v2746, %v2805
    %2811 = vrot.lane.b32.xlu0 %v2371, 120
    %v2812 = vpop.permute.xlu0 %2811
    %2813 = vrot.lane.b32.xlu0 %v2371, 56
    %v2814 = vpop.permute.xlu0 %2813
    %v2817 = vsel %vm2369, %v2812, %v2814
    %v2820 = vpack.i.b16 %v48, %v48
    %v2822 = vlaneseq
    %v2823 = vshrl.u32 %v2822, 7
    %v2824 = vsub.s32 0, %v2823
    %v2825 = vrot.slane %v2820, %v2824
    %v2826 = vmul.bf16 %v2817, %v2825
    %v2828 = vsel %vm2406, %v39, 0
    %v2831 = vsel %vm2410, %v2826, 0
    %2833 = vmatprep.subr.bf16.mxu0 0
    %2834 = vmatpush1.bf16.msra.mxu0 %v2831
    %2835 = vmatprep.subr.bf16.mxu0 0
    %2836 = vmatpush1.bf16.msra.mxu0 0
    %2837 = vmatprep.subr.bf16.mxu0 0
    %2838 = vmatpush1.bf16.msra.mxu0 0
    %2839 = vmatprep.subr.bf16.mxu0 0
    %2840 = vmatpush1.bf16.msra.mxu0 0
    %2841 = vmatprep.subr.bf16.mxu0 0
    %2842 = vmatpush1.bf16.msra.mxu0 0
    %2843 = vmatprep.subr.bf16.mxu0 0
    %2844 = vmatpush1.bf16.msra.mxu0 0
    %2845 = vmatprep.subr.bf16.mxu0 0
    %2846 = vmatpush1.bf16.msra.mxu0 0
    %2847 = vmatprep.subr.bf16.mxu0 0
    %2848 = vmatpush1.bf16.msra.mxu0 0
    %2849 = vmatprep.subr.bf16.mxu0 0
    %2850 = vmatpush1.bf16.msra.mxu0 0
    %2851 = vmatprep.subr.bf16.mxu0 0
    %2852 = vmatpush1.bf16.msra.mxu0 0
    %2853 = vmatprep.subr.bf16.mxu0 0
    %2854 = vmatpush1.bf16.msra.mxu0 0
    %2855 = vmatprep.subr.bf16.mxu0 0
    %2856 = vmatpush1.bf16.msra.mxu0 0
    %2857 = vmatprep.subr.bf16.mxu0 0
    %2858 = vmatpush1.bf16.msra.mxu0 0
    %2859 = vmatprep.subr.bf16.mxu0 0
    %2860 = vmatpush1.bf16.msra.mxu0 0
    %2861 = vmatprep.subr.bf16.mxu0 0
    %2862 = vmatpush1.bf16.msra.mxu0 0
    %2863 = vmatprep.subr.bf16.mxu0 0
    %2864 = vmatpush1.bf16.msra.mxu0 0
    %2865 = vmatprep.mubr.bf16.mxu0 0
    %2866 = vmatmul.mubr.bf16.gmra.mrb[0].mxu0 %v2828
    %v2867 = vpop.f32.mrb[0].mxu0
    %v2868 = vadd.f32 0.0, %v2867
    %v2869 = vpop.f32.mrb[0].mxu0
    %v2870 = vpop.f32.mrb[0].mxu0
    %v2871 = vpop.f32.mrb[0].mxu0
    %2872 = vdwg.mxu0
    %v2873 = vadd.f32 %v2810, %v2868
    %2874 = vrot.lane.b32.xlu0 %v2371, 119
    %v2875 = vpop.permute.xlu0 %2874
    %2876 = vrot.lane.b32.xlu0 %v2371, 55
    %v2877 = vpop.permute.xlu0 %2876
    %vm2878 = vcmask 449536
    %v2881 = vsel %vm2878, %v2875, %v2877
    %v2884 = vpack.i.b16 %v49, %v49
    %v2886 = vlaneseq
    %v2887 = vshrl.u32 %v2886, 7
    %v2888 = vsub.s32 0, %v2887
    %v2889 = vrot.slane %v2884, %v2888
    %v2890 = vmul.bf16 %v2881, %v2889
    %v2892 = vsel %vm2406, %v40, 0
    %v2895 = vsel %vm2410, %v2890, 0
    %2897 = vmatprep.subr.bf16.mxu0 0
    %2898 = vmatpush1.bf16.msra.mxu0 %v2895
    %2899 = vmatprep.subr.bf16.mxu0 0
    %2900 = vmatpush1.bf16.msra.mxu0 0
    %2901 = vmatprep.subr.bf16.mxu0 0
    %2902 = vmatpush1.bf16.msra.mxu0 0
    %2903 = vmatprep.subr.bf16.mxu0 0
    %2904 = vmatpush1.bf16.msra.mxu0 0
    %2905 = vmatprep.subr.bf16.mxu0 0
    %2906 = vmatpush1.bf16.msra.mxu0 0
    %2907 = vmatprep.subr.bf16.mxu0 0
    %2908 = vmatpush1.bf16.msra.mxu0 0
    %2909 = vmatprep.subr.bf16.mxu0 0
    %2910 = vmatpush1.bf16.msra.mxu0 0
    %2911 = vmatprep.subr.bf16.mxu0 0
    %2912 = vmatpush1.bf16.msra.mxu0 0
    %2913 = vmatprep.subr.bf16.mxu0 0
    %2914 = vmatpush1.bf16.msra.mxu0 0
    %2915 = vmatprep.subr.bf16.mxu0 0
    %2916 = vmatpush1.bf16.msra.mxu0 0
    %2917 = vmatprep.subr.bf16.mxu0 0
    %2918 = vmatpush1.bf16.msra.mxu0 0
    %2919 = vmatprep.subr.bf16.mxu0 0
    %2920 = vmatpush1.bf16.msra.mxu0 0
    %2921 = vmatprep.subr.bf16.mxu0 0
    %2922 = vmatpush1.bf16.msra.mxu0 0
    %2923 = vmatprep.subr.bf16.mxu0 0
    %2924 = vmatpush1.bf16.msra.mxu0 0
    %2925 = vmatprep.subr.bf16.mxu0 0
    %2926 = vmatpush1.bf16.msra.mxu0 0
    %2927 = vmatprep.subr.bf16.mxu0 0
    %2928 = vmatpush1.bf16.msra.mxu0 0
    %2929 = vmatprep.mubr.bf16.mxu0 0
    %2930 = vmatmul.mubr.bf16.gmra.mrb[0].mxu0 %v2892
    %v2931 = vpop.f32.mrb[0].mxu0
    %v2932 = vadd.f32 0.0, %v2931
    %v2933 = vpop.f32.mrb[0].mxu0
    %v2934 = vpop.f32.mrb[0].mxu0
    %v2935 = vpop.f32.mrb[0].mxu0
    %2936 = vdwg.mxu0
    %v2937 = vadd.f32 %v2873, %v2932
    %v2938 = vpack.c.bf16 %v2937, %v2937
    %vm2939 = vcmask 519168
    %2940 = vst.msk [vmem:[%s3] sm:$0xf] %vm2939, %v2938
    %v2941 = vunpack.c.l.bf16 %v2938
    %vm2942 = vcmask 523264
    %v2943 = vsel %vm2942, %v2941, 0.0
    %2944 = vadd.xlane.f32.xlu0 %v2943
    %v2945 = vpop.xlane.xlu0 %2944
    %v2946 = vadd.f32 %v2945, 0.0
    %v2947 = vmul.f32 %v2941, %v2941
    %v2948 = vsel %vm2942, %v2947, 0.0
    %2949 = vadd.xlane.f32.xlu0 %v2948
    %v2950 = vpop.xlane.xlu0 %2949
    %v2951 = vadd.f32 %v2950, 0.0
    %s2952 = scalar_lea.vmem [#allocation2], 64
    %v2953 = vld [vmem:[%s2952] sm:$0xff]
    %v2954 = vld [vmem:[%s2952 + $0x8] sm:$0xff]
    %v2955 = vld [vmem:[%s2952 + $0x10] sm:$0xff]
    %v2956 = vld [vmem:[%s2952 + $0x18] sm:$0xff]
    %v2957 = vld [vmem:[%s2952 + $0x20] sm:$0xff]
    %v2958 = vld [vmem:[%s2952 + $0x28] sm:$0xff]
    %v2959 = vld [vmem:[%s2952 + $0x30] sm:$0xff]
    %v2960 = vld [vmem:[%s2952 + $0x38] sm:$0xff]
    %v2969 = vcombine.high %v2953, %v2953
    %v2971 = vunpack.c.l.s4 1983009808
    %v2972 = vunpack.c.0.s8 %v2971
    %v2973 = vlaneseq
    %v2974 = vshrl.u32 %v2973, 7
    %v2975 = vsub.s32 %v2972, %v2974
    %v2976 = vrot.slane %v2953, %v2975
    %v2978 = vunpack.c.l.s4 1983009808
    %v2979 = vunpack.c.0.s8 %v2978
    %v2980 = vlaneseq
    %v2981 = vshrl.u32 %v2980, 7
    %v2982 = vsub.s32 %v2979, %v2981
    %v2983 = vrot.slane %v2969, %v2982
    %v2984 = vcombine.high %v2976, %v2976
    %v2985 = vcombine.high %v2983, %v2983
    %v2986 = vcombine.high %v2954, %v2954
    %v2988 = vunpack.c.l.s4 1983009808
    %v2989 = vunpack.c.0.s8 %v2988
    %v2990 = vlaneseq
    %v2991 = vshrl.u32 %v2990, 7
    %v2992 = vsub.s32 %v2989, %v2991
    %v2993 = vrot.slane %v2954, %v2992
    %v2995 = vunpack.c.l.s4 1983009808
    %v2996 = vunpack.c.0.s8 %v2995
    %v2997 = vlaneseq
    %v2998 = vshrl.u32 %v2997, 7
    %v2999 = vsub.s32 %v2996, %v2998
    %v3000 = vrot.slane %v2986, %v2999
    %v3001 = vcombine.high %v2993, %v2993
    %v3002 = vcombine.high %v3000, %v3000
    %v3003 = vcombine.high %v2955, %v2955
    %v3005 = vunpack.c.l.s4 1983009808
    %v3006 = vunpack.c.0.s8 %v3005
    %v3007 = vlaneseq
    %v3008 = vshrl.u32 %v3007, 7
    %v3009 = vsub.s32 %v3006, %v3008
    %v3010 = vrot.slane %v2955, %v3009
    %v3012 = vunpack.c.l.s4 1983009808
    %v3013 = vunpack.c.0.s8 %v3012
    %v3014 = vlaneseq
    %v3015 = vshrl.u32 %v3014, 7
    %v3016 = vsub.s32 %v3013, %v3015
    %v3017 = vrot.slane %v3003, %v3016
    %v3018 = vcombine.high %v3010, %v3010
    %v3019 = vcombine.high %v3017, %v3017
    %v3020 = vcombine.high %v2956, %v2956
    %v3022 = vunpack.c.l.s4 1983009808
    %v3023 = vunpack.c.0.s8 %v3022
    %v3024 = vlaneseq
    %v3025 = vshrl.u32 %v3024, 7
    %v3026 = vsub.s32 %v3023, %v3025
    %v3027 = vrot.slane %v2956, %v3026
    %v3029 = vunpack.c.l.s4 1983009808
    %v3030 = vunpack.c.0.s8 %v3029
    %v3031 = vlaneseq
    %v3032 = vshrl.u32 %v3031, 7
    %v3033 = vsub.s32 %v3030, %v3032
    %v3034 = vrot.slane %v3020, %v3033
    %v3035 = vcombine.high %v3027, %v3027
    %v3036 = vcombine.high %v3034, %v3034
    %v3037 = vcombine.high %v2957, %v2957
    %v3039 = vunpack.c.l.s4 1983009808
    %v3040 = vunpack.c.0.s8 %v3039
    %v3041 = vlaneseq
    %v3042 = vshrl.u32 %v3041, 7
    %v3043 = vsub.s32 %v3040, %v3042
    %v3044 = vrot.slane %v2957, %v3043
    %v3046 = vunpack.c.l.s4 1983009808
    %v3047 = vunpack.c.0.s8 %v3046
    %v3048 = vlaneseq
    %v3049 = vshrl.u32 %v3048, 7
    %v3050 = vsub.s32 %v3047, %v3049
    %v3051 = vrot.slane %v3037, %v3050
    %v3052 = vcombine.high %v3044, %v3044
    %v3053 = vcombine.high %v3051, %v3051
    %v3054 = vcombine.high %v2958, %v2958
    %v3056 = vunpack.c.l.s4 1983009808
    %v3057 = vunpack.c.0.s8 %v3056
    %v3058 = vlaneseq
    %v3059 = vshrl.u32 %v3058, 7
    %v3060 = vsub.s32 %v3057, %v3059
    %v3061 = vrot.slane %v2958, %v3060
    %v3063 = vunpack.c.l.s4 1983009808
    %v3064 = vunpack.c.0.s8 %v3063
    %v3065 = vlaneseq
    %v3066 = vshrl.u32 %v3065, 7
    %v3067 = vsub.s32 %v3064, %v3066
    %v3068 = vrot.slane %v3054, %v3067
    %v3069 = vcombine.high %v3061, %v3061
    %v3070 = vcombine.high %v3068, %v3068
    %v3071 = vcombine.high %v2959, %v2959
    %v3073 = vunpack.c.l.s4 1983009808
    %v3074 = vunpack.c.0.s8 %v3073
    %v3075 = vlaneseq
    %v3076 = vshrl.u32 %v3075, 7
    %v3077 = vsub.s32 %v3074, %v3076
    %v3078 = vrot.slane %v2959, %v3077
    %v3080 = vunpack.c.l.s4 1983009808
    %v3081 = vunpack.c.0.s8 %v3080
    %v3082 = vlaneseq
    %v3083 = vshrl.u32 %v3082, 7
    %v3084 = vsub.s32 %v3081, %v3083
    %v3085 = vrot.slane %v3071, %v3084
    %v3086 = vcombine.high %v3078, %v3078
    %v3087 = vcombine.high %v3085, %v3085
    %v3088 = vcombine.high %v2960, %v2960
    %v3090 = vunpack.c.l.s4 1983009808
    %v3091 = vunpack.c.0.s8 %v3090
    %v3092 = vlaneseq
    %v3093 = vshrl.u32 %v3092, 7
    %v3094 = vsub.s32 %v3091, %v3093
    %v3095 = vrot.slane %v2960, %v3094
    %v3097 = vunpack.c.l.s4 1983009808
    %v3098 = vunpack.c.0.s8 %v3097
    %v3099 = vlaneseq
    %v3100 = vshrl.u32 %v3099, 7
    %v3101 = vsub.s32 %v3098, %v3100
    %v3102 = vrot.slane %v3088, %v3101
    %v3103 = vcombine.high %v3095, %v3095
    %v3104 = vcombine.high %v3102, %v3102
    %v3137 = vsel %vm234, %v2976, -inf
    %v3138 = vrot.slane %v3137, 4
    %v3139 = vmax.f32 %v3137, %v3138
    %v3140 = vrot.slane %v3139, 2
    %v3141 = vmax.f32 %v3139, %v3140
    %v3142 = vrot.slane %v3141, 1
    %v3143 = vmax.f32 %v3141, %v3142
    %v3144 = vsel %vm234, %v2984, -inf
    %v3145 = vrot.slane %v3144, 4
    %v3146 = vmax.f32 %v3144, %v3145
    %v3147 = vrot.slane %v3146, 2
    %v3148 = vmax.f32 %v3146, %v3147
    %v3149 = vrot.slane %v3148, 1
    %v3150 = vmax.f32 %v3148, %v3149
    %v3151 = vsel %vm234, %v2983, -inf
    %v3152 = vrot.slane %v3151, 4
    %v3153 = vmax.f32 %v3151, %v3152
    %v3154 = vrot.slane %v3153, 2
    %v3155 = vmax.f32 %v3153, %v3154
    %v3156 = vrot.slane %v3155, 1
    %v3157 = vmax.f32 %v3155, %v3156
    %v3158 = vsel %vm234, %v2985, -inf
    %v3159 = vrot.slane %v3158, 4
    %v3160 = vmax.f32 %v3158, %v3159
    %v3161 = vrot.slane %v3160, 2
    %v3162 = vmax.f32 %v3160, %v3161
    %v3163 = vrot.slane %v3162, 1
    %v3164 = vmax.f32 %v3162, %v3163
    %v3165 = vsel %vm234, %v2993, -inf
    %v3166 = vrot.slane %v3165, 4
    %v3167 = vmax.f32 %v3165, %v3166
    %v3168 = vrot.slane %v3167, 2
    %v3169 = vmax.f32 %v3167, %v3168
    %v3170 = vrot.slane %v3169, 1
    %v3171 = vmax.f32 %v3169, %v3170
    %v3172 = vsel %vm234, %v3001, -inf
    %v3173 = vrot.slane %v3172, 4
    %v3174 = vmax.f32 %v3172, %v3173
    %v3175 = vrot.slane %v3174, 2
    %v3176 = vmax.f32 %v3174, %v3175
    %v3177 = vrot.slane %v3176, 1
    %v3178 = vmax.f32 %v3176, %v3177
    %v3179 = vsel %vm234, %v3000, -inf
    %v3180 = vrot.slane %v3179, 4
    %v3181 = vmax.f32 %v3179, %v3180
    %v3182 = vrot.slane %v3181, 2
    %v3183 = vmax.f32 %v3181, %v3182
    %v3184 = vrot.slane %v3183, 1
    %v3185 = vmax.f32 %v3183, %v3184
    %v3186 = vsel %vm234, %v3002, -inf
    %v3187 = vrot.slane %v3186, 4
    %v3188 = vmax.f32 %v3186, %v3187
    %v3189 = vrot.slane %v3188, 2
    %v3190 = vmax.f32 %v3188, %v3189
    %v3191 = vrot.slane %v3190, 1
    %v3192 = vmax.f32 %v3190, %v3191
    %v3193 = vsel %vm234, %v3010, -inf
    %v3194 = vrot.slane %v3193, 4
    %v3195 = vmax.f32 %v3193, %v3194
    %v3196 = vrot.slane %v3195, 2
    %v3197 = vmax.f32 %v3195, %v3196
    %v3198 = vrot.slane %v3197, 1
    %v3199 = vmax.f32 %v3197, %v3198
    %v3200 = vsel %vm234, %v3018, -inf
    %v3201 = vrot.slane %v3200, 4
    %v3202 = vmax.f32 %v3200, %v3201
    %v3203 = vrot.slane %v3202, 2
    %v3204 = vmax.f32 %v3202, %v3203
    %v3205 = vrot.slane %v3204, 1
    %v3206 = vmax.f32 %v3204, %v3205
    %v3207 = vsel %vm234, %v3017, -inf
    %v3208 = vrot.slane %v3207, 4
    %v3209 = vmax.f32 %v3207, %v3208
    %v3210 = vrot.slane %v3209, 2
    %v3211 = vmax.f32 %v3209, %v3210
    %v3212 = vrot.slane %v3211, 1
    %v3213 = vmax.f32 %v3211, %v3212
    %v3214 = vsel %vm234, %v3019, -inf
    %v3215 = vrot.slane %v3214, 4
    %v3216 = vmax.f32 %v3214, %v3215
    %v3217 = vrot.slane %v3216, 2
    %v3218 = vmax.f32 %v3216, %v3217
    %v3219 = vrot.slane %v3218, 1
    %v3220 = vmax.f32 %v3218, %v3219
    %v3221 = vsel %vm234, %v3027, -inf
    %v3222 = vrot.slane %v3221, 4
    %v3223 = vmax.f32 %v3221, %v3222
    %v3224 = vrot.slane %v3223, 2
    %v3225 = vmax.f32 %v3223, %v3224
    %v3226 = vrot.slane %v3225, 1
    %v3227 = vmax.f32 %v3225, %v3226
    %v3228 = vsel %vm234, %v3035, -inf
    %v3229 = vrot.slane %v3228, 4
    %v3230 = vmax.f32 %v3228, %v3229
    %v3231 = vrot.slane %v3230, 2
    %v3232 = vmax.f32 %v3230, %v3231
    %v3233 = vrot.slane %v3232, 1
    %v3234 = vmax.f32 %v3232, %v3233
    %v3235 = vsel %vm234, %v3034, -inf
    %v3236 = vrot.slane %v3235, 4
    %v3237 = vmax.f32 %v3235, %v3236
    %v3238 = vrot.slane %v3237, 2
    %v3239 = vmax.f32 %v3237, %v3238
    %v3240 = vrot.slane %v3239, 1
    %v3241 = vmax.f32 %v3239, %v3240
    %v3242 = vsel %vm234, %v3036, -inf
    %v3243 = vrot.slane %v3242, 4
    %v3244 = vmax.f32 %v3242, %v3243
    %v3245 = vrot.slane %v3244, 2
    %v3246 = vmax.f32 %v3244, %v3245
    %v3247 = vrot.slane %v3246, 1
    %v3248 = vmax.f32 %v3246, %v3247
    %v3249 = vsel %vm234, %v3044, -inf
    %v3250 = vrot.slane %v3249, 4
    %v3251 = vmax.f32 %v3249, %v3250
    %v3252 = vrot.slane %v3251, 2
    %v3253 = vmax.f32 %v3251, %v3252
    %v3254 = vrot.slane %v3253, 1
    %v3255 = vmax.f32 %v3253, %v3254
    %v3256 = vsel %vm234, %v3052, -inf
    %v3257 = vrot.slane %v3256, 4
    %v3258 = vmax.f32 %v3256, %v3257
    %v3259 = vrot.slane %v3258, 2
    %v3260 = vmax.f32 %v3258, %v3259
    %v3261 = vrot.slane %v3260, 1
    %v3262 = vmax.f32 %v3260, %v3261
    %v3263 = vsel %vm234, %v3051, -inf
    %v3264 = vrot.slane %v3263, 4
    %v3265 = vmax.f32 %v3263, %v3264
    %v3266 = vrot.slane %v3265, 2
    %v3267 = vmax.f32 %v3265, %v3266
    %v3268 = vrot.slane %v3267, 1
    %v3269 = vmax.f32 %v3267, %v3268
    %v3270 = vsel %vm234, %v3053, -inf
    %v3271 = vrot.slane %v3270, 4
    %v3272 = vmax.f32 %v3270, %v3271
    %v3273 = vrot.slane %v3272, 2
    %v3274 = vmax.f32 %v3272, %v3273
    %v3275 = vrot.slane %v3274, 1
    %v3276 = vmax.f32 %v3274, %v3275
    %v3277 = vsel %vm234, %v3061, -inf
    %v3278 = vrot.slane %v3277, 4
    %v3279 = vmax.f32 %v3277, %v3278
    %v3280 = vrot.slane %v3279, 2
    %v3281 = vmax.f32 %v3279, %v3280
    %v3282 = vrot.slane %v3281, 1
    %v3283 = vmax.f32 %v3281, %v3282
    %v3284 = vsel %vm234, %v3069, -inf
    %v3285 = vrot.slane %v3284, 4
    %v3286 = vmax.f32 %v3284, %v3285
    %v3287 = vrot.slane %v3286, 2
    %v3288 = vmax.f32 %v3286, %v3287
    %v3289 = vrot.slane %v3288, 1
    %v3290 = vmax.f32 %v3288, %v3289
    %v3291 = vsel %vm234, %v3068, -inf
    %v3292 = vrot.slane %v3291, 4
    %v3293 = vmax.f32 %v3291, %v3292
    %v3294 = vrot.slane %v3293, 2
    %v3295 = vmax.f32 %v3293, %v3294
    %v3296 = vrot.slane %v3295, 1
    %v3297 = vmax.f32 %v3295, %v3296
    %v3298 = vsel %vm234, %v3070, -inf
    %v3299 = vrot.slane %v3298, 4
    %v3300 = vmax.f32 %v3298, %v3299
    %v3301 = vrot.slane %v3300, 2
    %v3302 = vmax.f32 %v3300, %v3301
    %v3303 = vrot.slane %v3302, 1
    %v3304 = vmax.f32 %v3302, %v3303
    %v3305 = vsel %vm234, %v3078, -inf
    %v3306 = vrot.slane %v3305, 4
    %v3307 = vmax.f32 %v3305, %v3306
    %v3308 = vrot.slane %v3307, 2
    %v3309 = vmax.f32 %v3307, %v3308
    %v3310 = vrot.slane %v3309, 1
    %v3311 = vmax.f32 %v3309, %v3310
    %v3312 = vsel %vm234, %v3086, -inf
    %v3313 = vrot.slane %v3312, 4
    %v3314 = vmax.f32 %v3312, %v3313
    %v3315 = vrot.slane %v3314, 2
    %v3316 = vmax.f32 %v3314, %v3315
    %v3317 = vrot.slane %v3316, 1
    %v3318 = vmax.f32 %v3316, %v3317
    %v3319 = vsel %vm234, %v3085, -inf
    %v3320 = vrot.slane %v3319, 4
    %v3321 = vmax.f32 %v3319, %v3320
    %v3322 = vrot.slane %v3321, 2
    %v3323 = vmax.f32 %v3321, %v3322
    %v3324 = vrot.slane %v3323, 1
    %v3325 = vmax.f32 %v3323, %v3324
    %v3326 = vsel %vm234, %v3087, -inf
    %v3327 = vrot.slane %v3326, 4
    %v3328 = vmax.f32 %v3326, %v3327
    %v3329 = vrot.slane %v3328, 2
    %v3330 = vmax.f32 %v3328, %v3329
    %v3331 = vrot.slane %v3330, 1
    %v3332 = vmax.f32 %v3330, %v3331
    %v3333 = vsel %vm234, %v3095, -inf
    %v3334 = vrot.slane %v3333, 4
    %v3335 = vmax.f32 %v3333, %v3334
    %v3336 = vrot.slane %v3335, 2
    %v3337 = vmax.f32 %v3335, %v3336
    %v3338 = vrot.slane %v3337, 1
    %v3339 = vmax.f32 %v3337, %v3338
    %v3340 = vsel %vm234, %v3103, -inf
    %v3341 = vrot.slane %v3340, 4
    %v3342 = vmax.f32 %v3340, %v3341
    %v3343 = vrot.slane %v3342, 2
    %v3344 = vmax.f32 %v3342, %v3343
    %v3345 = vrot.slane %v3344, 1
    %v3346 = vmax.f32 %v3344, %v3345
    %v3347 = vsel %vm234, %v3102, -inf
    %v3348 = vrot.slane %v3347, 4
    %v3349 = vmax.f32 %v3347, %v3348
    %v3350 = vrot.slane %v3349, 2
    %v3351 = vmax.f32 %v3349, %v3350
    %v3352 = vrot.slane %v3351, 1
    %v3353 = vmax.f32 %v3351, %v3352
    %v3354 = vsel %vm234, %v3104, -inf
    %v3355 = vrot.slane %v3354, 4
    %v3356 = vmax.f32 %v3354, %v3355
    %v3357 = vrot.slane %v3356, 2
    %v3358 = vmax.f32 %v3356, %v3357
    %v3359 = vrot.slane %v3358, 1
    %v3360 = vmax.f32 %v3358, %v3359
    %3393 = vrot.lane.b32.xlu0 %v3143, 126
    %v3394 = vpop.permute.xlu0 %3393
    %3395 = vrot.lane.b32.xlu0 %v3150, 126
    %v3396 = vpop.permute.xlu0 %3395
    %3397 = vrot.lane.b32.xlu0 %v3157, 126
    %v3398 = vpop.permute.xlu0 %3397
    %3399 = vrot.lane.b32.xlu0 %v3164, 126
    %v3400 = vpop.permute.xlu0 %3399
    %3401 = vrot.lane.b32.xlu0 %v3171, 126
    %v3402 = vpop.permute.xlu0 %3401
    %3403 = vrot.lane.b32.xlu0 %v3178, 126
    %v3404 = vpop.permute.xlu0 %3403
    %3405 = vrot.lane.b32.xlu0 %v3185, 126
    %v3406 = vpop.permute.xlu0 %3405
    %3407 = vrot.lane.b32.xlu0 %v3192, 126
    %v3408 = vpop.permute.xlu0 %3407
    %3409 = vrot.lane.b32.xlu0 %v3199, 126
    %v3410 = vpop.permute.xlu0 %3409
    %3411 = vrot.lane.b32.xlu0 %v3206, 126
    %v3412 = vpop.permute.xlu0 %3411
    %3413 = vrot.lane.b32.xlu0 %v3213, 126
    %v3414 = vpop.permute.xlu0 %3413
    %3415 = vrot.lane.b32.xlu0 %v3220, 126
    %v3416 = vpop.permute.xlu0 %3415
    %3417 = vrot.lane.b32.xlu0 %v3227, 126
    %v3418 = vpop.permute.xlu0 %3417
    %3419 = vrot.lane.b32.xlu0 %v3234, 126
    %v3420 = vpop.permute.xlu0 %3419
    %3421 = vrot.lane.b32.xlu0 %v3241, 126
    %v3422 = vpop.permute.xlu0 %3421
    %3423 = vrot.lane.b32.xlu0 %v3248, 126
    %v3424 = vpop.permute.xlu0 %3423
    %3425 = vrot.lane.b32.xlu0 %v3255, 126
    %v3426 = vpop.permute.xlu0 %3425
    %3427 = vrot.lane.b32.xlu0 %v3262, 126
    %v3428 = vpop.permute.xlu0 %3427
    %3429 = vrot.lane.b32.xlu0 %v3269, 126
    %v3430 = vpop.permute.xlu0 %3429
    %3431 = vrot.lane.b32.xlu0 %v3276, 126
    %v3432 = vpop.permute.xlu0 %3431
    %3433 = vrot.lane.b32.xlu0 %v3283, 126
    %v3434 = vpop.permute.xlu0 %3433
    %3435 = vrot.lane.b32.xlu0 %v3290, 126
    %v3436 = vpop.permute.xlu0 %3435
    %3437 = vrot.lane.b32.xlu0 %v3297, 126
    %v3438 = vpop.permute.xlu0 %3437
    %3439 = vrot.lane.b32.xlu0 %v3304, 126
    %v3440 = vpop.permute.xlu0 %3439
    %3441 = vrot.lane.b32.xlu0 %v3311, 126
    %v3442 = vpop.permute.xlu0 %3441
    %3443 = vrot.lane.b32.xlu0 %v3318, 126
    %v3444 = vpop.permute.xlu0 %3443
    %3445 = vrot.lane.b32.xlu0 %v3325, 126
    %v3446 = vpop.permute.xlu0 %3445
    %3447 = vrot.lane.b32.xlu0 %v3332, 126
    %v3448 = vpop.permute.xlu0 %3447
    %3449 = vrot.lane.b32.xlu0 %v3339, 126
    %v3450 = vpop.permute.xlu0 %3449
    %3451 = vrot.lane.b32.xlu0 %v3346, 126
    %v3452 = vpop.permute.xlu0 %3451
    %3453 = vrot.lane.b32.xlu0 %v3353, 126
    %v3454 = vpop.permute.xlu0 %3453
    %3455 = vrot.lane.b32.xlu0 %v3360, 126
    %v3456 = vpop.permute.xlu0 %3455
    %3457 = vrot.lane.b32.xlu0 %v3143, 124
    %v3458 = vpop.permute.xlu0 %3457
    %3459 = vrot.lane.b32.xlu0 %v3150, 124
    %v3460 = vpop.permute.xlu0 %3459
    %3461 = vrot.lane.b32.xlu0 %v3157, 124
    %v3462 = vpop.permute.xlu0 %3461
    %3463 = vrot.lane.b32.xlu0 %v3164, 124
    %v3464 = vpop.permute.xlu0 %3463
    %3465 = vrot.lane.b32.xlu0 %v3171, 124
    %v3466 = vpop.permute.xlu0 %3465
    %3467 = vrot.lane.b32.xlu0 %v3178, 124
    %v3468 = vpop.permute.xlu0 %3467
    %3469 = vrot.lane.b32.xlu0 %v3185, 124
    %v3470 = vpop.permute.xlu0 %3469
    %3471 = vrot.lane.b32.xlu0 %v3192, 124
    %v3472 = vpop.permute.xlu0 %3471
    %3473 = vrot.lane.b32.xlu0 %v3199, 124
    %v3474 = vpop.permute.xlu0 %3473
    %3475 = vrot.lane.b32.xlu0 %v3206, 124
    %v3476 = vpop.permute.xlu0 %3475
    %3477 = vrot.lane.b32.xlu0 %v3213, 124
    %v3478 = vpop.permute.xlu0 %3477
    %3479 = vrot.lane.b32.xlu0 %v3220, 124
    %v3480 = vpop.permute.xlu0 %3479
    %3481 = vrot.lane.b32.xlu0 %v3227, 124
    %v3482 = vpop.permute.xlu0 %3481
    %3483 = vrot.lane.b32.xlu0 %v3234, 124
    %v3484 = vpop.permute.xlu0 %3483
    %3485 = vrot.lane.b32.xlu0 %v3241, 124
    %v3486 = vpop.permute.xlu0 %3485
    %3487 = vrot.lane.b32.xlu0 %v3248, 124
    %v3488 = vpop.permute.xlu0 %3487
    %3489 = vrot.lane.b32.xlu0 %v3255, 124
    %v3490 = vpop.permute.xlu0 %3489
    %3491 = vrot.lane.b32.xlu0 %v3262, 124
    %v3492 = vpop.permute.xlu0 %3491
    %3493 = vrot.lane.b32.xlu0 %v3269, 124
    %v3494 = vpop.permute.xlu0 %3493
    %3495 = vrot.lane.b32.xlu0 %v3276, 124
    %v3496 = vpop.permute.xlu0 %3495
    %3497 = vrot.lane.b32.xlu0 %v3283, 124
    %v3498 = vpop.permute.xlu0 %3497
    %3499 = vrot.lane.b32.xlu0 %v3290, 124
    %v3500 = vpop.permute.xlu0 %3499
    %3501 = vrot.lane.b32.xlu0 %v3297, 124
    %v3502 = vpop.permute.xlu0 %3501
    %3503 = vrot.lane.b32.xlu0 %v3304, 124
    %v3504 = vpop.permute.xlu0 %3503
    %3505 = vrot.lane.b32.xlu0 %v3311, 124
    %v3506 = vpop.permute.xlu0 %3505
    %3507 = vrot.lane.b32.xlu0 %v3318, 124
    %v3508 = vpop.permute.xlu0 %3507
    %3509 = vrot.lane.b32.xlu0 %v3325, 124
    %v3510 = vpop.permute.xlu0 %3509
    %3511 = vrot.lane.b32.xlu0 %v3332, 124
    %v3512 = vpop.permute.xlu0 %3511
    %3513 = vrot.lane.b32.xlu0 %v3339, 124
    %v3514 = vpop.permute.xlu0 %3513
    %3515 = vrot.lane.b32.xlu0 %v3346, 124
    %v3516 = vpop.permute.xlu0 %3515
    %3517 = vrot.lane.b32.xlu0 %v3353, 124
    %v3518 = vpop.permute.xlu0 %3517
    %3519 = vrot.lane.b32.xlu0 %v3360, 124
    %v3520 = vpop.permute.xlu0 %3519
    %3521 = vrot.lane.b32.xlu0 %v3143, 122
    %v3522 = vpop.permute.xlu0 %3521
    %3523 = vrot.lane.b32.xlu0 %v3150, 122
    %v3524 = vpop.permute.xlu0 %3523
    %3525 = vrot.lane.b32.xlu0 %v3157, 122
    %v3526 = vpop.permute.xlu0 %3525
    %3527 = vrot.lane.b32.xlu0 %v3164, 122
    %v3528 = vpop.permute.xlu0 %3527
    %3529 = vrot.lane.b32.xlu0 %v3171, 122
    %v3530 = vpop.permute.xlu0 %3529
    %3531 = vrot.lane.b32.xlu0 %v3178, 122
    %v3532 = vpop.permute.xlu0 %3531
    %3533 = vrot.lane.b32.xlu0 %v3185, 122
    %v3534 = vpop.permute.xlu0 %3533
    %3535 = vrot.lane.b32.xlu0 %v3192, 122
    %v3536 = vpop.permute.xlu0 %3535
    %3537 = vrot.lane.b32.xlu0 %v3199, 122
    %v3538 = vpop.permute.xlu0 %3537
    %3539 = vrot.lane.b32.xlu0 %v3206, 122
    %v3540 = vpop.permute.xlu0 %3539
    %3541 = vrot.lane.b32.xlu0 %v3213, 122
    %v3542 = vpop.permute.xlu0 %3541
    %3543 = vrot.lane.b32.xlu0 %v3220, 122
    %v3544 = vpop.permute.xlu0 %3543
    %3545 = vrot.lane.b32.xlu0 %v3227, 122
    %v3546 = vpop.permute.xlu0 %3545
    %3547 = vrot.lane.b32.xlu0 %v3234, 122
    %v3548 = vpop.permute.xlu0 %3547
    %3549 = vrot.lane.b32.xlu0 %v3241, 122
    %v3550 = vpop.permute.xlu0 %3549
    %3551 = vrot.lane.b32.xlu0 %v3248, 122
    %v3552 = vpop.permute.xlu0 %3551
    %3553 = vrot.lane.b32.xlu0 %v3255, 122
    %v3554 = vpop.permute.xlu0 %3553
    %3555 = vrot.lane.b32.xlu0 %v3262, 122
    %v3556 = vpop.permute.xlu0 %3555
    %3557 = vrot.lane.b32.xlu0 %v3269, 122
    %v3558 = vpop.permute.xlu0 %3557
    %3559 = vrot.lane.b32.xlu0 %v3276, 122
    %v3560 = vpop.permute.xlu0 %3559
    %3561 = vrot.lane.b32.xlu0 %v3283, 122
    %v3562 = vpop.permute.xlu0 %3561
    %3563 = vrot.lane.b32.xlu0 %v3290, 122
    %v3564 = vpop.permute.xlu0 %3563
    %3565 = vrot.lane.b32.xlu0 %v3297, 122
    %v3566 = vpop.permute.xlu0 %3565
    %3567 = vrot.lane.b32.xlu0 %v3304, 122
    %v3568 = vpop.permute.xlu0 %3567
    %3569 = vrot.lane.b32.xlu0 %v3311, 122
    %v3570 = vpop.permute.xlu0 %3569
    %3571 = vrot.lane.b32.xlu0 %v3318, 122
    %v3572 = vpop.permute.xlu0 %3571
    %3573 = vrot.lane.b32.xlu0 %v3325, 122
    %v3574 = vpop.permute.xlu0 %3573
    %3575 = vrot.lane.b32.xlu0 %v3332, 122
    %v3576 = vpop.permute.xlu0 %3575
    %3577 = vrot.lane.b32.xlu0 %v3339, 122
    %v3578 = vpop.permute.xlu0 %3577
    %3579 = vrot.lane.b32.xlu0 %v3346, 122
    %v3580 = vpop.permute.xlu0 %3579
    %3581 = vrot.lane.b32.xlu0 %v3353, 122
    %v3582 = vpop.permute.xlu0 %3581
    %3583 = vrot.lane.b32.xlu0 %v3360, 122
    %v3584 = vpop.permute.xlu0 %3583
    %3585 = vrot.lane.b32.xlu0 %v3143, 120
    %v3586 = vpop.permute.xlu0 %3585
    %3587 = vrot.lane.b32.xlu0 %v3150, 120
    %v3588 = vpop.permute.xlu0 %3587
    %3589 = vrot.lane.b32.xlu0 %v3157, 120
    %v3590 = vpop.permute.xlu0 %3589
    %3591 = vrot.lane.b32.xlu0 %v3164, 120
    %v3592 = vpop.permute.xlu0 %3591
    %3593 = vrot.lane.b32.xlu0 %v3171, 120
    %v3594 = vpop.permute.xlu0 %3593
    %3595 = vrot.lane.b32.xlu0 %v3178, 120
    %v3596 = vpop.permute.xlu0 %3595
    %3597 = vrot.lane.b32.xlu0 %v3185, 120
    %v3598 = vpop.permute.xlu0 %3597
    %3599 = vrot.lane.b32.xlu0 %v3192, 120
    %v3600 = vpop.permute.xlu0 %3599
    %3601 = vrot.lane.b32.xlu0 %v3199, 120
    %v3602 = vpop.permute.xlu0 %3601
    %3603 = vrot.lane.b32.xlu0 %v3206, 120
    %v3604 = vpop.permute.xlu0 %3603
    %3605 = vrot.lane.b32.xlu0 %v3213, 120
    %v3606 = vpop.permute.xlu0 %3605
    %3607 = vrot.lane.b32.xlu0 %v3220, 120
    %v3608 = vpop.permute.xlu0 %3607
    %3609 = vrot.lane.b32.xlu0 %v3227, 120
    %v3610 = vpop.permute.xlu0 %3609
    %3611 = vrot.lane.b32.xlu0 %v3234, 120
    %v3612 = vpop.permute.xlu0 %3611
    %3613 = vrot.lane.b32.xlu0 %v3241, 120
    %v3614 = vpop.permute.xlu0 %3613
    %3615 = vrot.lane.b32.xlu0 %v3248, 120
    %v3616 = vpop.permute.xlu0 %3615
    %3617 = vrot.lane.b32.xlu0 %v3255, 120
    %v3618 = vpop.permute.xlu0 %3617
    %3619 = vrot.lane.b32.xlu0 %v3262, 120
    %v3620 = vpop.permute.xlu0 %3619
    %3621 = vrot.lane.b32.xlu0 %v3269, 120
    %v3622 = vpop.permute.xlu0 %3621
    %3623 = vrot.lane.b32.xlu0 %v3276, 120
    %v3624 = vpop.permute.xlu0 %3623
    %3625 = vrot.lane.b32.xlu0 %v3283, 120
    %v3626 = vpop.permute.xlu0 %3625
    %3627 = vrot.lane.b32.xlu0 %v3290, 120
    %v3628 = vpop.permute.xlu0 %3627
    %3629 = vrot.lane.b32.xlu0 %v3297, 120
    %v3630 = vpop.permute.xlu0 %3629
    %3631 = vrot.lane.b32.xlu0 %v3304, 120
    %v3632 = vpop.permute.xlu0 %3631
    %3633 = vrot.lane.b32.xlu0 %v3311, 120
    %v3634 = vpop.permute.xlu0 %3633
    %3635 = vrot.lane.b32.xlu0 %v3318, 120
    %v3636 = vpop.permute.xlu0 %3635
    %3637 = vrot.lane.b32.xlu0 %v3325, 120
    %v3638 = vpop.permute.xlu0 %3637
    %3639 = vrot.lane.b32.xlu0 %v3332, 120
    %v3640 = vpop.permute.xlu0 %3639
    %3641 = vrot.lane.b32.xlu0 %v3339, 120
    %v3642 = vpop.permute.xlu0 %3641
    %3643 = vrot.lane.b32.xlu0 %v3346, 120
    %v3644 = vpop.permute.xlu0 %3643
    %3645 = vrot.lane.b32.xlu0 %v3353, 120
    %v3646 = vpop.permute.xlu0 %3645
    %3647 = vrot.lane.b32.xlu0 %v3360, 120
    %v3648 = vpop.permute.xlu0 %3647
    %3649 = vrot.lane.b32.xlu0 %v3143, 118
    %v3650 = vpop.permute.xlu0 %3649
    %3651 = vrot.lane.b32.xlu0 %v3150, 118
    %v3652 = vpop.permute.xlu0 %3651
    %3653 = vrot.lane.b32.xlu0 %v3157, 118
    %v3654 = vpop.permute.xlu0 %3653
    %3655 = vrot.lane.b32.xlu0 %v3164, 118
    %v3656 = vpop.permute.xlu0 %3655
    %3657 = vrot.lane.b32.xlu0 %v3171, 118
    %v3658 = vpop.permute.xlu0 %3657
    %3659 = vrot.lane.b32.xlu0 %v3178, 118
    %v3660 = vpop.permute.xlu0 %3659
    %3661 = vrot.lane.b32.xlu0 %v3185, 118
    %v3662 = vpop.permute.xlu0 %3661
    %3663 = vrot.lane.b32.xlu0 %v3192, 118
    %v3664 = vpop.permute.xlu0 %3663
    %3665 = vrot.lane.b32.xlu0 %v3199, 118
    %v3666 = vpop.permute.xlu0 %3665
    %3667 = vrot.lane.b32.xlu0 %v3206, 118
    %v3668 = vpop.permute.xlu0 %3667
    %3669 = vrot.lane.b32.xlu0 %v3213, 118
    %v3670 = vpop.permute.xlu0 %3669
    %3671 = vrot.lane.b32.xlu0 %v3220, 118
    %v3672 = vpop.permute.xlu0 %3671
    %3673 = vrot.lane.b32.xlu0 %v3227, 118
    %v3674 = vpop.permute.xlu0 %3673
    %3675 = vrot.lane.b32.xlu0 %v3234, 118
    %v3676 = vpop.permute.xlu0 %3675
    %3677 = vrot.lane.b32.xlu0 %v3241, 118
    %v3678 = vpop.permute.xlu0 %3677
    %3679 = vrot.lane.b32.xlu0 %v3248, 118
    %v3680 = vpop.permute.xlu0 %3679
    %3681 = vrot.lane.b32.xlu0 %v3255, 118
    %v3682 = vpop.permute.xlu0 %3681
    %3683 = vrot.lane.b32.xlu0 %v3262, 118
    %v3684 = vpop.permute.xlu0 %3683
    %3685 = vrot.lane.b32.xlu0 %v3269, 118
    %v3686 = vpop.permute.xlu0 %3685
    %3687 = vrot.lane.b32.xlu0 %v3276, 118
    %v3688 = vpop.permute.xlu0 %3687
    %3689 = vrot.lane.b32.xlu0 %v3283, 118
    %v3690 = vpop.permute.xlu0 %3689
    %3691 = vrot.lane.b32.xlu0 %v3290, 118
    %v3692 = vpop.permute.xlu0 %3691
    %3693 = vrot.lane.b32.xlu0 %v3297, 118
    %v3694 = vpop.permute.xlu0 %3693
    %3695 = vrot.lane.b32.xlu0 %v3304, 118
    %v3696 = vpop.permute.xlu0 %3695
    %3697 = vrot.lane.b32.xlu0 %v3311, 118
    %v3698 = vpop.permute.xlu0 %3697
    %3699 = vrot.lane.b32.xlu0 %v3318, 118
    %v3700 = vpop.permute.xlu0 %3699
    %3701 = vrot.lane.b32.xlu0 %v3325, 118
    %v3702 = vpop.permute.xlu0 %3701
    %3703 = vrot.lane.b32.xlu0 %v3332, 118
    %v3704 = vpop.permute.xlu0 %3703
    %3705 = vrot.lane.b32.xlu0 %v3339, 118
    %v3706 = vpop.permute.xlu0 %3705
    %3707 = vrot.lane.b32.xlu0 %v3346, 118
    %v3708 = vpop.permute.xlu0 %3707
    %3709 = vrot.lane.b32.xlu0 %v3353, 118
    %v3710 = vpop.permute.xlu0 %3709
    %3711 = vrot.lane.b32.xlu0 %v3360, 118
    %v3712 = vpop.permute.xlu0 %3711
    %3713 = vrot.lane.b32.xlu0 %v3143, 116
    %v3714 = vpop.permute.xlu0 %3713
    %3715 = vrot.lane.b32.xlu0 %v3150, 116
    %v3716 = vpop.permute.xlu0 %3715
    %3717 = vrot.lane.b32.xlu0 %v3157, 116
    %v3718 = vpop.permute.xlu0 %3717
    %3719 = vrot.lane.b32.xlu0 %v3164, 116
    %v3720 = vpop.permute.xlu0 %3719
    %3721 = vrot.lane.b32.xlu0 %v3171, 116
    %v3722 = vpop.permute.xlu0 %3721
    %3723 = vrot.lane.b32.xlu0 %v3178, 116
    %v3724 = vpop.permute.xlu0 %3723
    %3725 = vrot.lane.b32.xlu0 %v3185, 116
    %v3726 = vpop.permute.xlu0 %3725
    %3727 = vrot.lane.b32.xlu0 %v3192, 116
    %v3728 = vpop.permute.xlu0 %3727
    %3729 = vrot.lane.b32.xlu0 %v3199, 116
    %v3730 = vpop.permute.xlu0 %3729
    %3731 = vrot.lane.b32.xlu0 %v3206, 116
    %v3732 = vpop.permute.xlu0 %3731
    %3733 = vrot.lane.b32.xlu0 %v3213, 116
    %v3734 = vpop.permute.xlu0 %3733
    %3735 = vrot.lane.b32.xlu0 %v3220, 116
    %v3736 = vpop.permute.xlu0 %3735
    %3737 = vrot.lane.b32.xlu0 %v3227, 116
    %v3738 = vpop.permute.xlu0 %3737
    %3739 = vrot.lane.b32.xlu0 %v3234, 116
    %v3740 = vpop.permute.xlu0 %3739
    %3741 = vrot.lane.b32.xlu0 %v3241, 116
    %v3742 = vpop.permute.xlu0 %3741
    %3743 = vrot.lane.b32.xlu0 %v3248, 116
    %v3744 = vpop.permute.xlu0 %3743
    %3745 = vrot.lane.b32.xlu0 %v3255, 116
    %v3746 = vpop.permute.xlu0 %3745
    %3747 = vrot.lane.b32.xlu0 %v3262, 116
    %v3748 = vpop.permute.xlu0 %3747
    %3749 = vrot.lane.b32.xlu0 %v3269, 116
    %v3750 = vpop.permute.xlu0 %3749
    %3751 = vrot.lane.b32.xlu0 %v3276, 116
    %v3752 = vpop.permute.xlu0 %3751
    %3753 = vrot.lane.b32.xlu0 %v3283, 116
    %v3754 = vpop.permute.xlu0 %3753
    %3755 = vrot.lane.b32.xlu0 %v3290, 116
    %v3756 = vpop.permute.xlu0 %3755
    %3757 = vrot.lane.b32.xlu0 %v3297, 116
    %v3758 = vpop.permute.xlu0 %3757
    %3759 = vrot.lane.b32.xlu0 %v3304, 116
    %v3760 = vpop.permute.xlu0 %3759
    %3761 = vrot.lane.b32.xlu0 %v3311, 116
    %v3762 = vpop.permute.xlu0 %3761
    %3763 = vrot.lane.b32.xlu0 %v3318, 116
    %v3764 = vpop.permute.xlu0 %3763
    %3765 = vrot.lane.b32.xlu0 %v3325, 116
    %v3766 = vpop.permute.xlu0 %3765
    %3767 = vrot.lane.b32.xlu0 %v3332, 116
    %v3768 = vpop.permute.xlu0 %3767
    %3769 = vrot.lane.b32.xlu0 %v3339, 116
    %v3770 = vpop.permute.xlu0 %3769
    %3771 = vrot.lane.b32.xlu0 %v3346, 116
    %v3772 = vpop.permute.xlu0 %3771
    %3773 = vrot.lane.b32.xlu0 %v3353, 116
    %v3774 = vpop.permute.xlu0 %3773
    %3775 = vrot.lane.b32.xlu0 %v3360, 116
    %v3776 = vpop.permute.xlu0 %3775
    %3777 = vrot.lane.b32.xlu0 %v3143, 114
    %v3778 = vpop.permute.xlu0 %3777
    %3779 = vrot.lane.b32.xlu0 %v3150, 114
    %v3780 = vpop.permute.xlu0 %3779
    %3781 = vrot.lane.b32.xlu0 %v3157, 114
    %v3782 = vpop.permute.xlu0 %3781
    %3783 = vrot.lane.b32.xlu0 %v3164, 114
    %v3784 = vpop.permute.xlu0 %3783
    %3785 = vrot.lane.b32.xlu0 %v3171, 114
    %v3786 = vpop.permute.xlu0 %3785
    %3787 = vrot.lane.b32.xlu0 %v3178, 114
    %v3788 = vpop.permute.xlu0 %3787
    %3789 = vrot.lane.b32.xlu0 %v3185, 114
    %v3790 = vpop.permute.xlu0 %3789
    %3791 = vrot.lane.b32.xlu0 %v3192, 114
    %v3792 = vpop.permute.xlu0 %3791
    %3793 = vrot.lane.b32.xlu0 %v3199, 114
    %v3794 = vpop.permute.xlu0 %3793
    %3795 = vrot.lane.b32.xlu0 %v3206, 114
    %v3796 = vpop.permute.xlu0 %3795
    %3797 = vrot.lane.b32.xlu0 %v3213, 114
    %v3798 = vpop.permute.xlu0 %3797
    %3799 = vrot.lane.b32.xlu0 %v3220, 114
    %v3800 = vpop.permute.xlu0 %3799
    %3801 = vrot.lane.b32.xlu0 %v3227, 114
    %v3802 = vpop.permute.xlu0 %3801
    %3803 = vrot.lane.b32.xlu0 %v3234, 114
    %v3804 = vpop.permute.xlu0 %3803
    %3805 = vrot.lane.b32.xlu0 %v3241, 114
    %v3806 = vpop.permute.xlu0 %3805
    %3807 = vrot.lane.b32.xlu0 %v3248, 114
    %v3808 = vpop.permute.xlu0 %3807
    %3809 = vrot.lane.b32.xlu0 %v3255, 114
    %v3810 = vpop.permute.xlu0 %3809
    %3811 = vrot.lane.b32.xlu0 %v3262, 114
    %v3812 = vpop.permute.xlu0 %3811
    %3813 = vrot.lane.b32.xlu0 %v3269, 114
    %v3814 = vpop.permute.xlu0 %3813
    %3815 = vrot.lane.b32.xlu0 %v3276, 114
    %v3816 = vpop.permute.xlu0 %3815
    %3817 = vrot.lane.b32.xlu0 %v3283, 114
    %v3818 = vpop.permute.xlu0 %3817
    %3819 = vrot.lane.b32.xlu0 %v3290, 114
    %v3820 = vpop.permute.xlu0 %3819
    %3821 = vrot.lane.b32.xlu0 %v3297, 114
    %v3822 = vpop.permute.xlu0 %3821
    %3823 = vrot.lane.b32.xlu0 %v3304, 114
    %v3824 = vpop.permute.xlu0 %3823
    %3825 = vrot.lane.b32.xlu0 %v3311, 114
    %v3826 = vpop.permute.xlu0 %3825
    %3827 = vrot.lane.b32.xlu0 %v3318, 114
    %v3828 = vpop.permute.xlu0 %3827
    %3829 = vrot.lane.b32.xlu0 %v3325, 114
    %v3830 = vpop.permute.xlu0 %3829
    %3831 = vrot.lane.b32.xlu0 %v3332, 114
    %v3832 = vpop.permute.xlu0 %3831
    %3833 = vrot.lane.b32.xlu0 %v3339, 114
    %v3834 = vpop.permute.xlu0 %3833
    %3835 = vrot.lane.b32.xlu0 %v3346, 114
    %v3836 = vpop.permute.xlu0 %3835
    %3837 = vrot.lane.b32.xlu0 %v3353, 114
    %v3838 = vpop.permute.xlu0 %3837
    %3839 = vrot.lane.b32.xlu0 %v3360, 114
    %v3840 = vpop.permute.xlu0 %3839
    %v3841 = vrot.slane %v3150, 7
    %v3842 = vsel %vm940, %v3841, %v3143
    %v3843 = vrot.slane %v3157, 6
    %v3844 = vsel %vm943, %v3843, %v3842
    %v3845 = vrot.slane %v3164, 5
    %v3846 = vsel %vm946, %v3845, %v3844
    %v3847 = vrot.slane %v3171, 4
    %v3848 = vsel %vm949, %v3847, %v3846
    %v3849 = vrot.slane %v3178, 3
    %v3850 = vsel %vm952, %v3849, %v3848
    %v3851 = vrot.slane %v3185, 2
    %v3852 = vsel %vm955, %v3851, %v3850
    %v3853 = vrot.slane %v3192, 1
    %v3854 = vsel %vm958, %v3853, %v3852
    %v3855 = vrot.slane %v3396, 7
    %v3856 = vsel %vm940, %v3855, %v3394
    %v3857 = vrot.slane %v3398, 6
    %v3858 = vsel %vm943, %v3857, %v3856
    %v3859 = vrot.slane %v3400, 5
    %v3860 = vsel %vm946, %v3859, %v3858
    %v3861 = vrot.slane %v3402, 4
    %v3862 = vsel %vm949, %v3861, %v3860
    %v3863 = vrot.slane %v3404, 3
    %v3864 = vsel %vm952, %v3863, %v3862
    %v3865 = vrot.slane %v3406, 2
    %v3866 = vsel %vm955, %v3865, %v3864
    %v3867 = vrot.slane %v3408, 1
    %v3868 = vsel %vm958, %v3867, %v3866
    %v3869 = vrot.slane %v3460, 7
    %v3870 = vsel %vm940, %v3869, %v3458
    %v3871 = vrot.slane %v3462, 6
    %v3872 = vsel %vm943, %v3871, %v3870
    %v3873 = vrot.slane %v3464, 5
    %v3874 = vsel %vm946, %v3873, %v3872
    %v3875 = vrot.slane %v3466, 4
    %v3876 = vsel %vm949, %v3875, %v3874
    %v3877 = vrot.slane %v3468, 3
    %v3878 = vsel %vm952, %v3877, %v3876
    %v3879 = vrot.slane %v3470, 2
    %v3880 = vsel %vm955, %v3879, %v3878
    %v3881 = vrot.slane %v3472, 1
    %v3882 = vsel %vm958, %v3881, %v3880
    %v3883 = vrot.slane %v3524, 7
    %v3884 = vsel %vm940, %v3883, %v3522
    %v3885 = vrot.slane %v3526, 6
    %v3886 = vsel %vm943, %v3885, %v3884
    %v3887 = vrot.slane %v3528, 5
    %v3888 = vsel %vm946, %v3887, %v3886
    %v3889 = vrot.slane %v3530, 4
    %v3890 = vsel %vm949, %v3889, %v3888
    %v3891 = vrot.slane %v3532, 3
    %v3892 = vsel %vm952, %v3891, %v3890
    %v3893 = vrot.slane %v3534, 2
    %v3894 = vsel %vm955, %v3893, %v3892
    %v3895 = vrot.slane %v3536, 1
    %v3896 = vsel %vm958, %v3895, %v3894
    %v3897 = vrot.slane %v3588, 7
    %v3898 = vsel %vm940, %v3897, %v3586
    %v3899 = vrot.slane %v3590, 6
    %v3900 = vsel %vm943, %v3899, %v3898
    %v3901 = vrot.slane %v3592, 5
    %v3902 = vsel %vm946, %v3901, %v3900
    %v3903 = vrot.slane %v3594, 4
    %v3904 = vsel %vm949, %v3903, %v3902
    %v3905 = vrot.slane %v3596, 3
    %v3906 = vsel %vm952, %v3905, %v3904
    %v3907 = vrot.slane %v3598, 2
    %v3908 = vsel %vm955, %v3907, %v3906
    %v3909 = vrot.slane %v3600, 1
    %v3910 = vsel %vm958, %v3909, %v3908
    %v3911 = vrot.slane %v3652, 7
    %v3912 = vsel %vm940, %v3911, %v3650
    %v3913 = vrot.slane %v3654, 6
    %v3914 = vsel %vm943, %v3913, %v3912
    %v3915 = vrot.slane %v3656, 5
    %v3916 = vsel %vm946, %v3915, %v3914
    %v3917 = vrot.slane %v3658, 4
    %v3918 = vsel %vm949, %v3917, %v3916
    %v3919 = vrot.slane %v3660, 3
    %v3920 = vsel %vm952, %v3919, %v3918
    %v3921 = vrot.slane %v3662, 2
    %v3922 = vsel %vm955, %v3921, %v3920
    %v3923 = vrot.slane %v3664, 1
    %v3924 = vsel %vm958, %v3923, %v3922
    %v3925 = vrot.slane %v3716, 7
    %v3926 = vsel %vm940, %v3925, %v3714
    %v3927 = vrot.slane %v3718, 6
    %v3928 = vsel %vm943, %v3927, %v3926
    %v3929 = vrot.slane %v3720, 5
    %v3930 = vsel %vm946, %v3929, %v3928
    %v3931 = vrot.slane %v3722, 4
    %v3932 = vsel %vm949, %v3931, %v3930
    %v3933 = vrot.slane %v3724, 3
    %v3934 = vsel %vm952, %v3933, %v3932
    %v3935 = vrot.slane %v3726, 2
    %v3936 = vsel %vm955, %v3935, %v3934
    %v3937 = vrot.slane %v3728, 1
    %v3938 = vsel %vm958, %v3937, %v3936
    %v3939 = vrot.slane %v3780, 7
    %v3940 = vsel %vm940, %v3939, %v3778
    %v3941 = vrot.slane %v3782, 6
    %v3942 = vsel %vm943, %v3941, %v3940
    %v3943 = vrot.slane %v3784, 5
    %v3944 = vsel %vm946, %v3943, %v3942
    %v3945 = vrot.slane %v3786, 4
    %v3946 = vsel %vm949, %v3945, %v3944
    %v3947 = vrot.slane %v3788, 3
    %v3948 = vsel %vm952, %v3947, %v3946
    %v3949 = vrot.slane %v3790, 2
    %v3950 = vsel %vm955, %v3949, %v3948
    %v3951 = vrot.slane %v3792, 1
    %v3952 = vsel %vm958, %v3951, %v3950
    %v3953 = vrot.slane %v3206, 7
    %v3954 = vsel %vm940, %v3953, %v3199
    %v3955 = vrot.slane %v3213, 6
    %v3956 = vsel %vm943, %v3955, %v3954
    %v3957 = vrot.slane %v3220, 5
    %v3958 = vsel %vm946, %v3957, %v3956
    %v3959 = vrot.slane %v3227, 4
    %v3960 = vsel %vm949, %v3959, %v3958
    %v3961 = vrot.slane %v3234, 3
    %v3962 = vsel %vm952, %v3961, %v3960
    %v3963 = vrot.slane %v3241, 2
    %v3964 = vsel %vm955, %v3963, %v3962
    %v3965 = vrot.slane %v3248, 1
    %v3966 = vsel %vm958, %v3965, %v3964
    %v3967 = vrot.slane %v3412, 7
    %v3968 = vsel %vm940, %v3967, %v3410
    %v3969 = vrot.slane %v3414, 6
    %v3970 = vsel %vm943, %v3969, %v3968
    %v3971 = vrot.slane %v3416, 5
    %v3972 = vsel %vm946, %v3971, %v3970
    %v3973 = vrot.slane %v3418, 4
    %v3974 = vsel %vm949, %v3973, %v3972
    %v3975 = vrot.slane %v3420, 3
    %v3976 = vsel %vm952, %v3975, %v3974
    %v3977 = vrot.slane %v3422, 2
    %v3978 = vsel %vm955, %v3977, %v3976
    %v3979 = vrot.slane %v3424, 1
    %v3980 = vsel %vm958, %v3979, %v3978
    %v3981 = vrot.slane %v3476, 7
    %v3982 = vsel %vm940, %v3981, %v3474
    %v3983 = vrot.slane %v3478, 6
    %v3984 = vsel %vm943, %v3983, %v3982
    %v3985 = vrot.slane %v3480, 5
    %v3986 = vsel %vm946, %v3985, %v3984
    %v3987 = vrot.slane %v3482, 4
    %v3988 = vsel %vm949, %v3987, %v3986
    %v3989 = vrot.slane %v3484, 3
    %v3990 = vsel %vm952, %v3989, %v3988
    %v3991 = vrot.slane %v3486, 2
    %v3992 = vsel %vm955, %v3991, %v3990
    %v3993 = vrot.slane %v3488, 1
    %v3994 = vsel %vm958, %v3993, %v3992
    %v3995 = vrot.slane %v3540, 7
    %v3996 = vsel %vm940, %v3995, %v3538
    %v3997 = vrot.slane %v3542, 6
    %v3998 = vsel %vm943, %v3997, %v3996
    %v3999 = vrot.slane %v3544, 5
    %v4000 = vsel %vm946, %v3999, %v3998
    %v4001 = vrot.slane %v3546, 4
    %v4002 = vsel %vm949, %v4001, %v4000
    %v4003 = vrot.slane %v3548, 3
    %v4004 = vsel %vm952, %v4003, %v4002
    %v4005 = vrot.slane %v3550, 2
    %v4006 = vsel %vm955, %v4005, %v4004
    %v4007 = vrot.slane %v3552, 1
    %v4008 = vsel %vm958, %v4007, %v4006
    %v4009 = vrot.slane %v3604, 7
    %v4010 = vsel %vm940, %v4009, %v3602
    %v4011 = vrot.slane %v3606, 6
    %v4012 = vsel %vm943, %v4011, %v4010
    %v4013 = vrot.slane %v3608, 5
    %v4014 = vsel %vm946, %v4013, %v4012
    %v4015 = vrot.slane %v3610, 4
    %v4016 = vsel %vm949, %v4015, %v4014
    %v4017 = vrot.slane %v3612, 3
    %v4018 = vsel %vm952, %v4017, %v4016
    %v4019 = vrot.slane %v3614, 2
    %v4020 = vsel %vm955, %v4019, %v4018
    %v4021 = vrot.slane %v3616, 1
    %v4022 = vsel %vm958, %v4021, %v4020
    %v4023 = vrot.slane %v3668, 7
    %v4024 = vsel %vm940, %v4023, %v3666
    %v4025 = vrot.slane %v3670, 6
    %v4026 = vsel %vm943, %v4025, %v4024
    %v4027 = vrot.slane %v3672, 5
    %v4028 = vsel %vm946, %v4027, %v4026
    %v4029 = vrot.slane %v3674, 4
    %v4030 = vsel %vm949, %v4029, %v4028
    %v4031 = vrot.slane %v3676, 3
    %v4032 = vsel %vm952, %v4031, %v4030
    %v4033 = vrot.slane %v3678, 2
    %v4034 = vsel %vm955, %v4033, %v4032
    %v4035 = vrot.slane %v3680, 1
    %v4036 = vsel %vm958, %v4035, %v4034
    %v4037 = vrot.slane %v3732, 7
    %v4038 = vsel %vm940, %v4037, %v3730
    %v4039 = vrot.slane %v3734, 6
    %v4040 = vsel %vm943, %v4039, %v4038
    %v4041 = vrot.slane %v3736, 5
    %v4042 = vsel %vm946, %v4041, %v4040
    %v4043 = vrot.slane %v3738, 4
    %v4044 = vsel %vm949, %v4043, %v4042
    %v4045 = vrot.slane %v3740, 3
    %v4046 = vsel %vm952, %v4045, %v4044
    %v4047 = vrot.slane %v3742, 2
    %v4048 = vsel %vm955, %v4047, %v4046
    %v4049 = vrot.slane %v3744, 1
    %v4050 = vsel %vm958, %v4049, %v4048
    %v4051 = vrot.slane %v3796, 7
    %v4052 = vsel %vm940, %v4051, %v3794
    %v4053 = vrot.slane %v3798, 6
    %v4054 = vsel %vm943, %v4053, %v4052
    %v4055 = vrot.slane %v3800, 5
    %v4056 = vsel %vm946, %v4055, %v4054
    %v4057 = vrot.slane %v3802, 4
    %v4058 = vsel %vm949, %v4057, %v4056
    %v4059 = vrot.slane %v3804, 3
    %v4060 = vsel %vm952, %v4059, %v4058
    %v4061 = vrot.slane %v3806, 2
    %v4062 = vsel %vm955, %v4061, %v4060
    %v4063 = vrot.slane %v3808, 1
    %v4064 = vsel %vm958, %v4063, %v4062
    %v4065 = vrot.slane %v3262, 7
    %v4066 = vsel %vm940, %v4065, %v3255
    %v4067 = vrot.slane %v3269, 6
    %v4068 = vsel %vm943, %v4067, %v4066
    %v4069 = vrot.slane %v3276, 5
    %v4070 = vsel %vm946, %v4069, %v4068
    %v4071 = vrot.slane %v3283, 4
    %v4072 = vsel %vm949, %v4071, %v4070
    %v4073 = vrot.slane %v3290, 3
    %v4074 = vsel %vm952, %v4073, %v4072
    %v4075 = vrot.slane %v3297, 2
    %v4076 = vsel %vm955, %v4075, %v4074
    %v4077 = vrot.slane %v3304, 1
    %v4078 = vsel %vm958, %v4077, %v4076
    %v4079 = vrot.slane %v3428, 7
    %v4080 = vsel %vm940, %v4079, %v3426
    %v4081 = vrot.slane %v3430, 6
    %v4082 = vsel %vm943, %v4081, %v4080
    %v4083 = vrot.slane %v3432, 5
    %v4084 = vsel %vm946, %v4083, %v4082
    %v4085 = vrot.slane %v3434, 4
    %v4086 = vsel %vm949, %v4085, %v4084
    %v4087 = vrot.slane %v3436, 3
    %v4088 = vsel %vm952, %v4087, %v4086
    %v4089 = vrot.slane %v3438, 2
    %v4090 = vsel %vm955, %v4089, %v4088
    %v4091 = vrot.slane %v3440, 1
    %v4092 = vsel %vm958, %v4091, %v4090
    %v4093 = vrot.slane %v3492, 7
    %v4094 = vsel %vm940, %v4093, %v3490
    %v4095 = vrot.slane %v3494, 6
    %v4096 = vsel %vm943, %v4095, %v4094
    %v4097 = vrot.slane %v3496, 5
    %v4098 = vsel %vm946, %v4097, %v4096
    %v4099 = vrot.slane %v3498, 4
    %v4100 = vsel %vm949, %v4099, %v4098
    %v4101 = vrot.slane %v3500, 3
    %v4102 = vsel %vm952, %v4101, %v4100
    %v4103 = vrot.slane %v3502, 2
    %v4104 = vsel %vm955, %v4103, %v4102
    %v4105 = vrot.slane %v3504, 1
    %v4106 = vsel %vm958, %v4105, %v4104
    %v4107 = vrot.slane %v3556, 7
    %v4108 = vsel %vm940, %v4107, %v3554
    %v4109 = vrot.slane %v3558, 6
    %v4110 = vsel %vm943, %v4109, %v4108
    %v4111 = vrot.slane %v3560, 5
    %v4112 = vsel %vm946, %v4111, %v4110
    %v4113 = vrot.slane %v3562, 4
    %v4114 = vsel %vm949, %v4113, %v4112
    %v4115 = vrot.slane %v3564, 3
    %v4116 = vsel %vm952, %v4115, %v4114
    %v4117 = vrot.slane %v3566, 2
    %v4118 = vsel %vm955, %v4117, %v4116
    %v4119 = vrot.slane %v3568, 1
    %v4120 = vsel %vm958, %v4119, %v4118
    %v4121 = vrot.slane %v3620, 7
    %v4122 = vsel %vm940, %v4121, %v3618
    %v4123 = vrot.slane %v3622, 6
    %v4124 = vsel %vm943, %v4123, %v4122
    %v4125 = vrot.slane %v3624, 5
    %v4126 = vsel %vm946, %v4125, %v4124
    %v4127 = vrot.slane %v3626, 4
    %v4128 = vsel %vm949, %v4127, %v4126
    %v4129 = vrot.slane %v3628, 3
    %v4130 = vsel %vm952, %v4129, %v4128
    %v4131 = vrot.slane %v3630, 2
    %v4132 = vsel %vm955, %v4131, %v4130
    %v4133 = vrot.slane %v3632, 1
    %v4134 = vsel %vm958, %v4133, %v4132
    %v4135 = vrot.slane %v3684, 7
    %v4136 = vsel %vm940, %v4135, %v3682
    %v4137 = vrot.slane %v3686, 6
    %v4138 = vsel %vm943, %v4137, %v4136
    %v4139 = vrot.slane %v3688, 5
    %v4140 = vsel %vm946, %v4139, %v4138
    %v4141 = vrot.slane %v3690, 4
    %v4142 = vsel %vm949, %v4141, %v4140
    %v4143 = vrot.slane %v3692, 3
    %v4144 = vsel %vm952, %v4143, %v4142
    %v4145 = vrot.slane %v3694, 2
    %v4146 = vsel %vm955, %v4145, %v4144
    %v4147 = vrot.slane %v3696, 1
    %v4148 = vsel %vm958, %v4147, %v4146
    %v4149 = vrot.slane %v3748, 7
    %v4150 = vsel %vm940, %v4149, %v3746
    %v4151 = vrot.slane %v3750, 6
    %v4152 = vsel %vm943, %v4151, %v4150
    %v4153 = vrot.slane %v3752, 5
    %v4154 = vsel %vm946, %v4153, %v4152
    %v4155 = vrot.slane %v3754, 4
    %v4156 = vsel %vm949, %v4155, %v4154
    %v4157 = vrot.slane %v3756, 3
    %v4158 = vsel %vm952, %v4157, %v4156
    %v4159 = vrot.slane %v3758, 2
    %v4160 = vsel %vm955, %v4159, %v4158
    %v4161 = vrot.slane %v3760, 1
    %v4162 = vsel %vm958, %v4161, %v4160
    %v4163 = vrot.slane %v3812, 7
    %v4164 = vsel %vm940, %v4163, %v3810
    %v4165 = vrot.slane %v3814, 6
    %v4166 = vsel %vm943, %v4165, %v4164
    %v4167 = vrot.slane %v3816, 5
    %v4168 = vsel %vm946, %v4167, %v4166
    %v4169 = vrot.slane %v3818, 4
    %v4170 = vsel %vm949, %v4169, %v4168
    %v4171 = vrot.slane %v3820, 3
    %v4172 = vsel %vm952, %v4171, %v4170
    %v4173 = vrot.slane %v3822, 2
    %v4174 = vsel %vm955, %v4173, %v4172
    %v4175 = vrot.slane %v3824, 1
    %v4176 = vsel %vm958, %v4175, %v4174
    %v4177 = vrot.slane %v3318, 7
    %v4178 = vsel %vm940, %v4177, %v3311
    %v4179 = vrot.slane %v3325, 6
    %v4180 = vsel %vm943, %v4179, %v4178
    %v4181 = vrot.slane %v3332, 5
    %v4182 = vsel %vm946, %v4181, %v4180
    %v4183 = vrot.slane %v3339, 4
    %v4184 = vsel %vm949, %v4183, %v4182
    %v4185 = vrot.slane %v3346, 3
    %v4186 = vsel %vm952, %v4185, %v4184
    %v4187 = vrot.slane %v3353, 2
    %v4188 = vsel %vm955, %v4187, %v4186
    %v4189 = vrot.slane %v3360, 1
    %v4190 = vsel %vm958, %v4189, %v4188
    %v4191 = vrot.slane %v3444, 7
    %v4192 = vsel %vm940, %v4191, %v3442
    %v4193 = vrot.slane %v3446, 6
    %v4194 = vsel %vm943, %v4193, %v4192
    %v4195 = vrot.slane %v3448, 5
    %v4196 = vsel %vm946, %v4195, %v4194
    %v4197 = vrot.slane %v3450, 4
    %v4198 = vsel %vm949, %v4197, %v4196
    %v4199 = vrot.slane %v3452, 3
    %v4200 = vsel %vm952, %v4199, %v4198
    %v4201 = vrot.slane %v3454, 2
    %v4202 = vsel %vm955, %v4201, %v4200
    %v4203 = vrot.slane %v3456, 1
    %v4204 = vsel %vm958, %v4203, %v4202
    %v4205 = vrot.slane %v3508, 7
    %v4206 = vsel %vm940, %v4205, %v3506
    %v4207 = vrot.slane %v3510, 6
    %v4208 = vsel %vm943, %v4207, %v4206
    %v4209 = vrot.slane %v3512, 5
    %v4210 = vsel %vm946, %v4209, %v4208
    %v4211 = vrot.slane %v3514, 4
    %v4212 = vsel %vm949, %v4211, %v4210
    %v4213 = vrot.slane %v3516, 3
    %v4214 = vsel %vm952, %v4213, %v4212
    %v4215 = vrot.slane %v3518, 2
    %v4216 = vsel %vm955, %v4215, %v4214
    %v4217 = vrot.slane %v3520, 1
    %v4218 = vsel %vm958, %v4217, %v4216
    %v4219 = vrot.slane %v3572, 7
    %v4220 = vsel %vm940, %v4219, %v3570
    %v4221 = vrot.slane %v3574, 6
    %v4222 = vsel %vm943, %v4221, %v4220
    %v4223 = vrot.slane %v3576, 5
    %v4224 = vsel %vm946, %v4223, %v4222
    %v4225 = vrot.slane %v3578, 4
    %v4226 = vsel %vm949, %v4225, %v4224
    %v4227 = vrot.slane %v3580, 3
    %v4228 = vsel %vm952, %v4227, %v4226
    %v4229 = vrot.slane %v3582, 2
    %v4230 = vsel %vm955, %v4229, %v4228
    %v4231 = vrot.slane %v3584, 1
    %v4232 = vsel %vm958, %v4231, %v4230
    %v4233 = vrot.slane %v3636, 7
    %v4234 = vsel %vm940, %v4233, %v3634
    %v4235 = vrot.slane %v3638, 6
    %v4236 = vsel %vm943, %v4235, %v4234
    %v4237 = vrot.slane %v3640, 5
    %v4238 = vsel %vm946, %v4237, %v4236
    %v4239 = vrot.slane %v3642, 4
    %v4240 = vsel %vm949, %v4239, %v4238
    %v4241 = vrot.slane %v3644, 3
    %v4242 = vsel %vm952, %v4241, %v4240
    %v4243 = vrot.slane %v3646, 2
    %v4244 = vsel %vm955, %v4243, %v4242
    %v4245 = vrot.slane %v3648, 1
    %v4246 = vsel %vm958, %v4245, %v4244
    %v4247 = vrot.slane %v3700, 7
    %v4248 = vsel %vm940, %v4247, %v3698
    %v4249 = vrot.slane %v3702, 6
    %v4250 = vsel %vm943, %v4249, %v4248
    %v4251 = vrot.slane %v3704, 5
    %v4252 = vsel %vm946, %v4251, %v4250
    %v4253 = vrot.slane %v3706, 4
    %v4254 = vsel %vm949, %v4253, %v4252
    %v4255 = vrot.slane %v3708, 3
    %v4256 = vsel %vm952, %v4255, %v4254
    %v4257 = vrot.slane %v3710, 2
    %v4258 = vsel %vm955, %v4257, %v4256
    %v4259 = vrot.slane %v3712, 1
    %v4260 = vsel %vm958, %v4259, %v4258
    %v4261 = vrot.slane %v3764, 7
    %v4262 = vsel %vm940, %v4261, %v3762
    %v4263 = vrot.slane %v3766, 6
    %v4264 = vsel %vm943, %v4263, %v4262
    %v4265 = vrot.slane %v3768, 5
    %v4266 = vsel %vm946, %v4265, %v4264
    %v4267 = vrot.slane %v3770, 4
    %v4268 = vsel %vm949, %v4267, %v4266
    %v4269 = vrot.slane %v3772, 3
    %v4270 = vsel %vm952, %v4269, %v4268
    %v4271 = vrot.slane %v3774, 2
    %v4272 = vsel %vm955, %v4271, %v4270
    %v4273 = vrot.slane %v3776, 1
    %v4274 = vsel %vm958, %v4273, %v4272
    %v4275 = vrot.slane %v3828, 7
    %v4276 = vsel %vm940, %v4275, %v3826
    %v4277 = vrot.slane %v3830, 6
    %v4278 = vsel %vm943, %v4277, %v4276
    %v4279 = vrot.slane %v3832, 5
    %v4280 = vsel %vm946, %v4279, %v4278
    %v4281 = vrot.slane %v3834, 4
    %v4282 = vsel %vm949, %v4281, %v4280
    %v4283 = vrot.slane %v3836, 3
    %v4284 = vsel %vm952, %v4283, %v4282
    %v4285 = vrot.slane %v3838, 2
    %v4286 = vsel %vm955, %v4285, %v4284
    %v4287 = vrot.slane %v3840, 1
    %v4288 = vsel %vm958, %v4287, %v4286
    %v4321 = vcombine.low %v3854, %v3882
    %v4322 = vcombine.high %v3854, %v3882
    %v4324 = vunpack.c.l.s4 1983009808
    %v4325 = vunpack.c.0.s8 %v4324
    %v4326 = vlaneseq
    %v4327 = vshrl.u32 %v4326, 7
    %v4328 = vsub.s32 %v4325, %v4327
    %v4329 = vrot.slane %v4321, %v4328
    %v4331 = vunpack.c.l.s4 1983009808
    %v4332 = vunpack.c.0.s8 %v4331
    %v4333 = vlaneseq
    %v4334 = vshrl.u32 %v4333, 7
    %v4335 = vsub.s32 %v4332, %v4334
    %v4336 = vrot.slane %v4322, %v4335
    %v4337 = vcombine.low %v3868, %v3896
    %v4338 = vcombine.high %v3868, %v3896
    %v4340 = vunpack.c.l.s4 1983009808
    %v4341 = vunpack.c.0.s8 %v4340
    %v4342 = vlaneseq
    %v4343 = vshrl.u32 %v4342, 7
    %v4344 = vsub.s32 %v4341, %v4343
    %v4345 = vrot.slane %v4337, %v4344
    %v4347 = vunpack.c.l.s4 1983009808
    %v4348 = vunpack.c.0.s8 %v4347
    %v4349 = vlaneseq
    %v4350 = vshrl.u32 %v4349, 7
    %v4351 = vsub.s32 %v4348, %v4350
    %v4352 = vrot.slane %v4338, %v4351
    %v4353 = vcombine.low %v3910, %v3938
    %v4354 = vcombine.high %v3910, %v3938
    %v4356 = vunpack.c.l.s4 1983009808
    %v4357 = vunpack.c.0.s8 %v4356
    %v4358 = vlaneseq
    %v4359 = vshrl.u32 %v4358, 7
    %v4360 = vsub.s32 %v4357, %v4359
    %v4361 = vrot.slane %v4353, %v4360
    %v4363 = vunpack.c.l.s4 1983009808
    %v4364 = vunpack.c.0.s8 %v4363
    %v4365 = vlaneseq
    %v4366 = vshrl.u32 %v4365, 7
    %v4367 = vsub.s32 %v4364, %v4366
    %v4368 = vrot.slane %v4354, %v4367
    %v4369 = vcombine.low %v3924, %v3952
    %v4370 = vcombine.high %v3924, %v3952
    %v4372 = vunpack.c.l.s4 1983009808
    %v4373 = vunpack.c.0.s8 %v4372
    %v4374 = vlaneseq
    %v4375 = vshrl.u32 %v4374, 7
    %v4376 = vsub.s32 %v4373, %v4375
    %v4377 = vrot.slane %v4369, %v4376
    %v4379 = vunpack.c.l.s4 1983009808
    %v4380 = vunpack.c.0.s8 %v4379
    %v4381 = vlaneseq
    %v4382 = vshrl.u32 %v4381, 7
    %v4383 = vsub.s32 %v4380, %v4382
    %v4384 = vrot.slane %v4370, %v4383
    %v4385 = vcombine.low %v4329, %v4345
    %v4386 = vcombine.high %v4329, %v4345
    %v4388 = vunpack.c.l.s4 1934713408
    %v4389 = vunpack.c.0.s8 %v4388
    %v4390 = vlaneseq
    %v4391 = vshrl.u32 %v4390, 7
    %v4392 = vsub.s32 %v4389, %v4391
    %v4393 = vrot.slane %v4385, %v4392
    %v4395 = vunpack.c.l.s4 1934713408
    %v4396 = vunpack.c.0.s8 %v4395
    %v4397 = vlaneseq
    %v4398 = vshrl.u32 %v4397, 7
    %v4399 = vsub.s32 %v4396, %v4398
    %v4400 = vrot.slane %v4386, %v4399
    %v4401 = vcombine.low %v4336, %v4352
    %v4402 = vcombine.high %v4336, %v4352
    %v4404 = vunpack.c.l.s4 1934713408
    %v4405 = vunpack.c.0.s8 %v4404
    %v4406 = vlaneseq
    %v4407 = vshrl.u32 %v4406, 7
    %v4408 = vsub.s32 %v4405, %v4407
    %v4409 = vrot.slane %v4401, %v4408
    %v4411 = vunpack.c.l.s4 1934713408
    %v4412 = vunpack.c.0.s8 %v4411
    %v4413 = vlaneseq
    %v4414 = vshrl.u32 %v4413, 7
    %v4415 = vsub.s32 %v4412, %v4414
    %v4416 = vrot.slane %v4402, %v4415
    %v4417 = vcombine.low %v4361, %v4377
    %v4418 = vcombine.high %v4361, %v4377
    %v4420 = vunpack.c.l.s4 1934713408
    %v4421 = vunpack.c.0.s8 %v4420
    %v4422 = vlaneseq
    %v4423 = vshrl.u32 %v4422, 7
    %v4424 = vsub.s32 %v4421, %v4423
    %v4425 = vrot.slane %v4417, %v4424
    %v4427 = vunpack.c.l.s4 1934713408
    %v4428 = vunpack.c.0.s8 %v4427
    %v4429 = vlaneseq
    %v4430 = vshrl.u32 %v4429, 7
    %v4431 = vsub.s32 %v4428, %v4430
    %v4432 = vrot.slane %v4418, %v4431
    %v4433 = vcombine.low %v4368, %v4384
    %v4434 = vcombine.high %v4368, %v4384
    %v4436 = vunpack.c.l.s4 1934713408
    %v4437 = vunpack.c.0.s8 %v4436
    %v4438 = vlaneseq
    %v4439 = vshrl.u32 %v4438, 7
    %v4440 = vsub.s32 %v4437, %v4439
    %v4441 = vrot.slane %v4433, %v4440
    %v4443 = vunpack.c.l.s4 1934713408
    %v4444 = vunpack.c.0.s8 %v4443
    %v4445 = vlaneseq
    %v4446 = vshrl.u32 %v4445, 7
    %v4447 = vsub.s32 %v4444, %v4446
    %v4448 = vrot.slane %v4434, %v4447
    %v4449 = vcombine.low %v4393, %v4425
    %v4450 = vcombine.high %v4393, %v4425
    %v4451 = vcombine.low %v4400, %v4432
    %v4452 = vcombine.high %v4400, %v4432
    %v4453 = vcombine.low %v4409, %v4441
    %v4454 = vcombine.high %v4409, %v4441
    %v4455 = vcombine.low %v4416, %v4448
    %v4456 = vcombine.high %v4416, %v4448
    %v4457 = vcombine.low %v3966, %v3994
    %v4458 = vcombine.high %v3966, %v3994
    %v4460 = vunpack.c.l.s4 1983009808
    %v4461 = vunpack.c.0.s8 %v4460
    %v4462 = vlaneseq
    %v4463 = vshrl.u32 %v4462, 7
    %v4464 = vsub.s32 %v4461, %v4463
    %v4465 = vrot.slane %v4457, %v4464
    %v4467 = vunpack.c.l.s4 1983009808
    %v4468 = vunpack.c.0.s8 %v4467
    %v4469 = vlaneseq
    %v4470 = vshrl.u32 %v4469, 7
    %v4471 = vsub.s32 %v4468, %v4470
    %v4472 = vrot.slane %v4458, %v4471
    %v4473 = vcombine.low %v3980, %v4008
    %v4474 = vcombine.high %v3980, %v4008
    %v4476 = vunpack.c.l.s4 1983009808
    %v4477 = vunpack.c.0.s8 %v4476
    %v4478 = vlaneseq
    %v4479 = vshrl.u32 %v4478, 7
    %v4480 = vsub.s32 %v4477, %v4479
    %v4481 = vrot.slane %v4473, %v4480
    %v4483 = vunpack.c.l.s4 1983009808
    %v4484 = vunpack.c.0.s8 %v4483
    %v4485 = vlaneseq
    %v4486 = vshrl.u32 %v4485, 7
    %v4487 = vsub.s32 %v4484, %v4486
    %v4488 = vrot.slane %v4474, %v4487
    %v4489 = vcombine.low %v4022, %v4050
    %v4490 = vcombine.high %v4022, %v4050
    %v4492 = vunpack.c.l.s4 1983009808
    %v4493 = vunpack.c.0.s8 %v4492
    %v4494 = vlaneseq
    %v4495 = vshrl.u32 %v4494, 7
    %v4496 = vsub.s32 %v4493, %v4495
    %v4497 = vrot.slane %v4489, %v4496
    %v4499 = vunpack.c.l.s4 1983009808
    %v4500 = vunpack.c.0.s8 %v4499
    %v4501 = vlaneseq
    %v4502 = vshrl.u32 %v4501, 7
    %v4503 = vsub.s32 %v4500, %v4502
    %v4504 = vrot.slane %v4490, %v4503
    %v4505 = vcombine.low %v4036, %v4064
    %v4506 = vcombine.high %v4036, %v4064
    %v4508 = vunpack.c.l.s4 1983009808
    %v4509 = vunpack.c.0.s8 %v4508
    %v4510 = vlaneseq
    %v4511 = vshrl.u32 %v4510, 7
    %v4512 = vsub.s32 %v4509, %v4511
    %v4513 = vrot.slane %v4505, %v4512
    %v4515 = vunpack.c.l.s4 1983009808
    %v4516 = vunpack.c.0.s8 %v4515
    %v4517 = vlaneseq
    %v4518 = vshrl.u32 %v4517, 7
    %v4519 = vsub.s32 %v4516, %v4518
    %v4520 = vrot.slane %v4506, %v4519
    %v4521 = vcombine.low %v4465, %v4481
    %v4522 = vcombine.high %v4465, %v4481
    %v4524 = vunpack.c.l.s4 1934713408
    %v4525 = vunpack.c.0.s8 %v4524
    %v4526 = vlaneseq
    %v4527 = vshrl.u32 %v4526, 7
    %v4528 = vsub.s32 %v4525, %v4527
    %v4529 = vrot.slane %v4521, %v4528
    %v4531 = vunpack.c.l.s4 1934713408
    %v4532 = vunpack.c.0.s8 %v4531
    %v4533 = vlaneseq
    %v4534 = vshrl.u32 %v4533, 7
    %v4535 = vsub.s32 %v4532, %v4534
    %v4536 = vrot.slane %v4522, %v4535
    %v4537 = vcombine.low %v4472, %v4488
    %v4538 = vcombine.high %v4472, %v4488
    %v4540 = vunpack.c.l.s4 1934713408
    %v4541 = vunpack.c.0.s8 %v4540
    %v4542 = vlaneseq
    %v4543 = vshrl.u32 %v4542, 7
    %v4544 = vsub.s32 %v4541, %v4543
    %v4545 = vrot.slane %v4537, %v4544
    %v4547 = vunpack.c.l.s4 1934713408
    %v4548 = vunpack.c.0.s8 %v4547
    %v4549 = vlaneseq
    %v4550 = vshrl.u32 %v4549, 7
    %v4551 = vsub.s32 %v4548, %v4550
    %v4552 = vrot.slane %v4538, %v4551
    %v4553 = vcombine.low %v4497, %v4513
    %v4554 = vcombine.high %v4497, %v4513
    %v4556 = vunpack.c.l.s4 1934713408
    %v4557 = vunpack.c.0.s8 %v4556
    %v4558 = vlaneseq
    %v4559 = vshrl.u32 %v4558, 7
    %v4560 = vsub.s32 %v4557, %v4559
    %v4561 = vrot.slane %v4553, %v4560
    %v4563 = vunpack.c.l.s4 1934713408
    %v4564 = vunpack.c.0.s8 %v4563
    %v4565 = vlaneseq
    %v4566 = vshrl.u32 %v4565, 7
    %v4567 = vsub.s32 %v4564, %v4566
    %v4568 = vrot.slane %v4554, %v4567
    %v4569 = vcombine.low %v4504, %v4520
    %v4570 = vcombine.high %v4504, %v4520
    %v4572 = vunpack.c.l.s4 1934713408
    %v4573 = vunpack.c.0.s8 %v4572
    %v4574 = vlaneseq
    %v4575 = vshrl.u32 %v4574, 7
    %v4576 = vsub.s32 %v4573, %v4575
    %v4577 = vrot.slane %v4569, %v4576
    %v4579 = vunpack.c.l.s4 1934713408
    %v4580 = vunpack.c.0.s8 %v4579
    %v4581 = vlaneseq
    %v4582 = vshrl.u32 %v4581, 7
    %v4583 = vsub.s32 %v4580, %v4582
    %v4584 = vrot.slane %v4570, %v4583
    %v4585 = vcombine.low %v4529, %v4561
    %v4586 = vcombine.high %v4529, %v4561
    %v4587 = vcombine.low %v4536, %v4568
    %v4588 = vcombine.high %v4536, %v4568
    %v4589 = vcombine.low %v4545, %v4577
    %v4590 = vcombine.high %v4545, %v4577
    %v4591 = vcombine.low %v4552, %v4584
    %v4592 = vcombine.high %v4552, %v4584
    %v4593 = vcombine.low %v4078, %v4106
    %v4594 = vcombine.high %v4078, %v4106
    %v4596 = vunpack.c.l.s4 1983009808
    %v4597 = vunpack.c.0.s8 %v4596
    %v4598 = vlaneseq
    %v4599 = vshrl.u32 %v4598, 7
    %v4600 = vsub.s32 %v4597, %v4599
    %v4601 = vrot.slane %v4593, %v4600
    %v4603 = vunpack.c.l.s4 1983009808
    %v4604 = vunpack.c.0.s8 %v4603
    %v4605 = vlaneseq
    %v4606 = vshrl.u32 %v4605, 7
    %v4607 = vsub.s32 %v4604, %v4606
    %v4608 = vrot.slane %v4594, %v4607
    %v4609 = vcombine.low %v4092, %v4120
    %v4610 = vcombine.high %v4092, %v4120
    %v4612 = vunpack.c.l.s4 1983009808
    %v4613 = vunpack.c.0.s8 %v4612
    %v4614 = vlaneseq
    %v4615 = vshrl.u32 %v4614, 7
    %v4616 = vsub.s32 %v4613, %v4615
    %v4617 = vrot.slane %v4609, %v4616
    %v4619 = vunpack.c.l.s4 1983009808
    %v4620 = vunpack.c.0.s8 %v4619
    %v4621 = vlaneseq
    %v4622 = vshrl.u32 %v4621, 7
    %v4623 = vsub.s32 %v4620, %v4622
    %v4624 = vrot.slane %v4610, %v4623
    %v4625 = vcombine.low %v4134, %v4162
    %v4626 = vcombine.high %v4134, %v4162
    %v4628 = vunpack.c.l.s4 1983009808
    %v4629 = vunpack.c.0.s8 %v4628
    %v4630 = vlaneseq
    %v4631 = vshrl.u32 %v4630, 7
    %v4632 = vsub.s32 %v4629, %v4631
    %v4633 = vrot.slane %v4625, %v4632
    %v4635 = vunpack.c.l.s4 1983009808
    %v4636 = vunpack.c.0.s8 %v4635
    %v4637 = vlaneseq
    %v4638 = vshrl.u32 %v4637, 7
    %v4639 = vsub.s32 %v4636, %v4638
    %v4640 = vrot.slane %v4626, %v4639
    %v4641 = vcombine.low %v4148, %v4176
    %v4642 = vcombine.high %v4148, %v4176
    %v4644 = vunpack.c.l.s4 1983009808
    %v4645 = vunpack.c.0.s8 %v4644
    %v4646 = vlaneseq
    %v4647 = vshrl.u32 %v4646, 7
    %v4648 = vsub.s32 %v4645, %v4647
    %v4649 = vrot.slane %v4641, %v4648
    %v4651 = vunpack.c.l.s4 1983009808
    %v4652 = vunpack.c.0.s8 %v4651
    %v4653 = vlaneseq
    %v4654 = vshrl.u32 %v4653, 7
    %v4655 = vsub.s32 %v4652, %v4654
    %v4656 = vrot.slane %v4642, %v4655
    %v4657 = vcombine.low %v4601, %v4617
    %v4658 = vcombine.high %v4601, %v4617
    %v4660 = vunpack.c.l.s4 1934713408
    %v4661 = vunpack.c.0.s8 %v4660
    %v4662 = vlaneseq
    %v4663 = vshrl.u32 %v4662, 7
    %v4664 = vsub.s32 %v4661, %v4663
    %v4665 = vrot.slane %v4657, %v4664
    %v4667 = vunpack.c.l.s4 1934713408
    %v4668 = vunpack.c.0.s8 %v4667
    %v4669 = vlaneseq
    %v4670 = vshrl.u32 %v4669, 7
    %v4671 = vsub.s32 %v4668, %v4670
    %v4672 = vrot.slane %v4658, %v4671
    %v4673 = vcombine.low %v4608, %v4624
    %v4674 = vcombine.high %v4608, %v4624
    %v4676 = vunpack.c.l.s4 1934713408
    %v4677 = vunpack.c.0.s8 %v4676
    %v4678 = vlaneseq
    %v4679 = vshrl.u32 %v4678, 7
    %v4680 = vsub.s32 %v4677, %v4679
    %v4681 = vrot.slane %v4673, %v4680
    %v4683 = vunpack.c.l.s4 1934713408
    %v4684 = vunpack.c.0.s8 %v4683
    %v4685 = vlaneseq
    %v4686 = vshrl.u32 %v4685, 7
    %v4687 = vsub.s32 %v4684, %v4686
    %v4688 = vrot.slane %v4674, %v4687
    %v4689 = vcombine.low %v4633, %v4649
    %v4690 = vcombine.high %v4633, %v4649
    %v4692 = vunpack.c.l.s4 1934713408
    %v4693 = vunpack.c.0.s8 %v4692
    %v4694 = vlaneseq
    %v4695 = vshrl.u32 %v4694, 7
    %v4696 = vsub.s32 %v4693, %v4695
    %v4697 = vrot.slane %v4689, %v4696
    %v4699 = vunpack.c.l.s4 1934713408
    %v4700 = vunpack.c.0.s8 %v4699
    %v4701 = vlaneseq
    %v4702 = vshrl.u32 %v4701, 7
    %v4703 = vsub.s32 %v4700, %v4702
    %v4704 = vrot.slane %v4690, %v4703
    %v4705 = vcombine.low %v4640, %v4656
    %v4706 = vcombine.high %v4640, %v4656
    %v4708 = vunpack.c.l.s4 1934713408
    %v4709 = vunpack.c.0.s8 %v4708
    %v4710 = vlaneseq
    %v4711 = vshrl.u32 %v4710, 7
    %v4712 = vsub.s32 %v4709, %v4711
    %v4713 = vrot.slane %v4705, %v4712
    %v4715 = vunpack.c.l.s4 1934713408
    %v4716 = vunpack.c.0.s8 %v4715
    %v4717 = vlaneseq
    %v4718 = vshrl.u32 %v4717, 7
    %v4719 = vsub.s32 %v4716, %v4718
    %v4720 = vrot.slane %v4706, %v4719
    %v4721 = vcombine.low %v4665, %v4697
    %v4722 = vcombine.high %v4665, %v4697
    %v4723 = vcombine.low %v4672, %v4704
    %v4724 = vcombine.high %v4672, %v4704
    %v4725 = vcombine.low %v4681, %v4713
    %v4726 = vcombine.high %v4681, %v4713
    %v4727 = vcombine.low %v4688, %v4720
    %v4728 = vcombine.high %v4688, %v4720
    %v4729 = vcombine.low %v4190, %v4218
    %v4730 = vcombine.high %v4190, %v4218
    %v4732 = vunpack.c.l.s4 1983009808
    %v4733 = vunpack.c.0.s8 %v4732
    %v4734 = vlaneseq
    %v4735 = vshrl.u32 %v4734, 7
    %v4736 = vsub.s32 %v4733, %v4735
    %v4737 = vrot.slane %v4729, %v4736
    %v4739 = vunpack.c.l.s4 1983009808
    %v4740 = vunpack.c.0.s8 %v4739
    %v4741 = vlaneseq
    %v4742 = vshrl.u32 %v4741, 7
    %v4743 = vsub.s32 %v4740, %v4742
    %v4744 = vrot.slane %v4730, %v4743
    %v4745 = vcombine.low %v4204, %v4232
    %v4746 = vcombine.high %v4204, %v4232
    %v4748 = vunpack.c.l.s4 1983009808
    %v4749 = vunpack.c.0.s8 %v4748
    %v4750 = vlaneseq
    %v4751 = vshrl.u32 %v4750, 7
    %v4752 = vsub.s32 %v4749, %v4751
    %v4753 = vrot.slane %v4745, %v4752
    %v4755 = vunpack.c.l.s4 1983009808
    %v4756 = vunpack.c.0.s8 %v4755
    %v4757 = vlaneseq
    %v4758 = vshrl.u32 %v4757, 7
    %v4759 = vsub.s32 %v4756, %v4758
    %v4760 = vrot.slane %v4746, %v4759
    %v4761 = vcombine.low %v4246, %v4274
    %v4762 = vcombine.high %v4246, %v4274
    %v4764 = vunpack.c.l.s4 1983009808
    %v4765 = vunpack.c.0.s8 %v4764
    %v4766 = vlaneseq
    %v4767 = vshrl.u32 %v4766, 7
    %v4768 = vsub.s32 %v4765, %v4767
    %v4769 = vrot.slane %v4761, %v4768
    %v4771 = vunpack.c.l.s4 1983009808
    %v4772 = vunpack.c.0.s8 %v4771
    %v4773 = vlaneseq
    %v4774 = vshrl.u32 %v4773, 7
    %v4775 = vsub.s32 %v4772, %v4774
    %v4776 = vrot.slane %v4762, %v4775
    %v4777 = vcombine.low %v4260, %v4288
    %v4778 = vcombine.high %v4260, %v4288
    %v4780 = vunpack.c.l.s4 1983009808
    %v4781 = vunpack.c.0.s8 %v4780
    %v4782 = vlaneseq
    %v4783 = vshrl.u32 %v4782, 7
    %v4784 = vsub.s32 %v4781, %v4783
    %v4785 = vrot.slane %v4777, %v4784
    %v4787 = vunpack.c.l.s4 1983009808
    %v4788 = vunpack.c.0.s8 %v4787
    %v4789 = vlaneseq
    %v4790 = vshrl.u32 %v4789, 7
    %v4791 = vsub.s32 %v4788, %v4790
    %v4792 = vrot.slane %v4778, %v4791
    %v4793 = vcombine.low %v4737, %v4753
    %v4794 = vcombine.high %v4737, %v4753
    %v4796 = vunpack.c.l.s4 1934713408
    %v4797 = vunpack.c.0.s8 %v4796
    %v4798 = vlaneseq
    %v4799 = vshrl.u32 %v4798, 7
    %v4800 = vsub.s32 %v4797, %v4799
    %v4801 = vrot.slane %v4793, %v4800
    %v4803 = vunpack.c.l.s4 1934713408
    %v4804 = vunpack.c.0.s8 %v4803
    %v4805 = vlaneseq
    %v4806 = vshrl.u32 %v4805, 7
    %v4807 = vsub.s32 %v4804, %v4806
    %v4808 = vrot.slane %v4794, %v4807
    %v4809 = vcombine.low %v4744, %v4760
    %v4810 = vcombine.high %v4744, %v4760
    %v4812 = vunpack.c.l.s4 1934713408
    %v4813 = vunpack.c.0.s8 %v4812
    %v4814 = vlaneseq
    %v4815 = vshrl.u32 %v4814, 7
    %v4816 = vsub.s32 %v4813, %v4815
    %v4817 = vrot.slane %v4809, %v4816
    %v4819 = vunpack.c.l.s4 1934713408
    %v4820 = vunpack.c.0.s8 %v4819
    %v4821 = vlaneseq
    %v4822 = vshrl.u32 %v4821, 7
    %v4823 = vsub.s32 %v4820, %v4822
    %v4824 = vrot.slane %v4810, %v4823
    %v4825 = vcombine.low %v4769, %v4785
    %v4826 = vcombine.high %v4769, %v4785
    %v4828 = vunpack.c.l.s4 1934713408
    %v4829 = vunpack.c.0.s8 %v4828
    %v4830 = vlaneseq
    %v4831 = vshrl.u32 %v4830, 7
    %v4832 = vsub.s32 %v4829, %v4831
    %v4833 = vrot.slane %v4825, %v4832
    %v4835 = vunpack.c.l.s4 1934713408
    %v4836 = vunpack.c.0.s8 %v4835
    %v4837 = vlaneseq
    %v4838 = vshrl.u32 %v4837, 7
    %v4839 = vsub.s32 %v4836, %v4838
    %v4840 = vrot.slane %v4826, %v4839
    %v4841 = vcombine.low %v4776, %v4792
    %v4842 = vcombine.high %v4776, %v4792
    %v4844 = vunpack.c.l.s4 1934713408
    %v4845 = vunpack.c.0.s8 %v4844
    %v4846 = vlaneseq
    %v4847 = vshrl.u32 %v4846, 7
    %v4848 = vsub.s32 %v4845, %v4847
    %v4849 = vrot.slane %v4841, %v4848
    %v4851 = vunpack.c.l.s4 1934713408
    %v4852 = vunpack.c.0.s8 %v4851
    %v4853 = vlaneseq
    %v4854 = vshrl.u32 %v4853, 7
    %v4855 = vsub.s32 %v4852, %v4854
    %v4856 = vrot.slane %v4842, %v4855
    %v4857 = vcombine.low %v4801, %v4833
    %v4858 = vcombine.high %v4801, %v4833
    %v4859 = vcombine.low %v4808, %v4840
    %v4860 = vcombine.high %v4808, %v4840
    %v4861 = vcombine.low %v4817, %v4849
    %v4862 = vcombine.high %v4817, %v4849
    %v4863 = vcombine.low %v4824, %v4856
    %v4864 = vcombine.high %v4824, %v4856
    %v4865 = vsel %vm1970, %v4449, -inf
    %4866 = vmax.xlane.f32.xlu0 %v4865
    %v4867 = vpop.xlane.xlu0 %4866
    %v4868 = vsel %vm1970, %v4450, -inf
    %4869 = vmax.xlane.f32.xlu0 %v4868
    %v4870 = vpop.xlane.xlu0 %4869
    %v4871 = vsel %vm1970, %v4451, -inf
    %4872 = vmax.xlane.f32.xlu0 %v4871
    %v4873 = vpop.xlane.xlu0 %4872
    %v4874 = vsel %vm1970, %v4452, -inf
    %4875 = vmax.xlane.f32.xlu0 %v4874
    %v4876 = vpop.xlane.xlu0 %4875
    %v4877 = vsel %vm1970, %v4453, -inf
    %4878 = vmax.xlane.f32.xlu0 %v4877
    %v4879 = vpop.xlane.xlu0 %4878
    %v4880 = vsel %vm1970, %v4454, -inf
    %4881 = vmax.xlane.f32.xlu0 %v4880
    %v4882 = vpop.xlane.xlu0 %4881
    %v4883 = vsel %vm1970, %v4455, -inf
    %4884 = vmax.xlane.f32.xlu0 %v4883
    %v4885 = vpop.xlane.xlu0 %4884
    %v4886 = vsel %vm1970, %v4456, -inf
    %4887 = vmax.xlane.f32.xlu0 %v4886
    %v4888 = vpop.xlane.xlu0 %4887
    %v4889 = vsel %vm1970, %v4585, -inf
    %4890 = vmax.xlane.f32.xlu0 %v4889
    %v4891 = vpop.xlane.xlu0 %4890
    %v4892 = vsel %vm1970, %v4586, -inf
    %4893 = vmax.xlane.f32.xlu0 %v4892
    %v4894 = vpop.xlane.xlu0 %4893
    %v4895 = vsel %vm1970, %v4587, -inf
    %4896 = vmax.xlane.f32.xlu0 %v4895
    %v4897 = vpop.xlane.xlu0 %4896
    %v4898 = vsel %vm1970, %v4588, -inf
    %4899 = vmax.xlane.f32.xlu0 %v4898
    %v4900 = vpop.xlane.xlu0 %4899
    %v4901 = vsel %vm1970, %v4589, -inf
    %4902 = vmax.xlane.f32.xlu0 %v4901
    %v4903 = vpop.xlane.xlu0 %4902
    %v4904 = vsel %vm1970, %v4590, -inf
    %4905 = vmax.xlane.f32.xlu0 %v4904
    %v4906 = vpop.xlane.xlu0 %4905
    %v4907 = vsel %vm1970, %v4591, -inf
    %4908 = vmax.xlane.f32.xlu0 %v4907
    %v4909 = vpop.xlane.xlu0 %4908
    %v4910 = vsel %vm1970, %v4592, -inf
    %4911 = vmax.xlane.f32.xlu0 %v4910
    %v4912 = vpop.xlane.xlu0 %4911
    %v4913 = vsel %vm1970, %v4721, -inf
    %4914 = vmax.xlane.f32.xlu0 %v4913
    %v4915 = vpop.xlane.xlu0 %4914
    %v4916 = vsel %vm1970, %v4722, -inf
    %4917 = vmax.xlane.f32.xlu0 %v4916
    %v4918 = vpop.xlane.xlu0 %4917
    %v4919 = vsel %vm1970, %v4723, -inf
    %4920 = vmax.xlane.f32.xlu0 %v4919
    %v4921 = vpop.xlane.xlu0 %4920
    %v4922 = vsel %vm1970, %v4724, -inf
    %4923 = vmax.xlane.f32.xlu0 %v4922
    %v4924 = vpop.xlane.xlu0 %4923
    %v4925 = vsel %vm1970, %v4725, -inf
    %4926 = vmax.xlane.f32.xlu0 %v4925
    %v4927 = vpop.xlane.xlu0 %4926
    %v4928 = vsel %vm1970, %v4726, -inf
    %4929 = vmax.xlane.f32.xlu0 %v4928
    %v4930 = vpop.xlane.xlu0 %4929
    %v4931 = vsel %vm1970, %v4727, -inf
    %4932 = vmax.xlane.f32.xlu0 %v4931
    %v4933 = vpop.xlane.xlu0 %4932
    %v4934 = vsel %vm1970, %v4728, -inf
    %4935 = vmax.xlane.f32.xlu0 %v4934
    %v4936 = vpop.xlane.xlu0 %4935
    %v4937 = vsel %vm1970, %v4857, -inf
    %4938 = vmax.xlane.f32.xlu0 %v4937
    %v4939 = vpop.xlane.xlu0 %4938
    %v4940 = vsel %vm1970, %v4858, -inf
    %4941 = vmax.xlane.f32.xlu0 %v4940
    %v4942 = vpop.xlane.xlu0 %4941
    %v4943 = vsel %vm1970, %v4859, -inf
    %4944 = vmax.xlane.f32.xlu0 %v4943
    %v4945 = vpop.xlane.xlu0 %4944
    %v4946 = vsel %vm1970, %v4860, -inf
    %4947 = vmax.xlane.f32.xlu0 %v4946
    %v4948 = vpop.xlane.xlu0 %4947
    %v4949 = vsel %vm1970, %v4861, -inf
    %4950 = vmax.xlane.f32.xlu0 %v4949
    %v4951 = vpop.xlane.xlu0 %4950
    %v4952 = vsel %vm1970, %v4862, -inf
    %4953 = vmax.xlane.f32.xlu0 %v4952
    %v4954 = vpop.xlane.xlu0 %4953
    %v4955 = vsel %vm1970, %v4863, -inf
    %4956 = vmax.xlane.f32.xlu0 %v4955
    %v4957 = vpop.xlane.xlu0 %4956
    %v4958 = vsel %vm1970, %v4864, -inf
    %4959 = vmax.xlane.f32.xlu0 %v4958
    %v4960 = vpop.xlane.xlu0 %4959
    %v4993 = vlaneseq
    %v4994 = vshrl.u32 %v4993, 7
    %v4995 = vsub.s32 %v2100, %v4994
    %v4996 = vrot.slane %v4867, %v4995
    %v4997 = vlaneseq
    %v4998 = vshrl.u32 %v4997, 7
    %v4999 = vsub.s32 %v2100, %v4998
    %v5000 = vrot.slane %v4870, %v4999
    %v5001 = vlaneseq
    %v5002 = vshrl.u32 %v5001, 7
    %v5003 = vsub.s32 %v2100, %v5002
    %v5004 = vrot.slane %v4873, %v5003
    %v5005 = vlaneseq
    %v5006 = vshrl.u32 %v5005, 7
    %v5007 = vsub.s32 %v2100, %v5006
    %v5008 = vrot.slane %v4876, %v5007
    %v5009 = vlaneseq
    %v5010 = vshrl.u32 %v5009, 7
    %v5011 = vsub.s32 %v2100, %v5010
    %v5012 = vrot.slane %v4879, %v5011
    %v5013 = vlaneseq
    %v5014 = vshrl.u32 %v5013, 7
    %v5015 = vsub.s32 %v2100, %v5014
    %v5016 = vrot.slane %v4882, %v5015
    %v5017 = vlaneseq
    %v5018 = vshrl.u32 %v5017, 7
    %v5019 = vsub.s32 %v2100, %v5018
    %v5020 = vrot.slane %v4885, %v5019
    %v5021 = vlaneseq
    %v5022 = vshrl.u32 %v5021, 7
    %v5023 = vsub.s32 %v2100, %v5022
    %v5024 = vrot.slane %v4888, %v5023
    %v5025 = vlaneseq
    %v5026 = vshrl.u32 %v5025, 7
    %v5027 = vsub.s32 %v2100, %v5026
    %v5028 = vrot.slane %v4891, %v5027
    %v5029 = vlaneseq
    %v5030 = vshrl.u32 %v5029, 7
    %v5031 = vsub.s32 %v2100, %v5030
    %v5032 = vrot.slane %v4894, %v5031
    %v5033 = vlaneseq
    %v5034 = vshrl.u32 %v5033, 7
    %v5035 = vsub.s32 %v2100, %v5034
    %v5036 = vrot.slane %v4897, %v5035
    %v5037 = vlaneseq
    %v5038 = vshrl.u32 %v5037, 7
    %v5039 = vsub.s32 %v2100, %v5038
    %v5040 = vrot.slane %v4900, %v5039
    %v5041 = vlaneseq
    %v5042 = vshrl.u32 %v5041, 7
    %v5043 = vsub.s32 %v2100, %v5042
    %v5044 = vrot.slane %v4903, %v5043
    %v5045 = vlaneseq
    %v5046 = vshrl.u32 %v5045, 7
    %v5047 = vsub.s32 %v2100, %v5046
    %v5048 = vrot.slane %v4906, %v5047
    %v5049 = vlaneseq
    %v5050 = vshrl.u32 %v5049, 7
    %v5051 = vsub.s32 %v2100, %v5050
    %v5052 = vrot.slane %v4909, %v5051
    %v5053 = vlaneseq
    %v5054 = vshrl.u32 %v5053, 7
    %v5055 = vsub.s32 %v2100, %v5054
    %v5056 = vrot.slane %v4912, %v5055
    %v5057 = vlaneseq
    %v5058 = vshrl.u32 %v5057, 7
    %v5059 = vsub.s32 %v2100, %v5058
    %v5060 = vrot.slane %v4915, %v5059
    %v5061 = vlaneseq
    %v5062 = vshrl.u32 %v5061, 7
    %v5063 = vsub.s32 %v2100, %v5062
    %v5064 = vrot.slane %v4918, %v5063
    %v5065 = vlaneseq
    %v5066 = vshrl.u32 %v5065, 7
    %v5067 = vsub.s32 %v2100, %v5066
    %v5068 = vrot.slane %v4921, %v5067
    %v5069 = vlaneseq
    %v5070 = vshrl.u32 %v5069, 7
    %v5071 = vsub.s32 %v2100, %v5070
    %v5072 = vrot.slane %v4924, %v5071
    %v5073 = vlaneseq
    %v5074 = vshrl.u32 %v5073, 7
    %v5075 = vsub.s32 %v2100, %v5074
    %v5076 = vrot.slane %v4927, %v5075
    %v5077 = vlaneseq
    %v5078 = vshrl.u32 %v5077, 7
    %v5079 = vsub.s32 %v2100, %v5078
    %v5080 = vrot.slane %v4930, %v5079
    %v5081 = vlaneseq
    %v5082 = vshrl.u32 %v5081, 7
    %v5083 = vsub.s32 %v2100, %v5082
    %v5084 = vrot.slane %v4933, %v5083
    %v5085 = vlaneseq
    %v5086 = vshrl.u32 %v5085, 7
    %v5087 = vsub.s32 %v2100, %v5086
    %v5088 = vrot.slane %v4936, %v5087
    %v5089 = vlaneseq
    %v5090 = vshrl.u32 %v5089, 7
    %v5091 = vsub.s32 %v2100, %v5090
    %v5092 = vrot.slane %v4939, %v5091
    %v5093 = vlaneseq
    %v5094 = vshrl.u32 %v5093, 7
    %v5095 = vsub.s32 %v2100, %v5094
    %v5096 = vrot.slane %v4942, %v5095
    %v5097 = vlaneseq
    %v5098 = vshrl.u32 %v5097, 7
    %v5099 = vsub.s32 %v2100, %v5098
    %v5100 = vrot.slane %v4945, %v5099
    %v5101 = vlaneseq
    %v5102 = vshrl.u32 %v5101, 7
    %v5103 = vsub.s32 %v2100, %v5102
    %v5104 = vrot.slane %v4948, %v5103
    %v5105 = vlaneseq
    %v5106 = vshrl.u32 %v5105, 7
    %v5107 = vsub.s32 %v2100, %v5106
    %v5108 = vrot.slane %v4951, %v5107
    %v5109 = vlaneseq
    %v5110 = vshrl.u32 %v5109, 7
    %v5111 = vsub.s32 %v2100, %v5110
    %v5112 = vrot.slane %v4954, %v5111
    %v5113 = vlaneseq
    %v5114 = vshrl.u32 %v5113, 7
    %v5115 = vsub.s32 %v2100, %v5114
    %v5116 = vrot.slane %v4957, %v5115
    %v5117 = vlaneseq
    %v5118 = vshrl.u32 %v5117, 7
    %v5119 = vsub.s32 %v2100, %v5118
    %v5120 = vrot.slane %v4960, %v5119
    %v5121 = vsel %vm940, %v5000, %v4996
    %v5122 = vsel %vm943, %v5004, %v5121
    %v5123 = vsel %vm946, %v5008, %v5122
    %v5124 = vsel %vm949, %v5012, %v5123
    %v5125 = vsel %vm952, %v5016, %v5124
    %v5126 = vsel %vm955, %v5020, %v5125
    %v5127 = vsel %vm958, %v5024, %v5126
    %v5128 = vsel %vm940, %v5032, %v5028
    %v5129 = vsel %vm943, %v5036, %v5128
    %v5130 = vsel %vm946, %v5040, %v5129
    %v5131 = vsel %vm949, %v5044, %v5130
    %v5132 = vsel %vm952, %v5048, %v5131
    %v5133 = vsel %vm955, %v5052, %v5132
    %v5134 = vsel %vm958, %v5056, %v5133
    %v5135 = vsel %vm940, %v5064, %v5060
    %v5136 = vsel %vm943, %v5068, %v5135
    %v5137 = vsel %vm946, %v5072, %v5136
    %v5138 = vsel %vm949, %v5076, %v5137
    %v5139 = vsel %vm952, %v5080, %v5138
    %v5140 = vsel %vm955, %v5084, %v5139
    %v5141 = vsel %vm958, %v5088, %v5140
    %v5142 = vsel %vm940, %v5096, %v5092
    %v5143 = vsel %vm943, %v5100, %v5142
    %v5144 = vsel %vm946, %v5104, %v5143
    %v5145 = vsel %vm949, %v5108, %v5144
    %v5146 = vsel %vm952, %v5112, %v5145
    %v5147 = vsel %vm955, %v5116, %v5146
    %v5148 = vsel %vm958, %v5120, %v5147
    %v5153 = vcombine.low %v5127, %v5141
    %v5154 = vcombine.high %v5127, %v5141
    %v5156 = vunpack.c.l.s4 1983009808
    %v5157 = vunpack.c.0.s8 %v5156
    %v5158 = vlaneseq
    %v5159 = vshrl.u32 %v5158, 7
    %v5160 = vsub.s32 %v5157, %v5159
    %v5161 = vrot.slane %v5153, %v5160
    %v5163 = vunpack.c.l.s4 1983009808
    %v5164 = vunpack.c.0.s8 %v5163
    %v5165 = vlaneseq
    %v5166 = vshrl.u32 %v5165, 7
    %v5167 = vsub.s32 %v5164, %v5166
    %v5168 = vrot.slane %v5154, %v5167
    %v5169 = vcombine.low %v5134, %v5148
    %v5170 = vcombine.high %v5134, %v5148
    %v5172 = vunpack.c.l.s4 1983009808
    %v5173 = vunpack.c.0.s8 %v5172
    %v5174 = vlaneseq
    %v5175 = vshrl.u32 %v5174, 7
    %v5176 = vsub.s32 %v5173, %v5175
    %v5177 = vrot.slane %v5169, %v5176
    %v5179 = vunpack.c.l.s4 1983009808
    %v5180 = vunpack.c.0.s8 %v5179
    %v5181 = vlaneseq
    %v5182 = vshrl.u32 %v5181, 7
    %v5183 = vsub.s32 %v5180, %v5182
    %v5184 = vrot.slane %v5170, %v5183
    %v5185 = vcombine.low %v5161, %v5177
    %v5186 = vcombine.high %v5161, %v5177
    %v5188 = vunpack.c.l.s4 1934713408
    %v5189 = vunpack.c.0.s8 %v5188
    %v5190 = vlaneseq
    %v5191 = vshrl.u32 %v5190, 7
    %v5192 = vsub.s32 %v5189, %v5191
    %v5193 = vrot.slane %v5185, %v5192
    %v5195 = vunpack.c.l.s4 1934713408
    %v5196 = vunpack.c.0.s8 %v5195
    %v5197 = vlaneseq
    %v5198 = vshrl.u32 %v5197, 7
    %v5199 = vsub.s32 %v5196, %v5198
    %v5200 = vrot.slane %v5186, %v5199
    %v5201 = vcombine.low %v5168, %v5184
    %v5202 = vcombine.high %v5168, %v5184
    %v5204 = vunpack.c.l.s4 1934713408
    %v5205 = vunpack.c.0.s8 %v5204
    %v5206 = vlaneseq
    %v5207 = vshrl.u32 %v5206, 7
    %v5208 = vsub.s32 %v5205, %v5207
    %v5209 = vrot.slane %v5201, %v5208
    %v5211 = vunpack.c.l.s4 1934713408
    %v5212 = vunpack.c.0.s8 %v5211
    %v5213 = vlaneseq
    %v5214 = vshrl.u32 %v5213, 7
    %v5215 = vsub.s32 %v5212, %v5214
    %v5216 = vrot.slane %v5202, %v5215
    %v5217 = vcombine.high %v5193, 0.0
    %v5218 = vcombine.high %v5200, 0.0
    %v5219 = vcombine.high %v5209, 0.0
    %v5220 = vcombine.high %v5216, 0.0
    %5222 = vrot.lane.b32.xlu0 %v5217, 8
    %v5223 = vpop.permute.xlu0 %5222
    %5226 = vrot.lane.b32.xlu0 %v5200, 16
    %v5227 = vpop.permute.xlu0 %5226
    %5230 = vrot.lane.b32.xlu0 %v5218, 24
    %v5231 = vpop.permute.xlu0 %5230
    %5234 = vrot.lane.b32.xlu0 %v5209, 32
    %v5235 = vpop.permute.xlu0 %5234
    %5238 = vrot.lane.b32.xlu0 %v5219, 40
    %v5239 = vpop.permute.xlu0 %5238
    %5242 = vrot.lane.b32.xlu0 %v5216, 48
    %v5243 = vpop.permute.xlu0 %5242
    %5246 = vrot.lane.b32.xlu0 %v5220, 56
    %v5247 = vpop.permute.xlu0 %5246
    %v5249 = vsel %vm2357, %v5193, %v5223
    %v5250 = vsel %vm2359, %v5249, %v5227
    %v5251 = vsel %vm2361, %v5250, %v5231
    %v5252 = vsel %vm2363, %v5251, %v5235
    %v5253 = vsel %vm2365, %v5252, %v5239
    %v5254 = vsel %vm2367, %v5253, %v5243
    %v5255 = vsel %vm2369, %v5254, %v5247
    %v5256 = vpack.c.bf16 %v5255, %v5255
    %5258 = vrot.lane.b32.xlu0 %v5256, 73
    %v5259 = vpop.permute.xlu0 %5258
    %5260 = vrot.lane.b32.xlu0 %v5256, 9
    %v5261 = vpop.permute.xlu0 %5260
    %v5264 = vsel %vm2377, %v5259, %v5261
    %v5266 = vmul.bf16 %v5264, %v2388
    %5267 = vrot.lane.b32.xlu0 %v5256, 72
    %v5268 = vpop.permute.xlu0 %5267
    %5269 = vrot.lane.b32.xlu0 %v5256, 8
    %v5270 = vpop.permute.xlu0 %5269
    %v5273 = vsel %vm2357, %v5268, %v5270
    %v5275 = vmul.bf16 %v5273, %v2404
    %v5277 = vsel %vm2410, %v5275, 0
    %5279 = vmatprep.subr.bf16.mxu0 0
    %5280 = vmatpush1.bf16.msra.mxu0 %v5277
    %5281 = vmatprep.subr.bf16.mxu0 0
    %5282 = vmatpush1.bf16.msra.mxu0 0
    %5283 = vmatprep.subr.bf16.mxu0 0
    %5284 = vmatpush1.bf16.msra.mxu0 0
    %5285 = vmatprep.subr.bf16.mxu0 0
    %5286 = vmatpush1.bf16.msra.mxu0 0
    %5287 = vmatprep.subr.bf16.mxu0 0
    %5288 = vmatpush1.bf16.msra.mxu0 0
    %5289 = vmatprep.subr.bf16.mxu0 0
    %5290 = vmatpush1.bf16.msra.mxu0 0
    %5291 = vmatprep.subr.bf16.mxu0 0
    %5292 = vmatpush1.bf16.msra.mxu0 0
    %5293 = vmatprep.subr.bf16.mxu0 0
    %5294 = vmatpush1.bf16.msra.mxu0 0
    %5295 = vmatprep.subr.bf16.mxu0 0
    %5296 = vmatpush1.bf16.msra.mxu0 0
    %5297 = vmatprep.subr.bf16.mxu0 0
    %5298 = vmatpush1.bf16.msra.mxu0 0
    %5299 = vmatprep.subr.bf16.mxu0 0
    %5300 = vmatpush1.bf16.msra.mxu0 0
    %5301 = vmatprep.subr.bf16.mxu0 0
    %5302 = vmatpush1.bf16.msra.mxu0 0
    %5303 = vmatprep.subr.bf16.mxu0 0
    %5304 = vmatpush1.bf16.msra.mxu0 0
    %5305 = vmatprep.subr.bf16.mxu0 0
    %5306 = vmatpush1.bf16.msra.mxu0 0
    %5307 = vmatprep.subr.bf16.mxu0 0
    %5308 = vmatpush1.bf16.msra.mxu0 0
    %5309 = vmatprep.subr.bf16.mxu0 0
    %5310 = vmatpush1.bf16.msra.mxu0 0
    %5311 = vmatprep.mubr.bf16.mxu0 0
    %5312 = vmatmul.mubr.bf16.gmra.mrb[0].mxu0 %v2408
    %v5313 = vpop.f32.mrb[0].mxu0
    %v5314 = vadd.f32 0.0, %v5313
    %v5315 = vpop.f32.mrb[0].mxu0
    %v5316 = vpop.f32.mrb[0].mxu0
    %v5317 = vpop.f32.mrb[0].mxu0
    %5318 = vdwg.mxu0
    %v5320 = vsel %vm2410, %v5266, 0
    %5322 = vmatprep.subr.bf16.mxu0 0
    %5323 = vmatpush1.bf16.msra.mxu0 %v5320
    %5324 = vmatprep.subr.bf16.mxu0 0
    %5325 = vmatpush1.bf16.msra.mxu0 0
    %5326 = vmatprep.subr.bf16.mxu0 0
    %5327 = vmatpush1.bf16.msra.mxu0 0
    %5328 = vmatprep.subr.bf16.mxu0 0
    %5329 = vmatpush1.bf16.msra.mxu0 0
    %5330 = vmatprep.subr.bf16.mxu0 0
    %5331 = vmatpush1.bf16.msra.mxu0 0
    %5332 = vmatprep.subr.bf16.mxu0 0
    %5333 = vmatpush1.bf16.msra.mxu0 0
    %5334 = vmatprep.subr.bf16.mxu0 0
    %5335 = vmatpush1.bf16.msra.mxu0 0
    %5336 = vmatprep.subr.bf16.mxu0 0
    %5337 = vmatpush1.bf16.msra.mxu0 0
    %5338 = vmatprep.subr.bf16.mxu0 0
    %5339 = vmatpush1.bf16.msra.mxu0 0
    %5340 = vmatprep.subr.bf16.mxu0 0
    %5341 = vmatpush1.bf16.msra.mxu0 0
    %5342 = vmatprep.subr.bf16.mxu0 0
    %5343 = vmatpush1.bf16.msra.mxu0 0
    %5344 = vmatprep.subr.bf16.mxu0 0
    %5345 = vmatpush1.bf16.msra.mxu0 0
    %5346 = vmatprep.subr.bf16.mxu0 0
    %5347 = vmatpush1.bf16.msra.mxu0 0
    %5348 = vmatprep.subr.bf16.mxu0 0
    %5349 = vmatpush1.bf16.msra.mxu0 0
    %5350 = vmatprep.subr.bf16.mxu0 0
    %5351 = vmatpush1.bf16.msra.mxu0 0
    %5352 = vmatprep.subr.bf16.mxu0 0
    %5353 = vmatpush1.bf16.msra.mxu0 0
    %5354 = vmatprep.mubr.bf16.mxu0 0
    %5355 = vmatmul.mubr.bf16.gmra.mrb[0].mxu0 %v2455
    %v5356 = vpop.f32.mrb[0].mxu0
    %v5357 = vadd.f32 %v5314, %v5356
    %v5358 = vpop.f32.mrb[0].mxu0
    %v5359 = vpop.f32.mrb[0].mxu0
    %v5360 = vpop.f32.mrb[0].mxu0
    %5361 = vdwg.mxu0
    %5362 = vrot.lane.b32.xlu0 %v5256, 71
    %v5363 = vpop.permute.xlu0 %5362
    %5364 = vrot.lane.b32.xlu0 %v5256, 7
    %v5365 = vpop.permute.xlu0 %5364
    %v5368 = vsel %vm2504, %v5363, %v5365
    %v5370 = vmul.bf16 %v5368, %v2515
    %v5372 = vsel %vm2410, %v5370, 0
    %5374 = vmatprep.subr.bf16.mxu0 0
    %5375 = vmatpush1.bf16.msra.mxu0 %v5372
    %5376 = vmatprep.subr.bf16.mxu0 0
    %5377 = vmatpush1.bf16.msra.mxu0 0
    %5378 = vmatprep.subr.bf16.mxu0 0
    %5379 = vmatpush1.bf16.msra.mxu0 0
    %5380 = vmatprep.subr.bf16.mxu0 0
    %5381 = vmatpush1.bf16.msra.mxu0 0
    %5382 = vmatprep.subr.bf16.mxu0 0
    %5383 = vmatpush1.bf16.msra.mxu0 0
    %5384 = vmatprep.subr.bf16.mxu0 0
    %5385 = vmatpush1.bf16.msra.mxu0 0
    %5386 = vmatprep.subr.bf16.mxu0 0
    %5387 = vmatpush1.bf16.msra.mxu0 0
    %5388 = vmatprep.subr.bf16.mxu0 0
    %5389 = vmatpush1.bf16.msra.mxu0 0
    %5390 = vmatprep.subr.bf16.mxu0 0
    %5391 = vmatpush1.bf16.msra.mxu0 0
    %5392 = vmatprep.subr.bf16.mxu0 0
    %5393 = vmatpush1.bf16.msra.mxu0 0
    %5394 = vmatprep.subr.bf16.mxu0 0
    %5395 = vmatpush1.bf16.msra.mxu0 0
    %5396 = vmatprep.subr.bf16.mxu0 0
    %5397 = vmatpush1.bf16.msra.mxu0 0
    %5398 = vmatprep.subr.bf16.mxu0 0
    %5399 = vmatpush1.bf16.msra.mxu0 0
    %5400 = vmatprep.subr.bf16.mxu0 0
    %5401 = vmatpush1.bf16.msra.mxu0 0
    %5402 = vmatprep.subr.bf16.mxu0 0
    %5403 = vmatpush1.bf16.msra.mxu0 0
    %5404 = vmatprep.subr.bf16.mxu0 0
    %5405 = vmatpush1.bf16.msra.mxu0 0
    %5406 = vmatprep.mubr.bf16.mxu0 0
    %5407 = vmatmul.mubr.bf16.gmra.mrb[0].mxu0 %v2518
    %v5408 = vpop.f32.mrb[0].mxu0
    %v5409 = vadd.f32 0.0, %v5408
    %v5410 = vpop.f32.mrb[0].mxu0
    %v5411 = vpop.f32.mrb[0].mxu0
    %v5412 = vpop.f32.mrb[0].mxu0
    %5413 = vdwg.mxu0
    %v5414 = vadd.f32 %v5357, %v5409
    %5415 = vrot.lane.b32.xlu0 %v5256, 65
    %v5416 = vpop.permute.xlu0 %5415
    %5417 = vrot.lane.b32.xlu0 %v5256, 1
    %v5418 = vpop.permute.xlu0 %5417
    %v5421 = vsel %vm2568, %v5416, %v5418
    %v5423 = vmul.bf16 %v5421, %v2579
    %v5425 = vsel %vm2410, %v5423, 0
    %5427 = vmatprep.subr.bf16.mxu0 0
    %5428 = vmatpush1.bf16.msra.mxu0 %v5425
    %5429 = vmatprep.subr.bf16.mxu0 0
    %5430 = vmatpush1.bf16.msra.mxu0 0
    %5431 = vmatprep.subr.bf16.mxu0 0
    %5432 = vmatpush1.bf16.msra.mxu0 0
    %5433 = vmatprep.subr.bf16.mxu0 0
    %5434 = vmatpush1.bf16.msra.mxu0 0
    %5435 = vmatprep.subr.bf16.mxu0 0
    %5436 = vmatpush1.bf16.msra.mxu0 0
    %5437 = vmatprep.subr.bf16.mxu0 0
    %5438 = vmatpush1.bf16.msra.mxu0 0
    %5439 = vmatprep.subr.bf16.mxu0 0
    %5440 = vmatpush1.bf16.msra.mxu0 0
    %5441 = vmatprep.subr.bf16.mxu0 0
    %5442 = vmatpush1.bf16.msra.mxu0 0
    %5443 = vmatprep.subr.bf16.mxu0 0
    %5444 = vmatpush1.bf16.msra.mxu0 0
    %5445 = vmatprep.subr.bf16.mxu0 0
    %5446 = vmatpush1.bf16.msra.mxu0 0
    %5447 = vmatprep.subr.bf16.mxu0 0
    %5448 = vmatpush1.bf16.msra.mxu0 0
    %5449 = vmatprep.subr.bf16.mxu0 0
    %5450 = vmatpush1.bf16.msra.mxu0 0
    %5451 = vmatprep.subr.bf16.mxu0 0
    %5452 = vmatpush1.bf16.msra.mxu0 0
    %5453 = vmatprep.subr.bf16.mxu0 0
    %5454 = vmatpush1.bf16.msra.mxu0 0
    %5455 = vmatprep.subr.bf16.mxu0 0
    %5456 = vmatpush1.bf16.msra.mxu0 0
    %5457 = vmatprep.subr.bf16.mxu0 0
    %5458 = vmatpush1.bf16.msra.mxu0 0
    %5459 = vmatprep.mubr.bf16.mxu0 0
    %5460 = vmatmul.mubr.bf16.gmra.mrb[0].mxu0 %v2582
    %v5461 = vpop.f32.mrb[0].mxu0
    %v5462 = vadd.f32 0.0, %v5461
    %v5463 = vpop.f32.mrb[0].mxu0
    %v5464 = vpop.f32.mrb[0].mxu0
    %v5465 = vpop.f32.mrb[0].mxu0
    %5466 = vdwg.mxu0
    %v5467 = vadd.f32 %v5414, %v5462
    %v5468 = vmul.bf16 %v5256, %v2634
    %v5470 = vsel %vm2410, %v5468, 0
    %5472 = vmatprep.subr.bf16.mxu0 0
    %5473 = vmatpush1.bf16.msra.mxu0 %v5470
    %5474 = vmatprep.subr.bf16.mxu0 0
    %5475 = vmatpush1.bf16.msra.mxu0 0
    %5476 = vmatprep.subr.bf16.mxu0 0
    %5477 = vmatpush1.bf16.msra.mxu0 0
    %5478 = vmatprep.subr.bf16.mxu0 0
    %5479 = vmatpush1.bf16.msra.mxu0 0
    %5480 = vmatprep.subr.bf16.mxu0 0
    %5481 = vmatpush1.bf16.msra.mxu0 0
    %5482 = vmatprep.subr.bf16.mxu0 0
    %5483 = vmatpush1.bf16.msra.mxu0 0
    %5484 = vmatprep.subr.bf16.mxu0 0
    %5485 = vmatpush1.bf16.msra.mxu0 0
    %5486 = vmatprep.subr.bf16.mxu0 0
    %5487 = vmatpush1.bf16.msra.mxu0 0
    %5488 = vmatprep.subr.bf16.mxu0 0
    %5489 = vmatpush1.bf16.msra.mxu0 0
    %5490 = vmatprep.subr.bf16.mxu0 0
    %5491 = vmatpush1.bf16.msra.mxu0 0
    %5492 = vmatprep.subr.bf16.mxu0 0
    %5493 = vmatpush1.bf16.msra.mxu0 0
    %5494 = vmatprep.subr.bf16.mxu0 0
    %5495 = vmatpush1.bf16.msra.mxu0 0
    %5496 = vmatprep.subr.bf16.mxu0 0
    %5497 = vmatpush1.bf16.msra.mxu0 0
    %5498 = vmatprep.subr.bf16.mxu0 0
    %5499 = vmatpush1.bf16.msra.mxu0 0
    %5500 = vmatprep.subr.bf16.mxu0 0
    %5501 = vmatpush1.bf16.msra.mxu0 0
    %5502 = vmatprep.subr.bf16.mxu0 0
    %5503 = vmatpush1.bf16.msra.mxu0 0
    %5504 = vmatprep.mubr.bf16.mxu0 0
    %5505 = vmatmul.mubr.bf16.gmra.mrb[0].mxu0 %v2637
    %v5506 = vpop.f32.mrb[0].mxu0
    %v5507 = vadd.f32 0.0, %v5506
    %v5508 = vpop.f32.mrb[0].mxu0
    %v5509 = vpop.f32.mrb[0].mxu0
    %v5510 = vpop.f32.mrb[0].mxu0
    %5511 = vdwg.mxu0
    %v5512 = vadd.f32 %v5467, %v5507
    %5513 = vrot.lane.b32.xlu0 %v5256, 127
    %v5514 = vpop.permute.xlu0 %5513
    %5515 = vrot.lane.b32.xlu0 %v5256, 63
    %v5516 = vpop.permute.xlu0 %5515
    %v5519 = vsel %vm2687, %v5514, %v5516
    %v5521 = vmul.bf16 %v5519, %v2698
    %v5523 = vsel %vm2410, %v5521, 0
    %5525 = vmatprep.subr.bf16.mxu0 0
    %5526 = vmatpush1.bf16.msra.mxu0 %v5523
    %5527 = vmatprep.subr.bf16.mxu0 0
    %5528 = vmatpush1.bf16.msra.mxu0 0
    %5529 = vmatprep.subr.bf16.mxu0 0
    %5530 = vmatpush1.bf16.msra.mxu0 0
    %5531 = vmatprep.subr.bf16.mxu0 0
    %5532 = vmatpush1.bf16.msra.mxu0 0
    %5533 = vmatprep.subr.bf16.mxu0 0
    %5534 = vmatpush1.bf16.msra.mxu0 0
    %5535 = vmatprep.subr.bf16.mxu0 0
    %5536 = vmatpush1.bf16.msra.mxu0 0
    %5537 = vmatprep.subr.bf16.mxu0 0
    %5538 = vmatpush1.bf16.msra.mxu0 0
    %5539 = vmatprep.subr.bf16.mxu0 0
    %5540 = vmatpush1.bf16.msra.mxu0 0
    %5541 = vmatprep.subr.bf16.mxu0 0
    %5542 = vmatpush1.bf16.msra.mxu0 0
    %5543 = vmatprep.subr.bf16.mxu0 0
    %5544 = vmatpush1.bf16.msra.mxu0 0
    %5545 = vmatprep.subr.bf16.mxu0 0
    %5546 = vmatpush1.bf16.msra.mxu0 0
    %5547 = vmatprep.subr.bf16.mxu0 0
    %5548 = vmatpush1.bf16.msra.mxu0 0
    %5549 = vmatprep.subr.bf16.mxu0 0
    %5550 = vmatpush1.bf16.msra.mxu0 0
    %5551 = vmatprep.subr.bf16.mxu0 0
    %5552 = vmatpush1.bf16.msra.mxu0 0
    %5553 = vmatprep.subr.bf16.mxu0 0
    %5554 = vmatpush1.bf16.msra.mxu0 0
    %5555 = vmatprep.subr.bf16.mxu0 0
    %5556 = vmatpush1.bf16.msra.mxu0 0
    %5557 = vmatprep.mubr.bf16.mxu0 0
    %5558 = vmatmul.mubr.bf16.gmra.mrb[0].mxu0 %v2701
    %v5559 = vpop.f32.mrb[0].mxu0
    %v5560 = vadd.f32 0.0, %v5559
    %v5561 = vpop.f32.mrb[0].mxu0
    %v5562 = vpop.f32.mrb[0].mxu0
    %v5563 = vpop.f32.mrb[0].mxu0
    %5564 = vdwg.mxu0
    %v5565 = vadd.f32 %v5512, %v5560
    %5566 = vrot.lane.b32.xlu0 %v5256, 121
    %v5567 = vpop.permute.xlu0 %5566
    %5568 = vrot.lane.b32.xlu0 %v5256, 57
    %v5569 = vpop.permute.xlu0 %5568
    %v5572 = vsel %vm2751, %v5567, %v5569
    %v5574 = vmul.bf16 %v5572, %v2762
    %v5576 = vsel %vm2410, %v5574, 0
    %5578 = vmatprep.subr.bf16.mxu0 0
    %5579 = vmatpush1.bf16.msra.mxu0 %v5576
    %5580 = vmatprep.subr.bf16.mxu0 0
    %5581 = vmatpush1.bf16.msra.mxu0 0
    %5582 = vmatprep.subr.bf16.mxu0 0
    %5583 = vmatpush1.bf16.msra.mxu0 0
    %5584 = vmatprep.subr.bf16.mxu0 0
    %5585 = vmatpush1.bf16.msra.mxu0 0
    %5586 = vmatprep.subr.bf16.mxu0 0
    %5587 = vmatpush1.bf16.msra.mxu0 0
    %5588 = vmatprep.subr.bf16.mxu0 0
    %5589 = vmatpush1.bf16.msra.mxu0 0
    %5590 = vmatprep.subr.bf16.mxu0 0
    %5591 = vmatpush1.bf16.msra.mxu0 0
    %5592 = vmatprep.subr.bf16.mxu0 0
    %5593 = vmatpush1.bf16.msra.mxu0 0
    %5594 = vmatprep.subr.bf16.mxu0 0
    %5595 = vmatpush1.bf16.msra.mxu0 0
    %5596 = vmatprep.subr.bf16.mxu0 0
    %5597 = vmatpush1.bf16.msra.mxu0 0
    %5598 = vmatprep.subr.bf16.mxu0 0
    %5599 = vmatpush1.bf16.msra.mxu0 0
    %5600 = vmatprep.subr.bf16.mxu0 0
    %5601 = vmatpush1.bf16.msra.mxu0 0
    %5602 = vmatprep.subr.bf16.mxu0 0
    %5603 = vmatpush1.bf16.msra.mxu0 0
    %5604 = vmatprep.subr.bf16.mxu0 0
    %5605 = vmatpush1.bf16.msra.mxu0 0
    %5606 = vmatprep.subr.bf16.mxu0 0
    %5607 = vmatpush1.bf16.msra.mxu0 0
    %5608 = vmatprep.subr.bf16.mxu0 0
    %5609 = vmatpush1.bf16.msra.mxu0 0
    %5610 = vmatprep.mubr.bf16.mxu0 0
    %5611 = vmatmul.mubr.bf16.gmra.mrb[0].mxu0 %v2765
    %v5612 = vpop.f32.mrb[0].mxu0
    %v5613 = vadd.f32 0.0, %v5612
    %v5614 = vpop.f32.mrb[0].mxu0
    %v5615 = vpop.f32.mrb[0].mxu0
    %v5616 = vpop.f32.mrb[0].mxu0
    %5617 = vdwg.mxu0
    %v5618 = vadd.f32 %v5565, %v5613
    %5619 = vrot.lane.b32.xlu0 %v5256, 120
    %v5620 = vpop.permute.xlu0 %5619
    %5621 = vrot.lane.b32.xlu0 %v5256, 56
    %v5622 = vpop.permute.xlu0 %5621
    %v5625 = vsel %vm2369, %v5620, %v5622
    %v5627 = vmul.bf16 %v5625, %v2825
    %v5629 = vsel %vm2410, %v5627, 0
    %5631 = vmatprep.subr.bf16.mxu0 0
    %5632 = vmatpush1.bf16.msra.mxu0 %v5629
    %5633 = vmatprep.subr.bf16.mxu0 0
    %5634 = vmatpush1.bf16.msra.mxu0 0
    %5635 = vmatprep.subr.bf16.mxu0 0
    %5636 = vmatpush1.bf16.msra.mxu0 0
    %5637 = vmatprep.subr.bf16.mxu0 0
    %5638 = vmatpush1.bf16.msra.mxu0 0
    %5639 = vmatprep.subr.bf16.mxu0 0
    %5640 = vmatpush1.bf16.msra.mxu0 0
    %5641 = vmatprep.subr.bf16.mxu0 0
    %5642 = vmatpush1.bf16.msra.mxu0 0
    %5643 = vmatprep.subr.bf16.mxu0 0
    %5644 = vmatpush1.bf16.msra.mxu0 0
    %5645 = vmatprep.subr.bf16.mxu0 0
    %5646 = vmatpush1.bf16.msra.mxu0 0
    %5647 = vmatprep.subr.bf16.mxu0 0
    %5648 = vmatpush1.bf16.msra.mxu0 0
    %5649 = vmatprep.subr.bf16.mxu0 0
    %5650 = vmatpush1.bf16.msra.mxu0 0
    %5651 = vmatprep.subr.bf16.mxu0 0
    %5652 = vmatpush1.bf16.msra.mxu0 0
    %5653 = vmatprep.subr.bf16.mxu0 0
    %5654 = vmatpush1.bf16.msra.mxu0 0
    %5655 = vmatprep.subr.bf16.mxu0 0
    %5656 = vmatpush1.bf16.msra.mxu0 0
    %5657 = vmatprep.subr.bf16.mxu0 0
    %5658 = vmatpush1.bf16.msra.mxu0 0
    %5659 = vmatprep.subr.bf16.mxu0 0
    %5660 = vmatpush1.bf16.msra.mxu0 0
    %5661 = vmatprep.subr.bf16.mxu0 0
    %5662 = vmatpush1.bf16.msra.mxu0 0
    %5663 = vmatprep.mubr.bf16.mxu0 0
    %5664 = vmatmul.mubr.bf16.gmra.mrb[0].mxu0 %v2828
    %v5665 = vpop.f32.mrb[0].mxu0
    %v5666 = vadd.f32 0.0, %v5665
    %v5667 = vpop.f32.mrb[0].mxu0
    %v5668 = vpop.f32.mrb[0].mxu0
    %v5669 = vpop.f32.mrb[0].mxu0
    %5670 = vdwg.mxu0
    %v5671 = vadd.f32 %v5618, %v5666
    %5672 = vrot.lane.b32.xlu0 %v5256, 119
    %v5673 = vpop.permute.xlu0 %5672
    %5674 = vrot.lane.b32.xlu0 %v5256, 55
    %v5675 = vpop.permute.xlu0 %5674
    %v5678 = vsel %vm2878, %v5673, %v5675
    %v5680 = vmul.bf16 %v5678, %v2889
    %v5682 = vsel %vm2410, %v5680, 0
    %5684 = vmatprep.subr.bf16.mxu0 0
    %5685 = vmatpush1.bf16.msra.mxu0 %v5682
    %5686 = vmatprep.subr.bf16.mxu0 0
    %5687 = vmatpush1.bf16.msra.mxu0 0
    %5688 = vmatprep.subr.bf16.mxu0 0
    %5689 = vmatpush1.bf16.msra.mxu0 0
    %5690 = vmatprep.subr.bf16.mxu0 0
    %5691 = vmatpush1.bf16.msra.mxu0 0
    %5692 = vmatprep.subr.bf16.mxu0 0
    %5693 = vmatpush1.bf16.msra.mxu0 0
    %5694 = vmatprep.subr.bf16.mxu0 0
    %5695 = vmatpush1.bf16.msra.mxu0 0
    %5696 = vmatprep.subr.bf16.mxu0 0
    %5697 = vmatpush1.bf16.msra.mxu0 0
    %5698 = vmatprep.subr.bf16.mxu0 0
    %5699 = vmatpush1.bf16.msra.mxu0 0
    %5700 = vmatprep.subr.bf16.mxu0 0
    %5701 = vmatpush1.bf16.msra.mxu0 0
    %5702 = vmatprep.subr.bf16.mxu0 0
    %5703 = vmatpush1.bf16.msra.mxu0 0
    %5704 = vmatprep.subr.bf16.mxu0 0
    %5705 = vmatpush1.bf16.msra.mxu0 0
    %5706 = vmatprep.subr.bf16.mxu0 0
    %5707 = vmatpush1.bf16.msra.mxu0 0
    %5708 = vmatprep.subr.bf16.mxu0 0
    %5709 = vmatpush1.bf16.msra.mxu0 0
    %5710 = vmatprep.subr.bf16.mxu0 0
    %5711 = vmatpush1.bf16.msra.mxu0 0
    %5712 = vmatprep.subr.bf16.mxu0 0
    %5713 = vmatpush1.bf16.msra.mxu0 0
    %5714 = vmatprep.subr.bf16.mxu0 0
    %5715 = vmatpush1.bf16.msra.mxu0 0
    %5716 = vmatprep.mubr.bf16.mxu0 0
    %5717 = vmatmul.mubr.bf16.gmra.mrb[0].mxu0 %v2892
    %v5718 = vpop.f32.mrb[0].mxu0
    %v5719 = vadd.f32 0.0, %v5718
    %v5720 = vpop.f32.mrb[0].mxu0
    %v5721 = vpop.f32.mrb[0].mxu0
    %v5722 = vpop.f32.mrb[0].mxu0
    %5723 = vdwg.mxu0
    %v5724 = vadd.f32 %v5671, %v5719
    %v5725 = vpack.c.bf16 %v5724, %v5724
    %s5726 = scalar_lea.vmem %s3, 4
    %5727 = vst.msk [vmem:[%s5726] sm:$0xf] %vm2939, %v5725
    %v5728 = vunpack.c.l.bf16 %v5725
    %v5729 = vsel %vm2942, %v5728, 0.0
    %5730 = vadd.xlane.f32.xlu0 %v5729
    %v5731 = vpop.xlane.xlu0 %5730
    %v5732 = vadd.f32 %v2946, %v5731
    %v5733 = vmul.f32 %v5728, %v5728
    %v5734 = vsel %vm2942, %v5733, 0.0
    %5735 = vadd.xlane.f32.xlu0 %v5734
    %v5736 = vpop.xlane.xlu0 %5735
    %v5737 = vadd.f32 %v2951, %v5736
    %5738 = vst.msk [vmem:[%s4] sm:$0xff] %vm2568, %v5732
    %5739 = vst.msk [vmem:[%s5] sm:$0xff] %vm2568, %v5737
    // Predicated region
    $region18: #{encode_forward.3} parent=1 // pred_check
      _
    $region19: #{encode_forward.3} parent=1 // pred_check_branch
      %5741 = sbr.rel (0) target = $region21
    $region20: #{encode_forward.3} parent=1 // pred_region
      _
    $region21: #{encode_forward.3} parent=1 // pred_fallthru
      _
    // Predicated region
    $region22: #{encode_forward.3} parent=1 // pred_check
      _
    $region23: #{encode_forward.3} parent=1 // pred_check_branch
      %5743 = sbr.rel (0) target = $region25
    $region24: #{encode_forward.3} parent=1 // pred_region
      _
    $region25: #{encode_forward.3} parent=1 // pred_fallthru
      _
    // Predicated region
    $region26: #{encode_forward.3} parent=1 // pred_check
      _
    $region27: #{encode_forward.3} parent=1 // pred_check_branch
      %5745 = sbr.rel (0) target = $region29
    $region28: #{encode_forward.3} parent=1 // pred_region
      _
    $region29: #{encode_forward.3} parent=1 // pred_fallthru
      _
    // Predicated region
    $region30: #{encode_forward.3} parent=1 // pred_check
      _
    $region31: #{encode_forward.3} parent=1 // pred_check_branch
      %5747 = sbr.rel (0) target = $region33
    $region32: #{encode_forward.3} parent=1 // pred_region
      _
    $region33: #{encode_forward.3} parent=1 // pred_fallthru
      _
    // Predicated region
    $region34: #{encode_forward.3} parent=1 // pred_check
      _
    $region35: #{encode_forward.3} parent=1 // pred_check_branch
      %5749 = sbr.rel (0) target = $region37
    $region36: #{encode_forward.3} parent=1 // pred_region
      _
    $region37: #{encode_forward.3} parent=1 // pred_fallthru
      _
    // Predicated region
    $region38: #{encode_forward.3} parent=1 // pred_check
      _
    $region39: #{encode_forward.3} parent=1 // pred_check_branch
      %5751 = sbr.rel (0) target = $region41
    $region40: #{encode_forward.3} parent=1 // pred_region
      _
    $region41: #{encode_forward.3} parent=1 // pred_fallthru
      _
    %5752 = vsyncpa [#allocation3], 1

</llo_original>
